<compile_context>
chip_gen: v5e
topology: v5e:2x2
jax: 0.10.0
libtpu: 0.0.40
codegen_flags: <defaults>
</compile_context>

<pallas_src>
import functools
import math

import jax
import jax.numpy as jnp
from jax.experimental import pallas as pl
from jax.experimental.pallas import tpu as pltpu


# ----------------------------------------------------------------- helpers

_VMEM_LIMIT = 32 * 1024 * 1024  # safe on v7x (64 MiB phys), ample for our tiles


def _fit_tile(dim, target, align):
    """Largest `align`-aligned divisor of `dim` that is <= target.

    If dim <= target the full dim is used (full-extent blocks are always
    legal).  If no aligned divisor <= target exists we fall back to the full
    extent rather than emitting a block that violates the (8,128) tiling rule.
    """
    if dim <= target:
        return dim
    start = target - (target % align)
    for t in range(start, 0, -align):
        if dim % t == 0:
            return t
    return dim  # no aligned divisor: full-extent block (legal, more VMEM)


# --------------------------------------------------------- linear (+fusions)

def _linear_kernel(x_ref, w_ref, b_ref, *rest, relu, fuse_ln, eps):
    """One (tm, tn) output tile; grid axis 2 (K) is the reduction axis.
    Optional fused epilogue: bias (+ReLU) (+residual-add + LayerNorm)."""
    if fuse_ln:
        r_ref, g_ref, bt_ref, o_ref, acc_ref = rest
    else:
        o_ref, acc_ref = rest

    @pl.when(pl.program_id(2) == 0)
    def _():
        acc_ref[...] = jnp.zeros_like(acc_ref)

    tk = x_ref.shape[-1]
    w = w_ref[...].reshape(tk, -1)          # handles (tk,tn) and (1,tk,tn)
    acc_ref[...] += jnp.dot(x_ref[...], w, preferred_element_type=jnp.float32)

    @pl.when(pl.program_id(2) == pl.num_programs(2) - 1)
    def _():
        y = acc_ref[...] + b_ref[...].reshape(1, -1)     # f32
        if relu:
            y = jnp.maximum(y, 0.0)
        if fuse_ln:
            y = y + r_ref[...].astype(jnp.float32)       # residual add
            mean = jnp.mean(y, axis=-1, keepdims=True)
            yc = y - mean
            var = jnp.mean(yc * yc, axis=-1, keepdims=True)  # biased (torch LN)
            y = yc * jax.lax.rsqrt(var + eps) * g_ref[...] + bt_ref[...]
        o_ref[...] = y.reshape(o_ref.shape).astype(o_ref.dtype)


def linear(x2d, w, b, *, relu=False, residual=None, ln_gamma=None, ln_beta=None,
           ln_eps=1e-5, tm=512, tn=512, tk=1024, out_dtype=jnp.bfloat16):
    """x2d: (M, K) bf16.
    w: (K, N) bf16 -> out (M, N); or grouped (G, K, n) bf16 -> out (G, M, n)
    (the grid's j axis maps to the leading group dim, so q/k/v never need to
    be sliced apart in XLA).
    residual/ln_gamma/ln_beta: fuse residual-add + LayerNorm into the epilogue
    (requires the full row in one tile, i.e. non-grouped output)."""
    M, K = x2d.shape
    grouped = (w.ndim == 3)
    fuse_ln = residual is not None
    assert not (grouped and fuse_ln)

    tm = _fit_tile(M, tm, 8)
    tk = _fit_tile(K, tk, 128)

    if grouped:
        G, _, n = w.shape
        tn = n
        num_j = G
    else:
        G, n = 1, w.shape[1]
        tn = n if fuse_ln else _fit_tile(n, tn, 128)
        num_j = n // tn

    grid = (M // tm, num_j, K // tk)

    in_specs = [pl.BlockSpec((tm, tk), lambda i, j, k: (i, k))]
    if grouped:
        in_specs += [pl.BlockSpec((1, tk, tn), lambda i, j, k: (j, k, 0)),
                     pl.BlockSpec((1, 1, tn), lambda i, j, k: (j, 0, 0))]
        args = [x2d, w, b.reshape(G, 1, n)]
    else:
        in_specs += [pl.BlockSpec((tk, tn), lambda i, j, k: (k, j)),
                     pl.BlockSpec((1, tn), lambda i, j, k: (0, j))]
        args = [x2d, w, b.reshape(1, n)]

    if fuse_ln:
        in_specs += [pl.BlockSpec((tm, tn), lambda i, j, k: (i, j)),
                     pl.BlockSpec((1, tn), lambda i, j, k: (0, j)),
                     pl.BlockSpec((1, tn), lambda i, j, k: (0, j))]
        args += [residual, ln_gamma.reshape(1, n), ln_beta.reshape(1, n)]

    if grouped:
        out_shape = jax.ShapeDtypeStruct((G, M, n), out_dtype)
        out_specs = pl.BlockSpec((1, tm, tn), lambda i, j, k: (j, i, 0))
    else:
        out_shape = jax.ShapeDtypeStruct((M, n), out_dtype)
        out_specs = pl.BlockSpec((tm, tn), lambda i, j, k: (i, j))

    return pl.pallas_call(
        functools.partial(_linear_kernel, relu=relu, fuse_ln=fuse_ln, eps=ln_eps),
        grid=grid,
        in_specs=in_specs,
        out_specs=out_specs,
        out_shape=out_shape,
        scratch_shapes=[pltpu.VMEM((tm, tn), jnp.float32)],
        compiler_params=pltpu.CompilerParams(
            dimension_semantics=("parallel", "parallel", "arbitrary"),
            vmem_limit_bytes=_VMEM_LIMIT),
    )(*args)


# -------------------------------------------------------------- attention

def _attention_kernel(q_ref, k_ref, v_ref, *rest, num_heads, sm_scale, has_mask):
    """One (batch, query-tile) grid step.  Heads are split in-kernel (lane-dim
    reshape, no XLA transposes) and all head matmuls run as a single batched
    contraction on the MXU with f32 accumulation."""
    if has_mask:
        bias_ref, o_ref = rest
    else:
        (o_ref,) = rest

    Sq, D = q_ref.shape[-2], q_ref.shape[-1]
    Sk = k_ref.shape[-2]
    H = num_heads
    dk = D // H

    # (.., Sq, D) -> (H, Sq, dk); scale folded into q (S*dk work, not S*S).
    q = jnp.swapaxes((q_ref[...] * sm_scale).reshape(Sq, H, dk), 0, 1)
    k = jnp.swapaxes(k_ref[...].reshape(Sk, H, dk), 0, 1)
    v = jnp.swapaxes(v_ref[...].reshape(Sk, H, dk), 0, 1)

    # Head-batched QK^T: (H, Sq, Sk) f32.
    s = jnp.einsum('hqd,hkd->hqk', q, k, preferred_element_type=jnp.float32)
    if has_mask:
        s = s + bias_ref[...]            # precomputed (Sq, Sk) additive bias

    m = jnp.max(s, axis=-1, keepdims=True)
    p = jnp.exp(s - m)
    denom = jnp.sum(p, axis=-1, keepdims=True)
    p = p * pl.reciprocal(denom, approx=True)        # EUP reciprocal

    # Head-batched PV: (H, Sq, dk) f32.
    o = jnp.einsum('hqk,hkd->hqd', p.astype(v.dtype), v,
                   preferred_element_type=jnp.float32)

    # Merge heads and do a single lane-dense bf16 store.
    out = jnp.swapaxes(o, 0, 1).reshape(Sq, D)
    o_ref[...] = out.reshape(o_ref.shape).astype(o_ref.dtype)


def attention(q, kv, bias, num_heads):
    """q: packed qkv (3, B, S, D) when kv is None (self-attention), otherwise
    (B, S, D) queries with kv = (2, B, Sk, D).  bias: (S, Sk) f32 or None.
    Output: (B, S, D) bf16."""
    # TODO(synk): for long sequences add a KV grid axis with online-softmax
    # (flash-style) accumulation instead of holding the full (H, S, Sk) scores.
    packed = kv is None
    if packed:
        _, B, S, D = q.shape
        Sk = S
    else:
        B, S, D = q.shape
        Sk = kv.shape[2]
    assert D % num_heads == 0
    sm_scale = 1.0 / math.sqrt(D // num_heads)
    has_mask = bias is not None

    tq = _fit_tile(S, 256, 8)
    grid = (B, S // tq)

    if packed:
        in_specs = [pl.BlockSpec((1, 1, tq, D), lambda b, qi: (0, b, qi, 0)),
                    pl.BlockSpec((1, 1, Sk, D), lambda b, qi: (1, b, 0, 0)),
                    pl.BlockSpec((1, 1, Sk, D), lambda b, qi: (2, b, 0, 0))]
        args = [q, q, q]
    else:
        in_specs = [pl.BlockSpec((1, tq, D), lambda b, qi: (b, qi, 0)),
                    pl.BlockSpec((1, 1, Sk, D), lambda b, qi: (0, b, 0, 0)),
                    pl.BlockSpec((1, 1, Sk, D), lambda b, qi: (1, b, 0, 0))]
        args = [q, kv, kv]
    if has_mask:
        in_specs.append(pl.BlockSpec((tq, Sk), lambda b, qi: (qi, 0)))
        args.append(bias)

    return pl.pallas_call(
        functools.partial(_attention_kernel, num_heads=num_heads,
                          sm_scale=sm_scale, has_mask=has_mask),
        grid=grid,
        in_specs=in_specs,
        out_specs=pl.BlockSpec((1, tq, D), lambda b, qi: (b, qi, 0)),
        out_shape=jax.ShapeDtypeStruct((B, S, D), jnp.bfloat16),
        compiler_params=pltpu.CompilerParams(
            dimension_semantics=("parallel", "parallel"),
            vmem_limit_bytes=_VMEM_LIMIT),
    )(*args)


# ------------------------------------------------------------- model pieces

def multi_head_attention(x_q, x_kv, p, bias, num_heads, *, residual, ln_g, ln_b,
                         cross=False):
    B, S, D = x_q.shape
    if not cross:
        # Fused QKV projection emitted as (3, B*S, D): no XLA column slicing.
        qkv = linear(x_q.reshape(B * S, D), p["w_qkv"], p["b_qkv"])
        attn = attention(qkv.reshape(3, B, S, D), None, bias, num_heads)
    else:
        Bk, Sk, _ = x_kv.shape
        q = linear(x_q.reshape(B * S, D), p["w_q"], p["b_q"])          # (B*S, D)
        kv = linear(x_kv.reshape(Bk * Sk, D), p["w_kv"], p["b_kv"])    # (2, ., D)
        attn = attention(q.reshape(B, S, D), kv.reshape(2, Bk, Sk, D),
                         bias, num_heads)
    # Output projection with residual-add + LayerNorm fused into the epilogue.
    out = linear(attn.reshape(B * S, D), p["wo"], p["bo"],
                 residual=residual.reshape(B * S, D), ln_gamma=ln_g, ln_beta=ln_b)
    return out.reshape(B, S, D)


def encoder_block(x, p, bias, num_heads):
    B, S, D = x.shape
    x = multi_head_attention(x, x, p["mha"], bias, num_heads,
                             residual=x, ln_g=p["ln1_g"], ln_b=p["ln1_b"])
    x2 = x.reshape(B * S, D)
    h = linear(x2, p["ff_w1"], p["ff_b1"], relu=True)
    x = linear(h, p["ff_w2"], p["ff_b2"],
               residual=x2, ln_gamma=p["ln2_g"], ln_beta=p["ln2_b"])
    return x.reshape(B, S, D)


def decoder_block(x, enc_out, p, bias, num_heads):
    B, S, D = x.shape
    x = multi_head_attention(x, x, p["self_mha"], bias, num_heads,
                             residual=x, ln_g=p["ln1_g"], ln_b=p["ln1_b"])
    x = multi_head_attention(x, enc_out, p["cross_mha"], None, num_heads,
                             residual=x, ln_g=p["ln2_g"], ln_b=p["ln2_b"],
                             cross=True)
    x2 = x.reshape(B * S, D)
    h = linear(x2, p["ff_w1"], p["ff_b1"], relu=True)
    x = linear(h, p["ff_w2"], p["ff_b2"],
               residual=x2, ln_gamma=p["ln3_g"], ln_beta=p["ln3_b"])
    return x.reshape(B, S, D)


def positional_encoding(max_seq_len, d_model):
    pos = jnp.arange(max_seq_len, dtype=jnp.float32)[:, None]
    i = jnp.arange(0, d_model, 2, dtype=jnp.float32)
    div = jnp.exp(-math.log(10000.0) * i / d_model)
    pe = jnp.zeros((max_seq_len, d_model), jnp.float32)
    pe = pe.at[:, 0::2].set(jnp.sin(pos * div))
    pe = pe.at[:, 1::2].set(jnp.cos(pos * div))
    return pe


def input_embedding(token_ids, table, pe, d_model):
    # TODO(synk): token gather kept as an XLA op (no clean dense-Pallas gather).
    emb = jnp.take(table, token_ids, axis=0) * math.sqrt(d_model)
    return (emb + pe[None, : token_ids.shape[1], :]).astype(jnp.bfloat16)


def _mask_to_bias(mask, s_len):
    """Precompute the additive attention bias once (shared by batch & heads)."""
    if mask is None:
        return None
    m = jnp.broadcast_to(jnp.asarray(mask, jnp.float32), (s_len, s_len))
    return (1.0 - m) * (-1e9)


# ----------------------------------------------------------- parameter init

def _ln_params(d):
    return jnp.ones((d,), jnp.float32), jnp.zeros((d,), jnp.float32)


def _init_mha(key, d_model, cross=False):
    ks = jax.random.split(key, 4)
    mk = lambda k: (0.02 * jax.random.normal(k, (d_model, d_model), jnp.float32)
                    ).astype(jnp.bfloat16)
    p = {"wo": mk(ks[3]), "bo": jnp.zeros((d_model,), jnp.float32)}
    if cross:
        p["w_q"] = mk(ks[0])
        p["b_q"] = jnp.zeros((d_model,), jnp.float32)
        p["w_kv"] = jnp.stack([mk(ks[1]), mk(ks[2])], axis=0)       # (2, D, D)
        p["b_kv"] = jnp.zeros((2, d_model), jnp.float32)
    else:
        p["w_qkv"] = jnp.stack([mk(ks[0]), mk(ks[1]), mk(ks[2])], axis=0)  # (3,D,D)
        p["b_qkv"] = jnp.zeros((3, d_model), jnp.float32)
    return p


def _init_ffn(key, d_model):
    k1, k2 = jax.random.split(key)
    d_ff = 4 * d_model
    return {
        "ff_w1": (0.02 * jax.random.normal(k1, (d_model, d_ff), jnp.float32)
                  ).astype(jnp.bfloat16),
        "ff_b1": jnp.zeros((d_ff,), jnp.float32),
        "ff_w2": (0.02 * jax.random.normal(k2, (d_ff, d_model), jnp.float32)
                  ).astype(jnp.bfloat16),
        "ff_b2": jnp.zeros((d_model,), jnp.float32),
    }


def _init_enc_block(key, d_model):
    k1, k2 = jax.random.split(key)
    p = {"mha": _init_mha(k1, d_model)}
    p.update(_init_ffn(k2, d_model))
    p["ln1_g"], p["ln1_b"] = _ln_params(d_model)
    p["ln2_g"], p["ln2_b"] = _ln_params(d_model)
    return p


def _init_dec_block(key, d_model):
    k1, k2, k3 = jax.random.split(key, 3)
    p = {"self_mha": _init_mha(k1, d_model),
         "cross_mha": _init_mha(k2, d_model, cross=True)}
    p.update(_init_ffn(k3, d_model))
    p["ln1_g"], p["ln1_b"] = _ln_params(d_model)
    p["ln2_g"], p["ln2_b"] = _ln_params(d_model)
    p["ln3_g"], p["ln3_b"] = _ln_params(d_model)
    return p


def init_transformer_params(key, num_enc, num_dec, d_model,
                            enc_vocab_size, dec_vocab_size, max_seq_len,
                            enc_pad_idx=None, dec_pad_idx=None):
    k_enc_emb, k_dec_emb, k_enc, k_dec = jax.random.split(key, 4)
    enc_table = 0.02 * jax.random.normal(k_enc_emb, (enc_vocab_size, d_model), jnp.float32)
    dec_table = 0.02 * jax.random.normal(k_dec_emb, (dec_vocab_size, d_model), jnp.float32)
    if enc_pad_idx is not None:
        enc_table = enc_table.at[enc_pad_idx].set(0.0)
    if dec_pad_idx is not None:
        dec_table = dec_table.at[dec_pad_idx].set(0.0)
    return {
        "enc_emb": enc_table,
        "dec_emb": dec_table,
        "pe": positional_encoding(max_seq_len, d_model),
        "enc_blocks": [_init_enc_block(k, d_model) for k in jax.random.split(k_enc, num_enc)],
        "dec_blocks": [_init_dec_block(k, d_model) for k in jax.random.split(k_dec, num_dec)],
    }


# ------------------------------------------------------------ full forward

def transformer_forward(params, enc_token_ids, dec_token_ids,
                        enc_mask=None, dec_mask=None, *, d_model, num_heads):
    enc_bias = _mask_to_bias(enc_mask, enc_token_ids.shape[1])
    dec_bias = _mask_to_bias(dec_mask, dec_token_ids.shape[1])

    # ---- encoder ----
    x = input_embedding(enc_token_ids, params["enc_emb"], params["pe"], d_model)
    x = encoder_block(x, params["enc_blocks"][0], enc_bias, num_heads)
    for blk in params["enc_blocks"][1:]:
        # reproduces the reference: mask only given to the first encoder block
        x = encoder_block(x, blk, None, num_heads)
    enc_out = x

    # ---- decoder ----
    y = input_embedding(dec_token_ids, params["dec_emb"], params["pe"], d_model)
    for blk in params["dec_blocks"]:
        y = decoder_block(y, enc_out, blk, dec_bias, num_heads)
    return y.astype(jnp.float32)


# --------------------------------------------------------------------- main

if __name__ == "__main__":
    NUM_ENC, NUM_DEC = 2, 2
    D_MODEL, NUM_HEADS = 32, 4
    ENC_VOCAB, DEC_VOCAB = 50, 60
    MAX_SEQ_LEN = 8
    BATCH = 2
    ENC_PAD_IDX, DEC_PAD_IDX = 0, 0

    root = jax.random.PRNGKey(0)
    k_params, k_enc_tok, k_dec_tok = jax.random.split(root, 3)

    params = init_transformer_params(
        k_params, NUM_ENC, NUM_DEC, D_MODEL,
        ENC_VOCAB, DEC_VOCAB, MAX_SEQ_LEN, ENC_PAD_IDX, DEC_PAD_IDX)

    enc_token_ids = jax.random.randint(k_enc_tok, (BATCH, MAX_SEQ_LEN), 0,
                                       ENC_VOCAB, dtype=jnp.int32)
    dec_token_ids = jax.random.randint(k_dec_tok, (BATCH, MAX_SEQ_LEN), 0,
                                       DEC_VOCAB, dtype=jnp.int32)

    enc_mask = None
    dec_mask = jnp.tril(jnp.ones((MAX_SEQ_LEN, MAX_SEQ_LEN), jnp.float32))  # causal

    fwd = jax.jit(functools.partial(transformer_forward,
                                    d_model=D_MODEL, num_heads=NUM_HEADS))
    out = fwd(params, enc_token_ids, dec_token_ids, enc_mask, dec_mask)
    out = jax.block_until_ready(out)

    assert out.shape == (BATCH, MAX_SEQ_LEN, D_MODEL)
    assert bool(jnp.all(jnp.isfinite(out)))
    print("KERNEL_OK")
</pallas_src>

<mosaic_0001>
module attributes {stable_mosaic.version = 11 : i64} {
  func.func @_linear_kernel(%arg0: i32, %arg1: i32, %arg2: i32, %arg3: memref<16x32xbf16, #tpu.memory_space<vmem>>, %arg4: memref<1x32x32xbf16, #tpu.memory_space<vmem>>, %arg5: memref<1x1x32xf32, #tpu.memory_space<vmem>>, %arg6: memref<1x16x32xbf16, #tpu.memory_space<vmem>>, %arg7: memref<16x32xf32, #tpu.memory_space<vmem>>) attributes {dimension_semantics = [#tpu.dimension_semantics<parallel>, #tpu.dimension_semantics<parallel>, #tpu.dimension_semantics<arbitrary>], iteration_bounds = array<i64: 1, 3, 1>, scalar_prefetch = 0 : i64, scratch_operands = 1 : i64, tpu.core_type = #tpu.core_type<tc>, window_params = [{transform_indices = @transform_0, window_bounds = array<i64: 16, 32>}, {transform_indices = @transform_1, window_bounds = array<i64: 1, 32, 32>}, {transform_indices = @transform_2, window_bounds = array<i64: 1, 1, 32>}, {transform_indices = @transform_3, window_bounds = array<i64: 1, 16, 32>}]} {
    %c0_i32 = arith.constant 0 : i32
    %0 = arith.cmpi eq, %arg2, %c0_i32 : i32
    %1 = arith.extui %0 : i1 to i32
    %c0_i32_0 = arith.constant 0 : i32
    %2 = arith.cmpi ne, %1, %c0_i32_0 : i32
    scf.if %2 {
      %cst_11 = arith.constant 0.000000e+00 : f32
      %13 = vector.broadcast %cst_11 : f32 to vector<16x32xf32>
      %c0_12 = arith.constant 0 : index
      %c0_13 = arith.constant 0 : index
      %14 = vector.load %arg7[%c0_12, %c0_13] : memref<16x32xf32, #tpu.memory_space<vmem>>, vector<16x32xf32>
      tpu.vector_store %arg7[%c0_12, %c0_13], %13 {strides = array<i32>} : memref<16x32xf32, #tpu.memory_space<vmem>>, vector<16x32xf32>,
    } else {
    }
    %c0 = arith.constant 0 : index
    %c0_1 = arith.constant 0 : index
    %c0_2 = arith.constant 0 : index
    %3 = vector.load %arg4[%c0, %c0_1, %c0_2] : memref<1x32x32xbf16, #tpu.memory_space<vmem>>, vector<1x32x32xbf16>
    %4 = vector.shape_cast %3 : vector<1x32x32xbf16> to vector<32x32xbf16>
    %c0_3 = arith.constant 0 : index
    %c0_4 = arith.constant 0 : index
    %5 = vector.load %arg7[%c0_3, %c0_4] : memref<16x32xf32, #tpu.memory_space<vmem>>, vector<16x32xf32>
    %c0_5 = arith.constant 0 : index
    %c0_6 = arith.constant 0 : index
    %6 = vector.load %arg3[%c0_5, %c0_6] : memref<16x32xbf16, #tpu.memory_space<vmem>>, vector<16x32xbf16>
    %cst = arith.constant dense<0.000000e+00> : vector<16x32xf32>
    %7 = tpu.matmul %6, %4, %cst {dimension_numbers = #tpu.dot_dimension_numbers<[1], [0], [0], [1], [0, 0, 1, 1], [], []>} : vector<16x32xbf16>, vector<32x32xbf16>, vector<16x32xf32> -> vector<16x32xf32>
    %8 = arith.addf %5, %7 : vector<16x32xf32>
    %c0_7 = arith.constant 0 : index
    %c0_8 = arith.constant 0 : index
    %9 = vector.load %arg7[%c0_7, %c0_8] : memref<16x32xf32, #tpu.memory_space<vmem>>, vector<16x32xf32>
    tpu.vector_store %arg7[%c0_7, %c0_8], %8 {strides = array<i32>} : memref<16x32xf32, #tpu.memory_space<vmem>>, vector<16x32xf32>,
    %c0_i32_9 = arith.constant 0 : i32
    %10 = arith.cmpi eq, %arg2, %c0_i32_9 : i32
    %11 = arith.extui %10 : i1 to i32
    %c0_i32_10 = arith.constant 0 : i32
    %12 = arith.cmpi ne, %11, %c0_i32_10 : i32
    scf.if %12 {
      %c0_11 = arith.constant 0 : index
      %c0_12 = arith.constant 0 : index
      %13 = vector.load %arg7[%c0_11, %c0_12] : memref<16x32xf32, #tpu.memory_space<vmem>>, vector<16x32xf32>
      %c0_13 = arith.constant 0 : index
      %c0_14 = arith.constant 0 : index
      %c0_15 = arith.constant 0 : index
      %14 = vector.load %arg5[%c0_13, %c0_14, %c0_15] : memref<1x1x32xf32, #tpu.memory_space<vmem>>, vector<1x1x32xf32>
      %15 = vector.shape_cast %14 : vector<1x1x32xf32> to vector<1x32xf32>
      %16 = vector.broadcast %15 : vector<1x32xf32> to vector<16x32xf32>
      %17 = arith.addf %13, %16 : vector<16x32xf32>
      %18 = vector.shape_cast %17 : vector<16x32xf32> to vector<1x16x32xf32>
      %19 = arith.truncf %18 : vector<1x16x32xf32> to vector<1x16x32xbf16>
      %c0_16 = arith.constant 0 : index
      %c0_17 = arith.constant 0 : index
      %c0_18 = arith.constant 0 : index
      %20 = vector.load %arg6[%c0_16, %c0_17, %c0_18] : memref<1x16x32xbf16, #tpu.memory_space<vmem>>, vector<1x16x32xbf16>
      tpu.vector_store %arg6[%c0_16, %c0_17, %c0_18], %19 {strides = array<i32>} : memref<1x16x32xbf16, #tpu.memory_space<vmem>>, vector<1x16x32xbf16>,
    } else {
    }
    return
  }
  func.func @transform_0(%arg0: i32, %arg1: i32, %arg2: i32) -> (i32, i32) {
    %c0_i32 = arith.constant 0 : i32
    return %arg0, %arg2 : i32, i32
  }
  func.func @transform_1(%arg0: i32, %arg1: i32, %arg2: i32) -> (i32, i32, i32) {
    %c0_i32 = arith.constant 0 : i32
    %c0_i32_0 = arith.constant 0 : i32
    return %arg1, %arg2, %c0_i32 : i32, i32, i32
  }
  func.func @transform_2(%arg0: i32, %arg1: i32, %arg2: i32) -> (i32, i32, i32) {
    %c0_i32 = arith.constant 0 : i32
    %c0_i32_0 = arith.constant 0 : i32
    %c0_i32_1 = arith.constant 0 : i32
    return %arg1, %c0_i32, %c0_i32_0 : i32, i32, i32
  }
  func.func @transform_3(%arg0: i32, %arg1: i32, %arg2: i32) -> (i32, i32, i32) {
    %c0_i32 = arith.constant 0 : i32
    %c0_i32_0 = arith.constant 0 : i32
    return %arg1, %arg0, %c0_i32 : i32, i32, i32
  }
}

module attributes {stable_mosaic.version = 11 : i64} {
  func.func @_linear_kernel(%arg0: i32, %arg1: i32, %arg2: i32, %arg3: memref<16x32xbf16, #tpu.memory_space<vmem>>, %arg4: memref<32x32xbf16, #tpu.memory_space<vmem>>, %arg5: memref<1x32xf32, #tpu.memory_space<vmem>>, %arg6: memref<16x32xbf16, #tpu.memory_space<vmem>>, %arg7: memref<1x32xf32, #tpu.memory_space<vmem>>, %arg8: memref<1x32xf32, #tpu.memory_space<vmem>>, %arg9: memref<16x32xbf16, #tpu.memory_space<vmem>>, %arg10: memref<16x32xf32, #tpu.memory_space<vmem>>) attributes {dimension_semantics = [#tpu.dimension_semantics<parallel>, #tpu.dimension_semantics<parallel>, #tpu.dimension_semantics<arbitrary>], iteration_bounds = array<i64: 1, 1, 1>, scalar_prefetch = 0 : i64, scratch_operands = 1 : i64, tpu.core_type = #tpu.core_type<tc>, window_params = [{transform_indices = @transform_0, window_bounds = array<i64: 16, 32>}, {transform_indices = @transform_1, window_bounds = array<i64: 32, 32>}, {transform_indices = @transform_2, window_bounds = array<i64: 1, 32>}, {transform_indices = @transform_3, window_bounds = array<i64: 16, 32>}, {transform_indices = @transform_4, window_bounds = array<i64: 1, 32>}, {transform_indices = @transform_5, window_bounds = array<i64: 1, 32>}, {transform_indices = @transform_6, window_bounds = array<i64: 16, 32>}]} {
    %c0_i32 = arith.constant 0 : i32
    %0 = arith.cmpi eq, %arg2, %c0_i32 : i32
    %1 = arith.extui %0 : i1 to i32
    %c0_i32_0 = arith.constant 0 : i32
    %2 = arith.cmpi ne, %1, %c0_i32_0 : i32
    scf.if %2 {
      %cst_10 = arith.constant 0.000000e+00 : f32
      %12 = vector.broadcast %cst_10 : f32 to vector<16x32xf32>
      %c0_11 = arith.constant 0 : index
      %c0_12 = arith.constant 0 : index
      %13 = vector.load %arg10[%c0_11, %c0_12] : memref<16x32xf32, #tpu.memory_space<vmem>>, vector<16x32xf32>
      tpu.vector_store %arg10[%c0_11, %c0_12], %12 {strides = array<i32>} : memref<16x32xf32, #tpu.memory_space<vmem>>, vector<16x32xf32>,
    } else {
    }
    %c0 = arith.constant 0 : index
    %c0_1 = arith.constant 0 : index
    %3 = vector.load %arg4[%c0, %c0_1] : memref<32x32xbf16, #tpu.memory_space<vmem>>, vector<32x32xbf16>
    %c0_2 = arith.constant 0 : index
    %c0_3 = arith.constant 0 : index
    %4 = vector.load %arg10[%c0_2, %c0_3] : memref<16x32xf32, #tpu.memory_space<vmem>>, vector<16x32xf32>
    %c0_4 = arith.constant 0 : index
    %c0_5 = arith.constant 0 : index
    %5 = vector.load %arg3[%c0_4, %c0_5] : memref<16x32xbf16, #tpu.memory_space<vmem>>, vector<16x32xbf16>
    %cst = arith.constant dense<0.000000e+00> : vector<16x32xf32>
    %6 = tpu.matmul %5, %3, %cst {dimension_numbers = #tpu.dot_dimension_numbers<[1], [0], [0], [1], [0, 0, 1, 1], [], []>} : vector<16x32xbf16>, vector<32x32xbf16>, vector<16x32xf32> -> vector<16x32xf32>
    %7 = arith.addf %4, %6 : vector<16x32xf32>
    %c0_6 = arith.constant 0 : index
    %c0_7 = arith.constant 0 : index
    %8 = vector.load %arg10[%c0_6, %c0_7] : memref<16x32xf32, #tpu.memory_space<vmem>>, vector<16x32xf32>
    tpu.vector_store %arg10[%c0_6, %c0_7], %7 {strides = array<i32>} : memref<16x32xf32, #tpu.memory_space<vmem>>, vector<16x32xf32>,
    %c0_i32_8 = arith.constant 0 : i32
    %9 = arith.cmpi eq, %arg2, %c0_i32_8 : i32
    %10 = arith.extui %9 : i1 to i32
    %c0_i32_9 = arith.constant 0 : i32
    %11 = arith.cmpi ne, %10, %c0_i32_9 : i32
    scf.if %11 {
      %c0_10 = arith.constant 0 : index
      %c0_11 = arith.constant 0 : index
      %12 = vector.load %arg10[%c0_10, %c0_11] : memref<16x32xf32, #tpu.memory_space<vmem>>, vector<16x32xf32>
      %c0_12 = arith.constant 0 : index
      %c0_13 = arith.constant 0 : index
      %13 = vector.load %arg5[%c0_12, %c0_13] : memref<1x32xf32, #tpu.memory_space<vmem>>, vector<1x32xf32>
      %14 = vector.broadcast %13 : vector<1x32xf32> to vector<16x32xf32>
      %15 = arith.addf %12, %14 : vector<16x32xf32>
      %c0_14 = arith.constant 0 : index
      %c0_15 = arith.constant 0 : index
      %16 = vector.load %arg6[%c0_14, %c0_15] : memref<16x32xbf16, #tpu.memory_space<vmem>>, vector<16x32xbf16>
      %17 = arith.extf %16 : vector<16x32xbf16> to vector<16x32xf32>
      %18 = arith.addf %15, %17 : vector<16x32xf32>
      %cst_16 = arith.constant dense<0.000000e+00> : vector<16xf32>
      %19 = vector.multi_reduction <add>, %18, %cst_16 [1] : vector<16x32xf32> to vector<16xf32>
      %20 = vector.shape_cast %19 : vector<16xf32> to vector<16x1xf32>
      %cst_17 = arith.constant 3.200000e+01 : f32
      %21 = vector.broadcast %cst_17 : f32 to vector<16x1xf32>
      %22 = arith.divf %20, %21 : vector<16x1xf32>
      %23 = vector.broadcast %22 : vector<16x1xf32> to vector<16x32xf32>
      %24 = arith.subf %18, %23 : vector<16x32xf32>
      %25 = arith.mulf %24, %24 : vector<16x32xf32>
      %cst_18 = arith.constant dense<0.000000e+00> : vector<16xf32>
      %26 = vector.multi_reduction <add>, %25, %cst_18 [1] : vector<16x32xf32> to vector<16xf32>
      %27 = vector.shape_cast %26 : vector<16xf32> to vector<16x1xf32>
      %cst_19 = arith.constant 3.200000e+01 : f32
      %28 = vector.broadcast %cst_19 : f32 to vector<16x1xf32>
      %29 = arith.divf %27, %28 : vector<16x1xf32>
      %cst_20 = arith.constant 9.99999974E-6 : f32
      %30 = vector.broadcast %cst_20 : f32 to vector<16x1xf32>
      %31 = arith.addf %29, %30 : vector<16x1xf32>
      %32 = math.rsqrt %31 : vector<16x1xf32>
      %33 = vector.broadcast %32 : vector<16x1xf32> to vector<16x32xf32>
      %34 = arith.mulf %24, %33 : vector<16x32xf32>
      %c0_21 = arith.constant 0 : index
      %c0_22 = arith.constant 0 : index
      %35 = vector.load %arg7[%c0_21, %c0_22] : memref<1x32xf32, #tpu.memory_space<vmem>>, vector<1x32xf32>
      %36 = vector.broadcast %35 : vector<1x32xf32> to vector<16x32xf32>
      %37 = arith.mulf %34, %36 : vector<16x32xf32>
      %c0_23 = arith.constant 0 : index
      %c0_24 = arith.constant 0 : index
      %38 = vector.load %arg8[%c0_23, %c0_24] : memref<1x32xf32, #tpu.memory_space<vmem>>, vector<1x32xf32>
      %39 = vector.broadcast %38 : vector<1x32xf32> to vector<16x32xf32>
      %40 = arith.addf %37, %39 : vector<16x32xf32>
      %41 = arith.truncf %40 : vector<16x32xf32> to vector<16x32xbf16>
      %c0_25 = arith.constant 0 : index
      %c0_26 = arith.constant 0 : index
      %42 = vector.load %arg9[%c0_25, %c0_26] : memref<16x32xbf16, #tpu.memory_space<vmem>>, vector<16x32xbf16>
      tpu.vector_store %arg9[%c0_25, %c0_26], %41 {strides = array<i32>} : memref<16x32xbf16, #tpu.memory_space<vmem>>, vector<16x32xbf16>,
    } else {
    }
    return
  }
  func.func @transform_0(%arg0: i32, %arg1: i32, %arg2: i32) -> (i32, i32) {
    %c0_i32 = arith.constant 0 : i32
    return %arg0, %arg2 : i32, i32
  }
  func.func @transform_1(%arg0: i32, %arg1: i32, %arg2: i32) -> (i32, i32) {
    %c0_i32 = arith.constant 0 : i32
    return %arg2, %arg1 : i32, i32
  }
  func.func @transform_2(%arg0: i32, %arg1: i32, %arg2: i32) -> (i32, i32) {
    %c0_i32 = arith.constant 0 : i32
    %c0_i32_0 = arith.constant 0 : i32
    return %c0_i32, %arg1 : i32, i32
  }
  func.func @transform_3(%arg0: i32, %arg1: i32, %arg2: i32) -> (i32, i32) {
    %c0_i32 = arith.constant 0 : i32
    return %arg0, %arg1 : i32, i32
  }
  func.func @transform_4(%arg0: i32, %arg1: i32, %arg2: i32) -> (i32, i32) {
    %c0_i32 = arith.constant 0 : i32
    %c0_i32_0 = arith.constant 0 : i32
    return %c0_i32, %arg1 : i32, i32
  }
  func.func @transform_5(%arg0: i32, %arg1: i32, %arg2: i32) -> (i32, i32) {
    %c0_i32 = arith.constant 0 : i32
    %c0_i32_0 = arith.constant 0 : i32
    return %c0_i32, %arg1 : i32, i32
  }
  func.func @transform_6(%arg0: i32, %arg1: i32, %arg2: i32) -> (i32, i32) {
    %c0_i32 = arith.constant 0 : i32
    return %arg0, %arg1 : i32, i32
  }
}

module attributes {stable_mosaic.version = 11 : i64} {
  func.func @_attention_kernel(%arg0: i32, %arg1: i32, %arg2: memref<1x1x8x32xbf16, #tpu.memory_space<vmem>>, %arg3: memref<1x1x8x32xbf16, #tpu.memory_space<vmem>>, %arg4: memref<1x1x8x32xbf16, #tpu.memory_space<vmem>>, %arg5: memref<1x8x32xbf16, #tpu.memory_space<vmem>>) attributes {dimension_semantics = [#tpu.dimension_semantics<parallel>, #tpu.dimension_semantics<parallel>], iteration_bounds = array<i64: 2, 1>, scalar_prefetch = 0 : i64, scratch_operands = 0 : i64, tpu.core_type = #tpu.core_type<tc>, window_params = [{transform_indices = @transform_0, window_bounds = array<i64: 1, 1, 8, 32>}, {transform_indices = @transform_1, window_bounds = array<i64: 1, 1, 8, 32>}, {transform_indices = @transform_2, window_bounds = array<i64: 1, 1, 8, 32>}, {transform_indices = @transform_3, window_bounds = array<i64: 1, 8, 32>}]} {
    %c0 = arith.constant 0 : index
    %c0_0 = arith.constant 0 : index
    %c0_1 = arith.constant 0 : index
    %c0_2 = arith.constant 0 : index
    %0 = vector.load %arg2[%c0, %c0_0, %c0_1, %c0_2] : memref<1x1x8x32xbf16, #tpu.memory_space<vmem>>, vector<1x1x8x32xbf16>
    %cst = arith.constant 3.535160e-01 : bf16
    %1 = vector.broadcast %cst : bf16 to vector<1x1x8x32xbf16>
    %2 = arith.mulf %0, %1 : vector<1x1x8x32xbf16>
    %3 = vector.shape_cast %2 : vector<1x1x8x32xbf16> to vector<8x4x8xbf16>
    %4 = tpu.transpose %3, [1, 0, 2] : vector<8x4x8xbf16> -> vector<4x8x8xbf16>
    %c0_3 = arith.constant 0 : index
    %c0_4 = arith.constant 0 : index
    %c0_5 = arith.constant 0 : index
    %c0_6 = arith.constant 0 : index
    %5 = vector.load %arg3[%c0_3, %c0_4, %c0_5, %c0_6] : memref<1x1x8x32xbf16, #tpu.memory_space<vmem>>, vector<1x1x8x32xbf16>
    %6 = vector.shape_cast %5 : vector<1x1x8x32xbf16> to vector<8x4x8xbf16>
    %7 = tpu.transpose %6, [1, 0, 2] : vector<8x4x8xbf16> -> vector<4x8x8xbf16>
    %c0_7 = arith.constant 0 : index
    %c0_8 = arith.constant 0 : index
    %c0_9 = arith.constant 0 : index
    %c0_10 = arith.constant 0 : index
    %8 = vector.load %arg4[%c0_7, %c0_8, %c0_9, %c0_10] : memref<1x1x8x32xbf16, #tpu.memory_space<vmem>>, vector<1x1x8x32xbf16>
    %9 = vector.shape_cast %8 : vector<1x1x8x32xbf16> to vector<8x4x8xbf16>
    %10 = tpu.transpose %9, [1, 0, 2] : vector<8x4x8xbf16> -> vector<4x8x8xbf16>
    "tpu.trace_start"() <{level = 10 : i32, message = "hqd,hkd->hqk"}> : () -> ()
    %cst_11 = arith.constant dense<0.000000e+00> : vector<4x8x8xf32>
    %11 = tpu.matmul %4, %7, %cst_11 {dimension_numbers = #tpu.dot_dimension_numbers<[2], [2], [1], [1], [0, 0, 0, 1, 1, 1], [0], [0]>} : vector<4x8x8xbf16>, vector<4x8x8xbf16>, vector<4x8x8xf32> -> vector<4x8x8xf32>
    "tpu.trace_stop"() : () -> ()
    %cst_12 = arith.constant dense<0xFF800000> : vector<4x8xf32>
    %12 = vector.multi_reduction <maximumf>, %11, %cst_12 [2] : vector<4x8x8xf32> to vector<4x8xf32>
    %13 = vector.shape_cast %12 : vector<4x8xf32> to vector<4x8x1xf32>
    %14 = vector.broadcast %13 : vector<4x8x1xf32> to vector<4x8x8xf32>
    %15 = arith.subf %11, %14 : vector<4x8x8xf32>
    %16 = math.exp %15 : vector<4x8x8xf32>
    %cst_13 = arith.constant dense<0.000000e+00> : vector<4x8xf32>
    %17 = vector.multi_reduction <add>, %16, %cst_13 [2] : vector<4x8x8xf32> to vector<4x8xf32>
    %18 = vector.shape_cast %17 : vector<4x8xf32> to vector<4x8x1xf32>
    %19 = tpu.reciprocal %18 {approx = true} : vector<4x8x1xf32> -> vector<4x8x1xf32>
    %20 = vector.broadcast %19 : vector<4x8x1xf32> to vector<4x8x8xf32>
    %21 = arith.mulf %16, %20 : vector<4x8x8xf32>
    %22 = arith.truncf %21 : vector<4x8x8xf32> to vector<4x8x8xbf16>
    "tpu.trace_start"() <{level = 10 : i32, message = "hqk,hkd->hqd"}> : () -> ()
    %cst_14 = arith.constant dense<0.000000e+00> : vector<4x8x8xf32>
    %23 = tpu.matmul %22, %10, %cst_14 {dimension_numbers = #tpu.dot_dimension_numbers<[2], [1], [1], [2], [0, 0, 0, 1, 1, 2], [0], [0]>} : vector<4x8x8xbf16>, vector<4x8x8xbf16>, vector<4x8x8xf32> -> vector<4x8x8xf32>
    "tpu.trace_stop"() : () -> ()
    %24 = tpu.transpose %23, [1, 0, 2] : vector<4x8x8xf32> -> vector<8x4x8xf32>
    %25 = vector.shape_cast %24 : vector<8x4x8xf32> to vector<8x32xf32>
    %26 = vector.shape_cast %25 : vector<8x32xf32> to vector<1x8x32xf32>
    %27 = arith.truncf %26 : vector<1x8x32xf32> to vector<1x8x32xbf16>
    %c0_15 = arith.constant 0 : index
    %c0_16 = arith.constant 0 : index
    %c0_17 = arith.constant 0 : index
    %28 = vector.load %arg5[%c0_15, %c0_16, %c0_17] : memref<1x8x32xbf16, #tpu.memory_space<vmem>>, vector<1x8x32xbf16>
    tpu.vector_store %arg5[%c0_15, %c0_16, %c0_17], %27 {strides = array<i32>} : memref<1x8x32xbf16, #tpu.memory_space<vmem>>, vector<1x8x32xbf16>,
    return
  }
  func.func @transform_0(%arg0: i32, %arg1: i32) -> (i32, i32, i32, i32) {
    %c0_i32 = arith.constant 0 : i32
    %c0_i32_0 = arith.constant 0 : i32
    %c0_i32_1 = arith.constant 0 : i32
    return %c0_i32, %arg0, %arg1, %c0_i32_0 : i32, i32, i32, i32
  }
  func.func @transform_1(%arg0: i32, %arg1: i32) -> (i32, i32, i32, i32) {
    %c1_i32 = arith.constant 1 : i32
    %c0_i32 = arith.constant 0 : i32
    %c0_i32_0 = arith.constant 0 : i32
    %c0_i32_1 = arith.constant 0 : i32
    return %c1_i32, %arg0, %c0_i32, %c0_i32_0 : i32, i32, i32, i32
  }
  func.func @transform_2(%arg0: i32, %arg1: i32) -> (i32, i32, i32, i32) {
    %c2_i32 = arith.constant 2 : i32
    %c0_i32 = arith.constant 0 : i32
    %c0_i32_0 = arith.constant 0 : i32
    %c0_i32_1 = arith.constant 0 : i32
    return %c2_i32, %arg0, %c0_i32, %c0_i32_0 : i32, i32, i32, i32
  }
  func.func @transform_3(%arg0: i32, %arg1: i32) -> (i32, i32, i32) {
    %c0_i32 = arith.constant 0 : i32
    %c0_i32_0 = arith.constant 0 : i32
    return %arg0, %arg1, %c0_i32 : i32, i32, i32
  }
}

module attributes {stable_mosaic.version = 11 : i64} {
  func.func @_linear_kernel(%arg0: i32, %arg1: i32, %arg2: i32, %arg3: memref<16x32xbf16, #tpu.memory_space<vmem>>, %arg4: memref<32x128xbf16, #tpu.memory_space<vmem>>, %arg5: memref<1x128xf32, #tpu.memory_space<vmem>>, %arg6: memref<16x128xbf16, #tpu.memory_space<vmem>>, %arg7: memref<16x128xf32, #tpu.memory_space<vmem>>) attributes {dimension_semantics = [#tpu.dimension_semantics<parallel>, #tpu.dimension_semantics<parallel>, #tpu.dimension_semantics<arbitrary>], iteration_bounds = array<i64: 1, 1, 1>, scalar_prefetch = 0 : i64, scratch_operands = 1 : i64, tpu.core_type = #tpu.core_type<tc>, window_params = [{transform_indices = @transform_0, window_bounds = array<i64: 16, 32>}, {transform_indices = @transform_1, window_bounds = array<i64: 32, 128>}, {transform_indices = @transform_2, window_bounds = array<i64: 1, 128>}, {transform_indices = @transform_3, window_bounds = array<i64: 16, 128>}]} {
    %c0_i32 = arith.constant 0 : i32
    %0 = arith.cmpi eq, %arg2, %c0_i32 : i32
    %1 = arith.extui %0 : i1 to i32
    %c0_i32_0 = arith.constant 0 : i32
    %2 = arith.cmpi ne, %1, %c0_i32_0 : i32
    scf.if %2 {
      %cst_10 = arith.constant 0.000000e+00 : f32
      %12 = vector.broadcast %cst_10 : f32 to vector<16x128xf32>
      %c0_11 = arith.constant 0 : index
      %c0_12 = arith.constant 0 : index
      %13 = vector.load %arg7[%c0_11, %c0_12] : memref<16x128xf32, #tpu.memory_space<vmem>>, vector<16x128xf32>
      tpu.vector_store %arg7[%c0_11, %c0_12], %12 {strides = array<i32>} : memref<16x128xf32, #tpu.memory_space<vmem>>, vector<16x128xf32>,
    } else {
    }
    %c0 = arith.constant 0 : index
    %c0_1 = arith.constant 0 : index
    %3 = vector.load %arg4[%c0, %c0_1] : memref<32x128xbf16, #tpu.memory_space<vmem>>, vector<32x128xbf16>
    %c0_2 = arith.constant 0 : index
    %c0_3 = arith.constant 0 : index
    %4 = vector.load %arg7[%c0_2, %c0_3] : memref<16x128xf32, #tpu.memory_space<vmem>>, vector<16x128xf32>
    %c0_4 = arith.constant 0 : index
    %c0_5 = arith.constant 0 : index
    %5 = vector.load %arg3[%c0_4, %c0_5] : memref<16x32xbf16, #tpu.memory_space<vmem>>, vector<16x32xbf16>
    %cst = arith.constant dense<0.000000e+00> : vector<16x128xf32>
    %6 = tpu.matmul %5, %3, %cst {dimension_numbers = #tpu.dot_dimension_numbers<[1], [0], [0], [1], [0, 0, 1, 1], [], []>} : vector<16x32xbf16>, vector<32x128xbf16>, vector<16x128xf32> -> vector<16x128xf32>
    %7 = arith.addf %4, %6 : vector<16x128xf32>
    %c0_6 = arith.constant 0 : index
    %c0_7 = arith.constant 0 : index
    %8 = vector.load %arg7[%c0_6, %c0_7] : memref<16x128xf32, #tpu.memory_space<vmem>>, vector<16x128xf32>
    tpu.vector_store %arg7[%c0_6, %c0_7], %7 {strides = array<i32>} : memref<16x128xf32, #tpu.memory_space<vmem>>, vector<16x128xf32>,
    %c0_i32_8 = arith.constant 0 : i32
    %9 = arith.cmpi eq, %arg2, %c0_i32_8 : i32
    %10 = arith.extui %9 : i1 to i32
    %c0_i32_9 = arith.constant 0 : i32
    %11 = arith.cmpi ne, %10, %c0_i32_9 : i32
    scf.if %11 {
      %c0_10 = arith.constant 0 : index
      %c0_11 = arith.constant 0 : index
      %12 = vector.load %arg7[%c0_10, %c0_11] : memref<16x128xf32, #tpu.memory_space<vmem>>, vector<16x128xf32>
      %c0_12 = arith.constant 0 : index
      %c0_13 = arith.constant 0 : index
      %13 = vector.load %arg5[%c0_12, %c0_13] : memref<1x128xf32, #tpu.memory_space<vmem>>, vector<1x128xf32>
      %14 = vector.broadcast %13 : vector<1x128xf32> to vector<16x128xf32>
      %15 = arith.addf %12, %14 : vector<16x128xf32>
      %cst_14 = arith.constant 0.000000e+00 : f32
      %16 = vector.broadcast %cst_14 : f32 to vector<16x128xf32>
      %17 = arith.maximumf %15, %16 : vector<16x128xf32>
      %18 = arith.truncf %17 : vector<16x128xf32> to vector<16x128xbf16>
      %c0_15 = arith.constant 0 : index
      %c0_16 = arith.constant 0 : index
      %19 = vector.load %arg6[%c0_15, %c0_16] : memref<16x128xbf16, #tpu.memory_space<vmem>>, vector<16x128xbf16>
      tpu.vector_store %arg6[%c0_15, %c0_16], %18 {strides = array<i32>} : memref<16x128xbf16, #tpu.memory_space<vmem>>, vector<16x128xbf16>,
    } else {
    }
    return
  }
  func.func @transform_0(%arg0: i32, %arg1: i32, %arg2: i32) -> (i32, i32) {
    %c0_i32 = arith.constant 0 : i32
    return %arg0, %arg2 : i32, i32
  }
  func.func @transform_1(%arg0: i32, %arg1: i32, %arg2: i32) -> (i32, i32) {
    %c0_i32 = arith.constant 0 : i32
    return %arg2, %arg1 : i32, i32
  }
  func.func @transform_2(%arg0: i32, %arg1: i32, %arg2: i32) -> (i32, i32) {
    %c0_i32 = arith.constant 0 : i32
    %c0_i32_0 = arith.constant 0 : i32
    return %c0_i32, %arg1 : i32, i32
  }
  func.func @transform_3(%arg0: i32, %arg1: i32, %arg2: i32) -> (i32, i32) {
    %c0_i32 = arith.constant 0 : i32
    return %arg0, %arg1 : i32, i32
  }
}

module attributes {stable_mosaic.version = 11 : i64} {
  func.func @_linear_kernel(%arg0: i32, %arg1: i32, %arg2: i32, %arg3: memref<16x32xbf16, #tpu.memory_space<vmem>>, %arg4: memref<1x32x32xbf16, #tpu.memory_space<vmem>>, %arg5: memref<1x1x32xf32, #tpu.memory_space<vmem>>, %arg6: memref<1x16x32xbf16, #tpu.memory_space<vmem>>, %arg7: memref<16x32xf32, #tpu.memory_space<vmem>>) attributes {dimension_semantics = [#tpu.dimension_semantics<parallel>, #tpu.dimension_semantics<parallel>, #tpu.dimension_semantics<arbitrary>], iteration_bounds = array<i64: 1, 2, 1>, scalar_prefetch = 0 : i64, scratch_operands = 1 : i64, tpu.core_type = #tpu.core_type<tc>, window_params = [{transform_indices = @transform_0, window_bounds = array<i64: 16, 32>}, {transform_indices = @transform_1, window_bounds = array<i64: 1, 32, 32>}, {transform_indices = @transform_2, window_bounds = array<i64: 1, 1, 32>}, {transform_indices = @transform_3, window_bounds = array<i64: 1, 16, 32>}]} {
    %c0_i32 = arith.constant 0 : i32
    %0 = arith.cmpi eq, %arg2, %c0_i32 : i32
    %1 = arith.extui %0 : i1 to i32
    %c0_i32_0 = arith.constant 0 : i32
    %2 = arith.cmpi ne, %1, %c0_i32_0 : i32
    scf.if %2 {
      %cst_11 = arith.constant 0.000000e+00 : f32
      %13 = vector.broadcast %cst_11 : f32 to vector<16x32xf32>
      %c0_12 = arith.constant 0 : index
      %c0_13 = arith.constant 0 : index
      %14 = vector.load %arg7[%c0_12, %c0_13] : memref<16x32xf32, #tpu.memory_space<vmem>>, vector<16x32xf32>
      tpu.vector_store %arg7[%c0_12, %c0_13], %13 {strides = array<i32>} : memref<16x32xf32, #tpu.memory_space<vmem>>, vector<16x32xf32>,
    } else {
    }
    %c0 = arith.constant 0 : index
    %c0_1 = arith.constant 0 : index
    %c0_2 = arith.constant 0 : index
    %3 = vector.load %arg4[%c0, %c0_1, %c0_2] : memref<1x32x32xbf16, #tpu.memory_space<vmem>>, vector<1x32x32xbf16>
    %4 = vector.shape_cast %3 : vector<1x32x32xbf16> to vector<32x32xbf16>
    %c0_3 = arith.constant 0 : index
    %c0_4 = arith.constant 0 : index
    %5 = vector.load %arg7[%c0_3, %c0_4] : memref<16x32xf32, #tpu.memory_space<vmem>>, vector<16x32xf32>
    %c0_5 = arith.constant 0 : index
    %c0_6 = arith.constant 0 : index
    %6 = vector.load %arg3[%c0_5, %c0_6] : memref<16x32xbf16, #tpu.memory_space<vmem>>, vector<16x32xbf16>
    %cst = arith.constant dense<0.000000e+00> : vector<16x32xf32>
    %7 = tpu.matmul %6, %4, %cst {dimension_numbers = #tpu.dot_dimension_numbers<[1], [0], [0], [1], [0, 0, 1, 1], [], []>} : vector<16x32xbf16>, vector<32x32xbf16>, vector<16x32xf32> -> vector<16x32xf32>
    %8 = arith.addf %5, %7 : vector<16x32xf32>
    %c0_7 = arith.constant 0 : index
    %c0_8 = arith.constant 0 : index
    %9 = vector.load %arg7[%c0_7, %c0_8] : memref<16x32xf32, #tpu.memory_space<vmem>>, vector<16x32xf32>
    tpu.vector_store %arg7[%c0_7, %c0_8], %8 {strides = array<i32>} : memref<16x32xf32, #tpu.memory_space<vmem>>, vector<16x32xf32>,
    %c0_i32_9 = arith.constant 0 : i32
    %10 = arith.cmpi eq, %arg2, %c0_i32_9 : i32
    %11 = arith.extui %10 : i1 to i32
    %c0_i32_10 = arith.constant 0 : i32
    %12 = arith.cmpi ne, %11, %c0_i32_10 : i32
    scf.if %12 {
      %c0_11 = arith.constant 0 : index
      %c0_12 = arith.constant 0 : index
      %13 = vector.load %arg7[%c0_11, %c0_12] : memref<16x32xf32, #tpu.memory_space<vmem>>, vector<16x32xf32>
      %c0_13 = arith.constant 0 : index
      %c0_14 = arith.constant 0 : index
      %c0_15 = arith.constant 0 : index
      %14 = vector.load %arg5[%c0_13, %c0_14, %c0_15] : memref<1x1x32xf32, #tpu.memory_space<vmem>>, vector<1x1x32xf32>
      %15 = vector.shape_cast %14 : vector<1x1x32xf32> to vector<1x32xf32>
      %16 = vector.broadcast %15 : vector<1x32xf32> to vector<16x32xf32>
      %17 = arith.addf %13, %16 : vector<16x32xf32>
      %18 = vector.shape_cast %17 : vector<16x32xf32> to vector<1x16x32xf32>
      %19 = arith.truncf %18 : vector<1x16x32xf32> to vector<1x16x32xbf16>
      %c0_16 = arith.constant 0 : index
      %c0_17 = arith.constant 0 : index
      %c0_18 = arith.constant 0 : index
      %20 = vector.load %arg6[%c0_16, %c0_17, %c0_18] : memref<1x16x32xbf16, #tpu.memory_space<vmem>>, vector<1x16x32xbf16>
      tpu.vector_store %arg6[%c0_16, %c0_17, %c0_18], %19 {strides = array<i32>} : memref<1x16x32xbf16, #tpu.memory_space<vmem>>, vector<1x16x32xbf16>,
    } else {
    }
    return
  }
  func.func @transform_0(%arg0: i32, %arg1: i32, %arg2: i32) -> (i32, i32) {
    %c0_i32 = arith.constant 0 : i32
    return %arg0, %arg2 : i32, i32
  }
  func.func @transform_1(%arg0: i32, %arg1: i32, %arg2: i32) -> (i32, i32, i32) {
    %c0_i32 = arith.constant 0 : i32
    %c0_i32_0 = arith.constant 0 : i32
    return %arg1, %arg2, %c0_i32 : i32, i32, i32
  }
  func.func @transform_2(%arg0: i32, %arg1: i32, %arg2: i32) -> (i32, i32, i32) {
    %c0_i32 = arith.constant 0 : i32
    %c0_i32_0 = arith.constant 0 : i32
    %c0_i32_1 = arith.constant 0 : i32
    return %arg1, %c0_i32, %c0_i32_0 : i32, i32, i32
  }
  func.func @transform_3(%arg0: i32, %arg1: i32, %arg2: i32) -> (i32, i32, i32) {
    %c0_i32 = arith.constant 0 : i32
    %c0_i32_0 = arith.constant 0 : i32
    return %arg1, %arg0, %c0_i32 : i32, i32, i32
  }
}

module attributes {stable_mosaic.version = 11 : i64} {
  func.func @_linear_kernel(%arg0: i32, %arg1: i32, %arg2: i32, %arg3: memref<16x128xbf16, #tpu.memory_space<vmem>>, %arg4: memref<128x32xbf16, #tpu.memory_space<vmem>>, %arg5: memref<1x32xf32, #tpu.memory_space<vmem>>, %arg6: memref<16x32xbf16, #tpu.memory_space<vmem>>, %arg7: memref<1x32xf32, #tpu.memory_space<vmem>>, %arg8: memref<1x32xf32, #tpu.memory_space<vmem>>, %arg9: memref<16x32xbf16, #tpu.memory_space<vmem>>, %arg10: memref<16x32xf32, #tpu.memory_space<vmem>>) attributes {dimension_semantics = [#tpu.dimension_semantics<parallel>, #tpu.dimension_semantics<parallel>, #tpu.dimension_semantics<arbitrary>], iteration_bounds = array<i64: 1, 1, 1>, scalar_prefetch = 0 : i64, scratch_operands = 1 : i64, tpu.core_type = #tpu.core_type<tc>, window_params = [{transform_indices = @transform_0, window_bounds = array<i64: 16, 128>}, {transform_indices = @transform_1, window_bounds = array<i64: 128, 32>}, {transform_indices = @transform_2, window_bounds = array<i64: 1, 32>}, {transform_indices = @transform_3, window_bounds = array<i64: 16, 32>}, {transform_indices = @transform_4, window_bounds = array<i64: 1, 32>}, {transform_indices = @transform_5, window_bounds = array<i64: 1, 32>}, {transform_indices = @transform_6, window_bounds = array<i64: 16, 32>}]} {
    %c0_i32 = arith.constant 0 : i32
    %0 = arith.cmpi eq, %arg2, %c0_i32 : i32
    %1 = arith.extui %0 : i1 to i32
    %c0_i32_0 = arith.constant 0 : i32
    %2 = arith.cmpi ne, %1, %c0_i32_0 : i32
    scf.if %2 {
      %cst_10 = arith.constant 0.000000e+00 : f32
      %12 = vector.broadcast %cst_10 : f32 to vector<16x32xf32>
      %c0_11 = arith.constant 0 : index
      %c0_12 = arith.constant 0 : index
      %13 = vector.load %arg10[%c0_11, %c0_12] : memref<16x32xf32, #tpu.memory_space<vmem>>, vector<16x32xf32>
      tpu.vector_store %arg10[%c0_11, %c0_12], %12 {strides = array<i32>} : memref<16x32xf32, #tpu.memory_space<vmem>>, vector<16x32xf32>,
    } else {
    }
    %c0 = arith.constant 0 : index
    %c0_1 = arith.constant 0 : index
    %3 = vector.load %arg4[%c0, %c0_1] : memref<128x32xbf16, #tpu.memory_space<vmem>>, vector<128x32xbf16>
    %c0_2 = arith.constant 0 : index
    %c0_3 = arith.constant 0 : index
    %4 = vector.load %arg10[%c0_2, %c0_3] : memref<16x32xf32, #tpu.memory_space<vmem>>, vector<16x32xf32>
    %c0_4 = arith.constant 0 : index
    %c0_5 = arith.constant 0 : index
    %5 = vector.load %arg3[%c0_4, %c0_5] : memref<16x128xbf16, #tpu.memory_space<vmem>>, vector<16x128xbf16>
    %cst = arith.constant dense<0.000000e+00> : vector<16x32xf32>
    %6 = tpu.matmul %5, %3, %cst {dimension_numbers = #tpu.dot_dimension_numbers<[1], [0], [0], [1], [0, 0, 1, 1], [], []>} : vector<16x128xbf16>, vector<128x32xbf16>, vector<16x32xf32> -> vector<16x32xf32>
    %7 = arith.addf %4, %6 : vector<16x32xf32>
    %c0_6 = arith.constant 0 : index
    %c0_7 = arith.constant 0 : index
    %8 = vector.load %arg10[%c0_6, %c0_7] : memref<16x32xf32, #tpu.memory_space<vmem>>, vector<16x32xf32>
    tpu.vector_store %arg10[%c0_6, %c0_7], %7 {strides = array<i32>} : memref<16x32xf32, #tpu.memory_space<vmem>>, vector<16x32xf32>,
    %c0_i32_8 = arith.constant 0 : i32
    %9 = arith.cmpi eq, %arg2, %c0_i32_8 : i32
    %10 = arith.extui %9 : i1 to i32
    %c0_i32_9 = arith.constant 0 : i32
    %11 = arith.cmpi ne, %10, %c0_i32_9 : i32
    scf.if %11 {
      %c0_10 = arith.constant 0 : index
      %c0_11 = arith.constant 0 : index
      %12 = vector.load %arg10[%c0_10, %c0_11] : memref<16x32xf32, #tpu.memory_space<vmem>>, vector<16x32xf32>
      %c0_12 = arith.constant 0 : index
      %c0_13 = arith.constant 0 : index
      %13 = vector.load %arg5[%c0_12, %c0_13] : memref<1x32xf32, #tpu.memory_space<vmem>>, vector<1x32xf32>
      %14 = vector.broadcast %13 : vector<1x32xf32> to vector<16x32xf32>
      %15 = arith.addf %12, %14 : vector<16x32xf32>
      %c0_14 = arith.constant 0 : index
      %c0_15 = arith.constant 0 : index
      %16 = vector.load %arg6[%c0_14, %c0_15] : memref<16x32xbf16, #tpu.memory_space<vmem>>, vector<16x32xbf16>
      %17 = arith.extf %16 : vector<16x32xbf16> to vector<16x32xf32>
      %18 = arith.addf %15, %17 : vector<16x32xf32>
      %cst_16 = arith.constant dense<0.000000e+00> : vector<16xf32>
      %19 = vector.multi_reduction <add>, %18, %cst_16 [1] : vector<16x32xf32> to vector<16xf32>
      %20 = vector.shape_cast %19 : vector<16xf32> to vector<16x1xf32>
      %cst_17 = arith.constant 3.200000e+01 : f32
      %21 = vector.broadcast %cst_17 : f32 to vector<16x1xf32>
      %22 = arith.divf %20, %21 : vector<16x1xf32>
      %23 = vector.broadcast %22 : vector<16x1xf32> to vector<16x32xf32>
      %24 = arith.subf %18, %23 : vector<16x32xf32>
      %25 = arith.mulf %24, %24 : vector<16x32xf32>
      %cst_18 = arith.constant dense<0.000000e+00> : vector<16xf32>
      %26 = vector.multi_reduction <add>, %25, %cst_18 [1] : vector<16x32xf32> to vector<16xf32>
      %27 = vector.shape_cast %26 : vector<16xf32> to vector<16x1xf32>
      %cst_19 = arith.constant 3.200000e+01 : f32
      %28 = vector.broadcast %cst_19 : f32 to vector<16x1xf32>
      %29 = arith.divf %27, %28 : vector<16x1xf32>
      %cst_20 = arith.constant 9.99999974E-6 : f32
      %30 = vector.broadcast %cst_20 : f32 to vector<16x1xf32>
      %31 = arith.addf %29, %30 : vector<16x1xf32>
      %32 = math.rsqrt %31 : vector<16x1xf32>
      %33 = vector.broadcast %32 : vector<16x1xf32> to vector<16x32xf32>
      %34 = arith.mulf %24, %33 : vector<16x32xf32>
      %c0_21 = arith.constant 0 : index
      %c0_22 = arith.constant 0 : index
      %35 = vector.load %arg7[%c0_21, %c0_22] : memref<1x32xf32, #tpu.memory_space<vmem>>, vector<1x32xf32>
      %36 = vector.broadcast %35 : vector<1x32xf32> to vector<16x32xf32>
      %37 = arith.mulf %34, %36 : vector<16x32xf32>
      %c0_23 = arith.constant 0 : index
      %c0_24 = arith.constant 0 : index
      %38 = vector.load %arg8[%c0_23, %c0_24] : memref<1x32xf32, #tpu.memory_space<vmem>>, vector<1x32xf32>
      %39 = vector.broadcast %38 : vector<1x32xf32> to vector<16x32xf32>
      %40 = arith.addf %37, %39 : vector<16x32xf32>
      %41 = arith.truncf %40 : vector<16x32xf32> to vector<16x32xbf16>
      %c0_25 = arith.constant 0 : index
      %c0_26 = arith.constant 0 : index
      %42 = vector.load %arg9[%c0_25, %c0_26] : memref<16x32xbf16, #tpu.memory_space<vmem>>, vector<16x32xbf16>
      tpu.vector_store %arg9[%c0_25, %c0_26], %41 {strides = array<i32>} : memref<16x32xbf16, #tpu.memory_space<vmem>>, vector<16x32xbf16>,
    } else {
    }
    return
  }
  func.func @transform_0(%arg0: i32, %arg1: i32, %arg2: i32) -> (i32, i32) {
    %c0_i32 = arith.constant 0 : i32
    return %arg0, %arg2 : i32, i32
  }
  func.func @transform_1(%arg0: i32, %arg1: i32, %arg2: i32) -> (i32, i32) {
    %c0_i32 = arith.constant 0 : i32
    return %arg2, %arg1 : i32, i32
  }
  func.func @transform_2(%arg0: i32, %arg1: i32, %arg2: i32) -> (i32, i32) {
    %c0_i32 = arith.constant 0 : i32
    %c0_i32_0 = arith.constant 0 : i32
    return %c0_i32, %arg1 : i32, i32
  }
  func.func @transform_3(%arg0: i32, %arg1: i32, %arg2: i32) -> (i32, i32) {
    %c0_i32 = arith.constant 0 : i32
    return %arg0, %arg1 : i32, i32
  }
  func.func @transform_4(%arg0: i32, %arg1: i32, %arg2: i32) -> (i32, i32) {
    %c0_i32 = arith.constant 0 : i32
    %c0_i32_0 = arith.constant 0 : i32
    return %c0_i32, %arg1 : i32, i32
  }
  func.func @transform_5(%arg0: i32, %arg1: i32, %arg2: i32) -> (i32, i32) {
    %c0_i32 = arith.constant 0 : i32
    %c0_i32_0 = arith.constant 0 : i32
    return %c0_i32, %arg1 : i32, i32
  }
  func.func @transform_6(%arg0: i32, %arg1: i32, %arg2: i32) -> (i32, i32) {
    %c0_i32 = arith.constant 0 : i32
    return %arg0, %arg1 : i32, i32
  }
}

module attributes {stable_mosaic.version = 11 : i64} {
  func.func @_attention_kernel(%arg0: i32, %arg1: i32, %arg2: memref<1x1x8x32xbf16, #tpu.memory_space<vmem>>, %arg3: memref<1x1x8x32xbf16, #tpu.memory_space<vmem>>, %arg4: memref<1x1x8x32xbf16, #tpu.memory_space<vmem>>, %arg5: memref<8x8xf32, #tpu.memory_space<vmem>>, %arg6: memref<1x8x32xbf16, #tpu.memory_space<vmem>>) attributes {dimension_semantics = [#tpu.dimension_semantics<parallel>, #tpu.dimension_semantics<parallel>], iteration_bounds = array<i64: 2, 1>, scalar_prefetch = 0 : i64, scratch_operands = 0 : i64, tpu.core_type = #tpu.core_type<tc>, window_params = [{transform_indices = @transform_0, window_bounds = array<i64: 1, 1, 8, 32>}, {transform_indices = @transform_1, window_bounds = array<i64: 1, 1, 8, 32>}, {transform_indices = @transform_2, window_bounds = array<i64: 1, 1, 8, 32>}, {transform_indices = @transform_3, window_bounds = array<i64: 8, 8>}, {transform_indices = @transform_4, window_bounds = array<i64: 1, 8, 32>}]} {
    %c0 = arith.constant 0 : index
    %c0_0 = arith.constant 0 : index
    %c0_1 = arith.constant 0 : index
    %c0_2 = arith.constant 0 : index
    %0 = vector.load %arg2[%c0, %c0_0, %c0_1, %c0_2] : memref<1x1x8x32xbf16, #tpu.memory_space<vmem>>, vector<1x1x8x32xbf16>
    %cst = arith.constant 3.535160e-01 : bf16
    %1 = vector.broadcast %cst : bf16 to vector<1x1x8x32xbf16>
    %2 = arith.mulf %0, %1 : vector<1x1x8x32xbf16>
    %3 = vector.shape_cast %2 : vector<1x1x8x32xbf16> to vector<8x4x8xbf16>
    %4 = tpu.transpose %3, [1, 0, 2] : vector<8x4x8xbf16> -> vector<4x8x8xbf16>
    %c0_3 = arith.constant 0 : index
    %c0_4 = arith.constant 0 : index
    %c0_5 = arith.constant 0 : index
    %c0_6 = arith.constant 0 : index
    %5 = vector.load %arg3[%c0_3, %c0_4, %c0_5, %c0_6] : memref<1x1x8x32xbf16, #tpu.memory_space<vmem>>, vector<1x1x8x32xbf16>
    %6 = vector.shape_cast %5 : vector<1x1x8x32xbf16> to vector<8x4x8xbf16>
    %7 = tpu.transpose %6, [1, 0, 2] : vector<8x4x8xbf16> -> vector<4x8x8xbf16>
    %c0_7 = arith.constant 0 : index
    %c0_8 = arith.constant 0 : index
    %c0_9 = arith.constant 0 : index
    %c0_10 = arith.constant 0 : index
    %8 = vector.load %arg4[%c0_7, %c0_8, %c0_9, %c0_10] : memref<1x1x8x32xbf16, #tpu.memory_space<vmem>>, vector<1x1x8x32xbf16>
    %9 = vector.shape_cast %8 : vector<1x1x8x32xbf16> to vector<8x4x8xbf16>
    %10 = tpu.transpose %9, [1, 0, 2] : vector<8x4x8xbf16> -> vector<4x8x8xbf16>
    "tpu.trace_start"() <{level = 10 : i32, message = "hqd,hkd->hqk"}> : () -> ()
    %cst_11 = arith.constant dense<0.000000e+00> : vector<4x8x8xf32>
    %11 = tpu.matmul %4, %7, %cst_11 {dimension_numbers = #tpu.dot_dimension_numbers<[2], [2], [1], [1], [0, 0, 0, 1, 1, 1], [0], [0]>} : vector<4x8x8xbf16>, vector<4x8x8xbf16>, vector<4x8x8xf32> -> vector<4x8x8xf32>
    "tpu.trace_stop"() : () -> ()
    %c0_12 = arith.constant 0 : index
    %c0_13 = arith.constant 0 : index
    %12 = vector.load %arg5[%c0_12, %c0_13] : memref<8x8xf32, #tpu.memory_space<vmem>>, vector<8x8xf32>
    %13 = vector.shape_cast %12 : vector<8x8xf32> to vector<1x8x8xf32>
    %14 = vector.broadcast %13 : vector<1x8x8xf32> to vector<4x8x8xf32>
    %15 = arith.addf %11, %14 : vector<4x8x8xf32>
    %cst_14 = arith.constant dense<0xFF800000> : vector<4x8xf32>
    %16 = vector.multi_reduction <maximumf>, %15, %cst_14 [2] : vector<4x8x8xf32> to vector<4x8xf32>
    %17 = vector.shape_cast %16 : vector<4x8xf32> to vector<4x8x1xf32>
    %18 = vector.broadcast %17 : vector<4x8x1xf32> to vector<4x8x8xf32>
    %19 = arith.subf %15, %18 : vector<4x8x8xf32>
    %20 = math.exp %19 : vector<4x8x8xf32>
    %cst_15 = arith.constant dense<0.000000e+00> : vector<4x8xf32>
    %21 = vector.multi_reduction <add>, %20, %cst_15 [2] : vector<4x8x8xf32> to vector<4x8xf32>
    %22 = vector.shape_cast %21 : vector<4x8xf32> to vector<4x8x1xf32>
    %23 = tpu.reciprocal %22 {approx = true} : vector<4x8x1xf32> -> vector<4x8x1xf32>
    %24 = vector.broadcast %23 : vector<4x8x1xf32> to vector<4x8x8xf32>
    %25 = arith.mulf %20, %24 : vector<4x8x8xf32>
    %26 = arith.truncf %25 : vector<4x8x8xf32> to vector<4x8x8xbf16>
    "tpu.trace_start"() <{level = 10 : i32, message = "hqk,hkd->hqd"}> : () -> ()
    %cst_16 = arith.constant dense<0.000000e+00> : vector<4x8x8xf32>
    %27 = tpu.matmul %26, %10, %cst_16 {dimension_numbers = #tpu.dot_dimension_numbers<[2], [1], [1], [2], [0, 0, 0, 1, 1, 2], [0], [0]>} : vector<4x8x8xbf16>, vector<4x8x8xbf16>, vector<4x8x8xf32> -> vector<4x8x8xf32>
    "tpu.trace_stop"() : () -> ()
    %28 = tpu.transpose %27, [1, 0, 2] : vector<4x8x8xf32> -> vector<8x4x8xf32>
    %29 = vector.shape_cast %28 : vector<8x4x8xf32> to vector<8x32xf32>
    %30 = vector.shape_cast %29 : vector<8x32xf32> to vector<1x8x32xf32>
    %31 = arith.truncf %30 : vector<1x8x32xf32> to vector<1x8x32xbf16>
    %c0_17 = arith.constant 0 : index
    %c0_18 = arith.constant 0 : index
    %c0_19 = arith.constant 0 : index
    %32 = vector.load %arg6[%c0_17, %c0_18, %c0_19] : memref<1x8x32xbf16, #tpu.memory_space<vmem>>, vector<1x8x32xbf16>
    tpu.vector_store %arg6[%c0_17, %c0_18, %c0_19], %31 {strides = array<i32>} : memref<1x8x32xbf16, #tpu.memory_space<vmem>>, vector<1x8x32xbf16>,
    return
  }
  func.func @transform_0(%arg0: i32, %arg1: i32) -> (i32, i32, i32, i32) {
    %c0_i32 = arith.constant 0 : i32
    %c0_i32_0 = arith.constant 0 : i32
    %c0_i32_1 = arith.constant 0 : i32
    return %c0_i32, %arg0, %arg1, %c0_i32_0 : i32, i32, i32, i32
  }
  func.func @transform_1(%arg0: i32, %arg1: i32) -> (i32, i32, i32, i32) {
    %c1_i32 = arith.constant 1 : i32
    %c0_i32 = arith.constant 0 : i32
    %c0_i32_0 = arith.constant 0 : i32
    %c0_i32_1 = arith.constant 0 : i32
    return %c1_i32, %arg0, %c0_i32, %c0_i32_0 : i32, i32, i32, i32
  }
  func.func @transform_2(%arg0: i32, %arg1: i32) -> (i32, i32, i32, i32) {
    %c2_i32 = arith.constant 2 : i32
    %c0_i32 = arith.constant 0 : i32
    %c0_i32_0 = arith.constant 0 : i32
    %c0_i32_1 = arith.constant 0 : i32
    return %c2_i32, %arg0, %c0_i32, %c0_i32_0 : i32, i32, i32, i32
  }
  func.func @transform_3(%arg0: i32, %arg1: i32) -> (i32, i32) {
    %c0_i32 = arith.constant 0 : i32
    %c0_i32_0 = arith.constant 0 : i32
    return %arg1, %c0_i32 : i32, i32
  }
  func.func @transform_4(%arg0: i32, %arg1: i32) -> (i32, i32, i32) {
    %c0_i32 = arith.constant 0 : i32
    %c0_i32_0 = arith.constant 0 : i32
    return %arg0, %arg1, %c0_i32 : i32, i32, i32
  }
}

module attributes {stable_mosaic.version = 11 : i64} {
  func.func @_linear_kernel(%arg0: i32, %arg1: i32, %arg2: i32, %arg3: memref<16x32xbf16, #tpu.memory_space<vmem>>, %arg4: memref<32x32xbf16, #tpu.memory_space<vmem>>, %arg5: memref<1x32xf32, #tpu.memory_space<vmem>>, %arg6: memref<16x32xbf16, #tpu.memory_space<vmem>>, %arg7: memref<1x32xf32, #tpu.memory_space<vmem>>, %arg8: memref<1x32xf32, #tpu.memory_space<vmem>>, %arg9: memref<16x32xbf16, #tpu.memory_space<vmem>>, %arg10: memref<16x32xf32, #tpu.memory_space<vmem>>) attributes {dimension_semantics = [#tpu.dimension_semantics<parallel>, #tpu.dimension_semantics<parallel>, #tpu.dimension_semantics<arbitrary>], iteration_bounds = array<i64: 1, 1, 1>, scalar_prefetch = 0 : i64, scratch_operands = 1 : i64, tpu.core_type = #tpu.core_type<tc>, window_params = [{transform_indices = @transform_0, window_bounds = array<i64: 16, 32>}, {transform_indices = @transform_1, window_bounds = array<i64: 32, 32>}, {transform_indices = @transform_2, window_bounds = array<i64: 1, 32>}, {transform_indices = @transform_3, window_bounds = array<i64: 16, 32>}, {transform_indices = @transform_4, window_bounds = array<i64: 1, 32>}, {transform_indices = @transform_5, window_bounds = array<i64: 1, 32>}, {transform_indices = @transform_6, window_bounds = array<i64: 16, 32>}]} {
    %c0_i32 = arith.constant 0 : i32
    %0 = arith.cmpi eq, %arg2, %c0_i32 : i32
    %1 = arith.extui %0 : i1 to i32
    %c0_i32_0 = arith.constant 0 : i32
    %2 = arith.cmpi ne, %1, %c0_i32_0 : i32
    scf.if %2 {
      %cst_10 = arith.constant 0.000000e+00 : f32
      %12 = vector.broadcast %cst_10 : f32 to vector<16x32xf32>
      %c0_11 = arith.constant 0 : index
      %c0_12 = arith.constant 0 : index
      %13 = vector.load %arg10[%c0_11, %c0_12] : memref<16x32xf32, #tpu.memory_space<vmem>>, vector<16x32xf32>
      tpu.vector_store %arg10[%c0_11, %c0_12], %12 {strides = array<i32>} : memref<16x32xf32, #tpu.memory_space<vmem>>, vector<16x32xf32>,
    } else {
    }
    %c0 = arith.constant 0 : index
    %c0_1 = arith.constant 0 : index
    %3 = vector.load %arg4[%c0, %c0_1] : memref<32x32xbf16, #tpu.memory_space<vmem>>, vector<32x32xbf16>
    %c0_2 = arith.constant 0 : index
    %c0_3 = arith.constant 0 : index
    %4 = vector.load %arg10[%c0_2, %c0_3] : memref<16x32xf32, #tpu.memory_space<vmem>>, vector<16x32xf32>
    %c0_4 = arith.constant 0 : index
    %c0_5 = arith.constant 0 : index
    %5 = vector.load %arg3[%c0_4, %c0_5] : memref<16x32xbf16, #tpu.memory_space<vmem>>, vector<16x32xbf16>
    %cst = arith.constant dense<0.000000e+00> : vector<16x32xf32>
    %6 = tpu.matmul %5, %3, %cst {dimension_numbers = #tpu.dot_dimension_numbers<[1], [0], [0], [1], [0, 0, 1, 1], [], []>} : vector<16x32xbf16>, vector<32x32xbf16>, vector<16x32xf32> -> vector<16x32xf32>
    %7 = arith.addf %4, %6 : vector<16x32xf32>
    %c0_6 = arith.constant 0 : index
    %c0_7 = arith.constant 0 : index
    %8 = vector.load %arg10[%c0_6, %c0_7] : memref<16x32xf32, #tpu.memory_space<vmem>>, vector<16x32xf32>
    tpu.vector_store %arg10[%c0_6, %c0_7], %7 {strides = array<i32>} : memref<16x32xf32, #tpu.memory_space<vmem>>, vector<16x32xf32>,
    %c0_i32_8 = arith.constant 0 : i32
    %9 = arith.cmpi eq, %arg2, %c0_i32_8 : i32
    %10 = arith.extui %9 : i1 to i32
    %c0_i32_9 = arith.constant 0 : i32
    %11 = arith.cmpi ne, %10, %c0_i32_9 : i32
    scf.if %11 {
      %c0_10 = arith.constant 0 : index
      %c0_11 = arith.constant 0 : index
      %12 = vector.load %arg10[%c0_10, %c0_11] : memref<16x32xf32, #tpu.memory_space<vmem>>, vector<16x32xf32>
      %c0_12 = arith.constant 0 : index
      %c0_13 = arith.constant 0 : index
      %13 = vector.load %arg5[%c0_12, %c0_13] : memref<1x32xf32, #tpu.memory_space<vmem>>, vector<1x32xf32>
      %14 = vector.broadcast %13 : vector<1x32xf32> to vector<16x32xf32>
      %15 = arith.addf %12, %14 : vector<16x32xf32>
      %c0_14 = arith.constant 0 : index
      %c0_15 = arith.constant 0 : index
      %16 = vector.load %arg6[%c0_14, %c0_15] : memref<16x32xbf16, #tpu.memory_space<vmem>>, vector<16x32xbf16>
      %17 = arith.extf %16 : vector<16x32xbf16> to vector<16x32xf32>
      %18 = arith.addf %15, %17 : vector<16x32xf32>
      %cst_16 = arith.constant dense<0.000000e+00> : vector<16xf32>
      %19 = vector.multi_reduction <add>, %18, %cst_16 [1] : vector<16x32xf32> to vector<16xf32>
      %20 = vector.shape_cast %19 : vector<16xf32> to vector<16x1xf32>
      %cst_17 = arith.constant 3.200000e+01 : f32
      %21 = vector.broadcast %cst_17 : f32 to vector<16x1xf32>
      %22 = arith.divf %20, %21 : vector<16x1xf32>
      %23 = vector.broadcast %22 : vector<16x1xf32> to vector<16x32xf32>
      %24 = arith.subf %18, %23 : vector<16x32xf32>
      %25 = arith.mulf %24, %24 : vector<16x32xf32>
      %cst_18 = arith.constant dense<0.000000e+00> : vector<16xf32>
      %26 = vector.multi_reduction <add>, %25, %cst_18 [1] : vector<16x32xf32> to vector<16xf32>
      %27 = vector.shape_cast %26 : vector<16xf32> to vector<16x1xf32>
      %cst_19 = arith.constant 3.200000e+01 : f32
      %28 = vector.broadcast %cst_19 : f32 to vector<16x1xf32>
      %29 = arith.divf %27, %28 : vector<16x1xf32>
      %cst_20 = arith.constant 9.99999974E-6 : f32
      %30 = vector.broadcast %cst_20 : f32 to vector<16x1xf32>
      %31 = arith.addf %29, %30 : vector<16x1xf32>
      %32 = math.rsqrt %31 : vector<16x1xf32>
      %33 = vector.broadcast %32 : vector<16x1xf32> to vector<16x32xf32>
      %34 = arith.mulf %24, %33 : vector<16x32xf32>
      %c0_21 = arith.constant 0 : index
      %c0_22 = arith.constant 0 : index
      %35 = vector.load %arg7[%c0_21, %c0_22] : memref<1x32xf32, #tpu.memory_space<vmem>>, vector<1x32xf32>
      %36 = vector.broadcast %35 : vector<1x32xf32> to vector<16x32xf32>
      %37 = arith.mulf %34, %36 : vector<16x32xf32>
      %c0_23 = arith.constant 0 : index
      %c0_24 = arith.constant 0 : index
      %38 = vector.load %arg8[%c0_23, %c0_24] : memref<1x32xf32, #tpu.memory_space<vmem>>, vector<1x32xf32>
      %39 = vector.broadcast %38 : vector<1x32xf32> to vector<16x32xf32>
      %40 = arith.addf %37, %39 : vector<16x32xf32>
      %41 = arith.truncf %40 : vector<16x32xf32> to vector<16x32xbf16>
      %c0_25 = arith.constant 0 : index
      %c0_26 = arith.constant 0 : index
      %42 = vector.load %arg9[%c0_25, %c0_26] : memref<16x32xbf16, #tpu.memory_space<vmem>>, vector<16x32xbf16>
      tpu.vector_store %arg9[%c0_25, %c0_26], %41 {strides = array<i32>} : memref<16x32xbf16, #tpu.memory_space<vmem>>, vector<16x32xbf16>,
    } else {
    }
    return
  }
  func.func @transform_0(%arg0: i32, %arg1: i32, %arg2: i32) -> (i32, i32) {
    %c0_i32 = arith.constant 0 : i32
    return %arg0, %arg2 : i32, i32
  }
  func.func @transform_1(%arg0: i32, %arg1: i32, %arg2: i32) -> (i32, i32) {
    %c0_i32 = arith.constant 0 : i32
    return %arg2, %arg1 : i32, i32
  }
  func.func @transform_2(%arg0: i32, %arg1: i32, %arg2: i32) -> (i32, i32) {
    %c0_i32 = arith.constant 0 : i32
    %c0_i32_0 = arith.constant 0 : i32
    return %c0_i32, %arg1 : i32, i32
  }
  func.func @transform_3(%arg0: i32, %arg1: i32, %arg2: i32) -> (i32, i32) {
    %c0_i32 = arith.constant 0 : i32
    return %arg0, %arg1 : i32, i32
  }
  func.func @transform_4(%arg0: i32, %arg1: i32, %arg2: i32) -> (i32, i32) {
    %c0_i32 = arith.constant 0 : i32
    %c0_i32_0 = arith.constant 0 : i32
    return %c0_i32, %arg1 : i32, i32
  }
  func.func @transform_5(%arg0: i32, %arg1: i32, %arg2: i32) -> (i32, i32) {
    %c0_i32 = arith.constant 0 : i32
    %c0_i32_0 = arith.constant 0 : i32
    return %c0_i32, %arg1 : i32, i32
  }
  func.func @transform_6(%arg0: i32, %arg1: i32, %arg2: i32) -> (i32, i32) {
    %c0_i32 = arith.constant 0 : i32
    return %arg0, %arg1 : i32, i32
  }
}

module attributes {stable_mosaic.version = 11 : i64} {
  func.func @_attention_kernel(%arg0: i32, %arg1: i32, %arg2: memref<1x8x32xbf16, #tpu.memory_space<vmem>>, %arg3: memref<1x1x8x32xbf16, #tpu.memory_space<vmem>>, %arg4: memref<1x1x8x32xbf16, #tpu.memory_space<vmem>>, %arg5: memref<1x8x32xbf16, #tpu.memory_space<vmem>>) attributes {dimension_semantics = [#tpu.dimension_semantics<parallel>, #tpu.dimension_semantics<parallel>], iteration_bounds = array<i64: 2, 1>, scalar_prefetch = 0 : i64, scratch_operands = 0 : i64, tpu.core_type = #tpu.core_type<tc>, window_params = [{transform_indices = @transform_0, window_bounds = array<i64: 1, 8, 32>}, {transform_indices = @transform_1, window_bounds = array<i64: 1, 1, 8, 32>}, {transform_indices = @transform_2, window_bounds = array<i64: 1, 1, 8, 32>}, {transform_indices = @transform_3, window_bounds = array<i64: 1, 8, 32>}]} {
    %c0 = arith.constant 0 : index
    %c0_0 = arith.constant 0 : index
    %c0_1 = arith.constant 0 : index
    %0 = vector.load %arg2[%c0, %c0_0, %c0_1] : memref<1x8x32xbf16, #tpu.memory_space<vmem>>, vector<1x8x32xbf16>
    %cst = arith.constant 3.535160e-01 : bf16
    %1 = vector.broadcast %cst : bf16 to vector<1x8x32xbf16>
    %2 = arith.mulf %0, %1 : vector<1x8x32xbf16>
    %3 = vector.shape_cast %2 : vector<1x8x32xbf16> to vector<8x4x8xbf16>
    %4 = tpu.transpose %3, [1, 0, 2] : vector<8x4x8xbf16> -> vector<4x8x8xbf16>
    %c0_2 = arith.constant 0 : index
    %c0_3 = arith.constant 0 : index
    %c0_4 = arith.constant 0 : index
    %c0_5 = arith.constant 0 : index
    %5 = vector.load %arg3[%c0_2, %c0_3, %c0_4, %c0_5] : memref<1x1x8x32xbf16, #tpu.memory_space<vmem>>, vector<1x1x8x32xbf16>
    %6 = vector.shape_cast %5 : vector<1x1x8x32xbf16> to vector<8x4x8xbf16>
    %7 = tpu.transpose %6, [1, 0, 2] : vector<8x4x8xbf16> -> vector<4x8x8xbf16>
    %c0_6 = arith.constant 0 : index
    %c0_7 = arith.constant 0 : index
    %c0_8 = arith.constant 0 : index
    %c0_9 = arith.constant 0 : index
    %8 = vector.load %arg4[%c0_6, %c0_7, %c0_8, %c0_9] : memref<1x1x8x32xbf16, #tpu.memory_space<vmem>>, vector<1x1x8x32xbf16>
    %9 = vector.shape_cast %8 : vector<1x1x8x32xbf16> to vector<8x4x8xbf16>
    %10 = tpu.transpose %9, [1, 0, 2] : vector<8x4x8xbf16> -> vector<4x8x8xbf16>
    "tpu.trace_start"() <{level = 10 : i32, message = "hqd,hkd->hqk"}> : () -> ()
    %cst_10 = arith.constant dense<0.000000e+00> : vector<4x8x8xf32>
    %11 = tpu.matmul %4, %7, %cst_10 {dimension_numbers = #tpu.dot_dimension_numbers<[2], [2], [1], [1], [0, 0, 0, 1, 1, 1], [0], [0]>} : vector<4x8x8xbf16>, vector<4x8x8xbf16>, vector<4x8x8xf32> -> vector<4x8x8xf32>
    "tpu.trace_stop"() : () -> ()
    %cst_11 = arith.constant dense<0xFF800000> : vector<4x8xf32>
    %12 = vector.multi_reduction <maximumf>, %11, %cst_11 [2] : vector<4x8x8xf32> to vector<4x8xf32>
    %13 = vector.shape_cast %12 : vector<4x8xf32> to vector<4x8x1xf32>
    %14 = vector.broadcast %13 : vector<4x8x1xf32> to vector<4x8x8xf32>
    %15 = arith.subf %11, %14 : vector<4x8x8xf32>
    %16 = math.exp %15 : vector<4x8x8xf32>
    %cst_12 = arith.constant dense<0.000000e+00> : vector<4x8xf32>
    %17 = vector.multi_reduction <add>, %16, %cst_12 [2] : vector<4x8x8xf32> to vector<4x8xf32>
    %18 = vector.shape_cast %17 : vector<4x8xf32> to vector<4x8x1xf32>
    %19 = tpu.reciprocal %18 {approx = true} : vector<4x8x1xf32> -> vector<4x8x1xf32>
    %20 = vector.broadcast %19 : vector<4x8x1xf32> to vector<4x8x8xf32>
    %21 = arith.mulf %16, %20 : vector<4x8x8xf32>
    %22 = arith.truncf %21 : vector<4x8x8xf32> to vector<4x8x8xbf16>
    "tpu.trace_start"() <{level = 10 : i32, message = "hqk,hkd->hqd"}> : () -> ()
    %cst_13 = arith.constant dense<0.000000e+00> : vector<4x8x8xf32>
    %23 = tpu.matmul %22, %10, %cst_13 {dimension_numbers = #tpu.dot_dimension_numbers<[2], [1], [1], [2], [0, 0, 0, 1, 1, 2], [0], [0]>} : vector<4x8x8xbf16>, vector<4x8x8xbf16>, vector<4x8x8xf32> -> vector<4x8x8xf32>
    "tpu.trace_stop"() : () -> ()
    %24 = tpu.transpose %23, [1, 0, 2] : vector<4x8x8xf32> -> vector<8x4x8xf32>
    %25 = vector.shape_cast %24 : vector<8x4x8xf32> to vector<8x32xf32>
    %26 = vector.shape_cast %25 : vector<8x32xf32> to vector<1x8x32xf32>
    %27 = arith.truncf %26 : vector<1x8x32xf32> to vector<1x8x32xbf16>
    %c0_14 = arith.constant 0 : index
    %c0_15 = arith.constant 0 : index
    %c0_16 = arith.constant 0 : index
    %28 = vector.load %arg5[%c0_14, %c0_15, %c0_16] : memref<1x8x32xbf16, #tpu.memory_space<vmem>>, vector<1x8x32xbf16>
    tpu.vector_store %arg5[%c0_14, %c0_15, %c0_16], %27 {strides = array<i32>} : memref<1x8x32xbf16, #tpu.memory_space<vmem>>, vector<1x8x32xbf16>,
    return
  }
  func.func @transform_0(%arg0: i32, %arg1: i32) -> (i32, i32, i32) {
    %c0_i32 = arith.constant 0 : i32
    %c0_i32_0 = arith.constant 0 : i32
    return %arg0, %arg1, %c0_i32 : i32, i32, i32
  }
  func.func @transform_1(%arg0: i32, %arg1: i32) -> (i32, i32, i32, i32) {
    %c0_i32 = arith.constant 0 : i32
    %c0_i32_0 = arith.constant 0 : i32
    %c0_i32_1 = arith.constant 0 : i32
    %c0_i32_2 = arith.constant 0 : i32
    return %c0_i32, %arg0, %c0_i32_0, %c0_i32_1 : i32, i32, i32, i32
  }
  func.func @transform_2(%arg0: i32, %arg1: i32) -> (i32, i32, i32, i32) {
    %c1_i32 = arith.constant 1 : i32
    %c0_i32 = arith.constant 0 : i32
    %c0_i32_0 = arith.constant 0 : i32
    %c0_i32_1 = arith.constant 0 : i32
    return %c1_i32, %arg0, %c0_i32, %c0_i32_0 : i32, i32, i32, i32
  }
  func.func @transform_3(%arg0: i32, %arg1: i32) -> (i32, i32, i32) {
    %c0_i32 = arith.constant 0 : i32
    %c0_i32_0 = arith.constant 0 : i32
    return %arg0, %arg1, %c0_i32 : i32, i32, i32
  }
}

module attributes {stable_mosaic.version = 11 : i64} {
  func.func @_linear_kernel(%arg0: i32, %arg1: i32, %arg2: i32, %arg3: memref<16x32xbf16, #tpu.memory_space<vmem>>, %arg4: memref<32x32xbf16, #tpu.memory_space<vmem>>, %arg5: memref<1x32xf32, #tpu.memory_space<vmem>>, %arg6: memref<16x32xbf16, #tpu.memory_space<vmem>>, %arg7: memref<16x32xf32, #tpu.memory_space<vmem>>) attributes {dimension_semantics = [#tpu.dimension_semantics<parallel>, #tpu.dimension_semantics<parallel>, #tpu.dimension_semantics<arbitrary>], iteration_bounds = array<i64: 1, 1, 1>, scalar_prefetch = 0 : i64, scratch_operands = 1 : i64, tpu.core_type = #tpu.core_type<tc>, window_params = [{transform_indices = @transform_0, window_bounds = array<i64: 16, 32>}, {transform_indices = @transform_1, window_bounds = array<i64: 32, 32>}, {transform_indices = @transform_2, window_bounds = array<i64: 1, 32>}, {transform_indices = @transform_3, window_bounds = array<i64: 16, 32>}]} {
    %c0_i32 = arith.constant 0 : i32
    %0 = arith.cmpi eq, %arg2, %c0_i32 : i32
    %1 = arith.extui %0 : i1 to i32
    %c0_i32_0 = arith.constant 0 : i32
    %2 = arith.cmpi ne, %1, %c0_i32_0 : i32
    scf.if %2 {
      %cst_10 = arith.constant 0.000000e+00 : f32
      %12 = vector.broadcast %cst_10 : f32 to vector<16x32xf32>
      %c0_11 = arith.constant 0 : index
      %c0_12 = arith.constant 0 : index
      %13 = vector.load %arg7[%c0_11, %c0_12] : memref<16x32xf32, #tpu.memory_space<vmem>>, vector<16x32xf32>
      tpu.vector_store %arg7[%c0_11, %c0_12], %12 {strides = array<i32>} : memref<16x32xf32, #tpu.memory_space<vmem>>, vector<16x32xf32>,
    } else {
    }
    %c0 = arith.constant 0 : index
    %c0_1 = arith.constant 0 : index
    %3 = vector.load %arg4[%c0, %c0_1] : memref<32x32xbf16, #tpu.memory_space<vmem>>, vector<32x32xbf16>
    %c0_2 = arith.constant 0 : index
    %c0_3 = arith.constant 0 : index
    %4 = vector.load %arg7[%c0_2, %c0_3] : memref<16x32xf32, #tpu.memory_space<vmem>>, vector<16x32xf32>
    %c0_4 = arith.constant 0 : index
    %c0_5 = arith.constant 0 : index
    %5 = vector.load %arg3[%c0_4, %c0_5] : memref<16x32xbf16, #tpu.memory_space<vmem>>, vector<16x32xbf16>
    %cst = arith.constant dense<0.000000e+00> : vector<16x32xf32>
    %6 = tpu.matmul %5, %3, %cst {dimension_numbers = #tpu.dot_dimension_numbers<[1], [0], [0], [1], [0, 0, 1, 1], [], []>} : vector<16x32xbf16>, vector<32x32xbf16>, vector<16x32xf32> -> vector<16x32xf32>
    %7 = arith.addf %4, %6 : vector<16x32xf32>
    %c0_6 = arith.constant 0 : index
    %c0_7 = arith.constant 0 : index
    %8 = vector.load %arg7[%c0_6, %c0_7] : memref<16x32xf32, #tpu.memory_space<vmem>>, vector<16x32xf32>
    tpu.vector_store %arg7[%c0_6, %c0_7], %7 {strides = array<i32>} : memref<16x32xf32, #tpu.memory_space<vmem>>, vector<16x32xf32>,
    %c0_i32_8 = arith.constant 0 : i32
    %9 = arith.cmpi eq, %arg2, %c0_i32_8 : i32
    %10 = arith.extui %9 : i1 to i32
    %c0_i32_9 = arith.constant 0 : i32
    %11 = arith.cmpi ne, %10, %c0_i32_9 : i32
    scf.if %11 {
      %c0_10 = arith.constant 0 : index
      %c0_11 = arith.constant 0 : index
      %12 = vector.load %arg7[%c0_10, %c0_11] : memref<16x32xf32, #tpu.memory_space<vmem>>, vector<16x32xf32>
      %c0_12 = arith.constant 0 : index
      %c0_13 = arith.constant 0 : index
      %13 = vector.load %arg5[%c0_12, %c0_13] : memref<1x32xf32, #tpu.memory_space<vmem>>, vector<1x32xf32>
      %14 = vector.broadcast %13 : vector<1x32xf32> to vector<16x32xf32>
      %15 = arith.addf %12, %14 : vector<16x32xf32>
      %16 = arith.truncf %15 : vector<16x32xf32> to vector<16x32xbf16>
      %c0_14 = arith.constant 0 : index
      %c0_15 = arith.constant 0 : index
      %17 = vector.load %arg6[%c0_14, %c0_15] : memref<16x32xbf16, #tpu.memory_space<vmem>>, vector<16x32xbf16>
      tpu.vector_store %arg6[%c0_14, %c0_15], %16 {strides = array<i32>} : memref<16x32xbf16, #tpu.memory_space<vmem>>, vector<16x32xbf16>,
    } else {
    }
    return
  }
  func.func @transform_0(%arg0: i32, %arg1: i32, %arg2: i32) -> (i32, i32) {
    %c0_i32 = arith.constant 0 : i32
    return %arg0, %arg2 : i32, i32
  }
  func.func @transform_1(%arg0: i32, %arg1: i32, %arg2: i32) -> (i32, i32) {
    %c0_i32 = arith.constant 0 : i32
    return %arg2, %arg1 : i32, i32
  }
  func.func @transform_2(%arg0: i32, %arg1: i32, %arg2: i32) -> (i32, i32) {
    %c0_i32 = arith.constant 0 : i32
    %c0_i32_0 = arith.constant 0 : i32
    return %c0_i32, %arg1 : i32, i32
  }
  func.func @transform_3(%arg0: i32, %arg1: i32, %arg2: i32) -> (i32, i32) {
    %c0_i32 = arith.constant 0 : i32
    return %arg0, %arg1 : i32, i32
  }
}

module attributes {stable_mosaic.version = 11 : i64} {
  func.func @_linear_kernel(%arg0: i32, %arg1: i32, %arg2: i32, %arg3: memref<16x32xbf16, #tpu.memory_space<vmem>>, %arg4: memref<32x32xbf16, #tpu.memory_space<vmem>>, %arg5: memref<1x32xf32, #tpu.memory_space<vmem>>, %arg6: memref<16x32xbf16, #tpu.memory_space<vmem>>, %arg7: memref<1x32xf32, #tpu.memory_space<vmem>>, %arg8: memref<1x32xf32, #tpu.memory_space<vmem>>, %arg9: memref<16x32xbf16, #tpu.memory_space<vmem>>, %arg10: memref<16x32xf32, #tpu.memory_space<vmem>>) attributes {dimension_semantics = [#tpu.dimension_semantics<parallel>, #tpu.dimension_semantics<parallel>, #tpu.dimension_semantics<arbitrary>], iteration_bounds = array<i64: 1, 1, 1>, scalar_prefetch = 0 : i64, scratch_operands = 1 : i64, tpu.core_type = #tpu.core_type<tc>, window_params = [{transform_indices = @transform_0, window_bounds = array<i64: 16, 32>}, {transform_indices = @transform_1, window_bounds = array<i64: 32, 32>}, {transform_indices = @transform_2, window_bounds = array<i64: 1, 32>}, {transform_indices = @transform_3, window_bounds = array<i64: 16, 32>}, {transform_indices = @transform_4, window_bounds = array<i64: 1, 32>}, {transform_indices = @transform_5, window_bounds = array<i64: 1, 32>}, {transform_indices = @transform_6, window_bounds = array<i64: 16, 32>}]} {
    %c0_i32 = arith.constant 0 : i32
    %0 = arith.cmpi eq, %arg2, %c0_i32 : i32
    %1 = arith.extui %0 : i1 to i32
    %c0_i32_0 = arith.constant 0 : i32
    %2 = arith.cmpi ne, %1, %c0_i32_0 : i32
    scf.if %2 {
      %cst_10 = arith.constant 0.000000e+00 : f32
      %12 = vector.broadcast %cst_10 : f32 to vector<16x32xf32>
      %c0_11 = arith.constant 0 : index
      %c0_12 = arith.constant 0 : index
      %13 = vector.load %arg10[%c0_11, %c0_12] : memref<16x32xf32, #tpu.memory_space<vmem>>, vector<16x32xf32>
      tpu.vector_store %arg10[%c0_11, %c0_12], %12 {strides = array<i32>} : memref<16x32xf32, #tpu.memory_space<vmem>>, vector<16x32xf32>,
    } else {
    }
    %c0 = arith.constant 0 : index
    %c0_1 = arith.constant 0 : index
    %3 = vector.load %arg4[%c0, %c0_1] : memref<32x32xbf16, #tpu.memory_space<vmem>>, vector<32x32xbf16>
    %c0_2 = arith.constant 0 : index
    %c0_3 = arith.constant 0 : index
    %4 = vector.load %arg10[%c0_2, %c0_3] : memref<16x32xf32, #tpu.memory_space<vmem>>, vector<16x32xf32>
    %c0_4 = arith.constant 0 : index
    %c0_5 = arith.constant 0 : index
    %5 = vector.load %arg3[%c0_4, %c0_5] : memref<16x32xbf16, #tpu.memory_space<vmem>>, vector<16x32xbf16>
    %cst = arith.constant dense<0.000000e+00> : vector<16x32xf32>
    %6 = tpu.matmul %5, %3, %cst {dimension_numbers = #tpu.dot_dimension_numbers<[1], [0], [0], [1], [0, 0, 1, 1], [], []>} : vector<16x32xbf16>, vector<32x32xbf16>, vector<16x32xf32> -> vector<16x32xf32>
    %7 = arith.addf %4, %6 : vector<16x32xf32>
    %c0_6 = arith.constant 0 : index
    %c0_7 = arith.constant 0 : index
    %8 = vector.load %arg10[%c0_6, %c0_7] : memref<16x32xf32, #tpu.memory_space<vmem>>, vector<16x32xf32>
    tpu.vector_store %arg10[%c0_6, %c0_7], %7 {strides = array<i32>} : memref<16x32xf32, #tpu.memory_space<vmem>>, vector<16x32xf32>,
    %c0_i32_8 = arith.constant 0 : i32
    %9 = arith.cmpi eq, %arg2, %c0_i32_8 : i32
    %10 = arith.extui %9 : i1 to i32
    %c0_i32_9 = arith.constant 0 : i32
    %11 = arith.cmpi ne, %10, %c0_i32_9 : i32
    scf.if %11 {
      %c0_10 = arith.constant 0 : index
      %c0_11 = arith.constant 0 : index
      %12 = vector.load %arg10[%c0_10, %c0_11] : memref<16x32xf32, #tpu.memory_space<vmem>>, vector<16x32xf32>
      %c0_12 = arith.constant 0 : index
      %c0_13 = arith.constant 0 : index
      %13 = vector.load %arg5[%c0_12, %c0_13] : memref<1x32xf32, #tpu.memory_space<vmem>>, vector<1x32xf32>
      %14 = vector.broadcast %13 : vector<1x32xf32> to vector<16x32xf32>
      %15 = arith.addf %12, %14 : vector<16x32xf32>
      %c0_14 = arith.constant 0 : index
      %c0_15 = arith.constant 0 : index
      %16 = vector.load %arg6[%c0_14, %c0_15] : memref<16x32xbf16, #tpu.memory_space<vmem>>, vector<16x32xbf16>
      %17 = arith.extf %16 : vector<16x32xbf16> to vector<16x32xf32>
      %18 = arith.addf %15, %17 : vector<16x32xf32>
      %cst_16 = arith.constant dense<0.000000e+00> : vector<16xf32>
      %19 = vector.multi_reduction <add>, %18, %cst_16 [1] : vector<16x32xf32> to vector<16xf32>
      %20 = vector.shape_cast %19 : vector<16xf32> to vector<16x1xf32>
      %cst_17 = arith.constant 3.200000e+01 : f32
      %21 = vector.broadcast %cst_17 : f32 to vector<16x1xf32>
      %22 = arith.divf %20, %21 : vector<16x1xf32>
      %23 = vector.broadcast %22 : vector<16x1xf32> to vector<16x32xf32>
      %24 = arith.subf %18, %23 : vector<16x32xf32>
      %25 = arith.mulf %24, %24 : vector<16x32xf32>
      %cst_18 = arith.constant dense<0.000000e+00> : vector<16xf32>
      %26 = vector.multi_reduction <add>, %25, %cst_18 [1] : vector<16x32xf32> to vector<16xf32>
      %27 = vector.shape_cast %26 : vector<16xf32> to vector<16x1xf32>
      %cst_19 = arith.constant 3.200000e+01 : f32
      %28 = vector.broadcast %cst_19 : f32 to vector<16x1xf32>
      %29 = arith.divf %27, %28 : vector<16x1xf32>
      %cst_20 = arith.constant 9.99999974E-6 : f32
      %30 = vector.broadcast %cst_20 : f32 to vector<16x1xf32>
      %31 = arith.addf %29, %30 : vector<16x1xf32>
      %32 = math.rsqrt %31 : vector<16x1xf32>
      %33 = vector.broadcast %32 : vector<16x1xf32> to vector<16x32xf32>
      %34 = arith.mulf %24, %33 : vector<16x32xf32>
      %c0_21 = arith.constant 0 : index
      %c0_22 = arith.constant 0 : index
      %35 = vector.load %arg7[%c0_21, %c0_22] : memref<1x32xf32, #tpu.memory_space<vmem>>, vector<1x32xf32>
      %36 = vector.broadcast %35 : vector<1x32xf32> to vector<16x32xf32>
      %37 = arith.mulf %34, %36 : vector<16x32xf32>
      %c0_23 = arith.constant 0 : index
      %c0_24 = arith.constant 0 : index
      %38 = vector.load %arg8[%c0_23, %c0_24] : memref<1x32xf32, #tpu.memory_space<vmem>>, vector<1x32xf32>
      %39 = vector.broadcast %38 : vector<1x32xf32> to vector<16x32xf32>
      %40 = arith.addf %37, %39 : vector<16x32xf32>
      %41 = arith.truncf %40 : vector<16x32xf32> to vector<16x32xbf16>
      %c0_25 = arith.constant 0 : index
      %c0_26 = arith.constant 0 : index
      %42 = vector.load %arg9[%c0_25, %c0_26] : memref<16x32xbf16, #tpu.memory_space<vmem>>, vector<16x32xbf16>
      tpu.vector_store %arg9[%c0_25, %c0_26], %41 {strides = array<i32>} : memref<16x32xbf16, #tpu.memory_space<vmem>>, vector<16x32xbf16>,
    } else {
    }
    return
  }
  func.func @transform_0(%arg0: i32, %arg1: i32, %arg2: i32) -> (i32, i32) {
    %c0_i32 = arith.constant 0 : i32
    return %arg0, %arg2 : i32, i32
  }
  func.func @transform_1(%arg0: i32, %arg1: i32, %arg2: i32) -> (i32, i32) {
    %c0_i32 = arith.constant 0 : i32
    return %arg2, %arg1 : i32, i32
  }
  func.func @transform_2(%arg0: i32, %arg1: i32, %arg2: i32) -> (i32, i32) {
    %c0_i32 = arith.constant 0 : i32
    %c0_i32_0 = arith.constant 0 : i32
    return %c0_i32, %arg1 : i32, i32
  }
  func.func @transform_3(%arg0: i32, %arg1: i32, %arg2: i32) -> (i32, i32) {
    %c0_i32 = arith.constant 0 : i32
    return %arg0, %arg1 : i32, i32
  }
  func.func @transform_4(%arg0: i32, %arg1: i32, %arg2: i32) -> (i32, i32) {
    %c0_i32 = arith.constant 0 : i32
    %c0_i32_0 = arith.constant 0 : i32
    return %c0_i32, %arg1 : i32, i32
  }
  func.func @transform_5(%arg0: i32, %arg1: i32, %arg2: i32) -> (i32, i32) {
    %c0_i32 = arith.constant 0 : i32
    %c0_i32_0 = arith.constant 0 : i32
    return %c0_i32, %arg1 : i32, i32
  }
  func.func @transform_6(%arg0: i32, %arg1: i32, %arg2: i32) -> (i32, i32) {
    %c0_i32 = arith.constant 0 : i32
    return %arg0, %arg1 : i32, i32
  }
}

module attributes {stable_mosaic.version = 11 : i64} {
  func.func @_linear_kernel(%arg0: i32, %arg1: i32, %arg2: i32, %arg3: memref<16x32xbf16, #tpu.memory_space<vmem>>, %arg4: memref<32x128xbf16, #tpu.memory_space<vmem>>, %arg5: memref<1x128xf32, #tpu.memory_space<vmem>>, %arg6: memref<16x128xbf16, #tpu.memory_space<vmem>>, %arg7: memref<16x128xf32, #tpu.memory_space<vmem>>) attributes {dimension_semantics = [#tpu.dimension_semantics<parallel>, #tpu.dimension_semantics<parallel>, #tpu.dimension_semantics<arbitrary>], iteration_bounds = array<i64: 1, 1, 1>, scalar_prefetch = 0 : i64, scratch_operands = 1 : i64, tpu.core_type = #tpu.core_type<tc>, window_params = [{transform_indices = @transform_0, window_bounds = array<i64: 16, 32>}, {transform_indices = @transform_1, window_bounds = array<i64: 32, 128>}, {transform_indices = @transform_2, window_bounds = array<i64: 1, 128>}, {transform_indices = @transform_3, window_bounds = array<i64: 16, 128>}]} {
    %c0_i32 = arith.constant 0 : i32
    %0 = arith.cmpi eq, %arg2, %c0_i32 : i32
    %1 = arith.extui %0 : i1 to i32
    %c0_i32_0 = arith.constant 0 : i32
    %2 = arith.cmpi ne, %1, %c0_i32_0 : i32
    scf.if %2 {
      %cst_10 = arith.constant 0.000000e+00 : f32
      %12 = vector.broadcast %cst_10 : f32 to vector<16x128xf32>
      %c0_11 = arith.constant 0 : index
      %c0_12 = arith.constant 0 : index
      %13 = vector.load %arg7[%c0_11, %c0_12] : memref<16x128xf32, #tpu.memory_space<vmem>>, vector<16x128xf32>
      tpu.vector_store %arg7[%c0_11, %c0_12], %12 {strides = array<i32>} : memref<16x128xf32, #tpu.memory_space<vmem>>, vector<16x128xf32>,
    } else {
    }
    %c0 = arith.constant 0 : index
    %c0_1 = arith.constant 0 : index
    %3 = vector.load %arg4[%c0, %c0_1] : memref<32x128xbf16, #tpu.memory_space<vmem>>, vector<32x128xbf16>
    %c0_2 = arith.constant 0 : index
    %c0_3 = arith.constant 0 : index
    %4 = vector.load %arg7[%c0_2, %c0_3] : memref<16x128xf32, #tpu.memory_space<vmem>>, vector<16x128xf32>
    %c0_4 = arith.constant 0 : index
    %c0_5 = arith.constant 0 : index
    %5 = vector.load %arg3[%c0_4, %c0_5] : memref<16x32xbf16, #tpu.memory_space<vmem>>, vector<16x32xbf16>
    %cst = arith.constant dense<0.000000e+00> : vector<16x128xf32>
    %6 = tpu.matmul %5, %3, %cst {dimension_numbers = #tpu.dot_dimension_numbers<[1], [0], [0], [1], [0, 0, 1, 1], [], []>} : vector<16x32xbf16>, vector<32x128xbf16>, vector<16x128xf32> -> vector<16x128xf32>
    %7 = arith.addf %4, %6 : vector<16x128xf32>
    %c0_6 = arith.constant 0 : index
    %c0_7 = arith.constant 0 : index
    %8 = vector.load %arg7[%c0_6, %c0_7] : memref<16x128xf32, #tpu.memory_space<vmem>>, vector<16x128xf32>
    tpu.vector_store %arg7[%c0_6, %c0_7], %7 {strides = array<i32>} : memref<16x128xf32, #tpu.memory_space<vmem>>, vector<16x128xf32>,
    %c0_i32_8 = arith.constant 0 : i32
    %9 = arith.cmpi eq, %arg2, %c0_i32_8 : i32
    %10 = arith.extui %9 : i1 to i32
    %c0_i32_9 = arith.constant 0 : i32
    %11 = arith.cmpi ne, %10, %c0_i32_9 : i32
    scf.if %11 {
      %c0_10 = arith.constant 0 : index
      %c0_11 = arith.constant 0 : index
      %12 = vector.load %arg7[%c0_10, %c0_11] : memref<16x128xf32, #tpu.memory_space<vmem>>, vector<16x128xf32>
      %c0_12 = arith.constant 0 : index
      %c0_13 = arith.constant 0 : index
      %13 = vector.load %arg5[%c0_12, %c0_13] : memref<1x128xf32, #tpu.memory_space<vmem>>, vector<1x128xf32>
      %14 = vector.broadcast %13 : vector<1x128xf32> to vector<16x128xf32>
      %15 = arith.addf %12, %14 : vector<16x128xf32>
      %cst_14 = arith.constant 0.000000e+00 : f32
      %16 = vector.broadcast %cst_14 : f32 to vector<16x128xf32>
      %17 = arith.maximumf %15, %16 : vector<16x128xf32>
      %18 = arith.truncf %17 : vector<16x128xf32> to vector<16x128xbf16>
      %c0_15 = arith.constant 0 : index
      %c0_16 = arith.constant 0 : index
      %19 = vector.load %arg6[%c0_15, %c0_16] : memref<16x128xbf16, #tpu.memory_space<vmem>>, vector<16x128xbf16>
      tpu.vector_store %arg6[%c0_15, %c0_16], %18 {strides = array<i32>} : memref<16x128xbf16, #tpu.memory_space<vmem>>, vector<16x128xbf16>,
    } else {
    }
    return
  }
  func.func @transform_0(%arg0: i32, %arg1: i32, %arg2: i32) -> (i32, i32) {
    %c0_i32 = arith.constant 0 : i32
    return %arg0, %arg2 : i32, i32
  }
  func.func @transform_1(%arg0: i32, %arg1: i32, %arg2: i32) -> (i32, i32) {
    %c0_i32 = arith.constant 0 : i32
    return %arg2, %arg1 : i32, i32
  }
  func.func @transform_2(%arg0: i32, %arg1: i32, %arg2: i32) -> (i32, i32) {
    %c0_i32 = arith.constant 0 : i32
    %c0_i32_0 = arith.constant 0 : i32
    return %c0_i32, %arg1 : i32, i32
  }
  func.func @transform_3(%arg0: i32, %arg1: i32, %arg2: i32) -> (i32, i32) {
    %c0_i32 = arith.constant 0 : i32
    return %arg0, %arg1 : i32, i32
  }
}

module attributes {stable_mosaic.version = 11 : i64} {
  func.func @_linear_kernel(%arg0: i32, %arg1: i32, %arg2: i32, %arg3: memref<16x128xbf16, #tpu.memory_space<vmem>>, %arg4: memref<128x32xbf16, #tpu.memory_space<vmem>>, %arg5: memref<1x32xf32, #tpu.memory_space<vmem>>, %arg6: memref<16x32xbf16, #tpu.memory_space<vmem>>, %arg7: memref<1x32xf32, #tpu.memory_space<vmem>>, %arg8: memref<1x32xf32, #tpu.memory_space<vmem>>, %arg9: memref<16x32xbf16, #tpu.memory_space<vmem>>, %arg10: memref<16x32xf32, #tpu.memory_space<vmem>>) attributes {dimension_semantics = [#tpu.dimension_semantics<parallel>, #tpu.dimension_semantics<parallel>, #tpu.dimension_semantics<arbitrary>], iteration_bounds = array<i64: 1, 1, 1>, scalar_prefetch = 0 : i64, scratch_operands = 1 : i64, tpu.core_type = #tpu.core_type<tc>, window_params = [{transform_indices = @transform_0, window_bounds = array<i64: 16, 128>}, {transform_indices = @transform_1, window_bounds = array<i64: 128, 32>}, {transform_indices = @transform_2, window_bounds = array<i64: 1, 32>}, {transform_indices = @transform_3, window_bounds = array<i64: 16, 32>}, {transform_indices = @transform_4, window_bounds = array<i64: 1, 32>}, {transform_indices = @transform_5, window_bounds = array<i64: 1, 32>}, {transform_indices = @transform_6, window_bounds = array<i64: 16, 32>}]} {
    %c0_i32 = arith.constant 0 : i32
    %0 = arith.cmpi eq, %arg2, %c0_i32 : i32
    %1 = arith.extui %0 : i1 to i32
    %c0_i32_0 = arith.constant 0 : i32
    %2 = arith.cmpi ne, %1, %c0_i32_0 : i32
    scf.if %2 {
      %cst_10 = arith.constant 0.000000e+00 : f32
      %12 = vector.broadcast %cst_10 : f32 to vector<16x32xf32>
      %c0_11 = arith.constant 0 : index
      %c0_12 = arith.constant 0 : index
      %13 = vector.load %arg10[%c0_11, %c0_12] : memref<16x32xf32, #tpu.memory_space<vmem>>, vector<16x32xf32>
      tpu.vector_store %arg10[%c0_11, %c0_12], %12 {strides = array<i32>} : memref<16x32xf32, #tpu.memory_space<vmem>>, vector<16x32xf32>,
    } else {
    }
    %c0 = arith.constant 0 : index
    %c0_1 = arith.constant 0 : index
    %3 = vector.load %arg4[%c0, %c0_1] : memref<128x32xbf16, #tpu.memory_space<vmem>>, vector<128x32xbf16>
    %c0_2 = arith.constant 0 : index
    %c0_3 = arith.constant 0 : index
    %4 = vector.load %arg10[%c0_2, %c0_3] : memref<16x32xf32, #tpu.memory_space<vmem>>, vector<16x32xf32>
    %c0_4 = arith.constant 0 : index
    %c0_5 = arith.constant 0 : index
    %5 = vector.load %arg3[%c0_4, %c0_5] : memref<16x128xbf16, #tpu.memory_space<vmem>>, vector<16x128xbf16>
    %cst = arith.constant dense<0.000000e+00> : vector<16x32xf32>
    %6 = tpu.matmul %5, %3, %cst {dimension_numbers = #tpu.dot_dimension_numbers<[1], [0], [0], [1], [0, 0, 1, 1], [], []>} : vector<16x128xbf16>, vector<128x32xbf16>, vector<16x32xf32> -> vector<16x32xf32>
    %7 = arith.addf %4, %6 : vector<16x32xf32>
    %c0_6 = arith.constant 0 : index
    %c0_7 = arith.constant 0 : index
    %8 = vector.load %arg10[%c0_6, %c0_7] : memref<16x32xf32, #tpu.memory_space<vmem>>, vector<16x32xf32>
    tpu.vector_store %arg10[%c0_6, %c0_7], %7 {strides = array<i32>} : memref<16x32xf32, #tpu.memory_space<vmem>>, vector<16x32xf32>,
    %c0_i32_8 = arith.constant 0 : i32
    %9 = arith.cmpi eq, %arg2, %c0_i32_8 : i32
    %10 = arith.extui %9 : i1 to i32
    %c0_i32_9 = arith.constant 0 : i32
    %11 = arith.cmpi ne, %10, %c0_i32_9 : i32
    scf.if %11 {
      %c0_10 = arith.constant 0 : index
      %c0_11 = arith.constant 0 : index
      %12 = vector.load %arg10[%c0_10, %c0_11] : memref<16x32xf32, #tpu.memory_space<vmem>>, vector<16x32xf32>
      %c0_12 = arith.constant 0 : index
      %c0_13 = arith.constant 0 : index
      %13 = vector.load %arg5[%c0_12, %c0_13] : memref<1x32xf32, #tpu.memory_space<vmem>>, vector<1x32xf32>
      %14 = vector.broadcast %13 : vector<1x32xf32> to vector<16x32xf32>
      %15 = arith.addf %12, %14 : vector<16x32xf32>
      %c0_14 = arith.constant 0 : index
      %c0_15 = arith.constant 0 : index
      %16 = vector.load %arg6[%c0_14, %c0_15] : memref<16x32xbf16, #tpu.memory_space<vmem>>, vector<16x32xbf16>
      %17 = arith.extf %16 : vector<16x32xbf16> to vector<16x32xf32>
      %18 = arith.addf %15, %17 : vector<16x32xf32>
      %cst_16 = arith.constant dense<0.000000e+00> : vector<16xf32>
      %19 = vector.multi_reduction <add>, %18, %cst_16 [1] : vector<16x32xf32> to vector<16xf32>
      %20 = vector.shape_cast %19 : vector<16xf32> to vector<16x1xf32>
      %cst_17 = arith.constant 3.200000e+01 : f32
      %21 = vector.broadcast %cst_17 : f32 to vector<16x1xf32>
      %22 = arith.divf %20, %21 : vector<16x1xf32>
      %23 = vector.broadcast %22 : vector<16x1xf32> to vector<16x32xf32>
      %24 = arith.subf %18, %23 : vector<16x32xf32>
      %25 = arith.mulf %24, %24 : vector<16x32xf32>
      %cst_18 = arith.constant dense<0.000000e+00> : vector<16xf32>
      %26 = vector.multi_reduction <add>, %25, %cst_18 [1] : vector<16x32xf32> to vector<16xf32>
      %27 = vector.shape_cast %26 : vector<16xf32> to vector<16x1xf32>
      %cst_19 = arith.constant 3.200000e+01 : f32
      %28 = vector.broadcast %cst_19 : f32 to vector<16x1xf32>
      %29 = arith.divf %27, %28 : vector<16x1xf32>
      %cst_20 = arith.constant 9.99999974E-6 : f32
      %30 = vector.broadcast %cst_20 : f32 to vector<16x1xf32>
      %31 = arith.addf %29, %30 : vector<16x1xf32>
      %32 = math.rsqrt %31 : vector<16x1xf32>
      %33 = vector.broadcast %32 : vector<16x1xf32> to vector<16x32xf32>
      %34 = arith.mulf %24, %33 : vector<16x32xf32>
      %c0_21 = arith.constant 0 : index
      %c0_22 = arith.constant 0 : index
      %35 = vector.load %arg7[%c0_21, %c0_22] : memref<1x32xf32, #tpu.memory_space<vmem>>, vector<1x32xf32>
      %36 = vector.broadcast %35 : vector<1x32xf32> to vector<16x32xf32>
      %37 = arith.mulf %34, %36 : vector<16x32xf32>
      %c0_23 = arith.constant 0 : index
      %c0_24 = arith.constant 0 : index
      %38 = vector.load %arg8[%c0_23, %c0_24] : memref<1x32xf32, #tpu.memory_space<vmem>>, vector<1x32xf32>
      %39 = vector.broadcast %38 : vector<1x32xf32> to vector<16x32xf32>
      %40 = arith.addf %37, %39 : vector<16x32xf32>
      %41 = arith.truncf %40 : vector<16x32xf32> to vector<16x32xbf16>
      %c0_25 = arith.constant 0 : index
      %c0_26 = arith.constant 0 : index
      %42 = vector.load %arg9[%c0_25, %c0_26] : memref<16x32xbf16, #tpu.memory_space<vmem>>, vector<16x32xbf16>
      tpu.vector_store %arg9[%c0_25, %c0_26], %41 {strides = array<i32>} : memref<16x32xbf16, #tpu.memory_space<vmem>>, vector<16x32xbf16>,
    } else {
    }
    return
  }
  func.func @transform_0(%arg0: i32, %arg1: i32, %arg2: i32) -> (i32, i32) {
    %c0_i32 = arith.constant 0 : i32
    return %arg0, %arg2 : i32, i32
  }
  func.func @transform_1(%arg0: i32, %arg1: i32, %arg2: i32) -> (i32, i32) {
    %c0_i32 = arith.constant 0 : i32
    return %arg2, %arg1 : i32, i32
  }
  func.func @transform_2(%arg0: i32, %arg1: i32, %arg2: i32) -> (i32, i32) {
    %c0_i32 = arith.constant 0 : i32
    %c0_i32_0 = arith.constant 0 : i32
    return %c0_i32, %arg1 : i32, i32
  }
  func.func @transform_3(%arg0: i32, %arg1: i32, %arg2: i32) -> (i32, i32) {
    %c0_i32 = arith.constant 0 : i32
    return %arg0, %arg1 : i32, i32
  }
  func.func @transform_4(%arg0: i32, %arg1: i32, %arg2: i32) -> (i32, i32) {
    %c0_i32 = arith.constant 0 : i32
    %c0_i32_0 = arith.constant 0 : i32
    return %c0_i32, %arg1 : i32, i32
  }
  func.func @transform_5(%arg0: i32, %arg1: i32, %arg2: i32) -> (i32, i32) {
    %c0_i32 = arith.constant 0 : i32
    %c0_i32_0 = arith.constant 0 : i32
    return %c0_i32, %arg1 : i32, i32
  }
  func.func @transform_6(%arg0: i32, %arg1: i32, %arg2: i32) -> (i32, i32) {
    %c0_i32 = arith.constant 0 : i32
    return %arg0, %arg1 : i32, i32
  }
}

module attributes {stable_mosaic.version = 11 : i64} {
  func.func @_linear_kernel(%arg0: i32, %arg1: i32, %arg2: i32, %arg3: memref<16x32xbf16, #tpu.memory_space<vmem>>, %arg4: memref<32x32xbf16, #tpu.memory_space<vmem>>, %arg5: memref<1x32xf32, #tpu.memory_space<vmem>>, %arg6: memref<16x32xbf16, #tpu.memory_space<vmem>>, %arg7: memref<1x32xf32, #tpu.memory_space<vmem>>, %arg8: memref<1x32xf32, #tpu.memory_space<vmem>>, %arg9: memref<16x32xbf16, #tpu.memory_space<vmem>>, %arg10: memref<16x32xf32, #tpu.memory_space<vmem>>) attributes {dimension_semantics = [#tpu.dimension_semantics<parallel>, #tpu.dimension_semantics<parallel>, #tpu.dimension_semantics<arbitrary>], iteration_bounds = array<i64: 1, 1, 1>, scalar_prefetch = 0 : i64, scratch_operands = 1 : i64, tpu.core_type = #tpu.core_type<tc>, window_params = [{transform_indices = @transform_0, window_bounds = array<i64: 16, 32>}, {transform_indices = @transform_1, window_bounds = array<i64: 32, 32>}, {transform_indices = @transform_2, window_bounds = array<i64: 1, 32>}, {transform_indices = @transform_3, window_bounds = array<i64: 16, 32>}, {transform_indices = @transform_4, window_bounds = array<i64: 1, 32>}, {transform_indices = @transform_5, window_bounds = array<i64: 1, 32>}, {transform_indices = @transform_6, window_bounds = array<i64: 16, 32>}]} {
    %c0_i32 = arith.constant 0 : i32
    %0 = arith.cmpi eq, %arg2, %c0_i32 : i32
    %1 = arith.extui %0 : i1 to i32
    %c0_i32_0 = arith.constant 0 : i32
    %2 = arith.cmpi ne, %1, %c0_i32_0 : i32
    scf.if %2 {
      %cst_10 = arith.constant 0.000000e+00 : f32
      %12 = vector.broadcast %cst_10 : f32 to vector<16x32xf32>
      %c0_11 = arith.constant 0 : index
      %c0_12 = arith.constant 0 : index
      %13 = vector.load %arg10[%c0_11, %c0_12] : memref<16x32xf32, #tpu.memory_space<vmem>>, vector<16x32xf32>
      tpu.vector_store %arg10[%c0_11, %c0_12], %12 {strides = array<i32>} : memref<16x32xf32, #tpu.memory_space<vmem>>, vector<16x32xf32>,
    } else {
    }
    %c0 = arith.constant 0 : index
    %c0_1 = arith.constant 0 : index
    %3 = vector.load %arg4[%c0, %c0_1] : memref<32x32xbf16, #tpu.memory_space<vmem>>, vector<32x32xbf16>
    %c0_2 = arith.constant 0 : index
    %c0_3 = arith.constant 0 : index
    %4 = vector.load %arg10[%c0_2, %c0_3] : memref<16x32xf32, #tpu.memory_space<vmem>>, vector<16x32xf32>
    %c0_4 = arith.constant 0 : index
    %c0_5 = arith.constant 0 : index
    %5 = vector.load %arg3[%c0_4, %c0_5] : memref<16x32xbf16, #tpu.memory_space<vmem>>, vector<16x32xbf16>
    %cst = arith.constant dense<0.000000e+00> : vector<16x32xf32>
    %6 = tpu.matmul %5, %3, %cst {dimension_numbers = #tpu.dot_dimension_numbers<[1], [0], [0], [1], [0, 0, 1, 1], [], []>} : vector<16x32xbf16>, vector<32x32xbf16>, vector<16x32xf32> -> vector<16x32xf32>
    %7 = arith.addf %4, %6 : vector<16x32xf32>
    %c0_6 = arith.constant 0 : index
    %c0_7 = arith.constant 0 : index
    %8 = vector.load %arg10[%c0_6, %c0_7] : memref<16x32xf32, #tpu.memory_space<vmem>>, vector<16x32xf32>
    tpu.vector_store %arg10[%c0_6, %c0_7], %7 {strides = array<i32>} : memref<16x32xf32, #tpu.memory_space<vmem>>, vector<16x32xf32>,
    %c0_i32_8 = arith.constant 0 : i32
    %9 = arith.cmpi eq, %arg2, %c0_i32_8 : i32
    %10 = arith.extui %9 : i1 to i32
    %c0_i32_9 = arith.constant 0 : i32
    %11 = arith.cmpi ne, %10, %c0_i32_9 : i32
    scf.if %11 {
      %c0_10 = arith.constant 0 : index
      %c0_11 = arith.constant 0 : index
      %12 = vector.load %arg10[%c0_10, %c0_11] : memref<16x32xf32, #tpu.memory_space<vmem>>, vector<16x32xf32>
      %c0_12 = arith.constant 0 : index
      %c0_13 = arith.constant 0 : index
      %13 = vector.load %arg5[%c0_12, %c0_13] : memref<1x32xf32, #tpu.memory_space<vmem>>, vector<1x32xf32>
      %14 = vector.broadcast %13 : vector<1x32xf32> to vector<16x32xf32>
      %15 = arith.addf %12, %14 : vector<16x32xf32>
      %c0_14 = arith.constant 0 : index
      %c0_15 = arith.constant 0 : index
      %16 = vector.load %arg6[%c0_14, %c0_15] : memref<16x32xbf16, #tpu.memory_space<vmem>>, vector<16x32xbf16>
      %17 = arith.extf %16 : vector<16x32xbf16> to vector<16x32xf32>
      %18 = arith.addf %15, %17 : vector<16x32xf32>
      %cst_16 = arith.constant dense<0.000000e+00> : vector<16xf32>
      %19 = vector.multi_reduction <add>, %18, %cst_16 [1] : vector<16x32xf32> to vector<16xf32>
      %20 = vector.shape_cast %19 : vector<16xf32> to vector<16x1xf32>
      %cst_17 = arith.constant 3.200000e+01 : f32
      %21 = vector.broadcast %cst_17 : f32 to vector<16x1xf32>
      %22 = arith.divf %20, %21 : vector<16x1xf32>
      %23 = vector.broadcast %22 : vector<16x1xf32> to vector<16x32xf32>
      %24 = arith.subf %18, %23 : vector<16x32xf32>
      %25 = arith.mulf %24, %24 : vector<16x32xf32>
      %cst_18 = arith.constant dense<0.000000e+00> : vector<16xf32>
      %26 = vector.multi_reduction <add>, %25, %cst_18 [1] : vector<16x32xf32> to vector<16xf32>
      %27 = vector.shape_cast %26 : vector<16xf32> to vector<16x1xf32>
      %cst_19 = arith.constant 3.200000e+01 : f32
      %28 = vector.broadcast %cst_19 : f32 to vector<16x1xf32>
      %29 = arith.divf %27, %28 : vector<16x1xf32>
      %cst_20 = arith.constant 9.99999974E-6 : f32
      %30 = vector.broadcast %cst_20 : f32 to vector<16x1xf32>
      %31 = arith.addf %29, %30 : vector<16x1xf32>
      %32 = math.rsqrt %31 : vector<16x1xf32>
      %33 = vector.broadcast %32 : vector<16x1xf32> to vector<16x32xf32>
      %34 = arith.mulf %24, %33 : vector<16x32xf32>
      %c0_21 = arith.constant 0 : index
      %c0_22 = arith.constant 0 : index
      %35 = vector.load %arg7[%c0_21, %c0_22] : memref<1x32xf32, #tpu.memory_space<vmem>>, vector<1x32xf32>
      %36 = vector.broadcast %35 : vector<1x32xf32> to vector<16x32xf32>
      %37 = arith.mulf %34, %36 : vector<16x32xf32>
      %c0_23 = arith.constant 0 : index
      %c0_24 = arith.constant 0 : index
      %38 = vector.load %arg8[%c0_23, %c0_24] : memref<1x32xf32, #tpu.memory_space<vmem>>, vector<1x32xf32>
      %39 = vector.broadcast %38 : vector<1x32xf32> to vector<16x32xf32>
      %40 = arith.addf %37, %39 : vector<16x32xf32>
      %41 = arith.truncf %40 : vector<16x32xf32> to vector<16x32xbf16>
      %c0_25 = arith.constant 0 : index
      %c0_26 = arith.constant 0 : index
      %42 = vector.load %arg9[%c0_25, %c0_26] : memref<16x32xbf16, #tpu.memory_space<vmem>>, vector<16x32xbf16>
      tpu.vector_store %arg9[%c0_25, %c0_26], %41 {strides = array<i32>} : memref<16x32xbf16, #tpu.memory_space<vmem>>, vector<16x32xbf16>,
    } else {
    }
    return
  }
  func.func @transform_0(%arg0: i32, %arg1: i32, %arg2: i32) -> (i32, i32) {
    %c0_i32 = arith.constant 0 : i32
    return %arg0, %arg2 : i32, i32
  }
  func.func @transform_1(%arg0: i32, %arg1: i32, %arg2: i32) -> (i32, i32) {
    %c0_i32 = arith.constant 0 : i32
    return %arg2, %arg1 : i32, i32
  }
  func.func @transform_2(%arg0: i32, %arg1: i32, %arg2: i32) -> (i32, i32) {
    %c0_i32 = arith.constant 0 : i32
    %c0_i32_0 = arith.constant 0 : i32
    return %c0_i32, %arg1 : i32, i32
  }
  func.func @transform_3(%arg0: i32, %arg1: i32, %arg2: i32) -> (i32, i32) {
    %c0_i32 = arith.constant 0 : i32
    return %arg0, %arg1 : i32, i32
  }
  func.func @transform_4(%arg0: i32, %arg1: i32, %arg2: i32) -> (i32, i32) {
    %c0_i32 = arith.constant 0 : i32
    %c0_i32_0 = arith.constant 0 : i32
    return %c0_i32, %arg1 : i32, i32
  }
  func.func @transform_5(%arg0: i32, %arg1: i32, %arg2: i32) -> (i32, i32) {
    %c0_i32 = arith.constant 0 : i32
    %c0_i32_0 = arith.constant 0 : i32
    return %c0_i32, %arg1 : i32, i32
  }
  func.func @transform_6(%arg0: i32, %arg1: i32, %arg2: i32) -> (i32, i32) {
    %c0_i32 = arith.constant 0 : i32
    return %arg0, %arg1 : i32, i32
  }
}

</mosaic_0001>

<llo_original>
// kernel: transformer_forward.30
$region0: #{transformer_forward.30}
  #allocation0 [shape = 'u32[]', space=smem, size = 0x4, offset = 0x4, fixed_abs, tag = 'smem constant byte address 0x4 - core index']
  #allocation1 [shape = 'u32[72,128]{1,0:T(1,128)}', space=vmem, size = 0x9000, scoped, tag = 'internal scratch']
  #allocation2 [shape = 'f32[16,32]{1,0:T(8,128)}', space=vmem, size = 0x2000, scoped, tag = 'scratch operand']
  %s0 = inlined_call_operand.vmem [shape: bf16[16,32], index: 0, kind: input, shape index: {}]
  %s1 = inlined_call_operand.vmem [shape: bf16[32,32], index: 1, kind: input, shape index: {}]
  %s2 = inlined_call_operand.vmem [shape: f32[1,32], index: 2, kind: input, shape index: {}]
  %s3 = inlined_call_operand.vmem [shape: bf16[16,32], index: 3, kind: input, shape index: {}]
  %s4 = inlined_call_operand.vmem [shape: f32[1,32], index: 4, kind: input, shape index: {}]
  %s5 = inlined_call_operand.vmem [shape: f32[1,32], index: 5, kind: input, shape index: {}]
  %s6 = inlined_call_operand.vmem [shape: bf16[16,32], index: 6, kind: output, shape index: {}]
  %s7 = sld [smem:[#allocation0]]
  $region42: #{transformer_forward.30} parent=0
    _
  %s9 = ssub.s32 1, %s7
  %s10 = scalar_select 0, %s9, %s7
  // Predicated region
  $region2: #{transformer_forward.30} parent=0 // pred_check
    _
  $region3: #{transformer_forward.30} parent=0 // pred_check_branch
    %12 = sbr.rel (0) target = $region5
  $region4: #{transformer_forward.30} parent=0 // pred_region
    _
  $region5: #{transformer_forward.30} parent=0 // pred_fallthru
    _
  // Predicated region
  $region6: #{transformer_forward.30} parent=0 // pred_check
    _
  $region7: #{transformer_forward.30} parent=0 // pred_check_branch
    %14 = sbr.rel (0) target = $region9
  $region8: #{transformer_forward.30} parent=0 // pred_region
    _
  $region9: #{transformer_forward.30} parent=0 // pred_fallthru
    _
  // Predicated region
  $region10: #{transformer_forward.30} parent=0 // pred_check
    _
  $region11: #{transformer_forward.30} parent=0 // pred_check_branch
    %16 = sbr.rel (0) target = $region13
  $region12: #{transformer_forward.30} parent=0 // pred_region
    _
  $region13: #{transformer_forward.30} parent=0 // pred_fallthru
    _
  // Predicated region
  $region14: #{transformer_forward.30} parent=0 // pred_check
    _
  $region15: #{transformer_forward.30} parent=0 // pred_check_branch
    %18 = sbr.rel (0) target = $region17
  $region16: #{transformer_forward.30} parent=0 // pred_region
    _
  $region17: #{transformer_forward.30} parent=0 // pred_fallthru
    _
  // Predicated region
  $region18: #{transformer_forward.30} parent=0 // pred_check
    _
  $region19: #{transformer_forward.30} parent=0 // pred_check_branch
    %20 = sbr.rel (0) target = $region21
  $region20: #{transformer_forward.30} parent=0 // pred_region
    _
  $region21: #{transformer_forward.30} parent=0 // pred_fallthru
    _
  // Predicated region
  $region22: #{transformer_forward.30} parent=0 // pred_check
    _
  $region23: #{transformer_forward.30} parent=0 // pred_check_branch
    %22 = sbr.rel (0) target = $region25
  $region24: #{transformer_forward.30} parent=0 // pred_region
    _
  $region25: #{transformer_forward.30} parent=0 // pred_fallthru
    _
  %p24 = scmp.eq.s32.totalorder 0, 0
  // Predicated region
  $region26: #{transformer_forward.30} parent=0 // pred_check
    %p25 = pneg %p24
  $region27: #{transformer_forward.30} parent=0 // pred_check_branch
    %27 = sbr.rel (%p25) target = $region29
  $region28: #{transformer_forward.30} parent=0 // pred_region
    %vm28 = vcmask 261120
    %29 = vst.msk [vmem:[#allocation2] sm:$0xff] %vm28, 0.0
    %30 = vst.msk [vmem:[#allocation2 + $0x8] sm:$0xff] %vm28, 0.0
  $region29: #{transformer_forward.30} parent=0 // pred_fallthru
    _
  %v31 = vld [vmem:[%s1] sm:$0xf]
  %v32 = vld [vmem:[%s1 + $0x4] sm:$0xf]
  %v33 = vld [vmem:[%s1 + $0x8] sm:$0xf]
  %v34 = vld [vmem:[%s1 + $0xc] sm:$0xf]
  %v35 = vld [vmem:[#allocation2] sm:$0xff]
  %v36 = vld [vmem:[#allocation2 + $0x8] sm:$0xff]
  %v37 = vld [vmem:[%s0] sm:$0xf]
  %v38 = vld [vmem:[%s0 + $0x4] sm:$0xf]
  %v41 = vunpack.c.l.b16 %v37
  %v42 = vunpack.c.l.b16 %v38
  %v43 = vpack.c.b16 %v42, %v41
  %v48 = vunpack.c.l.b16 %v31
  %v49 = vunpack.c.l.b16 %v32
  %v50 = vunpack.c.l.b16 %v33
  %v51 = vunpack.c.l.b16 %v34
  %v52 = vpack.c.b16 %v49, %v48
  %v53 = vpack.c.b16 %v51, %v50
  %vm56 = vcmask 261120
  %v58 = vsel %vm56, %v43, 0
  %60 = vmatpush.bf16.msra.mxu0 0
  %61 = vmatpush.bf16.msra.mxu0 0
  %62 = vmatpush.bf16.msra.mxu0 0
  %63 = vmatpush.bf16.msra.mxu0 0
  %64 = vmatpush.bf16.msra.mxu0 0
  %65 = vmatpush.bf16.msra.mxu0 0
  %66 = vmatpush.bf16.msra.mxu0 %v53
  %67 = vmatpush.bf16.msra.mxu0 %v52
  %68 = vmatmul.bf16.gmra.mxu0 %v58
  %v69 = vpop.f32.mrf.mxu0
  %v70 = vadd.f32 0.0, %v69
  %v71 = vpop.f32.mrf.mxu0
  %v72 = vadd.f32 0.0, %v71
  %73 = vdwg.mxu0
  %v74 = vadd.f32 %v35, %v70
  %v75 = vadd.f32 %v36, %v72
  %76 = vst.msk [vmem:[#allocation2] sm:$0xff] %vm56, %v74
  %77 = vst.msk [vmem:[#allocation2 + $0x8] sm:$0xff] %vm56, %v75
  // Predicated region
  $region30: #{transformer_forward.30} parent=0 // pred_check
    %p78 = pneg %p24
  $region31: #{transformer_forward.30} parent=0 // pred_check_branch
    %80 = sbr.rel (%p78) target = $region33
  $region32: #{transformer_forward.30} parent=0 // pred_region
    %v81 = vld [vmem:[#allocation2] sm:$0xff]
    %v82 = vld [vmem:[#allocation2 + $0x8] sm:$0xff]
    %v83 = vld [vmem:[%s2] sm:$0x1]
    %v85 = vperm.slane %v83, 0
    %v87 = vadd.f32 %v81, %v85
    %v88 = vadd.f32 %v82, %v85
    %v89 = vld [vmem:[%s3] sm:$0xf]
    %v90 = vld [vmem:[%s3 + $0x4] sm:$0xf]
    %v91 = vunpack.c.l.bf16 %v89
    %v92 = vunpack.c.l.bf16 %v90
    %v93 = vadd.f32 %v87, %v91
    %v94 = vadd.f32 %v88, %v92
    %v95 = vsel %vm56, %v93, 0.0
    %96 = vadd.xlane.f32.xlu0 %v95
    %v97 = vpop.xlane.xlu0 %96
    %v98 = vsel %vm56, %v94, 0.0
    %99 = vadd.xlane.f32.xlu0 %v98
    %v100 = vpop.xlane.xlu0 %99
    %v101 = vrcp.pop 32.0
    %v102 = vmul.f32 32.0, %v101
    %v103 = vsub.f32 1.0, %v102
    %v104 = vmul.f32 %v101, %v103
    %v105 = vadd.f32 %v101, %v104
    %vm106 = vweird.f32 %v101
    %v107 = vsel %vm106, %v101, %v105
    %v108 = vmul.f32 %v97, %v107
    %v109 = vmul.f32 %v100, %v107
    %v110 = vsub.f32 %v93, %v108
    %v111 = vsub.f32 %v94, %v109
    %v112 = vmul.f32 %v110, %v110
    %v113 = vmul.f32 %v111, %v111
    %v114 = vsel %vm56, %v112, 0.0
    %115 = vadd.xlane.f32.xlu0 %v114
    %v116 = vpop.xlane.xlu0 %115
    %v117 = vsel %vm56, %v113, 0.0
    %118 = vadd.xlane.f32.xlu0 %v117
    %v119 = vpop.xlane.xlu0 %118
    %v120 = vmul.f32 %v116, %v107
    %v121 = vmul.f32 %v119, %v107
    %v122 = vadd.f32 %v120, 1e-05
    %v123 = vadd.f32 %v121, 1e-05
    %v124 = vrsqrt.pop %v122
    %v125 = vmul.f32 %v124, %v122
    %v126 = vmul.f32 %v125, %v124
    %v127 = vmul.f32 0.5, %v126
    %v128 = vsub.f32 1.5, %v127
    %v129 = vmul.f32 %v124, %v128
    %vm130 = vweird.f32 %v122
    %vm131 = vweird.f32 %v124
    %vm132 = vmor %vm130, %vm131
    %v133 = vsel %vm132, %v124, %v129
    %v134 = vrsqrt.pop %v123
    %v135 = vmul.f32 %v134, %v123
    %v136 = vmul.f32 %v135, %v134
    %v137 = vmul.f32 0.5, %v136
    %v138 = vsub.f32 1.5, %v137
    %v139 = vmul.f32 %v134, %v138
    %vm140 = vweird.f32 %v123
    %vm141 = vweird.f32 %v134
    %vm142 = vmor %vm140, %vm141
    %v143 = vsel %vm142, %v134, %v139
    %v144 = vmul.f32 %v110, %v133
    %v145 = vmul.f32 %v111, %v143
    %v146 = vld [vmem:[%s4] sm:$0x1]
    %v148 = vperm.slane %v146, 0
    %v150 = vmul.f32 %v144, %v148
    %v151 = vmul.f32 %v145, %v148
    %v152 = vld [vmem:[%s5] sm:$0x1]
    %v154 = vperm.slane %v152, 0
    %v156 = vadd.f32 %v150, %v154
    %v157 = vadd.f32 %v151, %v154
    %v158 = vpack.c.bf16 %v156, %v156
    %v159 = vpack.c.bf16 %v157, %v157
    %vm160 = vcmask 257024
    %161 = vst.msk [vmem:[%s6] sm:$0xf] %vm160, %v158
    %162 = vst.msk [vmem:[%s6 + $0x4] sm:$0xf] %vm160, %v159
  $region33: #{transformer_forward.30} parent=0 // pred_fallthru
    _
  // Predicated region
  $region34: #{transformer_forward.30} parent=0 // pred_check
    _
  $region35: #{transformer_forward.30} parent=0 // pred_check_branch
    %164 = sbr.rel (0) target = $region37
  $region36: #{transformer_forward.30} parent=0 // pred_region
    _
  $region37: #{transformer_forward.30} parent=0 // pred_fallthru
    _
  // Predicated region
  $region38: #{transformer_forward.30} parent=0 // pred_check
    _
  $region39: #{transformer_forward.30} parent=0 // pred_check_branch
    %166 = sbr.rel (0) target = $region41
  $region40: #{transformer_forward.30} parent=0 // pred_region
    _
  $region41: #{transformer_forward.30} parent=0 // pred_fallthru
    _

// kernel: transformer_forward.28
$region0: #{transformer_forward.28}
  #allocation0 [shape = 'u32[]', space=smem, size = 0x4, offset = 0x4, fixed_abs, tag = 'smem constant byte address 0x4 - core index']
  #allocation1 [shape = 'u32[72,128]{1,0:T(1,128)}', space=vmem, size = 0x9000, scoped, tag = 'internal scratch']
  #allocation2 [shape = 'f32[16,32]{1,0:T(8,128)}', space=vmem, size = 0x2000, scoped, tag = 'scratch operand']
  %s0 = inlined_call_operand.vmem [shape: bf16[16,32], index: 0, kind: input, shape index: {}]
  %s1 = inlined_call_operand.vmem [shape: bf16[3,32,32], index: 1, kind: input, shape index: {}]
  %s2 = inlined_call_operand.vmem [shape: f32[3,1,32], index: 2, kind: input, shape index: {}]
  %s3 = inlined_call_operand.vmem [shape: bf16[3,16,32], index: 3, kind: output, shape index: {}]
  %s4 = sld [smem:[#allocation0]]
  $region53: #{transformer_forward.28} parent=0
    _
  %s6 = ssub.s32 1, %s4
  %s7 = scalar_select 0, %s6, %s4
  loop: start=0, step=1, limit=5
  $region2: #{transformer_forward.28} parent=0 // loop_pre_header
    _
  $region3: #{transformer_forward.28} parent=0 // loop_header
    %s9 = sphi 0, %s13
    %p10 = scmp.ge.s32.totalorder %s9, 5
    %s16 = sphi 0, %s35
    %s17 = sphi 0, %s31
    %s18 = sphi 0, %s27
    %s19 = sphi 0, %s16
    %s20 = sphi 0, %s17
    %s21 = sphi 0, %s18
    %s22 = sphi 0, %s19
    %s23 = sphi 0, %s20
    %s24 = sphi 0, %s21
    %s40 = sphi 0, %s42
    %s43 = sphi 0, %s40
    %s44 = sphi 0, %s43
    %s60 = sphi 0, %s44
    %s68 = sphi 0, %s70
    %s71 = sphi 0, %s68
    %s72 = sphi 0, %s71
    %s88 = sphi 0, %s72
    %s94 = sphi 0, %s96
    %s97 = sphi 0, %s94
    %s98 = sphi 0, %s97
    %s114 = sphi 0, %s98
    %s122 = sphi 0, %s124
    %s125 = sphi 0, %s122
    %s126 = sphi 0, %s125
    %s142 = sphi 0, %s126
  $region4: #{transformer_forward.28} parent=0 // loop_header_branch
    %12 = sbr.rel (%p10) target = $region8
  $region5: #{transformer_forward.28} parent=0 // loop_body
    %s14 = ssub.s32 %s9, 1
    %s15 = ssub.s32 %s9, 2
    %s25 = sadd.s32 1, %s18
    %p26 = scmp.ge.s32.totalorder %s25, 1
    %s27 = scalar_select %p26, 0, %s25
    %s28 = sadd.s32 1, %s17
    %s29 = scalar_select %p26, %s28, %s17
    %p30 = scmp.ge.s32.totalorder %s29, 3
    %s31 = scalar_select %p30, 0, %s29
    %s32 = sadd.s32 1, %s16
    %s33 = scalar_select %p30, %s32, %s16
    %p34 = scmp.ge.s32.totalorder %s33, 1
    %s35 = scalar_select %p34, 0, %s33
    %s36 = ssub.s32 %s16, %s35
    %s37 = ssub.s32 %s18, %s27
    %s38 = sor.u32 %s36, %s37
    %p39 = scmp.eq.s32.totalorder %s38, 0
    %s41 = sadd.s32 %s40, 1
    %s42 = scalar_select %p39, %s40, %s41
    %p45 = pneg %p39
    %p46 = scmp.eq.s32.totalorder %s9, 2
    %p47 = por %p45, %p46
    %p48 = scmp.ne.s32.totalorder %s40, %s43
    %p49 = scmp.eq.s32.totalorder %s9, 0
    %p50 = por %p48, %p49
    %p51 = scmp.ne.s32.totalorder %s40, %s43
    %p52 = scmp.eq.s32.totalorder %s14, 2
    %p53 = por %p51, %p52
    %p54 = scmp.ne.s32.totalorder %s43, %s44
    %p55 = scmp.eq.s32.totalorder %s14, 0
    %p56 = por %p54, %p55
    %p57 = scmp.ne.s32.totalorder %s43, %s44
    %p58 = scmp.eq.s32.totalorder %s15, 2
    %p59 = por %p57, %p58
    %p61 = scmp.ne.s32.totalorder %s44, %s60
    %p62 = scmp.eq.s32.totalorder %s15, 0
    %p63 = por %p61, %p62
    %s64 = ssub.s32 %s17, %s31
    %s65 = ssub.s32 %s18, %s27
    %s66 = sor.u32 %s64, %s65
    %p67 = scmp.eq.s32.totalorder %s66, 0
    %s69 = sadd.s32 %s68, 1
    %s70 = scalar_select %p67, %s68, %s69
    %p73 = pneg %p67
    %p74 = scmp.eq.s32.totalorder %s9, 2
    %p75 = por %p73, %p74
    %p76 = scmp.ne.s32.totalorder %s68, %s71
    %p77 = scmp.eq.s32.totalorder %s9, 0
    %p78 = por %p76, %p77
    %p79 = scmp.ne.s32.totalorder %s68, %s71
    %p80 = scmp.eq.s32.totalorder %s14, 2
    %p81 = por %p79, %p80
    %p82 = scmp.ne.s32.totalorder %s71, %s72
    %p83 = scmp.eq.s32.totalorder %s14, 0
    %p84 = por %p82, %p83
    %p85 = scmp.ne.s32.totalorder %s71, %s72
    %p86 = scmp.eq.s32.totalorder %s15, 2
    %p87 = por %p85, %p86
    %p89 = scmp.ne.s32.totalorder %s72, %s88
    %p90 = scmp.eq.s32.totalorder %s15, 0
    %p91 = por %p89, %p90
    %s92 = ssub.s32 %s17, %s31
    %p93 = scmp.eq.s32.totalorder %s92, 0
    %s95 = sadd.s32 %s94, 1
    %s96 = scalar_select %p93, %s94, %s95
    %p99 = pneg %p93
    %p100 = scmp.eq.s32.totalorder %s9, 2
    %p101 = por %p99, %p100
    %p102 = scmp.ne.s32.totalorder %s94, %s97
    %p103 = scmp.eq.s32.totalorder %s9, 0
    %p104 = por %p102, %p103
    %p105 = scmp.ne.s32.totalorder %s94, %s97
    %p106 = scmp.eq.s32.totalorder %s14, 2
    %p107 = por %p105, %p106
    %p108 = scmp.ne.s32.totalorder %s97, %s98
    %p109 = scmp.eq.s32.totalorder %s14, 0
    %p110 = por %p108, %p109
    %p111 = scmp.ne.s32.totalorder %s97, %s98
    %p112 = scmp.eq.s32.totalorder %s15, 2
    %p113 = por %p111, %p112
    %p115 = scmp.ne.s32.totalorder %s98, %s114
    %p116 = scmp.eq.s32.totalorder %s15, 0
    %p117 = por %p115, %p116
    %s118 = ssub.s32 %s17, %s31
    %s119 = ssub.s32 %s16, %s35
    %s120 = sor.u32 %s118, %s119
    %p121 = scmp.eq.s32.totalorder %s120, 0
    %s123 = sadd.s32 %s122, 1
    %s124 = scalar_select %p121, %s122, %s123
    %p127 = pneg %p121
    %p128 = scmp.eq.s32.totalorder %s9, 2
    %p129 = por %p127, %p128
    %p130 = scmp.ne.s32.totalorder %s122, %s125
    %p131 = scmp.eq.s32.totalorder %s9, 0
    %p132 = por %p130, %p131
    %p133 = scmp.ne.s32.totalorder %s122, %s125
    %p134 = scmp.eq.s32.totalorder %s14, 2
    %p135 = por %p133, %p134
    %p136 = scmp.ne.s32.totalorder %s125, %s126
    %p137 = scmp.eq.s32.totalorder %s14, 0
    %p138 = por %p136, %p137
    %p139 = scmp.ne.s32.totalorder %s125, %s126
    %p140 = scmp.eq.s32.totalorder %s15, 2
    %p141 = por %p139, %p140
    %p143 = scmp.ne.s32.totalorder %s126, %s142
    %p144 = scmp.eq.s32.totalorder %s15, 0
    %p145 = por %p143, %p144
    %p146 = scmp.le.s32.totalorder 1, %s9
    %p147 = scmp.lt.s32.totalorder %s9, 4
    %p148 = pnand %p146, %p147
    %p149 = pneg %p148
    // Predicated region
    $region9: #{transformer_forward.28} parent=5 // pred_check
      _
    $region10: #{transformer_forward.28} parent=5 // pred_check_branch
      %151 = sbr.rel (%p148) target = $region12
    $region11: #{transformer_forward.28} parent=5 // pred_region
      %s152 = ssub.s32 %s9, 1
      // Predicated region
      $region13: #{transformer_forward.28} parent=11 // pred_check
        %p153 = pneg %p56
      $region14: #{transformer_forward.28} parent=11 // pred_check_branch
        %155 = sbr.rel (%p153) target = $region16
      $region15: #{transformer_forward.28} parent=11 // pred_region
        %s156 = smul.u32 2, %s19
        %p157 = scmp.lt.s32.totalorder %s156, 1
        %s158 = scalar_select %p157, %s156, 1
        %p159 = scmp.lt.s32.totalorder %s21, 0
        %s160 = scalar_select %p159, %s21, 0
        %s161 = sadd.s32 %s160, %s158
        %s162 = smul.addr %s161, 4
        %s163 = scalar_lea.vmem %s0, %s162
        %s164 = smul.u32 2, %s19
      $region16: #{transformer_forward.28} parent=11 // pred_fallthru
        _
    $region12: #{transformer_forward.28} parent=5 // pred_fallthru
      _
    %p165 = scmp.lt.s32.totalorder %s9, 3
    // Predicated region
    $region17: #{transformer_forward.28} parent=5 // pred_check
      %p166 = pneg %p165
    $region18: #{transformer_forward.28} parent=5 // pred_check_branch
      %168 = sbr.rel (%p166) target = $region20
    $region19: #{transformer_forward.28} parent=5 // pred_region
      // Predicated region
      $region21: #{transformer_forward.28} parent=19 // pred_check
        %p169 = pneg %p78
      $region22: #{transformer_forward.28} parent=19 // pred_check_branch
        %171 = sbr.rel (%p169) target = $region24
      $region23: #{transformer_forward.28} parent=19 // pred_region
        %s172 = smul.u32 4, %s18
        %p173 = scmp.lt.s32.totalorder %s17, 2
        %s174 = scalar_select %p173, %s17, 2
        %p175 = scmp.lt.s32.totalorder %s172, 3
        %s176 = scalar_select %p175, %s172, 3
        %s177 = smul.addr %s174, 4
        %s178 = sadd.s32 %s176, %s177
        %s179 = smul.addr %s178, 4
        %s180 = scalar_lea.vmem %s1, %s179
        %s181 = smul.u32 4, %s18
      $region24: #{transformer_forward.28} parent=19 // pred_fallthru
        _
      // Predicated region
      $region25: #{transformer_forward.28} parent=19 // pred_check
        %p182 = pneg %p104
      $region26: #{transformer_forward.28} parent=19 // pred_check_branch
        %184 = sbr.rel (%p182) target = $region28
      $region27: #{transformer_forward.28} parent=19 // pred_region
        %p185 = scmp.lt.s32.totalorder %s17, 2
        %s186 = scalar_select %p185, %s17, 2
        %s187 = scalar_lea.vmem %s2, %s186
      $region28: #{transformer_forward.28} parent=19 // pred_fallthru
        _
    $region20: #{transformer_forward.28} parent=5 // pred_fallthru
      _
    %p188 = scmp.le.s32.totalorder 1, %s9
    %p189 = scmp.lt.s32.totalorder %s9, 4
    %p190 = pnand %p188, %p189
    %p191 = pneg %p190
    // Predicated region
    $region29: #{transformer_forward.28} parent=5 // pred_check
      _
    $region30: #{transformer_forward.28} parent=5 // pred_check_branch
      %193 = sbr.rel (%p190) target = $region32
    $region31: #{transformer_forward.28} parent=5 // pred_region
      %s194 = ssub.s32 %s9, 1
      %s195 = smul.u32 2, %s19
      %p196 = scmp.lt.s32.totalorder %s195, 1
      %s197 = scalar_select %p196, %s195, 1
      %p198 = scmp.lt.s32.totalorder %s21, 0
      %s199 = scalar_select %p198, %s21, 0
      %s200 = sadd.s32 %s199, %s197
      %s201 = smul.addr %s200, 4
      %s202 = scalar_lea.vmem %s0, %s201
      %p203 = pneg %p56
      %p204 = pneg %p53
      %s205 = smul.u32 4, %s21
      %p206 = scmp.lt.s32.totalorder %s20, 2
      %s207 = scalar_select %p206, %s20, 2
      %p208 = scmp.lt.s32.totalorder %s205, 3
      %s209 = scalar_select %p208, %s205, 3
      %s210 = smul.addr %s207, 4
      %s211 = sadd.s32 %s209, %s210
      %s212 = smul.addr %s211, 4
      %s213 = scalar_lea.vmem %s1, %s212
      %p214 = pneg %p84
      %p215 = pneg %p81
      %p216 = scmp.lt.s32.totalorder %s20, 2
      %s217 = scalar_select %p216, %s20, 2
      %s218 = scalar_lea.vmem %s2, %s217
      %p219 = pneg %p110
      %p220 = pneg %p107
      %p221 = pneg %p138
      %p222 = pneg %p135
      %s223 = smul.u32 2, %s19
      %p224 = scmp.lt.s32.totalorder %s20, 2
      %s225 = scalar_select %p224, %s20, 2
      %p226 = scmp.lt.s32.totalorder %s223, 1
      %s227 = scalar_select %p226, %s223, 1
      %s228 = smul.addr %s225, 2
      %s229 = sadd.s32 %s227, %s228
      %s230 = smul.addr %s229, 4
      %s231 = scalar_lea.vmem %s3, %s230
      %s232 = smul.u32 2, %s19
      %p233 = scmp.lt.s32.totalorder %s232, 1
      %s234 = scalar_select %p233, %s232, 1
      %p235 = scmp.lt.s32.totalorder %s21, 0
      %s236 = scalar_select %p235, %s21, 0
      %s237 = sadd.s32 %s236, %s234
      %s238 = smul.addr %s237, 4
      %s239 = scalar_lea.vmem %s0, %s238
      %s240 = smul.u32 2, %s19
      %s241 = smul.u32 4, %s21
      %p242 = scmp.lt.s32.totalorder %s20, 2
      %s243 = scalar_select %p242, %s20, 2
      %p244 = scmp.lt.s32.totalorder %s241, 3
      %s245 = scalar_select %p244, %s241, 3
      %s246 = smul.addr %s243, 4
      %s247 = sadd.s32 %s245, %s246
      %s248 = smul.addr %s247, 4
      %s249 = scalar_lea.vmem %s1, %s248
      %s250 = smul.u32 4, %s21
      %p251 = scmp.lt.s32.totalorder %s20, 2
      %s252 = scalar_select %p251, %s20, 2
      %s253 = scalar_lea.vmem %s2, %s252
      %s254 = smul.u32 2, %s19
      %p255 = scmp.lt.s32.totalorder %s20, 2
      %s256 = scalar_select %p255, %s20, 2
      %p257 = scmp.lt.s32.totalorder %s254, 1
      %s258 = scalar_select %p257, %s254, 1
      %s259 = smul.addr %s256, 2
      %s260 = sadd.s32 %s258, %s259
      %s261 = smul.addr %s260, 4
      %s262 = scalar_lea.vmem %s3, %s261
      %s263 = smul.u32 2, %s19
      %p265 = scmp.eq.s32.totalorder %s21, 0
      // Predicated region
      $region33: #{transformer_forward.28} parent=31 // pred_check
        %p266 = pneg %p265
      $region34: #{transformer_forward.28} parent=31 // pred_check_branch
        %268 = sbr.rel (%p266) target = $region36
      $region35: #{transformer_forward.28} parent=31 // pred_region
        %vm269 = vcmask 261120
        %270 = vst.msk [vmem:[#allocation2] sm:$0xff] %vm269, 0.0
        %271 = vst.msk [vmem:[#allocation2 + $0x8] sm:$0xff] %vm269, 0.0
      $region36: #{transformer_forward.28} parent=31 // pred_fallthru
        _
      %v272 = vld [vmem:[%s249] sm:$0xf]
      %v273 = vld [vmem:[%s249 + $0x4] sm:$0xf]
      %v274 = vld [vmem:[%s249 + $0x8] sm:$0xf]
      %v275 = vld [vmem:[%s249 + $0xc] sm:$0xf]
      %v276 = vld [vmem:[#allocation2] sm:$0xff]
      %v277 = vld [vmem:[#allocation2 + $0x8] sm:$0xff]
      %v278 = vld [vmem:[%s239] sm:$0xf]
      %v279 = vld [vmem:[%s239 + $0x4] sm:$0xf]
      %v282 = vunpack.c.l.b16 %v278
      %v283 = vunpack.c.l.b16 %v279
      %v284 = vpack.c.b16 %v283, %v282
      %v289 = vunpack.c.l.b16 %v272
      %v290 = vunpack.c.l.b16 %v273
      %v291 = vunpack.c.l.b16 %v274
      %v292 = vunpack.c.l.b16 %v275
      %v293 = vpack.c.b16 %v290, %v289
      %v294 = vpack.c.b16 %v292, %v291
      %vm297 = vcmask 261120
      %v299 = vsel %vm297, %v284, 0
      %301 = vmatpush.bf16.msra.mxu0 0
      %302 = vmatpush.bf16.msra.mxu0 0
      %303 = vmatpush.bf16.msra.mxu0 0
      %304 = vmatpush.bf16.msra.mxu0 0
      %305 = vmatpush.bf16.msra.mxu0 0
      %306 = vmatpush.bf16.msra.mxu0 0
      %307 = vmatpush.bf16.msra.mxu0 %v294
      %308 = vmatpush.bf16.msra.mxu0 %v293
      %309 = vmatmul.bf16.gmra.mxu0 %v299
      %v310 = vpop.f32.mrf.mxu0
      %v311 = vadd.f32 0.0, %v310
      %v312 = vpop.f32.mrf.mxu0
      %v313 = vadd.f32 0.0, %v312
      %314 = vdwg.mxu0
      %v315 = vadd.f32 %v276, %v311
      %v316 = vadd.f32 %v277, %v313
      %317 = vst.msk [vmem:[#allocation2] sm:$0xff] %vm297, %v315
      %318 = vst.msk [vmem:[#allocation2 + $0x8] sm:$0xff] %vm297, %v316
      // Predicated region
      $region37: #{transformer_forward.28} parent=31 // pred_check
        %p319 = pneg %p265
      $region38: #{transformer_forward.28} parent=31 // pred_check_branch
        %321 = sbr.rel (%p319) target = $region40
      $region39: #{transformer_forward.28} parent=31 // pred_region
        %v322 = vld [vmem:[#allocation2] sm:$0xff]
        %v323 = vld [vmem:[#allocation2 + $0x8] sm:$0xff]
        %v324 = vld [vmem:[%s253] sm:$0x1]
        %v326 = vperm.slane %v324, 0
        %v328 = vadd.f32 %v322, %v326
        %v329 = vadd.f32 %v323, %v326
        %v330 = vpack.c.bf16 %v328, %v328
        %v331 = vpack.c.bf16 %v329, %v329
        %vm332 = vcmask 257024
        %333 = vst.msk [vmem:[%s262] sm:$0xf] %vm332, %v330
        %334 = vst.msk [vmem:[%s262 + $0x4] sm:$0xf] %vm332, %v331
      $region40: #{transformer_forward.28} parent=31 // pred_fallthru
        _
      %s335 = smul.u32 2, %s19
      %p336 = scmp.lt.s32.totalorder %s20, 2
      %s337 = scalar_select %p336, %s20, 2
      %p338 = scmp.lt.s32.totalorder %s335, 1
      %s339 = scalar_select %p338, %s335, 1
      %s340 = smul.addr %s337, 2
      %s341 = sadd.s32 %s339, %s340
      %s342 = smul.addr %s341, 4
      %s343 = scalar_lea.vmem %s3, %s342
      // Predicated region
      $region41: #{transformer_forward.28} parent=31 // pred_check
        %p344 = pneg %p135
      $region42: #{transformer_forward.28} parent=31 // pred_check_branch
        %346 = sbr.rel (%p344) target = $region44
      $region43: #{transformer_forward.28} parent=31 // pred_region
        %s347 = smul.u32 2, %s19
      $region44: #{transformer_forward.28} parent=31 // pred_fallthru
        _
    $region32: #{transformer_forward.28} parent=5 // pred_fallthru
      _
    %p348 = scmp.le.s32.totalorder 2, %s9
    // Predicated region
    $region45: #{transformer_forward.28} parent=5 // pred_check
      %p349 = pneg %p348
    $region46: #{transformer_forward.28} parent=5 // pred_check_branch
      %351 = sbr.rel (%p349) target = $region48
    $region47: #{transformer_forward.28} parent=5 // pred_region
      %s352 = ssub.s32 %s9, 2
      // Predicated region
      $region49: #{transformer_forward.28} parent=47 // pred_check
        %p353 = pneg %p141
      $region50: #{transformer_forward.28} parent=47 // pred_check_branch
        %355 = sbr.rel (%p353) target = $region52
      $region51: #{transformer_forward.28} parent=47 // pred_region
        %s356 = smul.u32 2, %s22
        %p357 = scmp.lt.s32.totalorder %s23, 2
        %s358 = scalar_select %p357, %s23, 2
        %p359 = scmp.lt.s32.totalorder %s356, 1
        %s360 = scalar_select %p359, %s356, 1
        %s361 = smul.addr %s358, 2
        %s362 = sadd.s32 %s360, %s361
        %s363 = smul.addr %s362, 4
        %s364 = scalar_lea.vmem %s3, %s363
      $region52: #{transformer_forward.28} parent=47 // pred_fallthru
        _
    $region48: #{transformer_forward.28} parent=5 // pred_fallthru
      _
  $region6: #{transformer_forward.28} parent=0 // loop_footer
    %s13 = sadd.s32 1, %s9
  $region7: #{transformer_forward.28} parent=0 // loop_footer_branch
    %8 = sbr.rel target = $region3
  $region8: #{transformer_forward.28} parent=0 // loop_exit
    _

// kernel: transformer_forward.31
$region0: #{transformer_forward.31}
  #allocation0 [shape = 'u32[]', space=smem, size = 0x4, offset = 0x4, fixed_abs, tag = 'smem constant byte address 0x4 - core index']
  #allocation1 [shape = 'u32[72,128]{1,0:T(1,128)}', space=vmem, size = 0x9000, scoped, tag = 'internal scratch']
  #allocation2 [shape = 'f32[16,128]{1,0:T(8,128)}', space=vmem, size = 0x2000, scoped, tag = 'scratch operand']
  %s0 = inlined_call_operand.vmem [shape: bf16[16,32], index: 0, kind: input, shape index: {}]
  %s1 = inlined_call_operand.vmem [shape: bf16[32,128], index: 1, kind: input, shape index: {}]
  %s2 = inlined_call_operand.vmem [shape: f32[1,128], index: 2, kind: input, shape index: {}]
  %s3 = inlined_call_operand.vmem [shape: bf16[16,128], index: 3, kind: output, shape index: {}]
  %s4 = sld [smem:[#allocation0]]
  $region30: #{transformer_forward.31} parent=0
    _
  %s6 = ssub.s32 1, %s4
  %s7 = scalar_select 0, %s6, %s4
  // Predicated region
  $region2: #{transformer_forward.31} parent=0 // pred_check
    _
  $region3: #{transformer_forward.31} parent=0 // pred_check_branch
    %9 = sbr.rel (0) target = $region5
  $region4: #{transformer_forward.31} parent=0 // pred_region
    _
  $region5: #{transformer_forward.31} parent=0 // pred_fallthru
    _
  // Predicated region
  $region6: #{transformer_forward.31} parent=0 // pred_check
    _
  $region7: #{transformer_forward.31} parent=0 // pred_check_branch
    %11 = sbr.rel (0) target = $region9
  $region8: #{transformer_forward.31} parent=0 // pred_region
    _
  $region9: #{transformer_forward.31} parent=0 // pred_fallthru
    _
  // Predicated region
  $region10: #{transformer_forward.31} parent=0 // pred_check
    _
  $region11: #{transformer_forward.31} parent=0 // pred_check_branch
    %13 = sbr.rel (0) target = $region13
  $region12: #{transformer_forward.31} parent=0 // pred_region
    _
  $region13: #{transformer_forward.31} parent=0 // pred_fallthru
    _
  %p15 = scmp.eq.s32.totalorder 0, 0
  // Predicated region
  $region14: #{transformer_forward.31} parent=0 // pred_check
    %p16 = pneg %p15
  $region15: #{transformer_forward.31} parent=0 // pred_check_branch
    %18 = sbr.rel (%p16) target = $region17
  $region16: #{transformer_forward.31} parent=0 // pred_region
    %19 = vst [vmem:[#allocation2] sm:$0xff] 0.0
    %20 = vst [vmem:[#allocation2 + $0x8] sm:$0xff] 0.0
  $region17: #{transformer_forward.31} parent=0 // pred_fallthru
    _
  %v21 = vld [vmem:[%s1] sm:$0xf]
  %v22 = vld [vmem:[%s1 + $0x4] sm:$0xf]
  %v23 = vld [vmem:[%s1 + $0x8] sm:$0xf]
  %v24 = vld [vmem:[%s1 + $0xc] sm:$0xf]
  %v25 = vld [vmem:[#allocation2] sm:$0xff]
  %v26 = vld [vmem:[#allocation2 + $0x8] sm:$0xff]
  %v27 = vld [vmem:[%s0] sm:$0xf]
  %v28 = vld [vmem:[%s0 + $0x4] sm:$0xf]
  %v31 = vunpack.c.l.b16 %v27
  %v32 = vunpack.c.l.b16 %v28
  %v33 = vpack.c.b16 %v32, %v31
  %v38 = vunpack.c.l.b16 %v21
  %v39 = vunpack.c.l.b16 %v22
  %v40 = vunpack.c.l.b16 %v23
  %v41 = vunpack.c.l.b16 %v24
  %v42 = vpack.c.b16 %v39, %v38
  %v43 = vpack.c.b16 %v41, %v40
  %vm46 = vcmask 261120
  %v48 = vsel %vm46, %v33, 0
  %50 = vmatpush.bf16.msra.mxu0 0
  %51 = vmatpush.bf16.msra.mxu0 0
  %52 = vmatpush.bf16.msra.mxu0 0
  %53 = vmatpush.bf16.msra.mxu0 0
  %54 = vmatpush.bf16.msra.mxu0 0
  %55 = vmatpush.bf16.msra.mxu0 0
  %56 = vmatpush.bf16.msra.mxu0 %v43
  %57 = vmatpush.bf16.msra.mxu0 %v42
  %58 = vmatmul.bf16.gmra.mxu0 %v48
  %v59 = vpop.f32.mrf.mxu0
  %v60 = vadd.f32 0.0, %v59
  %v61 = vpop.f32.mrf.mxu0
  %v62 = vadd.f32 0.0, %v61
  %63 = vdwg.mxu0
  %v64 = vadd.f32 %v25, %v60
  %v65 = vadd.f32 %v26, %v62
  %66 = vst [vmem:[#allocation2] sm:$0xff] %v64
  %67 = vst [vmem:[#allocation2 + $0x8] sm:$0xff] %v65
  // Predicated region
  $region18: #{transformer_forward.31} parent=0 // pred_check
    %p68 = pneg %p15
  $region19: #{transformer_forward.31} parent=0 // pred_check_branch
    %70 = sbr.rel (%p68) target = $region21
  $region20: #{transformer_forward.31} parent=0 // pred_region
    %v71 = vld [vmem:[#allocation2] sm:$0xff]
    %v72 = vld [vmem:[#allocation2 + $0x8] sm:$0xff]
    %v73 = vld [vmem:[%s2] sm:$0x1]
    %v75 = vperm.slane %v73, 0
    %v77 = vadd.f32 %v71, %v75
    %v78 = vadd.f32 %v72, %v75
    %v79 = vmax.f32 %v77, 0.0
    %v80 = vmax.f32 %v78, 0.0
    %v81 = vpack.c.bf16 %v79, %v79
    %v82 = vpack.c.bf16 %v80, %v80
    %83 = vst [vmem:[%s3] sm:$0xf] %v81
    %84 = vst [vmem:[%s3 + $0x4] sm:$0xf] %v82
  $region21: #{transformer_forward.31} parent=0 // pred_fallthru
    _
  // Predicated region
  $region22: #{transformer_forward.31} parent=0 // pred_check
    _
  $region23: #{transformer_forward.31} parent=0 // pred_check_branch
    %86 = sbr.rel (0) target = $region25
  $region24: #{transformer_forward.31} parent=0 // pred_region
    _
  $region25: #{transformer_forward.31} parent=0 // pred_fallthru
    _
  // Predicated region
  $region26: #{transformer_forward.31} parent=0 // pred_check
    _
  $region27: #{transformer_forward.31} parent=0 // pred_check_branch
    %88 = sbr.rel (0) target = $region29
  $region28: #{transformer_forward.31} parent=0 // pred_region
    _
  $region29: #{transformer_forward.31} parent=0 // pred_fallthru
    _

// kernel: transformer_forward.29
$region0: #{transformer_forward.29}
  #allocation0 [shape = 'u32[]', space=smem, size = 0x4, offset = 0x4, fixed_abs, tag = 'smem constant byte address 0x4 - core index']
  #allocation1 [shape = 'u32[72,128]{1,0:T(1,128)}', space=vmem, size = 0x9000, scoped, tag = 'internal scratch']
  %s0 = inlined_call_operand.vmem [shape: bf16[3,2,8,32], index: 0, kind: input, shape index: {}, may-alias: {0,1,2}]
  %s1 = inlined_call_operand.vmem [shape: bf16[3,2,8,32], index: 1, kind: input, shape index: {}, may-alias: {0,1,2}]
  %s2 = inlined_call_operand.vmem [shape: bf16[3,2,8,32], index: 2, kind: input, shape index: {}, may-alias: {0,1,2}]
  %s3 = inlined_call_operand.vmem [shape: bf16[2,8,32], index: 3, kind: output, shape index: {}]
  %s4 = sld [smem:[#allocation0]]
  $region45: #{transformer_forward.29} parent=0
    _
  %s6 = ssub.s32 1, %s4
  %s7 = scalar_select 0, %s6, %s4
  loop: start=0, step=1, limit=4
  $region2: #{transformer_forward.29} parent=0 // loop_pre_header
    _
  $region3: #{transformer_forward.29} parent=0 // loop_header
    %s9 = sphi 0, %s13
    %p10 = scmp.ge.s32.totalorder %s9, 4
    %s16 = sphi 0, %s28
    %s17 = sphi 0, %s24
    %s18 = sphi 0, %s16
    %s19 = sphi 0, %s17
    %s20 = sphi 0, %s18
    %s21 = sphi 0, %s19
    %s33 = sphi 0, %s35
    %s36 = sphi 0, %s33
    %s37 = sphi 0, %s36
    %s53 = sphi 0, %s37
    %s59 = sphi 0, %s61
    %s62 = sphi 0, %s59
    %s63 = sphi 0, %s62
    %s79 = sphi 0, %s63
    %s85 = sphi 0, %s87
    %s88 = sphi 0, %s85
    %s89 = sphi 0, %s88
    %s105 = sphi 0, %s89
    %s113 = sphi 0, %s115
    %s116 = sphi 0, %s113
    %s117 = sphi 0, %s116
    %s133 = sphi 0, %s117
  $region4: #{transformer_forward.29} parent=0 // loop_header_branch
    %12 = sbr.rel (%p10) target = $region8
  $region5: #{transformer_forward.29} parent=0 // loop_body
    %s14 = ssub.s32 %s9, 1
    %s15 = ssub.s32 %s9, 2
    %s22 = sadd.s32 1, %s17
    %p23 = scmp.ge.s32.totalorder %s22, 1
    %s24 = scalar_select %p23, 0, %s22
    %s25 = sadd.s32 1, %s16
    %s26 = scalar_select %p23, %s25, %s16
    %p27 = scmp.ge.s32.totalorder %s26, 2
    %s28 = scalar_select %p27, 0, %s26
    %s29 = ssub.s32 %s16, %s28
    %s30 = ssub.s32 %s17, %s24
    %s31 = sor.u32 %s29, %s30
    %p32 = scmp.eq.s32.totalorder %s31, 0
    %s34 = sadd.s32 %s33, 1
    %s35 = scalar_select %p32, %s33, %s34
    %p38 = pneg %p32
    %p39 = scmp.eq.s32.totalorder %s9, 1
    %p40 = por %p38, %p39
    %p41 = scmp.ne.s32.totalorder %s33, %s36
    %p42 = scmp.eq.s32.totalorder %s9, 0
    %p43 = por %p41, %p42
    %p44 = scmp.ne.s32.totalorder %s33, %s36
    %p45 = scmp.eq.s32.totalorder %s14, 1
    %p46 = por %p44, %p45
    %p47 = scmp.ne.s32.totalorder %s36, %s37
    %p48 = scmp.eq.s32.totalorder %s14, 0
    %p49 = por %p47, %p48
    %p50 = scmp.ne.s32.totalorder %s36, %s37
    %p51 = scmp.eq.s32.totalorder %s15, 1
    %p52 = por %p50, %p51
    %p54 = scmp.ne.s32.totalorder %s37, %s53
    %p55 = scmp.eq.s32.totalorder %s15, 0
    %p56 = por %p54, %p55
    %s57 = ssub.s32 %s16, %s28
    %p58 = scmp.eq.s32.totalorder %s57, 0
    %s60 = sadd.s32 %s59, 1
    %s61 = scalar_select %p58, %s59, %s60
    %p64 = pneg %p58
    %p65 = scmp.eq.s32.totalorder %s9, 1
    %p66 = por %p64, %p65
    %p67 = scmp.ne.s32.totalorder %s59, %s62
    %p68 = scmp.eq.s32.totalorder %s9, 0
    %p69 = por %p67, %p68
    %p70 = scmp.ne.s32.totalorder %s59, %s62
    %p71 = scmp.eq.s32.totalorder %s14, 1
    %p72 = por %p70, %p71
    %p73 = scmp.ne.s32.totalorder %s62, %s63
    %p74 = scmp.eq.s32.totalorder %s14, 0
    %p75 = por %p73, %p74
    %p76 = scmp.ne.s32.totalorder %s62, %s63
    %p77 = scmp.eq.s32.totalorder %s15, 1
    %p78 = por %p76, %p77
    %p80 = scmp.ne.s32.totalorder %s63, %s79
    %p81 = scmp.eq.s32.totalorder %s15, 0
    %p82 = por %p80, %p81
    %s83 = ssub.s32 %s16, %s28
    %p84 = scmp.eq.s32.totalorder %s83, 0
    %s86 = sadd.s32 %s85, 1
    %s87 = scalar_select %p84, %s85, %s86
    %p90 = pneg %p84
    %p91 = scmp.eq.s32.totalorder %s9, 1
    %p92 = por %p90, %p91
    %p93 = scmp.ne.s32.totalorder %s85, %s88
    %p94 = scmp.eq.s32.totalorder %s9, 0
    %p95 = por %p93, %p94
    %p96 = scmp.ne.s32.totalorder %s85, %s88
    %p97 = scmp.eq.s32.totalorder %s14, 1
    %p98 = por %p96, %p97
    %p99 = scmp.ne.s32.totalorder %s88, %s89
    %p100 = scmp.eq.s32.totalorder %s14, 0
    %p101 = por %p99, %p100
    %p102 = scmp.ne.s32.totalorder %s88, %s89
    %p103 = scmp.eq.s32.totalorder %s15, 1
    %p104 = por %p102, %p103
    %p106 = scmp.ne.s32.totalorder %s89, %s105
    %p107 = scmp.eq.s32.totalorder %s15, 0
    %p108 = por %p106, %p107
    %s109 = ssub.s32 %s16, %s28
    %s110 = ssub.s32 %s17, %s24
    %s111 = sor.u32 %s109, %s110
    %p112 = scmp.eq.s32.totalorder %s111, 0
    %s114 = sadd.s32 %s113, 1
    %s115 = scalar_select %p112, %s113, %s114
    %p118 = pneg %p112
    %p119 = scmp.eq.s32.totalorder %s9, 1
    %p120 = por %p118, %p119
    %p121 = scmp.ne.s32.totalorder %s113, %s116
    %p122 = scmp.eq.s32.totalorder %s9, 0
    %p123 = por %p121, %p122
    %p124 = scmp.ne.s32.totalorder %s113, %s116
    %p125 = scmp.eq.s32.totalorder %s14, 1
    %p126 = por %p124, %p125
    %p127 = scmp.ne.s32.totalorder %s116, %s117
    %p128 = scmp.eq.s32.totalorder %s14, 0
    %p129 = por %p127, %p128
    %p130 = scmp.ne.s32.totalorder %s116, %s117
    %p131 = scmp.eq.s32.totalorder %s15, 1
    %p132 = por %p130, %p131
    %p134 = scmp.ne.s32.totalorder %s117, %s133
    %p135 = scmp.eq.s32.totalorder %s15, 0
    %p136 = por %p134, %p135
    %p137 = scmp.le.s32.totalorder 1, %s9
    %p138 = scmp.lt.s32.totalorder %s9, 3
    %p139 = pnand %p137, %p138
    %p140 = pneg %p139
    // Predicated region
    $region9: #{transformer_forward.29} parent=5 // pred_check
      _
    $region10: #{transformer_forward.29} parent=5 // pred_check_branch
      %142 = sbr.rel (%p139) target = $region12
    $region11: #{transformer_forward.29} parent=5 // pred_region
      %s143 = ssub.s32 %s9, 1
    $region12: #{transformer_forward.29} parent=5 // pred_fallthru
      _
    %p144 = scmp.lt.s32.totalorder %s9, 2
    // Predicated region
    $region13: #{transformer_forward.29} parent=5 // pred_check
      %p145 = pneg %p144
    $region14: #{transformer_forward.29} parent=5 // pred_check_branch
      %147 = sbr.rel (%p145) target = $region16
    $region15: #{transformer_forward.29} parent=5 // pred_region
      // Predicated region
      $region17: #{transformer_forward.29} parent=15 // pred_check
        %p148 = pneg %p43
      $region18: #{transformer_forward.29} parent=15 // pred_check_branch
        %150 = sbr.rel (%p148) target = $region20
      $region19: #{transformer_forward.29} parent=15 // pred_region
        %p151 = scmp.lt.s32.totalorder %s16, 1
        %s152 = scalar_select %p151, %s16, 1
        %p153 = scmp.lt.s32.totalorder %s17, 0
        %s154 = scalar_select %p153, %s17, 0
        %s155 = sadd.s32 %s154, %s152
        %s156 = smul.addr %s155, 4
        %s157 = scalar_lea.vmem %s0, %s156
      $region20: #{transformer_forward.29} parent=15 // pred_fallthru
        _
      // Predicated region
      $region21: #{transformer_forward.29} parent=15 // pred_check
        %p158 = pneg %p69
      $region22: #{transformer_forward.29} parent=15 // pred_check_branch
        %160 = sbr.rel (%p158) target = $region24
      $region23: #{transformer_forward.29} parent=15 // pred_region
        %p161 = scmp.lt.s32.totalorder %s16, 1
        %s162 = scalar_select %p161, %s16, 1
        %s163 = sadd.s32 %s162, 2
        %s164 = smul.addr %s163, 4
        %s165 = scalar_lea.vmem %s1, %s164
      $region24: #{transformer_forward.29} parent=15 // pred_fallthru
        _
      // Predicated region
      $region25: #{transformer_forward.29} parent=15 // pred_check
        %p166 = pneg %p95
      $region26: #{transformer_forward.29} parent=15 // pred_check_branch
        %168 = sbr.rel (%p166) target = $region28
      $region27: #{transformer_forward.29} parent=15 // pred_region
        %p169 = scmp.lt.s32.totalorder %s16, 1
        %s170 = scalar_select %p169, %s16, 1
        %s171 = sadd.s32 %s170, 4
        %s172 = smul.addr %s171, 4
        %s173 = scalar_lea.vmem %s2, %s172
      $region28: #{transformer_forward.29} parent=15 // pred_fallthru
        _
    $region16: #{transformer_forward.29} parent=5 // pred_fallthru
      _
    %p174 = scmp.le.s32.totalorder 1, %s9
    %p175 = scmp.lt.s32.totalorder %s9, 3
    %p176 = pnand %p174, %p175
    %p177 = pneg %p176
    // Predicated region
    $region29: #{transformer_forward.29} parent=5 // pred_check
      _
    $region30: #{transformer_forward.29} parent=5 // pred_check_branch
      %179 = sbr.rel (%p176) target = $region32
    $region31: #{transformer_forward.29} parent=5 // pred_region
      %s180 = ssub.s32 %s9, 1
      %p181 = scmp.lt.s32.totalorder %s18, 1
      %s182 = scalar_select %p181, %s18, 1
      %p183 = scmp.lt.s32.totalorder %s19, 0
      %s184 = scalar_select %p183, %s19, 0
      %s185 = sadd.s32 %s184, %s182
      %s186 = smul.addr %s185, 4
      %s187 = scalar_lea.vmem %s0, %s186
      %p188 = pneg %p49
      %p189 = pneg %p46
      %p190 = scmp.lt.s32.totalorder %s18, 1
      %s191 = scalar_select %p190, %s18, 1
      %s192 = sadd.s32 %s191, 2
      %s193 = smul.addr %s192, 4
      %s194 = scalar_lea.vmem %s1, %s193
      %p195 = pneg %p75
      %p196 = pneg %p72
      %p197 = scmp.lt.s32.totalorder %s18, 1
      %s198 = scalar_select %p197, %s18, 1
      %s199 = sadd.s32 %s198, 4
      %s200 = smul.addr %s199, 4
      %s201 = scalar_lea.vmem %s2, %s200
      %p202 = pneg %p101
      %p203 = pneg %p98
      %p204 = pneg %p129
      %p205 = pneg %p126
      %p206 = scmp.lt.s32.totalorder %s18, 1
      %s207 = scalar_select %p206, %s18, 1
      %p208 = scmp.lt.s32.totalorder %s19, 0
      %s209 = scalar_select %p208, %s19, 0
      %s210 = sadd.s32 %s209, %s207
      %s211 = smul.addr %s210, 4
      %s212 = scalar_lea.vmem %s3, %s211
      %p213 = scmp.lt.s32.totalorder %s18, 1
      %s214 = scalar_select %p213, %s18, 1
      %p215 = scmp.lt.s32.totalorder %s19, 0
      %s216 = scalar_select %p215, %s19, 0
      %s217 = sadd.s32 %s216, %s214
      %s218 = smul.addr %s217, 4
      %s219 = scalar_lea.vmem %s0, %s218
      %p220 = scmp.lt.s32.totalorder %s18, 1
      %s221 = scalar_select %p220, %s18, 1
      %s222 = sadd.s32 %s221, 2
      %s223 = smul.addr %s222, 4
      %s224 = scalar_lea.vmem %s1, %s223
      %p225 = scmp.lt.s32.totalorder %s18, 1
      %s226 = scalar_select %p225, %s18, 1
      %s227 = sadd.s32 %s226, 4
      %s228 = smul.addr %s227, 4
      %s229 = scalar_lea.vmem %s2, %s228
      %p230 = scmp.lt.s32.totalorder %s18, 1
      %s231 = scalar_select %p230, %s18, 1
      %p232 = scmp.lt.s32.totalorder %s19, 0
      %s233 = scalar_select %p232, %s19, 0
      %s234 = sadd.s32 %s233, %s231
      %s235 = smul.addr %s234, 4
      %s236 = scalar_lea.vmem %s3, %s235
      %v238 = vld [vmem:[%s219] sm:$0xf]
      %v239 = vunpack.c.l.bf16 %v238
      %v240 = vmul.f32 %v239, 0.35351563
      %v241 = vpack.c.bf16 %v240, %v240
      %243 = vrot.lane.b32.xlu0 %v241, 120
      %v244 = vpop.permute.xlu0 %243
      %245 = vrot.lane.b32.xlu0 %v241, 112
      %v246 = vpop.permute.xlu0 %245
      %247 = vrot.lane.b32.xlu0 %v241, 104
      %v248 = vpop.permute.xlu0 %247
      %v251 = vpack.i.b16 %v244, %v241
      %v252 = vshrl.u32 %v241, 16
      %v253 = vshrl.u32 %v244, 16
      %v254 = vpack.i.b16 %v253, %v252
      %v257 = vpack.i.b16 %v248, %v246
      %v258 = vshrl.u32 %v246, 16
      %v259 = vshrl.u32 %v248, 16
      %v260 = vpack.i.b16 %v259, %v258
      %v263 = vunpack.c.l.s4 1983009808
      %v264 = vunpack.c.0.s8 %v263
      %v265 = vperm.slane %v251, %v264
      %v268 = vunpack.c.l.s4 1983009808
      %v269 = vunpack.c.0.s8 %v268
      %v270 = vperm.slane %v257, %v269
      %v271 = vrot.slane %v270, 4
      %vm272 = vcmask 1047556
      %v273 = vsel %vm272, %v271, %v265
      %v274 = vrot.slane %v265, 4
      %v275 = vsel %vm272, %v270, %v274
      %v277 = vunpack.c.l.s4 1934713408
      %v278 = vunpack.c.0.s8 %v277
      %v279 = vperm.slane %v273, %v278
      %v281 = vunpack.c.l.s4 1934713408
      %v282 = vunpack.c.0.s8 %v281
      %v283 = vperm.slane %v275, %v282
      %v284 = vrot.slane %v279, 4
      %v285 = vsel %vm272, 0, %v284
      %v286 = vrot.slane %v283, 4
      %v287 = vsel %vm272, 0, %v286
      %v290 = vunpack.c.l.s4 1983009808
      %v291 = vunpack.c.0.s8 %v290
      %v292 = vperm.slane %v254, %v291
      %v295 = vunpack.c.l.s4 1983009808
      %v296 = vunpack.c.0.s8 %v295
      %v297 = vperm.slane %v260, %v296
      %v298 = vrot.slane %v297, 4
      %v299 = vsel %vm272, %v298, %v292
      %v300 = vrot.slane %v292, 4
      %v301 = vsel %vm272, %v297, %v300
      %v303 = vunpack.c.l.s4 1934713408
      %v304 = vunpack.c.0.s8 %v303
      %v305 = vperm.slane %v299, %v304
      %v307 = vunpack.c.l.s4 1934713408
      %v308 = vunpack.c.0.s8 %v307
      %v309 = vperm.slane %v301, %v308
      %v310 = vrot.slane %v305, 4
      %v311 = vsel %vm272, 0, %v310
      %v312 = vrot.slane %v309, 4
      %v313 = vsel %vm272, 0, %v312
      %v314 = vsel %vm272, %v286, %v279
      %v316 = vunpack.c.l.s4 1983009808
      %v317 = vunpack.c.0.s8 %v316
      %v318 = vperm.slane %v314, %v317
      %v319 = vrot.slane %v287, 4
      %v320 = vsel %vm272, %v319, %v285
      %v322 = vunpack.c.l.s4 1983009808
      %v323 = vunpack.c.0.s8 %v322
      %v324 = vperm.slane %v320, %v323
      %v325 = vrot.slane %v324, 4
      %v326 = vsel %vm272, %v325, %v318
      %v328 = vunpack.c.l.s4 1934713408
      %v329 = vunpack.c.0.s8 %v328
      %v330 = vperm.slane %v326, %v329
      %v331 = vrot.slane %v330, 4
      %v332 = vsel %vm272, 0, %v331
      %v333 = vsel %vm272, %v312, %v305
      %v335 = vunpack.c.l.s4 1983009808
      %v336 = vunpack.c.0.s8 %v335
      %v337 = vperm.slane %v333, %v336
      %v338 = vrot.slane %v313, 4
      %v339 = vsel %vm272, %v338, %v311
      %v341 = vunpack.c.l.s4 1983009808
      %v342 = vunpack.c.0.s8 %v341
      %v343 = vperm.slane %v339, %v342
      %v344 = vrot.slane %v343, 4
      %v345 = vsel %vm272, %v344, %v337
      %v347 = vunpack.c.l.s4 1934713408
      %v348 = vunpack.c.0.s8 %v347
      %v349 = vperm.slane %v345, %v348
      %v350 = vrot.slane %v349, 4
      %v351 = vsel %vm272, 0, %v350
      %v354 = vpack.i.b16 %v349, %v330
      %v355 = vshrl.u32 %v330, 16
      %v356 = vshrl.u32 %v349, 16
      %v357 = vpack.i.b16 %v356, %v355
      %v360 = vpack.i.b16 %v351, %v332
      %v361 = vshrl.u32 %v332, 16
      %v362 = vshrl.u32 %v351, 16
      %v363 = vpack.i.b16 %v362, %v361
      %v364 = vld [vmem:[%s224] sm:$0xf]
      %366 = vrot.lane.b32.xlu0 %v364, 120
      %v367 = vpop.permute.xlu0 %366
      %368 = vrot.lane.b32.xlu0 %v364, 112
      %v369 = vpop.permute.xlu0 %368
      %370 = vrot.lane.b32.xlu0 %v364, 104
      %v371 = vpop.permute.xlu0 %370
      %v374 = vpack.i.b16 %v367, %v364
      %v375 = vshrl.u32 %v364, 16
      %v376 = vshrl.u32 %v367, 16
      %v377 = vpack.i.b16 %v376, %v375
      %v380 = vpack.i.b16 %v371, %v369
      %v381 = vshrl.u32 %v369, 16
      %v382 = vshrl.u32 %v371, 16
      %v383 = vpack.i.b16 %v382, %v381
      %v386 = vunpack.c.l.s4 1983009808
      %v387 = vunpack.c.0.s8 %v386
      %v388 = vperm.slane %v374, %v387
      %v391 = vunpack.c.l.s4 1983009808
      %v392 = vunpack.c.0.s8 %v391
      %v393 = vperm.slane %v380, %v392
      %v394 = vrot.slane %v393, 4
      %v395 = vsel %vm272, %v394, %v388
      %v396 = vrot.slane %v388, 4
      %v397 = vsel %vm272, %v393, %v396
      %v399 = vunpack.c.l.s4 1934713408
      %v400 = vunpack.c.0.s8 %v399
      %v401 = vperm.slane %v395, %v400
      %v403 = vunpack.c.l.s4 1934713408
      %v404 = vunpack.c.0.s8 %v403
      %v405 = vperm.slane %v397, %v404
      %v406 = vrot.slane %v401, 4
      %v407 = vsel %vm272, 0, %v406
      %v408 = vrot.slane %v405, 4
      %v409 = vsel %vm272, 0, %v408
      %v412 = vunpack.c.l.s4 1983009808
      %v413 = vunpack.c.0.s8 %v412
      %v414 = vperm.slane %v377, %v413
      %v417 = vunpack.c.l.s4 1983009808
      %v418 = vunpack.c.0.s8 %v417
      %v419 = vperm.slane %v383, %v418
      %v420 = vrot.slane %v419, 4
      %v421 = vsel %vm272, %v420, %v414
      %v422 = vrot.slane %v414, 4
      %v423 = vsel %vm272, %v419, %v422
      %v425 = vunpack.c.l.s4 1934713408
      %v426 = vunpack.c.0.s8 %v425
      %v427 = vperm.slane %v421, %v426
      %v429 = vunpack.c.l.s4 1934713408
      %v430 = vunpack.c.0.s8 %v429
      %v431 = vperm.slane %v423, %v430
      %v432 = vrot.slane %v427, 4
      %v433 = vsel %vm272, 0, %v432
      %v434 = vrot.slane %v431, 4
      %v435 = vsel %vm272, 0, %v434
      %v436 = vsel %vm272, %v408, %v401
      %v438 = vunpack.c.l.s4 1983009808
      %v439 = vunpack.c.0.s8 %v438
      %v440 = vperm.slane %v436, %v439
      %v441 = vrot.slane %v409, 4
      %v442 = vsel %vm272, %v441, %v407
      %v444 = vunpack.c.l.s4 1983009808
      %v445 = vunpack.c.0.s8 %v444
      %v446 = vperm.slane %v442, %v445
      %v447 = vrot.slane %v446, 4
      %v448 = vsel %vm272, %v447, %v440
      %v450 = vunpack.c.l.s4 1934713408
      %v451 = vunpack.c.0.s8 %v450
      %v452 = vperm.slane %v448, %v451
      %v453 = vrot.slane %v452, 4
      %v454 = vsel %vm272, 0, %v453
      %v455 = vsel %vm272, %v434, %v427
      %v457 = vunpack.c.l.s4 1983009808
      %v458 = vunpack.c.0.s8 %v457
      %v459 = vperm.slane %v455, %v458
      %v460 = vrot.slane %v435, 4
      %v461 = vsel %vm272, %v460, %v433
      %v463 = vunpack.c.l.s4 1983009808
      %v464 = vunpack.c.0.s8 %v463
      %v465 = vperm.slane %v461, %v464
      %v466 = vrot.slane %v465, 4
      %v467 = vsel %vm272, %v466, %v459
      %v469 = vunpack.c.l.s4 1934713408
      %v470 = vunpack.c.0.s8 %v469
      %v471 = vperm.slane %v467, %v470
      %v472 = vrot.slane %v471, 4
      %v473 = vsel %vm272, 0, %v472
      %v476 = vpack.i.b16 %v471, %v452
      %v477 = vshrl.u32 %v452, 16
      %v478 = vshrl.u32 %v471, 16
      %v479 = vpack.i.b16 %v478, %v477
      %v482 = vpack.i.b16 %v473, %v454
      %v483 = vshrl.u32 %v454, 16
      %v484 = vshrl.u32 %v473, 16
      %v485 = vpack.i.b16 %v484, %v483
      %v486 = vld [vmem:[%s229] sm:$0xf]
      %488 = vrot.lane.b32.xlu0 %v486, 120
      %v489 = vpop.permute.xlu0 %488
      %490 = vrot.lane.b32.xlu0 %v486, 112
      %v491 = vpop.permute.xlu0 %490
      %492 = vrot.lane.b32.xlu0 %v486, 104
      %v493 = vpop.permute.xlu0 %492
      %v496 = vpack.i.b16 %v489, %v486
      %v497 = vshrl.u32 %v486, 16
      %v498 = vshrl.u32 %v489, 16
      %v499 = vpack.i.b16 %v498, %v497
      %v502 = vpack.i.b16 %v493, %v491
      %v503 = vshrl.u32 %v491, 16
      %v504 = vshrl.u32 %v493, 16
      %v505 = vpack.i.b16 %v504, %v503
      %v508 = vunpack.c.l.s4 1983009808
      %v509 = vunpack.c.0.s8 %v508
      %v510 = vperm.slane %v496, %v509
      %v513 = vunpack.c.l.s4 1983009808
      %v514 = vunpack.c.0.s8 %v513
      %v515 = vperm.slane %v502, %v514
      %v516 = vrot.slane %v515, 4
      %v517 = vsel %vm272, %v516, %v510
      %v518 = vrot.slane %v510, 4
      %v519 = vsel %vm272, %v515, %v518
      %v521 = vunpack.c.l.s4 1934713408
      %v522 = vunpack.c.0.s8 %v521
      %v523 = vperm.slane %v517, %v522
      %v525 = vunpack.c.l.s4 1934713408
      %v526 = vunpack.c.0.s8 %v525
      %v527 = vperm.slane %v519, %v526
      %v528 = vrot.slane %v523, 4
      %v529 = vsel %vm272, 0, %v528
      %v530 = vrot.slane %v527, 4
      %v531 = vsel %vm272, 0, %v530
      %v534 = vunpack.c.l.s4 1983009808
      %v535 = vunpack.c.0.s8 %v534
      %v536 = vperm.slane %v499, %v535
      %v539 = vunpack.c.l.s4 1983009808
      %v540 = vunpack.c.0.s8 %v539
      %v541 = vperm.slane %v505, %v540
      %v542 = vrot.slane %v541, 4
      %v543 = vsel %vm272, %v542, %v536
      %v544 = vrot.slane %v536, 4
      %v545 = vsel %vm272, %v541, %v544
      %v547 = vunpack.c.l.s4 1934713408
      %v548 = vunpack.c.0.s8 %v547
      %v549 = vperm.slane %v543, %v548
      %v551 = vunpack.c.l.s4 1934713408
      %v552 = vunpack.c.0.s8 %v551
      %v553 = vperm.slane %v545, %v552
      %v554 = vrot.slane %v549, 4
      %v555 = vsel %vm272, 0, %v554
      %v556 = vrot.slane %v553, 4
      %v557 = vsel %vm272, 0, %v556
      %v558 = vsel %vm272, %v530, %v523
      %v560 = vunpack.c.l.s4 1983009808
      %v561 = vunpack.c.0.s8 %v560
      %v562 = vperm.slane %v558, %v561
      %v563 = vrot.slane %v531, 4
      %v564 = vsel %vm272, %v563, %v529
      %v566 = vunpack.c.l.s4 1983009808
      %v567 = vunpack.c.0.s8 %v566
      %v568 = vperm.slane %v564, %v567
      %v569 = vrot.slane %v568, 4
      %v570 = vsel %vm272, %v569, %v562
      %v572 = vunpack.c.l.s4 1934713408
      %v573 = vunpack.c.0.s8 %v572
      %v574 = vperm.slane %v570, %v573
      %v575 = vrot.slane %v574, 4
      %v576 = vsel %vm272, 0, %v575
      %v577 = vsel %vm272, %v556, %v549
      %v579 = vunpack.c.l.s4 1983009808
      %v580 = vunpack.c.0.s8 %v579
      %v581 = vperm.slane %v577, %v580
      %v582 = vrot.slane %v557, 4
      %v583 = vsel %vm272, %v582, %v555
      %v585 = vunpack.c.l.s4 1983009808
      %v586 = vunpack.c.0.s8 %v585
      %v587 = vperm.slane %v583, %v586
      %v588 = vrot.slane %v587, 4
      %v589 = vsel %vm272, %v588, %v581
      %v591 = vunpack.c.l.s4 1934713408
      %v592 = vunpack.c.0.s8 %v591
      %v593 = vperm.slane %v589, %v592
      %v594 = vrot.slane %v593, 4
      %v595 = vsel %vm272, 0, %v594
      %v598 = vpack.i.b16 %v593, %v574
      %v599 = vshrl.u32 %v574, 16
      %v600 = vshrl.u32 %v593, 16
      %v601 = vpack.i.b16 %v600, %v599
      %v604 = vpack.i.b16 %v595, %v576
      %v605 = vshrl.u32 %v576, 16
      %v606 = vshrl.u32 %v595, 16
      %v607 = vpack.i.b16 %v606, %v605
      %vm608 = vcmask 64512
      %v610 = vsel %vm608, %v354, 0
      %v613 = vsel %vm608, %v476, 0
      %615 = vmatpush.bf16.xpose.msra.mxu0 0
      %616 = vmatpush.bf16.xpose.msra.mxu0 0
      %617 = vmatpush.bf16.xpose.msra.mxu0 0
      %618 = vmatpush.bf16.xpose.msra.mxu0 0
      %619 = vmatpush.bf16.xpose.msra.mxu0 0
      %620 = vmatpush.bf16.xpose.msra.mxu0 0
      %621 = vmatpush.bf16.xpose.msra.mxu0 0
      %622 = vmatpush.bf16.xpose.msra.mxu0 %v613
      %623 = vmatmul.bf16.gmra.mxu0 %v610
      %v624 = vpop.f32.mrf.mxu0
      %v625 = vadd.f32 0.0, %v624
      %v626 = vpop.f32.mrf.mxu0
      %627 = vdwg.mxu0
      %v629 = vsel %vm608, %v357, 0
      %v632 = vsel %vm608, %v479, 0
      %634 = vmatpush.bf16.xpose.msra.mxu0 0
      %635 = vmatpush.bf16.xpose.msra.mxu0 0
      %636 = vmatpush.bf16.xpose.msra.mxu0 0
      %637 = vmatpush.bf16.xpose.msra.mxu0 0
      %638 = vmatpush.bf16.xpose.msra.mxu0 0
      %639 = vmatpush.bf16.xpose.msra.mxu0 0
      %640 = vmatpush.bf16.xpose.msra.mxu0 0
      %641 = vmatpush.bf16.xpose.msra.mxu0 %v632
      %642 = vmatmul.bf16.gmra.mxu0 %v629
      %v643 = vpop.f32.mrf.mxu0
      %v644 = vadd.f32 0.0, %v643
      %v645 = vpop.f32.mrf.mxu0
      %646 = vdwg.mxu0
      %v648 = vsel %vm608, %v360, 0
      %v651 = vsel %vm608, %v482, 0
      %653 = vmatpush.bf16.xpose.msra.mxu0 0
      %654 = vmatpush.bf16.xpose.msra.mxu0 0
      %655 = vmatpush.bf16.xpose.msra.mxu0 0
      %656 = vmatpush.bf16.xpose.msra.mxu0 0
      %657 = vmatpush.bf16.xpose.msra.mxu0 0
      %658 = vmatpush.bf16.xpose.msra.mxu0 0
      %659 = vmatpush.bf16.xpose.msra.mxu0 0
      %660 = vmatpush.bf16.xpose.msra.mxu0 %v651
      %661 = vmatmul.bf16.gmra.mxu0 %v648
      %v662 = vpop.f32.mrf.mxu0
      %v663 = vadd.f32 0.0, %v662
      %v664 = vpop.f32.mrf.mxu0
      %665 = vdwg.mxu0
      %v667 = vsel %vm608, %v363, 0
      %v670 = vsel %vm608, %v485, 0
      %672 = vmatpush.bf16.xpose.msra.mxu0 0
      %673 = vmatpush.bf16.xpose.msra.mxu0 0
      %674 = vmatpush.bf16.xpose.msra.mxu0 0
      %675 = vmatpush.bf16.xpose.msra.mxu0 0
      %676 = vmatpush.bf16.xpose.msra.mxu0 0
      %677 = vmatpush.bf16.xpose.msra.mxu0 0
      %678 = vmatpush.bf16.xpose.msra.mxu0 0
      %679 = vmatpush.bf16.xpose.msra.mxu0 %v670
      %680 = vmatmul.bf16.gmra.mxu0 %v667
      %v681 = vpop.f32.mrf.mxu0
      %v682 = vadd.f32 0.0, %v681
      %v683 = vpop.f32.mrf.mxu0
      %684 = vdwg.mxu0
      %v685 = vsel %vm608, %v625, -inf
      %686 = vmax.xlane.f32.xlu0 %v685
      %v687 = vpop.xlane.xlu0 %686
      %v688 = vsel %vm608, %v644, -inf
      %689 = vmax.xlane.f32.xlu0 %v688
      %v690 = vpop.xlane.xlu0 %689
      %v691 = vsel %vm608, %v663, -inf
      %692 = vmax.xlane.f32.xlu0 %v691
      %v693 = vpop.xlane.xlu0 %692
      %v694 = vsel %vm608, %v682, -inf
      %695 = vmax.xlane.f32.xlu0 %v694
      %v696 = vpop.xlane.xlu0 %695
      %v697 = vsub.f32 %v625, %v687
      %v698 = vsub.f32 %v644, %v690
      %v699 = vsub.f32 %v663, %v693
      %v700 = vsub.f32 %v682, %v696
      %v701 = vmul.f32 %v697, 1.442695
      %v702 = vpow.pop %v701
      %v703 = vmul.f32 %v698, 1.442695
      %v704 = vpow.pop %v703
      %v705 = vmul.f32 %v699, 1.442695
      %v706 = vpow.pop %v705
      %v707 = vmul.f32 %v700, 1.442695
      %v708 = vpow.pop %v707
      %v709 = vsel %vm608, %v702, 0.0
      %710 = vadd.xlane.f32.xlu0 %v709
      %v711 = vpop.xlane.xlu0 %710
      %v712 = vsel %vm608, %v704, 0.0
      %713 = vadd.xlane.f32.xlu0 %v712
      %v714 = vpop.xlane.xlu0 %713
      %v715 = vsel %vm608, %v706, 0.0
      %716 = vadd.xlane.f32.xlu0 %v715
      %v717 = vpop.xlane.xlu0 %716
      %v718 = vsel %vm608, %v708, 0.0
      %719 = vadd.xlane.f32.xlu0 %v718
      %v720 = vpop.xlane.xlu0 %719
      %v721 = vrcp.pop %v711
      %v722 = vrcp.pop %v714
      %v723 = vrcp.pop %v717
      %v724 = vrcp.pop %v720
      %v725 = vmul.f32 %v702, %v721
      %v726 = vmul.f32 %v704, %v722
      %v727 = vmul.f32 %v706, %v723
      %v728 = vmul.f32 %v708, %v724
      %v729 = vpack.c.bf16 %v725, %v725
      %v730 = vpack.c.bf16 %v726, %v726
      %v731 = vpack.c.bf16 %v727, %v727
      %v732 = vpack.c.bf16 %v728, %v728
      %v734 = vsel %vm608, %v729, 0
      %vm736 = vcmask 1043456
      %v738 = vsel %vm736, %v598, 0
      %740 = vmatpush.bf16.msra.mxu0 0
      %741 = vmatpush.bf16.msra.mxu0 0
      %742 = vmatpush.bf16.msra.mxu0 0
      %743 = vmatpush.bf16.msra.mxu0 0
      %744 = vmatpush.bf16.msra.mxu0 0
      %745 = vmatpush.bf16.msra.mxu0 0
      %746 = vmatpush.bf16.msra.mxu0 0
      %747 = vmatpush.bf16.msra.mxu0 %v738
      %748 = vmatmul.bf16.gmra.mxu0 %v734
      %v749 = vpop.f32.mrf.mxu0
      %v750 = vadd.f32 0.0, %v749
      %v751 = vpop.f32.mrf.mxu0
      %752 = vdwg.mxu0
      %v754 = vsel %vm608, %v730, 0
      %v757 = vsel %vm736, %v601, 0
      %759 = vmatpush.bf16.msra.mxu0 0
      %760 = vmatpush.bf16.msra.mxu0 0
      %761 = vmatpush.bf16.msra.mxu0 0
      %762 = vmatpush.bf16.msra.mxu0 0
      %763 = vmatpush.bf16.msra.mxu0 0
      %764 = vmatpush.bf16.msra.mxu0 0
      %765 = vmatpush.bf16.msra.mxu0 0
      %766 = vmatpush.bf16.msra.mxu0 %v757
      %767 = vmatmul.bf16.gmra.mxu0 %v754
      %v768 = vpop.f32.mrf.mxu0
      %v769 = vadd.f32 0.0, %v768
      %v770 = vpop.f32.mrf.mxu0
      %771 = vdwg.mxu0
      %v773 = vsel %vm608, %v731, 0
      %v776 = vsel %vm736, %v604, 0
      %778 = vmatpush.bf16.msra.mxu0 0
      %779 = vmatpush.bf16.msra.mxu0 0
      %780 = vmatpush.bf16.msra.mxu0 0
      %781 = vmatpush.bf16.msra.mxu0 0
      %782 = vmatpush.bf16.msra.mxu0 0
      %783 = vmatpush.bf16.msra.mxu0 0
      %784 = vmatpush.bf16.msra.mxu0 0
      %785 = vmatpush.bf16.msra.mxu0 %v776
      %786 = vmatmul.bf16.gmra.mxu0 %v773
      %v787 = vpop.f32.mrf.mxu0
      %v788 = vadd.f32 0.0, %v787
      %v789 = vpop.f32.mrf.mxu0
      %790 = vdwg.mxu0
      %v792 = vsel %vm608, %v732, 0
      %v795 = vsel %vm736, %v607, 0
      %797 = vmatpush.bf16.msra.mxu0 0
      %798 = vmatpush.bf16.msra.mxu0 0
      %799 = vmatpush.bf16.msra.mxu0 0
      %800 = vmatpush.bf16.msra.mxu0 0
      %801 = vmatpush.bf16.msra.mxu0 0
      %802 = vmatpush.bf16.msra.mxu0 0
      %803 = vmatpush.bf16.msra.mxu0 0
      %804 = vmatpush.bf16.msra.mxu0 %v795
      %805 = vmatmul.bf16.gmra.mxu0 %v792
      %v806 = vpop.f32.mrf.mxu0
      %v807 = vadd.f32 0.0, %v806
      %v808 = vpop.f32.mrf.mxu0
      %809 = vdwg.mxu0
      %v810 = vrot.slane %v788, 4
      %vm811 = vcmask 1047556
      %v812 = vsel %vm811, %v810, %v750
      %v813 = vrot.slane %v750, 4
      %v814 = vsel %vm811, %v788, %v813
      %v816 = vunpack.c.l.s4 1983009808
      %v817 = vunpack.c.0.s8 %v816
      %v818 = vperm.slane %v812, %v817
      %v820 = vunpack.c.l.s4 1983009808
      %v821 = vunpack.c.0.s8 %v820
      %v822 = vperm.slane %v814, %v821
      %v823 = vrot.slane %v807, 4
      %v824 = vsel %vm811, %v823, %v769
      %v825 = vrot.slane %v769, 4
      %v826 = vsel %vm811, %v807, %v825
      %v828 = vunpack.c.l.s4 1983009808
      %v829 = vunpack.c.0.s8 %v828
      %v830 = vperm.slane %v824, %v829
      %v832 = vunpack.c.l.s4 1983009808
      %v833 = vunpack.c.0.s8 %v832
      %v834 = vperm.slane %v826, %v833
      %v835 = vrot.slane %v830, 4
      %v836 = vsel %vm811, %v835, %v818
      %v837 = vrot.slane %v818, 4
      %v838 = vsel %vm811, %v830, %v837
      %v840 = vunpack.c.l.s4 1934713408
      %v841 = vunpack.c.0.s8 %v840
      %v842 = vperm.slane %v836, %v841
      %v844 = vunpack.c.l.s4 1934713408
      %v845 = vunpack.c.0.s8 %v844
      %v846 = vperm.slane %v838, %v845
      %v847 = vrot.slane %v834, 4
      %v848 = vsel %vm811, %v847, %v822
      %v849 = vrot.slane %v822, 4
      %v850 = vsel %vm811, %v834, %v849
      %v852 = vunpack.c.l.s4 1934713408
      %v853 = vunpack.c.0.s8 %v852
      %v854 = vperm.slane %v848, %v853
      %v856 = vunpack.c.l.s4 1934713408
      %v857 = vunpack.c.0.s8 %v856
      %v858 = vperm.slane %v850, %v857
      %v859 = vrot.slane %v842, 4
      %v860 = vsel %vm811, 0.0, %v859
      %v861 = vrot.slane %v846, 4
      %v862 = vsel %vm811, 0.0, %v861
      %v863 = vrot.slane %v854, 4
      %v864 = vsel %vm811, 0.0, %v863
      %v865 = vrot.slane %v858, 4
      %v866 = vsel %vm811, 0.0, %v865
      %v867 = vsel %vm811, %v861, %v842
      %v869 = vunpack.c.l.s4 1983009808
      %v870 = vunpack.c.0.s8 %v869
      %v871 = vperm.slane %v867, %v870
      %v872 = vrot.slane %v862, 4
      %v873 = vsel %vm811, %v872, %v860
      %v875 = vunpack.c.l.s4 1983009808
      %v876 = vunpack.c.0.s8 %v875
      %v877 = vperm.slane %v873, %v876
      %v878 = vsel %vm811, %v865, %v854
      %v880 = vunpack.c.l.s4 1983009808
      %v881 = vunpack.c.0.s8 %v880
      %v882 = vperm.slane %v878, %v881
      %v883 = vrot.slane %v866, 4
      %v884 = vsel %vm811, %v883, %v864
      %v886 = vunpack.c.l.s4 1983009808
      %v887 = vunpack.c.0.s8 %v886
      %v888 = vperm.slane %v884, %v887
      %v889 = vrot.slane %v877, 4
      %v890 = vsel %vm811, %v889, %v871
      %v891 = vrot.slane %v871, 4
      %v892 = vsel %vm811, %v877, %v891
      %v894 = vunpack.c.l.s4 1934713408
      %v895 = vunpack.c.0.s8 %v894
      %v896 = vperm.slane %v890, %v895
      %v898 = vunpack.c.l.s4 1934713408
      %v899 = vunpack.c.0.s8 %v898
      %v900 = vperm.slane %v892, %v899
      %v901 = vrot.slane %v888, 4
      %v902 = vsel %vm811, %v901, %v882
      %v903 = vrot.slane %v882, 4
      %v904 = vsel %vm811, %v888, %v903
      %v906 = vunpack.c.l.s4 1934713408
      %v907 = vunpack.c.0.s8 %v906
      %v908 = vperm.slane %v902, %v907
      %v910 = vunpack.c.l.s4 1934713408
      %v911 = vunpack.c.0.s8 %v910
      %v912 = vperm.slane %v904, %v911
      %v913 = vrot.slane %v908, 4
      %v914 = vsel %vm811, %v913, %v896
      %v915 = vrot.slane %v896, 4
      %v916 = vsel %vm811, %v908, %v915
      %v917 = vrot.slane %v912, 4
      %v918 = vsel %vm811, %v917, %v900
      %v919 = vrot.slane %v900, 4
      %v920 = vsel %vm811, %v912, %v919
      %922 = vrot.lane.b32.xlu0 %v916, 8
      %v923 = vpop.permute.xlu0 %922
      %926 = vrot.lane.b32.xlu0 %v918, 16
      %v927 = vpop.permute.xlu0 %926
      %930 = vrot.lane.b32.xlu0 %v920, 24
      %v931 = vpop.permute.xlu0 %930
      %v933 = vsel %vm608, %v914, %v923
      %vm934 = vcmask 130048
      %v935 = vsel %vm934, %v933, %v927
      %vm936 = vcmask 195584
      %v937 = vsel %vm936, %v935, %v931
      %v938 = vpack.c.bf16 %v937, %v937
      %vm939 = vcmask 257024
      %940 = vst.msk [vmem:[%s236] sm:$0xf] %vm939, %v938
      %p941 = scmp.lt.s32.totalorder %s18, 1
      %s942 = scalar_select %p941, %s18, 1
      %p943 = scmp.lt.s32.totalorder %s19, 0
      %s944 = scalar_select %p943, %s19, 0
      %s945 = sadd.s32 %s944, %s942
      %s946 = smul.addr %s945, 4
      %s947 = scalar_lea.vmem %s3, %s946
      // Predicated region
      $region33: #{transformer_forward.29} parent=31 // pred_check
        %p948 = pneg %p126
      $region34: #{transformer_forward.29} parent=31 // pred_check_branch
        %950 = sbr.rel (%p948) target = $region36
      $region35: #{transformer_forward.29} parent=31 // pred_region
        _
      $region36: #{transformer_forward.29} parent=31 // pred_fallthru
        _
    $region32: #{transformer_forward.29} parent=5 // pred_fallthru
      _
    %p951 = scmp.le.s32.totalorder 2, %s9
    // Predicated region
    $region37: #{transformer_forward.29} parent=5 // pred_check
      %p952 = pneg %p951
    $region38: #{transformer_forward.29} parent=5 // pred_check_branch
      %954 = sbr.rel (%p952) target = $region40
    $region39: #{transformer_forward.29} parent=5 // pred_region
      %s955 = ssub.s32 %s9, 2
      // Predicated region
      $region41: #{transformer_forward.29} parent=39 // pred_check
        %p956 = pneg %p132
      $region42: #{transformer_forward.29} parent=39 // pred_check_branch
        %958 = sbr.rel (%p956) target = $region44
      $region43: #{transformer_forward.29} parent=39 // pred_region
        %p959 = scmp.lt.s32.totalorder %s20, 1
        %s960 = scalar_select %p959, %s20, 1
        %p961 = scmp.lt.s32.totalorder %s21, 0
        %s962 = scalar_select %p961, %s21, 0
        %s963 = sadd.s32 %s962, %s960
        %s964 = smul.addr %s963, 4
        %s965 = scalar_lea.vmem %s3, %s964
      $region44: #{transformer_forward.29} parent=39 // pred_fallthru
        _
    $region40: #{transformer_forward.29} parent=5 // pred_fallthru
      _
  $region6: #{transformer_forward.29} parent=0 // loop_footer
    %s13 = sadd.s32 1, %s9
  $region7: #{transformer_forward.29} parent=0 // loop_footer_branch
    %8 = sbr.rel target = $region3
  $region8: #{transformer_forward.29} parent=0 // loop_exit
    _

// kernel: transformer_forward.42
$region0: #{transformer_forward.42}
  #allocation0 [shape = 'u32[]', space=smem, size = 0x4, offset = 0x4, fixed_abs, tag = 'smem constant byte address 0x4 - core index']
  #allocation1 [shape = 'u32[72,128]{1,0:T(1,128)}', space=vmem, size = 0x9000, scoped, tag = 'internal scratch']
  #allocation2 [shape = 'f32[16,32]{1,0:T(8,128)}', space=vmem, size = 0x2000, scoped, tag = 'scratch operand']
  %s0 = inlined_call_operand.vmem [shape: bf16[16,32], index: 0, kind: input, shape index: {}]
  %s1 = inlined_call_operand.vmem [shape: bf16[2,32,32], index: 1, kind: input, shape index: {}]
  %s2 = inlined_call_operand.vmem [shape: f32[2,1,32], index: 2, kind: input, shape index: {}]
  %s3 = inlined_call_operand.vmem [shape: bf16[2,16,32], index: 3, kind: output, shape index: {}]
  %s4 = sld [smem:[#allocation0]]
  $region53: #{transformer_forward.42} parent=0
    _
  %s6 = ssub.s32 1, %s4
  %s7 = scalar_select 0, %s6, %s4
  loop: start=0, step=1, limit=4
  $region2: #{transformer_forward.42} parent=0 // loop_pre_header
    _
  $region3: #{transformer_forward.42} parent=0 // loop_header
    %s9 = sphi 0, %s13
    %p10 = scmp.ge.s32.totalorder %s9, 4
    %s16 = sphi 0, %s35
    %s17 = sphi 0, %s31
    %s18 = sphi 0, %s27
    %s19 = sphi 0, %s16
    %s20 = sphi 0, %s17
    %s21 = sphi 0, %s18
    %s22 = sphi 0, %s19
    %s23 = sphi 0, %s20
    %s24 = sphi 0, %s21
    %s40 = sphi 0, %s42
    %s43 = sphi 0, %s40
    %s44 = sphi 0, %s43
    %s60 = sphi 0, %s44
    %s68 = sphi 0, %s70
    %s71 = sphi 0, %s68
    %s72 = sphi 0, %s71
    %s88 = sphi 0, %s72
    %s94 = sphi 0, %s96
    %s97 = sphi 0, %s94
    %s98 = sphi 0, %s97
    %s114 = sphi 0, %s98
    %s122 = sphi 0, %s124
    %s125 = sphi 0, %s122
    %s126 = sphi 0, %s125
    %s142 = sphi 0, %s126
  $region4: #{transformer_forward.42} parent=0 // loop_header_branch
    %12 = sbr.rel (%p10) target = $region8
  $region5: #{transformer_forward.42} parent=0 // loop_body
    %s14 = ssub.s32 %s9, 1
    %s15 = ssub.s32 %s9, 2
    %s25 = sadd.s32 1, %s18
    %p26 = scmp.ge.s32.totalorder %s25, 1
    %s27 = scalar_select %p26, 0, %s25
    %s28 = sadd.s32 1, %s17
    %s29 = scalar_select %p26, %s28, %s17
    %p30 = scmp.ge.s32.totalorder %s29, 2
    %s31 = scalar_select %p30, 0, %s29
    %s32 = sadd.s32 1, %s16
    %s33 = scalar_select %p30, %s32, %s16
    %p34 = scmp.ge.s32.totalorder %s33, 1
    %s35 = scalar_select %p34, 0, %s33
    %s36 = ssub.s32 %s16, %s35
    %s37 = ssub.s32 %s18, %s27
    %s38 = sor.u32 %s36, %s37
    %p39 = scmp.eq.s32.totalorder %s38, 0
    %s41 = sadd.s32 %s40, 1
    %s42 = scalar_select %p39, %s40, %s41
    %p45 = pneg %p39
    %p46 = scmp.eq.s32.totalorder %s9, 1
    %p47 = por %p45, %p46
    %p48 = scmp.ne.s32.totalorder %s40, %s43
    %p49 = scmp.eq.s32.totalorder %s9, 0
    %p50 = por %p48, %p49
    %p51 = scmp.ne.s32.totalorder %s40, %s43
    %p52 = scmp.eq.s32.totalorder %s14, 1
    %p53 = por %p51, %p52
    %p54 = scmp.ne.s32.totalorder %s43, %s44
    %p55 = scmp.eq.s32.totalorder %s14, 0
    %p56 = por %p54, %p55
    %p57 = scmp.ne.s32.totalorder %s43, %s44
    %p58 = scmp.eq.s32.totalorder %s15, 1
    %p59 = por %p57, %p58
    %p61 = scmp.ne.s32.totalorder %s44, %s60
    %p62 = scmp.eq.s32.totalorder %s15, 0
    %p63 = por %p61, %p62
    %s64 = ssub.s32 %s17, %s31
    %s65 = ssub.s32 %s18, %s27
    %s66 = sor.u32 %s64, %s65
    %p67 = scmp.eq.s32.totalorder %s66, 0
    %s69 = sadd.s32 %s68, 1
    %s70 = scalar_select %p67, %s68, %s69
    %p73 = pneg %p67
    %p74 = scmp.eq.s32.totalorder %s9, 1
    %p75 = por %p73, %p74
    %p76 = scmp.ne.s32.totalorder %s68, %s71
    %p77 = scmp.eq.s32.totalorder %s9, 0
    %p78 = por %p76, %p77
    %p79 = scmp.ne.s32.totalorder %s68, %s71
    %p80 = scmp.eq.s32.totalorder %s14, 1
    %p81 = por %p79, %p80
    %p82 = scmp.ne.s32.totalorder %s71, %s72
    %p83 = scmp.eq.s32.totalorder %s14, 0
    %p84 = por %p82, %p83
    %p85 = scmp.ne.s32.totalorder %s71, %s72
    %p86 = scmp.eq.s32.totalorder %s15, 1
    %p87 = por %p85, %p86
    %p89 = scmp.ne.s32.totalorder %s72, %s88
    %p90 = scmp.eq.s32.totalorder %s15, 0
    %p91 = por %p89, %p90
    %s92 = ssub.s32 %s17, %s31
    %p93 = scmp.eq.s32.totalorder %s92, 0
    %s95 = sadd.s32 %s94, 1
    %s96 = scalar_select %p93, %s94, %s95
    %p99 = pneg %p93
    %p100 = scmp.eq.s32.totalorder %s9, 1
    %p101 = por %p99, %p100
    %p102 = scmp.ne.s32.totalorder %s94, %s97
    %p103 = scmp.eq.s32.totalorder %s9, 0
    %p104 = por %p102, %p103
    %p105 = scmp.ne.s32.totalorder %s94, %s97
    %p106 = scmp.eq.s32.totalorder %s14, 1
    %p107 = por %p105, %p106
    %p108 = scmp.ne.s32.totalorder %s97, %s98
    %p109 = scmp.eq.s32.totalorder %s14, 0
    %p110 = por %p108, %p109
    %p111 = scmp.ne.s32.totalorder %s97, %s98
    %p112 = scmp.eq.s32.totalorder %s15, 1
    %p113 = por %p111, %p112
    %p115 = scmp.ne.s32.totalorder %s98, %s114
    %p116 = scmp.eq.s32.totalorder %s15, 0
    %p117 = por %p115, %p116
    %s118 = ssub.s32 %s17, %s31
    %s119 = ssub.s32 %s16, %s35
    %s120 = sor.u32 %s118, %s119
    %p121 = scmp.eq.s32.totalorder %s120, 0
    %s123 = sadd.s32 %s122, 1
    %s124 = scalar_select %p121, %s122, %s123
    %p127 = pneg %p121
    %p128 = scmp.eq.s32.totalorder %s9, 1
    %p129 = por %p127, %p128
    %p130 = scmp.ne.s32.totalorder %s122, %s125
    %p131 = scmp.eq.s32.totalorder %s9, 0
    %p132 = por %p130, %p131
    %p133 = scmp.ne.s32.totalorder %s122, %s125
    %p134 = scmp.eq.s32.totalorder %s14, 1
    %p135 = por %p133, %p134
    %p136 = scmp.ne.s32.totalorder %s125, %s126
    %p137 = scmp.eq.s32.totalorder %s14, 0
    %p138 = por %p136, %p137
    %p139 = scmp.ne.s32.totalorder %s125, %s126
    %p140 = scmp.eq.s32.totalorder %s15, 1
    %p141 = por %p139, %p140
    %p143 = scmp.ne.s32.totalorder %s126, %s142
    %p144 = scmp.eq.s32.totalorder %s15, 0
    %p145 = por %p143, %p144
    %p146 = scmp.le.s32.totalorder 1, %s9
    %p147 = scmp.lt.s32.totalorder %s9, 3
    %p148 = pnand %p146, %p147
    %p149 = pneg %p148
    // Predicated region
    $region9: #{transformer_forward.42} parent=5 // pred_check
      _
    $region10: #{transformer_forward.42} parent=5 // pred_check_branch
      %151 = sbr.rel (%p148) target = $region12
    $region11: #{transformer_forward.42} parent=5 // pred_region
      %s152 = ssub.s32 %s9, 1
      // Predicated region
      $region13: #{transformer_forward.42} parent=11 // pred_check
        %p153 = pneg %p56
      $region14: #{transformer_forward.42} parent=11 // pred_check_branch
        %155 = sbr.rel (%p153) target = $region16
      $region15: #{transformer_forward.42} parent=11 // pred_region
        %s156 = smul.u32 2, %s19
        %p157 = scmp.lt.s32.totalorder %s156, 1
        %s158 = scalar_select %p157, %s156, 1
        %p159 = scmp.lt.s32.totalorder %s21, 0
        %s160 = scalar_select %p159, %s21, 0
        %s161 = sadd.s32 %s160, %s158
        %s162 = smul.addr %s161, 4
        %s163 = scalar_lea.vmem %s0, %s162
        %s164 = smul.u32 2, %s19
      $region16: #{transformer_forward.42} parent=11 // pred_fallthru
        _
    $region12: #{transformer_forward.42} parent=5 // pred_fallthru
      _
    %p165 = scmp.lt.s32.totalorder %s9, 2
    // Predicated region
    $region17: #{transformer_forward.42} parent=5 // pred_check
      %p166 = pneg %p165
    $region18: #{transformer_forward.42} parent=5 // pred_check_branch
      %168 = sbr.rel (%p166) target = $region20
    $region19: #{transformer_forward.42} parent=5 // pred_region
      // Predicated region
      $region21: #{transformer_forward.42} parent=19 // pred_check
        %p169 = pneg %p78
      $region22: #{transformer_forward.42} parent=19 // pred_check_branch
        %171 = sbr.rel (%p169) target = $region24
      $region23: #{transformer_forward.42} parent=19 // pred_region
        %s172 = smul.u32 4, %s18
        %p173 = scmp.lt.s32.totalorder %s17, 1
        %s174 = scalar_select %p173, %s17, 1
        %p175 = scmp.lt.s32.totalorder %s172, 3
        %s176 = scalar_select %p175, %s172, 3
        %s177 = smul.addr %s174, 4
        %s178 = sadd.s32 %s176, %s177
        %s179 = smul.addr %s178, 4
        %s180 = scalar_lea.vmem %s1, %s179
        %s181 = smul.u32 4, %s18
      $region24: #{transformer_forward.42} parent=19 // pred_fallthru
        _
      // Predicated region
      $region25: #{transformer_forward.42} parent=19 // pred_check
        %p182 = pneg %p104
      $region26: #{transformer_forward.42} parent=19 // pred_check_branch
        %184 = sbr.rel (%p182) target = $region28
      $region27: #{transformer_forward.42} parent=19 // pred_region
        %p185 = scmp.lt.s32.totalorder %s17, 1
        %s186 = scalar_select %p185, %s17, 1
        %s187 = scalar_lea.vmem %s2, %s186
      $region28: #{transformer_forward.42} parent=19 // pred_fallthru
        _
    $region20: #{transformer_forward.42} parent=5 // pred_fallthru
      _
    %p188 = scmp.le.s32.totalorder 1, %s9
    %p189 = scmp.lt.s32.totalorder %s9, 3
    %p190 = pnand %p188, %p189
    %p191 = pneg %p190
    // Predicated region
    $region29: #{transformer_forward.42} parent=5 // pred_check
      _
    $region30: #{transformer_forward.42} parent=5 // pred_check_branch
      %193 = sbr.rel (%p190) target = $region32
    $region31: #{transformer_forward.42} parent=5 // pred_region
      %s194 = ssub.s32 %s9, 1
      %s195 = smul.u32 2, %s19
      %p196 = scmp.lt.s32.totalorder %s195, 1
      %s197 = scalar_select %p196, %s195, 1
      %p198 = scmp.lt.s32.totalorder %s21, 0
      %s199 = scalar_select %p198, %s21, 0
      %s200 = sadd.s32 %s199, %s197
      %s201 = smul.addr %s200, 4
      %s202 = scalar_lea.vmem %s0, %s201
      %p203 = pneg %p56
      %p204 = pneg %p53
      %s205 = smul.u32 4, %s21
      %p206 = scmp.lt.s32.totalorder %s20, 1
      %s207 = scalar_select %p206, %s20, 1
      %p208 = scmp.lt.s32.totalorder %s205, 3
      %s209 = scalar_select %p208, %s205, 3
      %s210 = smul.addr %s207, 4
      %s211 = sadd.s32 %s209, %s210
      %s212 = smul.addr %s211, 4
      %s213 = scalar_lea.vmem %s1, %s212
      %p214 = pneg %p84
      %p215 = pneg %p81
      %p216 = scmp.lt.s32.totalorder %s20, 1
      %s217 = scalar_select %p216, %s20, 1
      %s218 = scalar_lea.vmem %s2, %s217
      %p219 = pneg %p110
      %p220 = pneg %p107
      %p221 = pneg %p138
      %p222 = pneg %p135
      %s223 = smul.u32 2, %s19
      %p224 = scmp.lt.s32.totalorder %s20, 1
      %s225 = scalar_select %p224, %s20, 1
      %p226 = scmp.lt.s32.totalorder %s223, 1
      %s227 = scalar_select %p226, %s223, 1
      %s228 = smul.addr %s225, 2
      %s229 = sadd.s32 %s227, %s228
      %s230 = smul.addr %s229, 4
      %s231 = scalar_lea.vmem %s3, %s230
      %s232 = smul.u32 2, %s19
      %p233 = scmp.lt.s32.totalorder %s232, 1
      %s234 = scalar_select %p233, %s232, 1
      %p235 = scmp.lt.s32.totalorder %s21, 0
      %s236 = scalar_select %p235, %s21, 0
      %s237 = sadd.s32 %s236, %s234
      %s238 = smul.addr %s237, 4
      %s239 = scalar_lea.vmem %s0, %s238
      %s240 = smul.u32 2, %s19
      %s241 = smul.u32 4, %s21
      %p242 = scmp.lt.s32.totalorder %s20, 1
      %s243 = scalar_select %p242, %s20, 1
      %p244 = scmp.lt.s32.totalorder %s241, 3
      %s245 = scalar_select %p244, %s241, 3
      %s246 = smul.addr %s243, 4
      %s247 = sadd.s32 %s245, %s246
      %s248 = smul.addr %s247, 4
      %s249 = scalar_lea.vmem %s1, %s248
      %s250 = smul.u32 4, %s21
      %p251 = scmp.lt.s32.totalorder %s20, 1
      %s252 = scalar_select %p251, %s20, 1
      %s253 = scalar_lea.vmem %s2, %s252
      %s254 = smul.u32 2, %s19
      %p255 = scmp.lt.s32.totalorder %s20, 1
      %s256 = scalar_select %p255, %s20, 1
      %p257 = scmp.lt.s32.totalorder %s254, 1
      %s258 = scalar_select %p257, %s254, 1
      %s259 = smul.addr %s256, 2
      %s260 = sadd.s32 %s258, %s259
      %s261 = smul.addr %s260, 4
      %s262 = scalar_lea.vmem %s3, %s261
      %s263 = smul.u32 2, %s19
      %p265 = scmp.eq.s32.totalorder %s21, 0
      // Predicated region
      $region33: #{transformer_forward.42} parent=31 // pred_check
        %p266 = pneg %p265
      $region34: #{transformer_forward.42} parent=31 // pred_check_branch
        %268 = sbr.rel (%p266) target = $region36
      $region35: #{transformer_forward.42} parent=31 // pred_region
        %vm269 = vcmask 261120
        %270 = vst.msk [vmem:[#allocation2] sm:$0xff] %vm269, 0.0
        %271 = vst.msk [vmem:[#allocation2 + $0x8] sm:$0xff] %vm269, 0.0
      $region36: #{transformer_forward.42} parent=31 // pred_fallthru
        _
      %v272 = vld [vmem:[%s249] sm:$0xf]
      %v273 = vld [vmem:[%s249 + $0x4] sm:$0xf]
      %v274 = vld [vmem:[%s249 + $0x8] sm:$0xf]
      %v275 = vld [vmem:[%s249 + $0xc] sm:$0xf]
      %v276 = vld [vmem:[#allocation2] sm:$0xff]
      %v277 = vld [vmem:[#allocation2 + $0x8] sm:$0xff]
      %v278 = vld [vmem:[%s239] sm:$0xf]
      %v279 = vld [vmem:[%s239 + $0x4] sm:$0xf]
      %v282 = vunpack.c.l.b16 %v278
      %v283 = vunpack.c.l.b16 %v279
      %v284 = vpack.c.b16 %v283, %v282
      %v289 = vunpack.c.l.b16 %v272
      %v290 = vunpack.c.l.b16 %v273
      %v291 = vunpack.c.l.b16 %v274
      %v292 = vunpack.c.l.b16 %v275
      %v293 = vpack.c.b16 %v290, %v289
      %v294 = vpack.c.b16 %v292, %v291
      %vm297 = vcmask 261120
      %v299 = vsel %vm297, %v284, 0
      %301 = vmatpush.bf16.msra.mxu0 0
      %302 = vmatpush.bf16.msra.mxu0 0
      %303 = vmatpush.bf16.msra.mxu0 0
      %304 = vmatpush.bf16.msra.mxu0 0
      %305 = vmatpush.bf16.msra.mxu0 0
      %306 = vmatpush.bf16.msra.mxu0 0
      %307 = vmatpush.bf16.msra.mxu0 %v294
      %308 = vmatpush.bf16.msra.mxu0 %v293
      %309 = vmatmul.bf16.gmra.mxu0 %v299
      %v310 = vpop.f32.mrf.mxu0
      %v311 = vadd.f32 0.0, %v310
      %v312 = vpop.f32.mrf.mxu0
      %v313 = vadd.f32 0.0, %v312
      %314 = vdwg.mxu0
      %v315 = vadd.f32 %v276, %v311
      %v316 = vadd.f32 %v277, %v313
      %317 = vst.msk [vmem:[#allocation2] sm:$0xff] %vm297, %v315
      %318 = vst.msk [vmem:[#allocation2 + $0x8] sm:$0xff] %vm297, %v316
      // Predicated region
      $region37: #{transformer_forward.42} parent=31 // pred_check
        %p319 = pneg %p265
      $region38: #{transformer_forward.42} parent=31 // pred_check_branch
        %321 = sbr.rel (%p319) target = $region40
      $region39: #{transformer_forward.42} parent=31 // pred_region
        %v322 = vld [vmem:[#allocation2] sm:$0xff]
        %v323 = vld [vmem:[#allocation2 + $0x8] sm:$0xff]
        %v324 = vld [vmem:[%s253] sm:$0x1]
        %v326 = vperm.slane %v324, 0
        %v328 = vadd.f32 %v322, %v326
        %v329 = vadd.f32 %v323, %v326
        %v330 = vpack.c.bf16 %v328, %v328
        %v331 = vpack.c.bf16 %v329, %v329
        %vm332 = vcmask 257024
        %333 = vst.msk [vmem:[%s262] sm:$0xf] %vm332, %v330
        %334 = vst.msk [vmem:[%s262 + $0x4] sm:$0xf] %vm332, %v331
      $region40: #{transformer_forward.42} parent=31 // pred_fallthru
        _
      %s335 = smul.u32 2, %s19
      %p336 = scmp.lt.s32.totalorder %s20, 1
      %s337 = scalar_select %p336, %s20, 1
      %p338 = scmp.lt.s32.totalorder %s335, 1
      %s339 = scalar_select %p338, %s335, 1
      %s340 = smul.addr %s337, 2
      %s341 = sadd.s32 %s339, %s340
      %s342 = smul.addr %s341, 4
      %s343 = scalar_lea.vmem %s3, %s342
      // Predicated region
      $region41: #{transformer_forward.42} parent=31 // pred_check
        %p344 = pneg %p135
      $region42: #{transformer_forward.42} parent=31 // pred_check_branch
        %346 = sbr.rel (%p344) target = $region44
      $region43: #{transformer_forward.42} parent=31 // pred_region
        %s347 = smul.u32 2, %s19
      $region44: #{transformer_forward.42} parent=31 // pred_fallthru
        _
    $region32: #{transformer_forward.42} parent=5 // pred_fallthru
      _
    %p348 = scmp.le.s32.totalorder 2, %s9
    // Predicated region
    $region45: #{transformer_forward.42} parent=5 // pred_check
      %p349 = pneg %p348
    $region46: #{transformer_forward.42} parent=5 // pred_check_branch
      %351 = sbr.rel (%p349) target = $region48
    $region47: #{transformer_forward.42} parent=5 // pred_region
      %s352 = ssub.s32 %s9, 2
      // Predicated region
      $region49: #{transformer_forward.42} parent=47 // pred_check
        %p353 = pneg %p141
      $region50: #{transformer_forward.42} parent=47 // pred_check_branch
        %355 = sbr.rel (%p353) target = $region52
      $region51: #{transformer_forward.42} parent=47 // pred_region
        %s356 = smul.u32 2, %s22
        %p357 = scmp.lt.s32.totalorder %s23, 1
        %s358 = scalar_select %p357, %s23, 1
        %p359 = scmp.lt.s32.totalorder %s356, 1
        %s360 = scalar_select %p359, %s356, 1
        %s361 = smul.addr %s358, 2
        %s362 = sadd.s32 %s360, %s361
        %s363 = smul.addr %s362, 4
        %s364 = scalar_lea.vmem %s3, %s363
      $region52: #{transformer_forward.42} parent=47 // pred_fallthru
        _
    $region48: #{transformer_forward.42} parent=5 // pred_fallthru
      _
  $region6: #{transformer_forward.42} parent=0 // loop_footer
    %s13 = sadd.s32 1, %s9
  $region7: #{transformer_forward.42} parent=0 // loop_footer_branch
    %8 = sbr.rel target = $region3
  $region8: #{transformer_forward.42} parent=0 // loop_exit
    _

// kernel: transformer_forward.32
$region0: #{transformer_forward.32}
  #allocation0 [shape = 'u32[]', space=smem, size = 0x4, offset = 0x4, fixed_abs, tag = 'smem constant byte address 0x4 - core index']
  #allocation1 [shape = 'u32[72,128]{1,0:T(1,128)}', space=vmem, size = 0x9000, scoped, tag = 'internal scratch']
  #allocation2 [shape = 'f32[16,32]{1,0:T(8,128)}', space=vmem, size = 0x2000, scoped, tag = 'scratch operand']
  %s0 = inlined_call_operand.vmem [shape: bf16[16,128], index: 0, kind: input, shape index: {}]
  %s1 = inlined_call_operand.vmem [shape: bf16[128,32], index: 1, kind: input, shape index: {}]
  %s2 = inlined_call_operand.vmem [shape: f32[1,32], index: 2, kind: input, shape index: {}]
  %s3 = inlined_call_operand.vmem [shape: bf16[16,32], index: 3, kind: input, shape index: {}]
  %s4 = inlined_call_operand.vmem [shape: f32[1,32], index: 4, kind: input, shape index: {}]
  %s5 = inlined_call_operand.vmem [shape: f32[1,32], index: 5, kind: input, shape index: {}]
  %s6 = inlined_call_operand.vmem [shape: bf16[16,32], index: 6, kind: output, shape index: {}]
  %s7 = sld [smem:[#allocation0]]
  $region42: #{transformer_forward.32} parent=0
    _
  %s9 = ssub.s32 1, %s7
  %s10 = scalar_select 0, %s9, %s7
  // Predicated region
  $region2: #{transformer_forward.32} parent=0 // pred_check
    _
  $region3: #{transformer_forward.32} parent=0 // pred_check_branch
    %12 = sbr.rel (0) target = $region5
  $region4: #{transformer_forward.32} parent=0 // pred_region
    _
  $region5: #{transformer_forward.32} parent=0 // pred_fallthru
    _
  // Predicated region
  $region6: #{transformer_forward.32} parent=0 // pred_check
    _
  $region7: #{transformer_forward.32} parent=0 // pred_check_branch
    %14 = sbr.rel (0) target = $region9
  $region8: #{transformer_forward.32} parent=0 // pred_region
    _
  $region9: #{transformer_forward.32} parent=0 // pred_fallthru
    _
  // Predicated region
  $region10: #{transformer_forward.32} parent=0 // pred_check
    _
  $region11: #{transformer_forward.32} parent=0 // pred_check_branch
    %16 = sbr.rel (0) target = $region13
  $region12: #{transformer_forward.32} parent=0 // pred_region
    _
  $region13: #{transformer_forward.32} parent=0 // pred_fallthru
    _
  // Predicated region
  $region14: #{transformer_forward.32} parent=0 // pred_check
    _
  $region15: #{transformer_forward.32} parent=0 // pred_check_branch
    %18 = sbr.rel (0) target = $region17
  $region16: #{transformer_forward.32} parent=0 // pred_region
    _
  $region17: #{transformer_forward.32} parent=0 // pred_fallthru
    _
  // Predicated region
  $region18: #{transformer_forward.32} parent=0 // pred_check
    _
  $region19: #{transformer_forward.32} parent=0 // pred_check_branch
    %20 = sbr.rel (0) target = $region21
  $region20: #{transformer_forward.32} parent=0 // pred_region
    _
  $region21: #{transformer_forward.32} parent=0 // pred_fallthru
    _
  // Predicated region
  $region22: #{transformer_forward.32} parent=0 // pred_check
    _
  $region23: #{transformer_forward.32} parent=0 // pred_check_branch
    %22 = sbr.rel (0) target = $region25
  $region24: #{transformer_forward.32} parent=0 // pred_region
    _
  $region25: #{transformer_forward.32} parent=0 // pred_fallthru
    _
  %p23 = scmp.eq.s32.totalorder 0, 0
  // Predicated region
  $region26: #{transformer_forward.32} parent=0 // pred_check
    %p24 = pneg %p23
  $region27: #{transformer_forward.32} parent=0 // pred_check_branch
    %26 = sbr.rel (%p24) target = $region29
  $region28: #{transformer_forward.32} parent=0 // pred_region
    %vm27 = vcmask 261120
    %28 = vst.msk [vmem:[#allocation2] sm:$0xff] %vm27, 0.0
    %29 = vst.msk [vmem:[#allocation2 + $0x8] sm:$0xff] %vm27, 0.0
  $region29: #{transformer_forward.32} parent=0 // pred_fallthru
    _
  %v30 = vld [vmem:[%s1] sm:$0xf]
  %v31 = vld [vmem:[%s1 + $0x4] sm:$0xf]
  %v32 = vld [vmem:[%s1 + $0x8] sm:$0xf]
  %v33 = vld [vmem:[%s1 + $0xc] sm:$0xf]
  %v34 = vld [vmem:[%s1 + $0x10] sm:$0xf]
  %v35 = vld [vmem:[%s1 + $0x14] sm:$0xf]
  %v36 = vld [vmem:[%s1 + $0x18] sm:$0xf]
  %v37 = vld [vmem:[%s1 + $0x1c] sm:$0xf]
  %v38 = vld [vmem:[%s1 + $0x20] sm:$0xf]
  %v39 = vld [vmem:[%s1 + $0x24] sm:$0xf]
  %v40 = vld [vmem:[%s1 + $0x28] sm:$0xf]
  %v41 = vld [vmem:[%s1 + $0x2c] sm:$0xf]
  %v42 = vld [vmem:[%s1 + $0x30] sm:$0xf]
  %v43 = vld [vmem:[%s1 + $0x34] sm:$0xf]
  %v44 = vld [vmem:[%s1 + $0x38] sm:$0xf]
  %v45 = vld [vmem:[%s1 + $0x3c] sm:$0xf]
  %v46 = vld [vmem:[#allocation2] sm:$0xff]
  %v47 = vld [vmem:[#allocation2 + $0x8] sm:$0xff]
  %v48 = vld [vmem:[%s0] sm:$0xf]
  %v49 = vld [vmem:[%s0 + $0x4] sm:$0xf]
  %v52 = vunpack.c.l.b16 %v48
  %v53 = vunpack.c.l.b16 %v49
  %v54 = vpack.c.b16 %v53, %v52
  %v72 = vunpack.c.l.b16 %v30
  %v73 = vunpack.c.l.b16 %v31
  %v74 = vunpack.c.l.b16 %v32
  %v75 = vunpack.c.l.b16 %v33
  %v76 = vunpack.c.l.b16 %v34
  %v77 = vunpack.c.l.b16 %v35
  %v78 = vunpack.c.l.b16 %v36
  %v79 = vunpack.c.l.b16 %v37
  %v80 = vunpack.c.l.b16 %v38
  %v81 = vunpack.c.l.b16 %v39
  %v82 = vunpack.c.l.b16 %v40
  %v83 = vunpack.c.l.b16 %v41
  %v84 = vunpack.c.l.b16 %v42
  %v85 = vunpack.c.l.b16 %v43
  %v86 = vunpack.c.l.b16 %v44
  %v87 = vunpack.c.l.b16 %v45
  %v88 = vpack.c.b16 %v73, %v72
  %v89 = vpack.c.b16 %v75, %v74
  %v90 = vpack.c.b16 %v77, %v76
  %v91 = vpack.c.b16 %v79, %v78
  %v92 = vpack.c.b16 %v81, %v80
  %v93 = vpack.c.b16 %v83, %v82
  %v94 = vpack.c.b16 %v85, %v84
  %v95 = vpack.c.b16 %v87, %v86
  %104 = vmatpush.bf16.msra.mxu0 %v95
  %105 = vmatpush.bf16.msra.mxu0 %v94
  %106 = vmatpush.bf16.msra.mxu0 %v93
  %107 = vmatpush.bf16.msra.mxu0 %v92
  %108 = vmatpush.bf16.msra.mxu0 %v91
  %109 = vmatpush.bf16.msra.mxu0 %v90
  %110 = vmatpush.bf16.msra.mxu0 %v89
  %111 = vmatpush.bf16.msra.mxu0 %v88
  %112 = vmatmul.bf16.gmra.mxu0 %v54
  %v113 = vpop.f32.mrf.mxu0
  %v114 = vadd.f32 0.0, %v113
  %v115 = vpop.f32.mrf.mxu0
  %v116 = vadd.f32 0.0, %v115
  %117 = vdwg.mxu0
  %v118 = vadd.f32 %v46, %v114
  %v119 = vadd.f32 %v47, %v116
  %vm120 = vcmask 261120
  %121 = vst.msk [vmem:[#allocation2] sm:$0xff] %vm120, %v118
  %122 = vst.msk [vmem:[#allocation2 + $0x8] sm:$0xff] %vm120, %v119
  // Predicated region
  $region30: #{transformer_forward.32} parent=0 // pred_check
    %p123 = pneg %p23
  $region31: #{transformer_forward.32} parent=0 // pred_check_branch
    %125 = sbr.rel (%p123) target = $region33
  $region32: #{transformer_forward.32} parent=0 // pred_region
    %v126 = vld [vmem:[#allocation2] sm:$0xff]
    %v127 = vld [vmem:[#allocation2 + $0x8] sm:$0xff]
    %v128 = vld [vmem:[%s2] sm:$0x1]
    %v130 = vperm.slane %v128, 0
    %v132 = vadd.f32 %v126, %v130
    %v133 = vadd.f32 %v127, %v130
    %v134 = vld [vmem:[%s3] sm:$0xf]
    %v135 = vld [vmem:[%s3 + $0x4] sm:$0xf]
    %v136 = vunpack.c.l.bf16 %v134
    %v137 = vunpack.c.l.bf16 %v135
    %v138 = vadd.f32 %v132, %v136
    %v139 = vadd.f32 %v133, %v137
    %v140 = vsel %vm120, %v138, 0.0
    %141 = vadd.xlane.f32.xlu0 %v140
    %v142 = vpop.xlane.xlu0 %141
    %v143 = vsel %vm120, %v139, 0.0
    %144 = vadd.xlane.f32.xlu0 %v143
    %v145 = vpop.xlane.xlu0 %144
    %v146 = vrcp.pop 32.0
    %v147 = vmul.f32 32.0, %v146
    %v148 = vsub.f32 1.0, %v147
    %v149 = vmul.f32 %v146, %v148
    %v150 = vadd.f32 %v146, %v149
    %vm151 = vweird.f32 %v146
    %v152 = vsel %vm151, %v146, %v150
    %v153 = vmul.f32 %v142, %v152
    %v154 = vmul.f32 %v145, %v152
    %v155 = vsub.f32 %v138, %v153
    %v156 = vsub.f32 %v139, %v154
    %v157 = vmul.f32 %v155, %v155
    %v158 = vmul.f32 %v156, %v156
    %v159 = vsel %vm120, %v157, 0.0
    %160 = vadd.xlane.f32.xlu0 %v159
    %v161 = vpop.xlane.xlu0 %160
    %v162 = vsel %vm120, %v158, 0.0
    %163 = vadd.xlane.f32.xlu0 %v162
    %v164 = vpop.xlane.xlu0 %163
    %v165 = vmul.f32 %v161, %v152
    %v166 = vmul.f32 %v164, %v152
    %v167 = vadd.f32 %v165, 1e-05
    %v168 = vadd.f32 %v166, 1e-05
    %v169 = vrsqrt.pop %v167
    %v170 = vmul.f32 %v169, %v167
    %v171 = vmul.f32 %v170, %v169
    %v172 = vmul.f32 0.5, %v171
    %v173 = vsub.f32 1.5, %v172
    %v174 = vmul.f32 %v169, %v173
    %vm175 = vweird.f32 %v167
    %vm176 = vweird.f32 %v169
    %vm177 = vmor %vm175, %vm176
    %v178 = vsel %vm177, %v169, %v174
    %v179 = vrsqrt.pop %v168
    %v180 = vmul.f32 %v179, %v168
    %v181 = vmul.f32 %v180, %v179
    %v182 = vmul.f32 0.5, %v181
    %v183 = vsub.f32 1.5, %v182
    %v184 = vmul.f32 %v179, %v183
    %vm185 = vweird.f32 %v168
    %vm186 = vweird.f32 %v179
    %vm187 = vmor %vm185, %vm186
    %v188 = vsel %vm187, %v179, %v184
    %v189 = vmul.f32 %v155, %v178
    %v190 = vmul.f32 %v156, %v188
    %v191 = vld [vmem:[%s4] sm:$0x1]
    %v193 = vperm.slane %v191, 0
    %v195 = vmul.f32 %v189, %v193
    %v196 = vmul.f32 %v190, %v193
    %v197 = vld [vmem:[%s5] sm:$0x1]
    %v199 = vperm.slane %v197, 0
    %v201 = vadd.f32 %v195, %v199
    %v202 = vadd.f32 %v196, %v199
    %v203 = vpack.c.bf16 %v201, %v201
    %v204 = vpack.c.bf16 %v202, %v202
    %vm205 = vcmask 257024
    %206 = vst.msk [vmem:[%s6] sm:$0xf] %vm205, %v203
    %207 = vst.msk [vmem:[%s6 + $0x4] sm:$0xf] %vm205, %v204
  $region33: #{transformer_forward.32} parent=0 // pred_fallthru
    _
  // Predicated region
  $region34: #{transformer_forward.32} parent=0 // pred_check
    _
  $region35: #{transformer_forward.32} parent=0 // pred_check_branch
    %209 = sbr.rel (0) target = $region37
  $region36: #{transformer_forward.32} parent=0 // pred_region
    _
  $region37: #{transformer_forward.32} parent=0 // pred_fallthru
    _
  // Predicated region
  $region38: #{transformer_forward.32} parent=0 // pred_check
    _
  $region39: #{transformer_forward.32} parent=0 // pred_check_branch
    %211 = sbr.rel (0) target = $region41
  $region40: #{transformer_forward.32} parent=0 // pred_region
    _
  $region41: #{transformer_forward.32} parent=0 // pred_fallthru
    _

// kernel: transformer_forward.39
$region0: #{transformer_forward.39}
  #allocation0 [shape = 'u32[]', space=smem, size = 0x4, offset = 0x4, fixed_abs, tag = 'smem constant byte address 0x4 - core index']
  #allocation1 [shape = 'u32[72,128]{1,0:T(1,128)}', space=vmem, size = 0x9000, scoped, tag = 'internal scratch']
  %s0 = inlined_call_operand.vmem [shape: bf16[3,2,8,32], index: 0, kind: input, shape index: {}, may-alias: {0,1,2}]
  %s1 = inlined_call_operand.vmem [shape: bf16[3,2,8,32], index: 1, kind: input, shape index: {}, may-alias: {0,1,2}]
  %s2 = inlined_call_operand.vmem [shape: bf16[3,2,8,32], index: 2, kind: input, shape index: {}, may-alias: {0,1,2}]
  %s3 = inlined_call_operand.vmem [shape: f32[8,8], index: 3, kind: input, shape index: {}]
  %s4 = inlined_call_operand.vmem [shape: bf16[2,8,32], index: 4, kind: output, shape index: {}]
  %s5 = sld [smem:[#allocation0]]
  $region49: #{transformer_forward.39} parent=0
    _
  %s7 = ssub.s32 1, %s5
  %s8 = scalar_select 0, %s7, %s5
  loop: start=0, step=1, limit=4
  $region2: #{transformer_forward.39} parent=0 // loop_pre_header
    _
  $region3: #{transformer_forward.39} parent=0 // loop_header
    %s10 = sphi 0, %s14
    %p11 = scmp.ge.s32.totalorder %s10, 4
    %s17 = sphi 0, %s29
    %s18 = sphi 0, %s25
    %s19 = sphi 0, %s17
    %s20 = sphi 0, %s18
    %s21 = sphi 0, %s19
    %s22 = sphi 0, %s20
    %s34 = sphi 0, %s36
    %s37 = sphi 0, %s34
    %s38 = sphi 0, %s37
    %s54 = sphi 0, %s38
    %s60 = sphi 0, %s62
    %s63 = sphi 0, %s60
    %s64 = sphi 0, %s63
    %s80 = sphi 0, %s64
    %s86 = sphi 0, %s88
    %s89 = sphi 0, %s86
    %s90 = sphi 0, %s89
    %s106 = sphi 0, %s90
    %s112 = sphi 0, %s114
    %s115 = sphi 0, %s112
    %s116 = sphi 0, %s115
    %s132 = sphi 0, %s116
    %s140 = sphi 0, %s142
    %s143 = sphi 0, %s140
    %s144 = sphi 0, %s143
    %s160 = sphi 0, %s144
  $region4: #{transformer_forward.39} parent=0 // loop_header_branch
    %13 = sbr.rel (%p11) target = $region8
  $region5: #{transformer_forward.39} parent=0 // loop_body
    %s15 = ssub.s32 %s10, 1
    %s16 = ssub.s32 %s10, 2
    %s23 = sadd.s32 1, %s18
    %p24 = scmp.ge.s32.totalorder %s23, 1
    %s25 = scalar_select %p24, 0, %s23
    %s26 = sadd.s32 1, %s17
    %s27 = scalar_select %p24, %s26, %s17
    %p28 = scmp.ge.s32.totalorder %s27, 2
    %s29 = scalar_select %p28, 0, %s27
    %s30 = ssub.s32 %s17, %s29
    %s31 = ssub.s32 %s18, %s25
    %s32 = sor.u32 %s30, %s31
    %p33 = scmp.eq.s32.totalorder %s32, 0
    %s35 = sadd.s32 %s34, 1
    %s36 = scalar_select %p33, %s34, %s35
    %p39 = pneg %p33
    %p40 = scmp.eq.s32.totalorder %s10, 1
    %p41 = por %p39, %p40
    %p42 = scmp.ne.s32.totalorder %s34, %s37
    %p43 = scmp.eq.s32.totalorder %s10, 0
    %p44 = por %p42, %p43
    %p45 = scmp.ne.s32.totalorder %s34, %s37
    %p46 = scmp.eq.s32.totalorder %s15, 1
    %p47 = por %p45, %p46
    %p48 = scmp.ne.s32.totalorder %s37, %s38
    %p49 = scmp.eq.s32.totalorder %s15, 0
    %p50 = por %p48, %p49
    %p51 = scmp.ne.s32.totalorder %s37, %s38
    %p52 = scmp.eq.s32.totalorder %s16, 1
    %p53 = por %p51, %p52
    %p55 = scmp.ne.s32.totalorder %s38, %s54
    %p56 = scmp.eq.s32.totalorder %s16, 0
    %p57 = por %p55, %p56
    %s58 = ssub.s32 %s17, %s29
    %p59 = scmp.eq.s32.totalorder %s58, 0
    %s61 = sadd.s32 %s60, 1
    %s62 = scalar_select %p59, %s60, %s61
    %p65 = pneg %p59
    %p66 = scmp.eq.s32.totalorder %s10, 1
    %p67 = por %p65, %p66
    %p68 = scmp.ne.s32.totalorder %s60, %s63
    %p69 = scmp.eq.s32.totalorder %s10, 0
    %p70 = por %p68, %p69
    %p71 = scmp.ne.s32.totalorder %s60, %s63
    %p72 = scmp.eq.s32.totalorder %s15, 1
    %p73 = por %p71, %p72
    %p74 = scmp.ne.s32.totalorder %s63, %s64
    %p75 = scmp.eq.s32.totalorder %s15, 0
    %p76 = por %p74, %p75
    %p77 = scmp.ne.s32.totalorder %s63, %s64
    %p78 = scmp.eq.s32.totalorder %s16, 1
    %p79 = por %p77, %p78
    %p81 = scmp.ne.s32.totalorder %s64, %s80
    %p82 = scmp.eq.s32.totalorder %s16, 0
    %p83 = por %p81, %p82
    %s84 = ssub.s32 %s17, %s29
    %p85 = scmp.eq.s32.totalorder %s84, 0
    %s87 = sadd.s32 %s86, 1
    %s88 = scalar_select %p85, %s86, %s87
    %p91 = pneg %p85
    %p92 = scmp.eq.s32.totalorder %s10, 1
    %p93 = por %p91, %p92
    %p94 = scmp.ne.s32.totalorder %s86, %s89
    %p95 = scmp.eq.s32.totalorder %s10, 0
    %p96 = por %p94, %p95
    %p97 = scmp.ne.s32.totalorder %s86, %s89
    %p98 = scmp.eq.s32.totalorder %s15, 1
    %p99 = por %p97, %p98
    %p100 = scmp.ne.s32.totalorder %s89, %s90
    %p101 = scmp.eq.s32.totalorder %s15, 0
    %p102 = por %p100, %p101
    %p103 = scmp.ne.s32.totalorder %s89, %s90
    %p104 = scmp.eq.s32.totalorder %s16, 1
    %p105 = por %p103, %p104
    %p107 = scmp.ne.s32.totalorder %s90, %s106
    %p108 = scmp.eq.s32.totalorder %s16, 0
    %p109 = por %p107, %p108
    %s110 = ssub.s32 %s18, %s25
    %p111 = scmp.eq.s32.totalorder %s110, 0
    %s113 = sadd.s32 %s112, 1
    %s114 = scalar_select %p111, %s112, %s113
    %p117 = pneg %p111
    %p118 = scmp.eq.s32.totalorder %s10, 1
    %p119 = por %p117, %p118
    %p120 = scmp.ne.s32.totalorder %s112, %s115
    %p121 = scmp.eq.s32.totalorder %s10, 0
    %p122 = por %p120, %p121
    %p123 = scmp.ne.s32.totalorder %s112, %s115
    %p124 = scmp.eq.s32.totalorder %s15, 1
    %p125 = por %p123, %p124
    %p126 = scmp.ne.s32.totalorder %s115, %s116
    %p127 = scmp.eq.s32.totalorder %s15, 0
    %p128 = por %p126, %p127
    %p129 = scmp.ne.s32.totalorder %s115, %s116
    %p130 = scmp.eq.s32.totalorder %s16, 1
    %p131 = por %p129, %p130
    %p133 = scmp.ne.s32.totalorder %s116, %s132
    %p134 = scmp.eq.s32.totalorder %s16, 0
    %p135 = por %p133, %p134
    %s136 = ssub.s32 %s17, %s29
    %s137 = ssub.s32 %s18, %s25
    %s138 = sor.u32 %s136, %s137
    %p139 = scmp.eq.s32.totalorder %s138, 0
    %s141 = sadd.s32 %s140, 1
    %s142 = scalar_select %p139, %s140, %s141
    %p145 = pneg %p139
    %p146 = scmp.eq.s32.totalorder %s10, 1
    %p147 = por %p145, %p146
    %p148 = scmp.ne.s32.totalorder %s140, %s143
    %p149 = scmp.eq.s32.totalorder %s10, 0
    %p150 = por %p148, %p149
    %p151 = scmp.ne.s32.totalorder %s140, %s143
    %p152 = scmp.eq.s32.totalorder %s15, 1
    %p153 = por %p151, %p152
    %p154 = scmp.ne.s32.totalorder %s143, %s144
    %p155 = scmp.eq.s32.totalorder %s15, 0
    %p156 = por %p154, %p155
    %p157 = scmp.ne.s32.totalorder %s143, %s144
    %p158 = scmp.eq.s32.totalorder %s16, 1
    %p159 = por %p157, %p158
    %p161 = scmp.ne.s32.totalorder %s144, %s160
    %p162 = scmp.eq.s32.totalorder %s16, 0
    %p163 = por %p161, %p162
    %p164 = scmp.le.s32.totalorder 1, %s10
    %p165 = scmp.lt.s32.totalorder %s10, 3
    %p166 = pnand %p164, %p165
    %p167 = pneg %p166
    // Predicated region
    $region9: #{transformer_forward.39} parent=5 // pred_check
      _
    $region10: #{transformer_forward.39} parent=5 // pred_check_branch
      %169 = sbr.rel (%p166) target = $region12
    $region11: #{transformer_forward.39} parent=5 // pred_region
      %s170 = ssub.s32 %s10, 1
      // Predicated region
      $region13: #{transformer_forward.39} parent=11 // pred_check
        %p171 = pneg %p128
      $region14: #{transformer_forward.39} parent=11 // pred_check_branch
        %173 = sbr.rel (%p171) target = $region16
      $region15: #{transformer_forward.39} parent=11 // pred_region
        %p174 = scmp.lt.s32.totalorder %s20, 0
        %s175 = scalar_select %p174, %s20, 0
        %s176 = smul.addr %s175, 8
        %s177 = scalar_lea.vmem %s3, %s176
      $region16: #{transformer_forward.39} parent=11 // pred_fallthru
        _
    $region12: #{transformer_forward.39} parent=5 // pred_fallthru
      _
    %p178 = scmp.lt.s32.totalorder %s10, 2
    // Predicated region
    $region17: #{transformer_forward.39} parent=5 // pred_check
      %p179 = pneg %p178
    $region18: #{transformer_forward.39} parent=5 // pred_check_branch
      %181 = sbr.rel (%p179) target = $region20
    $region19: #{transformer_forward.39} parent=5 // pred_region
      // Predicated region
      $region21: #{transformer_forward.39} parent=19 // pred_check
        %p182 = pneg %p44
      $region22: #{transformer_forward.39} parent=19 // pred_check_branch
        %184 = sbr.rel (%p182) target = $region24
      $region23: #{transformer_forward.39} parent=19 // pred_region
        %p185 = scmp.lt.s32.totalorder %s17, 1
        %s186 = scalar_select %p185, %s17, 1
        %p187 = scmp.lt.s32.totalorder %s18, 0
        %s188 = scalar_select %p187, %s18, 0
        %s189 = sadd.s32 %s188, %s186
        %s190 = smul.addr %s189, 4
        %s191 = scalar_lea.vmem %s0, %s190
      $region24: #{transformer_forward.39} parent=19 // pred_fallthru
        _
      // Predicated region
      $region25: #{transformer_forward.39} parent=19 // pred_check
        %p192 = pneg %p70
      $region26: #{transformer_forward.39} parent=19 // pred_check_branch
        %194 = sbr.rel (%p192) target = $region28
      $region27: #{transformer_forward.39} parent=19 // pred_region
        %p195 = scmp.lt.s32.totalorder %s17, 1
        %s196 = scalar_select %p195, %s17, 1
        %s197 = sadd.s32 %s196, 2
        %s198 = smul.addr %s197, 4
        %s199 = scalar_lea.vmem %s1, %s198
      $region28: #{transformer_forward.39} parent=19 // pred_fallthru
        _
      // Predicated region
      $region29: #{transformer_forward.39} parent=19 // pred_check
        %p200 = pneg %p96
      $region30: #{transformer_forward.39} parent=19 // pred_check_branch
        %202 = sbr.rel (%p200) target = $region32
      $region31: #{transformer_forward.39} parent=19 // pred_region
        %p203 = scmp.lt.s32.totalorder %s17, 1
        %s204 = scalar_select %p203, %s17, 1
        %s205 = sadd.s32 %s204, 4
        %s206 = smul.addr %s205, 4
        %s207 = scalar_lea.vmem %s2, %s206
      $region32: #{transformer_forward.39} parent=19 // pred_fallthru
        _
    $region20: #{transformer_forward.39} parent=5 // pred_fallthru
      _
    %p208 = scmp.le.s32.totalorder 1, %s10
    %p209 = scmp.lt.s32.totalorder %s10, 3
    %p210 = pnand %p208, %p209
    %p211 = pneg %p210
    // Predicated region
    $region33: #{transformer_forward.39} parent=5 // pred_check
      _
    $region34: #{transformer_forward.39} parent=5 // pred_check_branch
      %213 = sbr.rel (%p210) target = $region36
    $region35: #{transformer_forward.39} parent=5 // pred_region
      %s214 = ssub.s32 %s10, 1
      %p215 = scmp.lt.s32.totalorder %s19, 1
      %s216 = scalar_select %p215, %s19, 1
      %p217 = scmp.lt.s32.totalorder %s20, 0
      %s218 = scalar_select %p217, %s20, 0
      %s219 = sadd.s32 %s218, %s216
      %s220 = smul.addr %s219, 4
      %s221 = scalar_lea.vmem %s0, %s220
      %p222 = pneg %p50
      %p223 = pneg %p47
      %p224 = scmp.lt.s32.totalorder %s19, 1
      %s225 = scalar_select %p224, %s19, 1
      %s226 = sadd.s32 %s225, 2
      %s227 = smul.addr %s226, 4
      %s228 = scalar_lea.vmem %s1, %s227
      %p229 = pneg %p76
      %p230 = pneg %p73
      %p231 = scmp.lt.s32.totalorder %s19, 1
      %s232 = scalar_select %p231, %s19, 1
      %s233 = sadd.s32 %s232, 4
      %s234 = smul.addr %s233, 4
      %s235 = scalar_lea.vmem %s2, %s234
      %p236 = pneg %p102
      %p237 = pneg %p99
      %p238 = scmp.lt.s32.totalorder %s20, 0
      %s239 = scalar_select %p238, %s20, 0
      %s240 = smul.addr %s239, 8
      %s241 = scalar_lea.vmem %s3, %s240
      %p242 = pneg %p128
      %p243 = pneg %p125
      %p244 = pneg %p156
      %p245 = pneg %p153
      %p246 = scmp.lt.s32.totalorder %s19, 1
      %s247 = scalar_select %p246, %s19, 1
      %p248 = scmp.lt.s32.totalorder %s20, 0
      %s249 = scalar_select %p248, %s20, 0
      %s250 = sadd.s32 %s249, %s247
      %s251 = smul.addr %s250, 4
      %s252 = scalar_lea.vmem %s4, %s251
      %p253 = scmp.lt.s32.totalorder %s19, 1
      %s254 = scalar_select %p253, %s19, 1
      %p255 = scmp.lt.s32.totalorder %s20, 0
      %s256 = scalar_select %p255, %s20, 0
      %s257 = sadd.s32 %s256, %s254
      %s258 = smul.addr %s257, 4
      %s259 = scalar_lea.vmem %s0, %s258
      %p260 = scmp.lt.s32.totalorder %s19, 1
      %s261 = scalar_select %p260, %s19, 1
      %s262 = sadd.s32 %s261, 2
      %s263 = smul.addr %s262, 4
      %s264 = scalar_lea.vmem %s1, %s263
      %p265 = scmp.lt.s32.totalorder %s19, 1
      %s266 = scalar_select %p265, %s19, 1
      %s267 = sadd.s32 %s266, 4
      %s268 = smul.addr %s267, 4
      %s269 = scalar_lea.vmem %s2, %s268
      %p270 = scmp.lt.s32.totalorder %s20, 0
      %s271 = scalar_select %p270, %s20, 0
      %s272 = smul.addr %s271, 8
      %s273 = scalar_lea.vmem %s3, %s272
      %p274 = scmp.lt.s32.totalorder %s19, 1
      %s275 = scalar_select %p274, %s19, 1
      %p276 = scmp.lt.s32.totalorder %s20, 0
      %s277 = scalar_select %p276, %s20, 0
      %s278 = sadd.s32 %s277, %s275
      %s279 = smul.addr %s278, 4
      %s280 = scalar_lea.vmem %s4, %s279
      %v282 = vld [vmem:[%s259] sm:$0xf]
      %v283 = vunpack.c.l.bf16 %v282
      %v284 = vmul.f32 %v283, 0.35351563
      %v285 = vpack.c.bf16 %v284, %v284
      %287 = vrot.lane.b32.xlu0 %v285, 120
      %v288 = vpop.permute.xlu0 %287
      %289 = vrot.lane.b32.xlu0 %v285, 112
      %v290 = vpop.permute.xlu0 %289
      %291 = vrot.lane.b32.xlu0 %v285, 104
      %v292 = vpop.permute.xlu0 %291
      %v295 = vpack.i.b16 %v288, %v285
      %v296 = vshrl.u32 %v285, 16
      %v297 = vshrl.u32 %v288, 16
      %v298 = vpack.i.b16 %v297, %v296
      %v301 = vpack.i.b16 %v292, %v290
      %v302 = vshrl.u32 %v290, 16
      %v303 = vshrl.u32 %v292, 16
      %v304 = vpack.i.b16 %v303, %v302
      %v307 = vunpack.c.l.s4 1983009808
      %v308 = vunpack.c.0.s8 %v307
      %v309 = vperm.slane %v295, %v308
      %v312 = vunpack.c.l.s4 1983009808
      %v313 = vunpack.c.0.s8 %v312
      %v314 = vperm.slane %v301, %v313
      %v315 = vrot.slane %v314, 4
      %vm316 = vcmask 1047556
      %v317 = vsel %vm316, %v315, %v309
      %v318 = vrot.slane %v309, 4
      %v319 = vsel %vm316, %v314, %v318
      %v321 = vunpack.c.l.s4 1934713408
      %v322 = vunpack.c.0.s8 %v321
      %v323 = vperm.slane %v317, %v322
      %v325 = vunpack.c.l.s4 1934713408
      %v326 = vunpack.c.0.s8 %v325
      %v327 = vperm.slane %v319, %v326
      %v328 = vrot.slane %v323, 4
      %v329 = vsel %vm316, 0, %v328
      %v330 = vrot.slane %v327, 4
      %v331 = vsel %vm316, 0, %v330
      %v334 = vunpack.c.l.s4 1983009808
      %v335 = vunpack.c.0.s8 %v334
      %v336 = vperm.slane %v298, %v335
      %v339 = vunpack.c.l.s4 1983009808
      %v340 = vunpack.c.0.s8 %v339
      %v341 = vperm.slane %v304, %v340
      %v342 = vrot.slane %v341, 4
      %v343 = vsel %vm316, %v342, %v336
      %v344 = vrot.slane %v336, 4
      %v345 = vsel %vm316, %v341, %v344
      %v347 = vunpack.c.l.s4 1934713408
      %v348 = vunpack.c.0.s8 %v347
      %v349 = vperm.slane %v343, %v348
      %v351 = vunpack.c.l.s4 1934713408
      %v352 = vunpack.c.0.s8 %v351
      %v353 = vperm.slane %v345, %v352
      %v354 = vrot.slane %v349, 4
      %v355 = vsel %vm316, 0, %v354
      %v356 = vrot.slane %v353, 4
      %v357 = vsel %vm316, 0, %v356
      %v358 = vsel %vm316, %v330, %v323
      %v360 = vunpack.c.l.s4 1983009808
      %v361 = vunpack.c.0.s8 %v360
      %v362 = vperm.slane %v358, %v361
      %v363 = vrot.slane %v331, 4
      %v364 = vsel %vm316, %v363, %v329
      %v366 = vunpack.c.l.s4 1983009808
      %v367 = vunpack.c.0.s8 %v366
      %v368 = vperm.slane %v364, %v367
      %v369 = vrot.slane %v368, 4
      %v370 = vsel %vm316, %v369, %v362
      %v372 = vunpack.c.l.s4 1934713408
      %v373 = vunpack.c.0.s8 %v372
      %v374 = vperm.slane %v370, %v373
      %v375 = vrot.slane %v374, 4
      %v376 = vsel %vm316, 0, %v375
      %v377 = vsel %vm316, %v356, %v349
      %v379 = vunpack.c.l.s4 1983009808
      %v380 = vunpack.c.0.s8 %v379
      %v381 = vperm.slane %v377, %v380
      %v382 = vrot.slane %v357, 4
      %v383 = vsel %vm316, %v382, %v355
      %v385 = vunpack.c.l.s4 1983009808
      %v386 = vunpack.c.0.s8 %v385
      %v387 = vperm.slane %v383, %v386
      %v388 = vrot.slane %v387, 4
      %v389 = vsel %vm316, %v388, %v381
      %v391 = vunpack.c.l.s4 1934713408
      %v392 = vunpack.c.0.s8 %v391
      %v393 = vperm.slane %v389, %v392
      %v394 = vrot.slane %v393, 4
      %v395 = vsel %vm316, 0, %v394
      %v398 = vpack.i.b16 %v393, %v374
      %v399 = vshrl.u32 %v374, 16
      %v400 = vshrl.u32 %v393, 16
      %v401 = vpack.i.b16 %v400, %v399
      %v404 = vpack.i.b16 %v395, %v376
      %v405 = vshrl.u32 %v376, 16
      %v406 = vshrl.u32 %v395, 16
      %v407 = vpack.i.b16 %v406, %v405
      %v408 = vld [vmem:[%s264] sm:$0xf]
      %410 = vrot.lane.b32.xlu0 %v408, 120
      %v411 = vpop.permute.xlu0 %410
      %412 = vrot.lane.b32.xlu0 %v408, 112
      %v413 = vpop.permute.xlu0 %412
      %414 = vrot.lane.b32.xlu0 %v408, 104
      %v415 = vpop.permute.xlu0 %414
      %v418 = vpack.i.b16 %v411, %v408
      %v419 = vshrl.u32 %v408, 16
      %v420 = vshrl.u32 %v411, 16
      %v421 = vpack.i.b16 %v420, %v419
      %v424 = vpack.i.b16 %v415, %v413
      %v425 = vshrl.u32 %v413, 16
      %v426 = vshrl.u32 %v415, 16
      %v427 = vpack.i.b16 %v426, %v425
      %v430 = vunpack.c.l.s4 1983009808
      %v431 = vunpack.c.0.s8 %v430
      %v432 = vperm.slane %v418, %v431
      %v435 = vunpack.c.l.s4 1983009808
      %v436 = vunpack.c.0.s8 %v435
      %v437 = vperm.slane %v424, %v436
      %v438 = vrot.slane %v437, 4
      %v439 = vsel %vm316, %v438, %v432
      %v440 = vrot.slane %v432, 4
      %v441 = vsel %vm316, %v437, %v440
      %v443 = vunpack.c.l.s4 1934713408
      %v444 = vunpack.c.0.s8 %v443
      %v445 = vperm.slane %v439, %v444
      %v447 = vunpack.c.l.s4 1934713408
      %v448 = vunpack.c.0.s8 %v447
      %v449 = vperm.slane %v441, %v448
      %v450 = vrot.slane %v445, 4
      %v451 = vsel %vm316, 0, %v450
      %v452 = vrot.slane %v449, 4
      %v453 = vsel %vm316, 0, %v452
      %v456 = vunpack.c.l.s4 1983009808
      %v457 = vunpack.c.0.s8 %v456
      %v458 = vperm.slane %v421, %v457
      %v461 = vunpack.c.l.s4 1983009808
      %v462 = vunpack.c.0.s8 %v461
      %v463 = vperm.slane %v427, %v462
      %v464 = vrot.slane %v463, 4
      %v465 = vsel %vm316, %v464, %v458
      %v466 = vrot.slane %v458, 4
      %v467 = vsel %vm316, %v463, %v466
      %v469 = vunpack.c.l.s4 1934713408
      %v470 = vunpack.c.0.s8 %v469
      %v471 = vperm.slane %v465, %v470
      %v473 = vunpack.c.l.s4 1934713408
      %v474 = vunpack.c.0.s8 %v473
      %v475 = vperm.slane %v467, %v474
      %v476 = vrot.slane %v471, 4
      %v477 = vsel %vm316, 0, %v476
      %v478 = vrot.slane %v475, 4
      %v479 = vsel %vm316, 0, %v478
      %v480 = vsel %vm316, %v452, %v445
      %v482 = vunpack.c.l.s4 1983009808
      %v483 = vunpack.c.0.s8 %v482
      %v484 = vperm.slane %v480, %v483
      %v485 = vrot.slane %v453, 4
      %v486 = vsel %vm316, %v485, %v451
      %v488 = vunpack.c.l.s4 1983009808
      %v489 = vunpack.c.0.s8 %v488
      %v490 = vperm.slane %v486, %v489
      %v491 = vrot.slane %v490, 4
      %v492 = vsel %vm316, %v491, %v484
      %v494 = vunpack.c.l.s4 1934713408
      %v495 = vunpack.c.0.s8 %v494
      %v496 = vperm.slane %v492, %v495
      %v497 = vrot.slane %v496, 4
      %v498 = vsel %vm316, 0, %v497
      %v499 = vsel %vm316, %v478, %v471
      %v501 = vunpack.c.l.s4 1983009808
      %v502 = vunpack.c.0.s8 %v501
      %v503 = vperm.slane %v499, %v502
      %v504 = vrot.slane %v479, 4
      %v505 = vsel %vm316, %v504, %v477
      %v507 = vunpack.c.l.s4 1983009808
      %v508 = vunpack.c.0.s8 %v507
      %v509 = vperm.slane %v505, %v508
      %v510 = vrot.slane %v509, 4
      %v511 = vsel %vm316, %v510, %v503
      %v513 = vunpack.c.l.s4 1934713408
      %v514 = vunpack.c.0.s8 %v513
      %v515 = vperm.slane %v511, %v514
      %v516 = vrot.slane %v515, 4
      %v517 = vsel %vm316, 0, %v516
      %v520 = vpack.i.b16 %v515, %v496
      %v521 = vshrl.u32 %v496, 16
      %v522 = vshrl.u32 %v515, 16
      %v523 = vpack.i.b16 %v522, %v521
      %v526 = vpack.i.b16 %v517, %v498
      %v527 = vshrl.u32 %v498, 16
      %v528 = vshrl.u32 %v517, 16
      %v529 = vpack.i.b16 %v528, %v527
      %v530 = vld [vmem:[%s269] sm:$0xf]
      %532 = vrot.lane.b32.xlu0 %v530, 120
      %v533 = vpop.permute.xlu0 %532
      %534 = vrot.lane.b32.xlu0 %v530, 112
      %v535 = vpop.permute.xlu0 %534
      %536 = vrot.lane.b32.xlu0 %v530, 104
      %v537 = vpop.permute.xlu0 %536
      %v540 = vpack.i.b16 %v533, %v530
      %v541 = vshrl.u32 %v530, 16
      %v542 = vshrl.u32 %v533, 16
      %v543 = vpack.i.b16 %v542, %v541
      %v546 = vpack.i.b16 %v537, %v535
      %v547 = vshrl.u32 %v535, 16
      %v548 = vshrl.u32 %v537, 16
      %v549 = vpack.i.b16 %v548, %v547
      %v552 = vunpack.c.l.s4 1983009808
      %v553 = vunpack.c.0.s8 %v552
      %v554 = vperm.slane %v540, %v553
      %v557 = vunpack.c.l.s4 1983009808
      %v558 = vunpack.c.0.s8 %v557
      %v559 = vperm.slane %v546, %v558
      %v560 = vrot.slane %v559, 4
      %v561 = vsel %vm316, %v560, %v554
      %v562 = vrot.slane %v554, 4
      %v563 = vsel %vm316, %v559, %v562
      %v565 = vunpack.c.l.s4 1934713408
      %v566 = vunpack.c.0.s8 %v565
      %v567 = vperm.slane %v561, %v566
      %v569 = vunpack.c.l.s4 1934713408
      %v570 = vunpack.c.0.s8 %v569
      %v571 = vperm.slane %v563, %v570
      %v572 = vrot.slane %v567, 4
      %v573 = vsel %vm316, 0, %v572
      %v574 = vrot.slane %v571, 4
      %v575 = vsel %vm316, 0, %v574
      %v578 = vunpack.c.l.s4 1983009808
      %v579 = vunpack.c.0.s8 %v578
      %v580 = vperm.slane %v543, %v579
      %v583 = vunpack.c.l.s4 1983009808
      %v584 = vunpack.c.0.s8 %v583
      %v585 = vperm.slane %v549, %v584
      %v586 = vrot.slane %v585, 4
      %v587 = vsel %vm316, %v586, %v580
      %v588 = vrot.slane %v580, 4
      %v589 = vsel %vm316, %v585, %v588
      %v591 = vunpack.c.l.s4 1934713408
      %v592 = vunpack.c.0.s8 %v591
      %v593 = vperm.slane %v587, %v592
      %v595 = vunpack.c.l.s4 1934713408
      %v596 = vunpack.c.0.s8 %v595
      %v597 = vperm.slane %v589, %v596
      %v598 = vrot.slane %v593, 4
      %v599 = vsel %vm316, 0, %v598
      %v600 = vrot.slane %v597, 4
      %v601 = vsel %vm316, 0, %v600
      %v602 = vsel %vm316, %v574, %v567
      %v604 = vunpack.c.l.s4 1983009808
      %v605 = vunpack.c.0.s8 %v604
      %v606 = vperm.slane %v602, %v605
      %v607 = vrot.slane %v575, 4
      %v608 = vsel %vm316, %v607, %v573
      %v610 = vunpack.c.l.s4 1983009808
      %v611 = vunpack.c.0.s8 %v610
      %v612 = vperm.slane %v608, %v611
      %v613 = vrot.slane %v612, 4
      %v614 = vsel %vm316, %v613, %v606
      %v616 = vunpack.c.l.s4 1934713408
      %v617 = vunpack.c.0.s8 %v616
      %v618 = vperm.slane %v614, %v617
      %v619 = vrot.slane %v618, 4
      %v620 = vsel %vm316, 0, %v619
      %v621 = vsel %vm316, %v600, %v593
      %v623 = vunpack.c.l.s4 1983009808
      %v624 = vunpack.c.0.s8 %v623
      %v625 = vperm.slane %v621, %v624
      %v626 = vrot.slane %v601, 4
      %v627 = vsel %vm316, %v626, %v599
      %v629 = vunpack.c.l.s4 1983009808
      %v630 = vunpack.c.0.s8 %v629
      %v631 = vperm.slane %v627, %v630
      %v632 = vrot.slane %v631, 4
      %v633 = vsel %vm316, %v632, %v625
      %v635 = vunpack.c.l.s4 1934713408
      %v636 = vunpack.c.0.s8 %v635
      %v637 = vperm.slane %v633, %v636
      %v638 = vrot.slane %v637, 4
      %v639 = vsel %vm316, 0, %v638
      %v642 = vpack.i.b16 %v637, %v618
      %v643 = vshrl.u32 %v618, 16
      %v644 = vshrl.u32 %v637, 16
      %v645 = vpack.i.b16 %v644, %v643
      %v648 = vpack.i.b16 %v639, %v620
      %v649 = vshrl.u32 %v620, 16
      %v650 = vshrl.u32 %v639, 16
      %v651 = vpack.i.b16 %v650, %v649
      %v652 = vld [vmem:[%s273] sm:$0xff]
      %vm653 = vcmask 64512
      %v655 = vsel %vm653, %v398, 0
      %v658 = vsel %vm653, %v520, 0
      %660 = vmatpush.bf16.xpose.msra.mxu0 0
      %661 = vmatpush.bf16.xpose.msra.mxu0 0
      %662 = vmatpush.bf16.xpose.msra.mxu0 0
      %663 = vmatpush.bf16.xpose.msra.mxu0 0
      %664 = vmatpush.bf16.xpose.msra.mxu0 0
      %665 = vmatpush.bf16.xpose.msra.mxu0 0
      %666 = vmatpush.bf16.xpose.msra.mxu0 0
      %667 = vmatpush.bf16.xpose.msra.mxu0 %v658
      %668 = vmatmul.bf16.gmra.mxu0 %v655
      %v669 = vpop.f32.mrf.mxu0
      %v670 = vadd.f32 %v652, %v669
      %v671 = vpop.f32.mrf.mxu0
      %672 = vdwg.mxu0
      %v674 = vsel %vm653, %v401, 0
      %v677 = vsel %vm653, %v523, 0
      %679 = vmatpush.bf16.xpose.msra.mxu0 0
      %680 = vmatpush.bf16.xpose.msra.mxu0 0
      %681 = vmatpush.bf16.xpose.msra.mxu0 0
      %682 = vmatpush.bf16.xpose.msra.mxu0 0
      %683 = vmatpush.bf16.xpose.msra.mxu0 0
      %684 = vmatpush.bf16.xpose.msra.mxu0 0
      %685 = vmatpush.bf16.xpose.msra.mxu0 0
      %686 = vmatpush.bf16.xpose.msra.mxu0 %v677
      %687 = vmatmul.bf16.gmra.mxu0 %v674
      %v688 = vpop.f32.mrf.mxu0
      %v689 = vadd.f32 %v652, %v688
      %v690 = vpop.f32.mrf.mxu0
      %691 = vdwg.mxu0
      %v693 = vsel %vm653, %v404, 0
      %v696 = vsel %vm653, %v526, 0
      %698 = vmatpush.bf16.xpose.msra.mxu0 0
      %699 = vmatpush.bf16.xpose.msra.mxu0 0
      %700 = vmatpush.bf16.xpose.msra.mxu0 0
      %701 = vmatpush.bf16.xpose.msra.mxu0 0
      %702 = vmatpush.bf16.xpose.msra.mxu0 0
      %703 = vmatpush.bf16.xpose.msra.mxu0 0
      %704 = vmatpush.bf16.xpose.msra.mxu0 0
      %705 = vmatpush.bf16.xpose.msra.mxu0 %v696
      %706 = vmatmul.bf16.gmra.mxu0 %v693
      %v707 = vpop.f32.mrf.mxu0
      %v708 = vadd.f32 %v652, %v707
      %v709 = vpop.f32.mrf.mxu0
      %710 = vdwg.mxu0
      %v712 = vsel %vm653, %v407, 0
      %v715 = vsel %vm653, %v529, 0
      %717 = vmatpush.bf16.xpose.msra.mxu0 0
      %718 = vmatpush.bf16.xpose.msra.mxu0 0
      %719 = vmatpush.bf16.xpose.msra.mxu0 0
      %720 = vmatpush.bf16.xpose.msra.mxu0 0
      %721 = vmatpush.bf16.xpose.msra.mxu0 0
      %722 = vmatpush.bf16.xpose.msra.mxu0 0
      %723 = vmatpush.bf16.xpose.msra.mxu0 0
      %724 = vmatpush.bf16.xpose.msra.mxu0 %v715
      %725 = vmatmul.bf16.gmra.mxu0 %v712
      %v726 = vpop.f32.mrf.mxu0
      %v727 = vadd.f32 %v652, %v726
      %v728 = vpop.f32.mrf.mxu0
      %729 = vdwg.mxu0
      %v730 = vsel %vm653, %v670, -inf
      %731 = vmax.xlane.f32.xlu0 %v730
      %v732 = vpop.xlane.xlu0 %731
      %v733 = vsel %vm653, %v689, -inf
      %734 = vmax.xlane.f32.xlu0 %v733
      %v735 = vpop.xlane.xlu0 %734
      %v736 = vsel %vm653, %v708, -inf
      %737 = vmax.xlane.f32.xlu0 %v736
      %v738 = vpop.xlane.xlu0 %737
      %v739 = vsel %vm653, %v727, -inf
      %740 = vmax.xlane.f32.xlu0 %v739
      %v741 = vpop.xlane.xlu0 %740
      %v742 = vsub.f32 %v670, %v732
      %v743 = vsub.f32 %v689, %v735
      %v744 = vsub.f32 %v708, %v738
      %v745 = vsub.f32 %v727, %v741
      %v746 = vmul.f32 %v742, 1.442695
      %v747 = vpow.pop %v746
      %v748 = vmul.f32 %v743, 1.442695
      %v749 = vpow.pop %v748
      %v750 = vmul.f32 %v744, 1.442695
      %v751 = vpow.pop %v750
      %v752 = vmul.f32 %v745, 1.442695
      %v753 = vpow.pop %v752
      %v754 = vsel %vm653, %v747, 0.0
      %755 = vadd.xlane.f32.xlu0 %v754
      %v756 = vpop.xlane.xlu0 %755
      %v757 = vsel %vm653, %v749, 0.0
      %758 = vadd.xlane.f32.xlu0 %v757
      %v759 = vpop.xlane.xlu0 %758
      %v760 = vsel %vm653, %v751, 0.0
      %761 = vadd.xlane.f32.xlu0 %v760
      %v762 = vpop.xlane.xlu0 %761
      %v763 = vsel %vm653, %v753, 0.0
      %764 = vadd.xlane.f32.xlu0 %v763
      %v765 = vpop.xlane.xlu0 %764
      %v766 = vrcp.pop %v756
      %v767 = vrcp.pop %v759
      %v768 = vrcp.pop %v762
      %v769 = vrcp.pop %v765
      %v770 = vmul.f32 %v747, %v766
      %v771 = vmul.f32 %v749, %v767
      %v772 = vmul.f32 %v751, %v768
      %v773 = vmul.f32 %v753, %v769
      %v774 = vpack.c.bf16 %v770, %v770
      %v775 = vpack.c.bf16 %v771, %v771
      %v776 = vpack.c.bf16 %v772, %v772
      %v777 = vpack.c.bf16 %v773, %v773
      %v779 = vsel %vm653, %v774, 0
      %vm781 = vcmask 1043456
      %v783 = vsel %vm781, %v642, 0
      %785 = vmatpush.bf16.msra.mxu0 0
      %786 = vmatpush.bf16.msra.mxu0 0
      %787 = vmatpush.bf16.msra.mxu0 0
      %788 = vmatpush.bf16.msra.mxu0 0
      %789 = vmatpush.bf16.msra.mxu0 0
      %790 = vmatpush.bf16.msra.mxu0 0
      %791 = vmatpush.bf16.msra.mxu0 0
      %792 = vmatpush.bf16.msra.mxu0 %v783
      %793 = vmatmul.bf16.gmra.mxu0 %v779
      %v794 = vpop.f32.mrf.mxu0
      %v795 = vadd.f32 0.0, %v794
      %v796 = vpop.f32.mrf.mxu0
      %797 = vdwg.mxu0
      %v799 = vsel %vm653, %v775, 0
      %v802 = vsel %vm781, %v645, 0
      %804 = vmatpush.bf16.msra.mxu0 0
      %805 = vmatpush.bf16.msra.mxu0 0
      %806 = vmatpush.bf16.msra.mxu0 0
      %807 = vmatpush.bf16.msra.mxu0 0
      %808 = vmatpush.bf16.msra.mxu0 0
      %809 = vmatpush.bf16.msra.mxu0 0
      %810 = vmatpush.bf16.msra.mxu0 0
      %811 = vmatpush.bf16.msra.mxu0 %v802
      %812 = vmatmul.bf16.gmra.mxu0 %v799
      %v813 = vpop.f32.mrf.mxu0
      %v814 = vadd.f32 0.0, %v813
      %v815 = vpop.f32.mrf.mxu0
      %816 = vdwg.mxu0
      %v818 = vsel %vm653, %v776, 0
      %v821 = vsel %vm781, %v648, 0
      %823 = vmatpush.bf16.msra.mxu0 0
      %824 = vmatpush.bf16.msra.mxu0 0
      %825 = vmatpush.bf16.msra.mxu0 0
      %826 = vmatpush.bf16.msra.mxu0 0
      %827 = vmatpush.bf16.msra.mxu0 0
      %828 = vmatpush.bf16.msra.mxu0 0
      %829 = vmatpush.bf16.msra.mxu0 0
      %830 = vmatpush.bf16.msra.mxu0 %v821
      %831 = vmatmul.bf16.gmra.mxu0 %v818
      %v832 = vpop.f32.mrf.mxu0
      %v833 = vadd.f32 0.0, %v832
      %v834 = vpop.f32.mrf.mxu0
      %835 = vdwg.mxu0
      %v837 = vsel %vm653, %v777, 0
      %v840 = vsel %vm781, %v651, 0
      %842 = vmatpush.bf16.msra.mxu0 0
      %843 = vmatpush.bf16.msra.mxu0 0
      %844 = vmatpush.bf16.msra.mxu0 0
      %845 = vmatpush.bf16.msra.mxu0 0
      %846 = vmatpush.bf16.msra.mxu0 0
      %847 = vmatpush.bf16.msra.mxu0 0
      %848 = vmatpush.bf16.msra.mxu0 0
      %849 = vmatpush.bf16.msra.mxu0 %v840
      %850 = vmatmul.bf16.gmra.mxu0 %v837
      %v851 = vpop.f32.mrf.mxu0
      %v852 = vadd.f32 0.0, %v851
      %v853 = vpop.f32.mrf.mxu0
      %854 = vdwg.mxu0
      %v855 = vrot.slane %v833, 4
      %vm856 = vcmask 1047556
      %v857 = vsel %vm856, %v855, %v795
      %v858 = vrot.slane %v795, 4
      %v859 = vsel %vm856, %v833, %v858
      %v861 = vunpack.c.l.s4 1983009808
      %v862 = vunpack.c.0.s8 %v861
      %v863 = vperm.slane %v857, %v862
      %v865 = vunpack.c.l.s4 1983009808
      %v866 = vunpack.c.0.s8 %v865
      %v867 = vperm.slane %v859, %v866
      %v868 = vrot.slane %v852, 4
      %v869 = vsel %vm856, %v868, %v814
      %v870 = vrot.slane %v814, 4
      %v871 = vsel %vm856, %v852, %v870
      %v873 = vunpack.c.l.s4 1983009808
      %v874 = vunpack.c.0.s8 %v873
      %v875 = vperm.slane %v869, %v874
      %v877 = vunpack.c.l.s4 1983009808
      %v878 = vunpack.c.0.s8 %v877
      %v879 = vperm.slane %v871, %v878
      %v880 = vrot.slane %v875, 4
      %v881 = vsel %vm856, %v880, %v863
      %v882 = vrot.slane %v863, 4
      %v883 = vsel %vm856, %v875, %v882
      %v885 = vunpack.c.l.s4 1934713408
      %v886 = vunpack.c.0.s8 %v885
      %v887 = vperm.slane %v881, %v886
      %v889 = vunpack.c.l.s4 1934713408
      %v890 = vunpack.c.0.s8 %v889
      %v891 = vperm.slane %v883, %v890
      %v892 = vrot.slane %v879, 4
      %v893 = vsel %vm856, %v892, %v867
      %v894 = vrot.slane %v867, 4
      %v895 = vsel %vm856, %v879, %v894
      %v897 = vunpack.c.l.s4 1934713408
      %v898 = vunpack.c.0.s8 %v897
      %v899 = vperm.slane %v893, %v898
      %v901 = vunpack.c.l.s4 1934713408
      %v902 = vunpack.c.0.s8 %v901
      %v903 = vperm.slane %v895, %v902
      %v904 = vrot.slane %v887, 4
      %v905 = vsel %vm856, 0.0, %v904
      %v906 = vrot.slane %v891, 4
      %v907 = vsel %vm856, 0.0, %v906
      %v908 = vrot.slane %v899, 4
      %v909 = vsel %vm856, 0.0, %v908
      %v910 = vrot.slane %v903, 4
      %v911 = vsel %vm856, 0.0, %v910
      %v912 = vsel %vm856, %v906, %v887
      %v914 = vunpack.c.l.s4 1983009808
      %v915 = vunpack.c.0.s8 %v914
      %v916 = vperm.slane %v912, %v915
      %v917 = vrot.slane %v907, 4
      %v918 = vsel %vm856, %v917, %v905
      %v920 = vunpack.c.l.s4 1983009808
      %v921 = vunpack.c.0.s8 %v920
      %v922 = vperm.slane %v918, %v921
      %v923 = vsel %vm856, %v910, %v899
      %v925 = vunpack.c.l.s4 1983009808
      %v926 = vunpack.c.0.s8 %v925
      %v927 = vperm.slane %v923, %v926
      %v928 = vrot.slane %v911, 4
      %v929 = vsel %vm856, %v928, %v909
      %v931 = vunpack.c.l.s4 1983009808
      %v932 = vunpack.c.0.s8 %v931
      %v933 = vperm.slane %v929, %v932
      %v934 = vrot.slane %v922, 4
      %v935 = vsel %vm856, %v934, %v916
      %v936 = vrot.slane %v916, 4
      %v937 = vsel %vm856, %v922, %v936
      %v939 = vunpack.c.l.s4 1934713408
      %v940 = vunpack.c.0.s8 %v939
      %v941 = vperm.slane %v935, %v940
      %v943 = vunpack.c.l.s4 1934713408
      %v944 = vunpack.c.0.s8 %v943
      %v945 = vperm.slane %v937, %v944
      %v946 = vrot.slane %v933, 4
      %v947 = vsel %vm856, %v946, %v927
      %v948 = vrot.slane %v927, 4
      %v949 = vsel %vm856, %v933, %v948
      %v951 = vunpack.c.l.s4 1934713408
      %v952 = vunpack.c.0.s8 %v951
      %v953 = vperm.slane %v947, %v952
      %v955 = vunpack.c.l.s4 1934713408
      %v956 = vunpack.c.0.s8 %v955
      %v957 = vperm.slane %v949, %v956
      %v958 = vrot.slane %v953, 4
      %v959 = vsel %vm856, %v958, %v941
      %v960 = vrot.slane %v941, 4
      %v961 = vsel %vm856, %v953, %v960
      %v962 = vrot.slane %v957, 4
      %v963 = vsel %vm856, %v962, %v945
      %v964 = vrot.slane %v945, 4
      %v965 = vsel %vm856, %v957, %v964
      %967 = vrot.lane.b32.xlu0 %v961, 8
      %v968 = vpop.permute.xlu0 %967
      %971 = vrot.lane.b32.xlu0 %v963, 16
      %v972 = vpop.permute.xlu0 %971
      %975 = vrot.lane.b32.xlu0 %v965, 24
      %v976 = vpop.permute.xlu0 %975
      %v978 = vsel %vm653, %v959, %v968
      %vm979 = vcmask 130048
      %v980 = vsel %vm979, %v978, %v972
      %vm981 = vcmask 195584
      %v982 = vsel %vm981, %v980, %v976
      %v983 = vpack.c.bf16 %v982, %v982
      %vm984 = vcmask 257024
      %985 = vst.msk [vmem:[%s280] sm:$0xf] %vm984, %v983
      %p986 = scmp.lt.s32.totalorder %s19, 1
      %s987 = scalar_select %p986, %s19, 1
      %p988 = scmp.lt.s32.totalorder %s20, 0
      %s989 = scalar_select %p988, %s20, 0
      %s990 = sadd.s32 %s989, %s987
      %s991 = smul.addr %s990, 4
      %s992 = scalar_lea.vmem %s4, %s991
      // Predicated region
      $region37: #{transformer_forward.39} parent=35 // pred_check
        %p993 = pneg %p153
      $region38: #{transformer_forward.39} parent=35 // pred_check_branch
        %995 = sbr.rel (%p993) target = $region40
      $region39: #{transformer_forward.39} parent=35 // pred_region
        _
      $region40: #{transformer_forward.39} parent=35 // pred_fallthru
        _
    $region36: #{transformer_forward.39} parent=5 // pred_fallthru
      _
    %p996 = scmp.le.s32.totalorder 2, %s10
    // Predicated region
    $region41: #{transformer_forward.39} parent=5 // pred_check
      %p997 = pneg %p996
    $region42: #{transformer_forward.39} parent=5 // pred_check_branch
      %999 = sbr.rel (%p997) target = $region44
    $region43: #{transformer_forward.39} parent=5 // pred_region
      %s1000 = ssub.s32 %s10, 2
      // Predicated region
      $region45: #{transformer_forward.39} parent=43 // pred_check
        %p1001 = pneg %p159
      $region46: #{transformer_forward.39} parent=43 // pred_check_branch
        %1003 = sbr.rel (%p1001) target = $region48
      $region47: #{transformer_forward.39} parent=43 // pred_region
        %p1004 = scmp.lt.s32.totalorder %s21, 1
        %s1005 = scalar_select %p1004, %s21, 1
        %p1006 = scmp.lt.s32.totalorder %s22, 0
        %s1007 = scalar_select %p1006, %s22, 0
        %s1008 = sadd.s32 %s1007, %s1005
        %s1009 = smul.addr %s1008, 4
        %s1010 = scalar_lea.vmem %s4, %s1009
      $region48: #{transformer_forward.39} parent=43 // pred_fallthru
        _
    $region44: #{transformer_forward.39} parent=5 // pred_fallthru
      _
  $region6: #{transformer_forward.39} parent=0 // loop_footer
    %s14 = sadd.s32 1, %s10
  $region7: #{transformer_forward.39} parent=0 // loop_footer_branch
    %9 = sbr.rel target = $region3
  $region8: #{transformer_forward.39} parent=0 // loop_exit
    _

// kernel: transformer_forward.40
$region0: #{transformer_forward.40}
  #allocation0 [shape = 'u32[]', space=smem, size = 0x4, offset = 0x4, fixed_abs, tag = 'smem constant byte address 0x4 - core index']
  #allocation1 [shape = 'u32[72,128]{1,0:T(1,128)}', space=vmem, size = 0x9000, scoped, tag = 'internal scratch']
  #allocation2 [shape = 'f32[16,32]{1,0:T(8,128)}', space=vmem, size = 0x2000, scoped, tag = 'scratch operand']
  %s0 = inlined_call_operand.vmem [shape: bf16[16,32], index: 0, kind: input, shape index: {}]
  %s1 = inlined_call_operand.vmem [shape: bf16[32,32], index: 1, kind: input, shape index: {}]
  %s2 = inlined_call_operand.vmem [shape: f32[1,32], index: 2, kind: input, shape index: {}]
  %s3 = inlined_call_operand.vmem [shape: bf16[16,32], index: 3, kind: input, shape index: {}]
  %s4 = inlined_call_operand.hbm [shape: f32[1,32], index: 4, kind: input, shape index: {}]
  %s5 = inlined_call_operand.hbm [shape: f32[1,32], index: 5, kind: input, shape index: {}]
  %s6 = inlined_call_operand.vmem [shape: bf16[16,32], index: 6, kind: output, shape index: {}]
  %s7 = sld [smem:[#allocation0]]
  $region50: #{transformer_forward.40} parent=0
    _
  %s9 = ssub.s32 1, %s7
  %s10 = scalar_select 0, %s9, %s7
  $region1: #{transformer_forward.40} parent=0
    #allocation3 [shape = 'u8[512]{0}', space=vmem, size = 0x400, scoped, tag = 'input window, operand 4, single buffered']
    #allocation4 [shape = 's32[1]{0}', space=sflag, size = 0x4, scoped, tag = 'scoped memory for transformer_forward.40']
    #allocation5 [shape = 'u8[512]{0}', space=vmem, size = 0x400, scoped, tag = 'input window, operand 5, single buffered']
    #allocation6 [shape = 's32[1]{0}', space=sflag, size = 0x4, scoped, tag = 'scoped memory for transformer_forward.40']
    %11 = vsyncpa [#allocation4], 0
    %12 = vsyncpa [#allocation6], 0
    // Predicated region
    $region2: #{transformer_forward.40} parent=1 // pred_check
      _
    $region3: #{transformer_forward.40} parent=1 // pred_check_branch
      %14 = sbr.rel (0) target = $region5
    $region4: #{transformer_forward.40} parent=1 // pred_region
      _
    $region5: #{transformer_forward.40} parent=1 // pred_fallthru
      _
    // Predicated region
    $region6: #{transformer_forward.40} parent=1 // pred_check
      _
    $region7: #{transformer_forward.40} parent=1 // pred_check_branch
      %16 = sbr.rel (0) target = $region9
    $region8: #{transformer_forward.40} parent=1 // pred_region
      _
    $region9: #{transformer_forward.40} parent=1 // pred_fallthru
      _
    // Predicated region
    $region10: #{transformer_forward.40} parent=1 // pred_check
      _
    $region11: #{transformer_forward.40} parent=1 // pred_check_branch
      %18 = sbr.rel (0) target = $region13
    $region12: #{transformer_forward.40} parent=1 // pred_region
      _
    $region13: #{transformer_forward.40} parent=1 // pred_fallthru
      _
    // Predicated region
    $region14: #{transformer_forward.40} parent=1 // pred_check
      _
    $region15: #{transformer_forward.40} parent=1 // pred_check_branch
      %20 = sbr.rel (0) target = $region17
    $region16: #{transformer_forward.40} parent=1 // pred_region
      _
    $region17: #{transformer_forward.40} parent=1 // pred_fallthru
      _
    // Predicated region
    $region18: #{transformer_forward.40} parent=1 // pred_check
      _
    $region19: #{transformer_forward.40} parent=1 // pred_check_branch
      %22 = sbr.rel (0) target = $region21
    $region20: #{transformer_forward.40} parent=1 // pred_region
      %24 = vsyncadd [#allocation4], 0
      %s26 = sshll.u32 %s4, 4
      %s27 = int_to_ptr.hbm [resolvable:$true] %s26
      %s28 = sshll.u32 [#allocation3], 4
      %s29 = int_to_ptr.vmem [resolvable:$true] %s28
      %31 = dma.hbm_to_vmem [thread:$0]  %s27, 16, %s29, [#allocation4]
    $region21: #{transformer_forward.40} parent=1 // pred_fallthru
      _
    // Predicated region
    $region22: #{transformer_forward.40} parent=1 // pred_check
      _
    $region23: #{transformer_forward.40} parent=1 // pred_check_branch
      %33 = sbr.rel (0) target = $region25
    $region24: #{transformer_forward.40} parent=1 // pred_region
      %35 = vsyncadd [#allocation6], 0
      %s37 = sshll.u32 %s5, 4
      %s38 = int_to_ptr.hbm [resolvable:$true] %s37
      %s39 = sshll.u32 [#allocation5], 4
      %s40 = int_to_ptr.vmem [resolvable:$true] %s39
      %42 = dma.hbm_to_vmem [thread:$0]  %s38, 16, %s40, [#allocation6]
    $region25: #{transformer_forward.40} parent=1 // pred_fallthru
      _
    // Predicated region
    $region26: #{transformer_forward.40} parent=1 // pred_check
      _
    $region27: #{transformer_forward.40} parent=1 // pred_check_branch
      %44 = sbr.rel (0) target = $region29
    $region28: #{transformer_forward.40} parent=1 // pred_region
      %46 = dma.done [#allocation4], 16
    $region29: #{transformer_forward.40} parent=1 // pred_fallthru
      _
    // Predicated region
    $region30: #{transformer_forward.40} parent=1 // pred_check
      _
    $region31: #{transformer_forward.40} parent=1 // pred_check_branch
      %48 = sbr.rel (0) target = $region33
    $region32: #{transformer_forward.40} parent=1 // pred_region
      %50 = dma.done [#allocation6], 16
    $region33: #{transformer_forward.40} parent=1 // pred_fallthru
      _
    %p52 = scmp.eq.s32.totalorder 0, 0
    // Predicated region
    $region34: #{transformer_forward.40} parent=1 // pred_check
      %p53 = pneg %p52
    $region35: #{transformer_forward.40} parent=1 // pred_check_branch
      %55 = sbr.rel (%p53) target = $region37
    $region36: #{transformer_forward.40} parent=1 // pred_region
      %vm56 = vcmask 261120
      %57 = vst.msk [vmem:[#allocation2] sm:$0xff] %vm56, 0.0
      %58 = vst.msk [vmem:[#allocation2 + $0x8] sm:$0xff] %vm56, 0.0
    $region37: #{transformer_forward.40} parent=1 // pred_fallthru
      _
    %v59 = vld [vmem:[%s1] sm:$0xf]
    %v60 = vld [vmem:[%s1 + $0x4] sm:$0xf]
    %v61 = vld [vmem:[%s1 + $0x8] sm:$0xf]
    %v62 = vld [vmem:[%s1 + $0xc] sm:$0xf]
    %v63 = vld [vmem:[#allocation2] sm:$0xff]
    %v64 = vld [vmem:[#allocation2 + $0x8] sm:$0xff]
    %v65 = vld [vmem:[%s0] sm:$0xf]
    %v66 = vld [vmem:[%s0 + $0x4] sm:$0xf]
    %v69 = vunpack.c.l.b16 %v65
    %v70 = vunpack.c.l.b16 %v66
    %v71 = vpack.c.b16 %v70, %v69
    %v76 = vunpack.c.l.b16 %v59
    %v77 = vunpack.c.l.b16 %v60
    %v78 = vunpack.c.l.b16 %v61
    %v79 = vunpack.c.l.b16 %v62
    %v80 = vpack.c.b16 %v77, %v76
    %v81 = vpack.c.b16 %v79, %v78
    %vm84 = vcmask 261120
    %v86 = vsel %vm84, %v71, 0
    %88 = vmatpush.bf16.msra.mxu0 0
    %89 = vmatpush.bf16.msra.mxu0 0
    %90 = vmatpush.bf16.msra.mxu0 0
    %91 = vmatpush.bf16.msra.mxu0 0
    %92 = vmatpush.bf16.msra.mxu0 0
    %93 = vmatpush.bf16.msra.mxu0 0
    %94 = vmatpush.bf16.msra.mxu0 %v81
    %95 = vmatpush.bf16.msra.mxu0 %v80
    %96 = vmatmul.bf16.gmra.mxu0 %v86
    %v97 = vpop.f32.mrf.mxu0
    %v98 = vadd.f32 0.0, %v97
    %v99 = vpop.f32.mrf.mxu0
    %v100 = vadd.f32 0.0, %v99
    %101 = vdwg.mxu0
    %v102 = vadd.f32 %v63, %v98
    %v103 = vadd.f32 %v64, %v100
    %104 = vst.msk [vmem:[#allocation2] sm:$0xff] %vm84, %v102
    %105 = vst.msk [vmem:[#allocation2 + $0x8] sm:$0xff] %vm84, %v103
    // Predicated region
    $region38: #{transformer_forward.40} parent=1 // pred_check
      %p106 = pneg %p52
    $region39: #{transformer_forward.40} parent=1 // pred_check_branch
      %108 = sbr.rel (%p106) target = $region41
    $region40: #{transformer_forward.40} parent=1 // pred_region
      %v109 = vld [vmem:[#allocation2] sm:$0xff]
      %v110 = vld [vmem:[#allocation2 + $0x8] sm:$0xff]
      %v111 = vld [vmem:[%s2] sm:$0x1]
      %v113 = vperm.slane %v111, 0
      %v115 = vadd.f32 %v109, %v113
      %v116 = vadd.f32 %v110, %v113
      %v117 = vld [vmem:[%s3] sm:$0xf]
      %v118 = vld [vmem:[%s3 + $0x4] sm:$0xf]
      %v119 = vunpack.c.l.bf16 %v117
      %v120 = vunpack.c.l.bf16 %v118
      %v121 = vadd.f32 %v115, %v119
      %v122 = vadd.f32 %v116, %v120
      %v123 = vsel %vm84, %v121, 0.0
      %124 = vadd.xlane.f32.xlu0 %v123
      %v125 = vpop.xlane.xlu0 %124
      %v126 = vsel %vm84, %v122, 0.0
      %127 = vadd.xlane.f32.xlu0 %v126
      %v128 = vpop.xlane.xlu0 %127
      %v129 = vrcp.pop 32.0
      %v130 = vmul.f32 32.0, %v129
      %v131 = vsub.f32 1.0, %v130
      %v132 = vmul.f32 %v129, %v131
      %v133 = vadd.f32 %v129, %v132
      %vm134 = vweird.f32 %v129
      %v135 = vsel %vm134, %v129, %v133
      %v136 = vmul.f32 %v125, %v135
      %v137 = vmul.f32 %v128, %v135
      %v138 = vsub.f32 %v121, %v136
      %v139 = vsub.f32 %v122, %v137
      %v140 = vmul.f32 %v138, %v138
      %v141 = vmul.f32 %v139, %v139
      %v142 = vsel %vm84, %v140, 0.0
      %143 = vadd.xlane.f32.xlu0 %v142
      %v144 = vpop.xlane.xlu0 %143
      %v145 = vsel %vm84, %v141, 0.0
      %146 = vadd.xlane.f32.xlu0 %v145
      %v147 = vpop.xlane.xlu0 %146
      %v148 = vmul.f32 %v144, %v135
      %v149 = vmul.f32 %v147, %v135
      %v150 = vadd.f32 %v148, 1e-05
      %v151 = vadd.f32 %v149, 1e-05
      %v152 = vrsqrt.pop %v150
      %v153 = vmul.f32 %v152, %v150
      %v154 = vmul.f32 %v153, %v152
      %v155 = vmul.f32 0.5, %v154
      %v156 = vsub.f32 1.5, %v155
      %v157 = vmul.f32 %v152, %v156
      %vm158 = vweird.f32 %v150
      %vm159 = vweird.f32 %v152
      %vm160 = vmor %vm158, %vm159
      %v161 = vsel %vm160, %v152, %v157
      %v162 = vrsqrt.pop %v151
      %v163 = vmul.f32 %v162, %v151
      %v164 = vmul.f32 %v163, %v162
      %v165 = vmul.f32 0.5, %v164
      %v166 = vsub.f32 1.5, %v165
      %v167 = vmul.f32 %v162, %v166
      %vm168 = vweird.f32 %v151
      %vm169 = vweird.f32 %v162
      %vm170 = vmor %vm168, %vm169
      %v171 = vsel %vm170, %v162, %v167
      %v172 = vmul.f32 %v138, %v161
      %v173 = vmul.f32 %v139, %v171
      %v174 = vld [vmem:[#allocation3] sm:$0x1]
      %v176 = vperm.slane %v174, 0
      %v178 = vmul.f32 %v172, %v176
      %v179 = vmul.f32 %v173, %v176
      %v180 = vld [vmem:[#allocation5] sm:$0x1]
      %v182 = vperm.slane %v180, 0
      %v184 = vadd.f32 %v178, %v182
      %v185 = vadd.f32 %v179, %v182
      %v186 = vpack.c.bf16 %v184, %v184
      %v187 = vpack.c.bf16 %v185, %v185
      %vm188 = vcmask 257024
      %189 = vst.msk [vmem:[%s6] sm:$0xf] %vm188, %v186
      %190 = vst.msk [vmem:[%s6 + $0x4] sm:$0xf] %vm188, %v187
    $region41: #{transformer_forward.40} parent=1 // pred_fallthru
      _
    // Predicated region
    $region42: #{transformer_forward.40} parent=1 // pred_check
      _
    $region43: #{transformer_forward.40} parent=1 // pred_check_branch
      %192 = sbr.rel (0) target = $region45
    $region44: #{transformer_forward.40} parent=1 // pred_region
      _
    $region45: #{transformer_forward.40} parent=1 // pred_fallthru
      _
    // Predicated region
    $region46: #{transformer_forward.40} parent=1 // pred_check
      _
    $region47: #{transformer_forward.40} parent=1 // pred_check_branch
      %194 = sbr.rel (0) target = $region49
    $region48: #{transformer_forward.40} parent=1 // pred_region
      _
    $region49: #{transformer_forward.40} parent=1 // pred_fallthru
      _
    %195 = vsyncpa [#allocation4], 1
    %196 = vsyncpa [#allocation6], 1

// kernel: transformer_forward.41
$region0: #{transformer_forward.41}
  #allocation0 [shape = 'u32[]', space=smem, size = 0x4, offset = 0x4, fixed_abs, tag = 'smem constant byte address 0x4 - core index']
  #allocation1 [shape = 'u32[72,128]{1,0:T(1,128)}', space=vmem, size = 0x9000, scoped, tag = 'internal scratch']
  #allocation2 [shape = 'f32[16,32]{1,0:T(8,128)}', space=vmem, size = 0x2000, scoped, tag = 'scratch operand']
  %s0 = inlined_call_operand.vmem [shape: bf16[16,32], index: 0, kind: input, shape index: {}]
  %s1 = inlined_call_operand.vmem [shape: bf16[32,32], index: 1, kind: input, shape index: {}]
  %s2 = inlined_call_operand.hbm [shape: f32[1,32], index: 2, kind: input, shape index: {}]
  %s3 = inlined_call_operand.vmem [shape: bf16[16,32], index: 3, kind: output, shape index: {}]
  %s4 = sld [smem:[#allocation0]]
  $region34: #{transformer_forward.41} parent=0
    _
  %s6 = ssub.s32 1, %s4
  %s7 = scalar_select 0, %s6, %s4
  $region1: #{transformer_forward.41} parent=0
    #allocation3 [shape = 'u8[512]{0}', space=vmem, size = 0x400, scoped, tag = 'input window, operand 2, single buffered']
    #allocation4 [shape = 's32[1]{0}', space=sflag, size = 0x4, scoped, tag = 'scoped memory for transformer_forward.41']
    %8 = vsyncpa [#allocation4], 0
    // Predicated region
    $region2: #{transformer_forward.41} parent=1 // pred_check
      _
    $region3: #{transformer_forward.41} parent=1 // pred_check_branch
      %10 = sbr.rel (0) target = $region5
    $region4: #{transformer_forward.41} parent=1 // pred_region
      _
    $region5: #{transformer_forward.41} parent=1 // pred_fallthru
      _
    // Predicated region
    $region6: #{transformer_forward.41} parent=1 // pred_check
      _
    $region7: #{transformer_forward.41} parent=1 // pred_check_branch
      %12 = sbr.rel (0) target = $region9
    $region8: #{transformer_forward.41} parent=1 // pred_region
      _
    $region9: #{transformer_forward.41} parent=1 // pred_fallthru
      _
    // Predicated region
    $region10: #{transformer_forward.41} parent=1 // pred_check
      _
    $region11: #{transformer_forward.41} parent=1 // pred_check_branch
      %14 = sbr.rel (0) target = $region13
    $region12: #{transformer_forward.41} parent=1 // pred_region
      %16 = vsyncadd [#allocation4], 0
      %s18 = sshll.u32 %s2, 4
      %s19 = int_to_ptr.hbm [resolvable:$true] %s18
      %s20 = sshll.u32 [#allocation3], 4
      %s21 = int_to_ptr.vmem [resolvable:$true] %s20
      %23 = dma.hbm_to_vmem [thread:$0]  %s19, 16, %s21, [#allocation4]
    $region13: #{transformer_forward.41} parent=1 // pred_fallthru
      _
    // Predicated region
    $region14: #{transformer_forward.41} parent=1 // pred_check
      _
    $region15: #{transformer_forward.41} parent=1 // pred_check_branch
      %25 = sbr.rel (0) target = $region17
    $region16: #{transformer_forward.41} parent=1 // pred_region
      %27 = dma.done [#allocation4], 16
    $region17: #{transformer_forward.41} parent=1 // pred_fallthru
      _
    %p29 = scmp.eq.s32.totalorder 0, 0
    // Predicated region
    $region18: #{transformer_forward.41} parent=1 // pred_check
      %p30 = pneg %p29
    $region19: #{transformer_forward.41} parent=1 // pred_check_branch
      %32 = sbr.rel (%p30) target = $region21
    $region20: #{transformer_forward.41} parent=1 // pred_region
      %vm33 = vcmask 261120
      %34 = vst.msk [vmem:[#allocation2] sm:$0xff] %vm33, 0.0
      %35 = vst.msk [vmem:[#allocation2 + $0x8] sm:$0xff] %vm33, 0.0
    $region21: #{transformer_forward.41} parent=1 // pred_fallthru
      _
    %v36 = vld [vmem:[%s1] sm:$0xf]
    %v37 = vld [vmem:[%s1 + $0x4] sm:$0xf]
    %v38 = vld [vmem:[%s1 + $0x8] sm:$0xf]
    %v39 = vld [vmem:[%s1 + $0xc] sm:$0xf]
    %v40 = vld [vmem:[#allocation2] sm:$0xff]
    %v41 = vld [vmem:[#allocation2 + $0x8] sm:$0xff]
    %v42 = vld [vmem:[%s0] sm:$0xf]
    %v43 = vld [vmem:[%s0 + $0x4] sm:$0xf]
    %v46 = vunpack.c.l.b16 %v42
    %v47 = vunpack.c.l.b16 %v43
    %v48 = vpack.c.b16 %v47, %v46
    %v53 = vunpack.c.l.b16 %v36
    %v54 = vunpack.c.l.b16 %v37
    %v55 = vunpack.c.l.b16 %v38
    %v56 = vunpack.c.l.b16 %v39
    %v57 = vpack.c.b16 %v54, %v53
    %v58 = vpack.c.b16 %v56, %v55
    %vm61 = vcmask 261120
    %v63 = vsel %vm61, %v48, 0
    %65 = vmatpush.bf16.msra.mxu0 0
    %66 = vmatpush.bf16.msra.mxu0 0
    %67 = vmatpush.bf16.msra.mxu0 0
    %68 = vmatpush.bf16.msra.mxu0 0
    %69 = vmatpush.bf16.msra.mxu0 0
    %70 = vmatpush.bf16.msra.mxu0 0
    %71 = vmatpush.bf16.msra.mxu0 %v58
    %72 = vmatpush.bf16.msra.mxu0 %v57
    %73 = vmatmul.bf16.gmra.mxu0 %v63
    %v74 = vpop.f32.mrf.mxu0
    %v75 = vadd.f32 0.0, %v74
    %v76 = vpop.f32.mrf.mxu0
    %v77 = vadd.f32 0.0, %v76
    %78 = vdwg.mxu0
    %v79 = vadd.f32 %v40, %v75
    %v80 = vadd.f32 %v41, %v77
    %81 = vst.msk [vmem:[#allocation2] sm:$0xff] %vm61, %v79
    %82 = vst.msk [vmem:[#allocation2 + $0x8] sm:$0xff] %vm61, %v80
    // Predicated region
    $region22: #{transformer_forward.41} parent=1 // pred_check
      %p83 = pneg %p29
    $region23: #{transformer_forward.41} parent=1 // pred_check_branch
      %85 = sbr.rel (%p83) target = $region25
    $region24: #{transformer_forward.41} parent=1 // pred_region
      %v86 = vld [vmem:[#allocation2] sm:$0xff]
      %v87 = vld [vmem:[#allocation2 + $0x8] sm:$0xff]
      %v88 = vld [vmem:[#allocation3] sm:$0x1]
      %v90 = vperm.slane %v88, 0
      %v92 = vadd.f32 %v86, %v90
      %v93 = vadd.f32 %v87, %v90
      %v94 = vpack.c.bf16 %v92, %v92
      %v95 = vpack.c.bf16 %v93, %v93
      %vm96 = vcmask 257024
      %97 = vst.msk [vmem:[%s3] sm:$0xf] %vm96, %v94
      %98 = vst.msk [vmem:[%s3 + $0x4] sm:$0xf] %vm96, %v95
    $region25: #{transformer_forward.41} parent=1 // pred_fallthru
      _
    // Predicated region
    $region26: #{transformer_forward.41} parent=1 // pred_check
      _
    $region27: #{transformer_forward.41} parent=1 // pred_check_branch
      %100 = sbr.rel (0) target = $region29
    $region28: #{transformer_forward.41} parent=1 // pred_region
      _
    $region29: #{transformer_forward.41} parent=1 // pred_fallthru
      _
    // Predicated region
    $region30: #{transformer_forward.41} parent=1 // pred_check
      _
    $region31: #{transformer_forward.41} parent=1 // pred_check_branch
      %102 = sbr.rel (0) target = $region33
    $region32: #{transformer_forward.41} parent=1 // pred_region
      _
    $region33: #{transformer_forward.41} parent=1 // pred_fallthru
      _
    %103 = vsyncpa [#allocation4], 1

// kernel: transformer_forward.43
$region0: #{transformer_forward.43}
  #allocation0 [shape = 'u32[]', space=smem, size = 0x4, offset = 0x4, fixed_abs, tag = 'smem constant byte address 0x4 - core index']
  #allocation1 [shape = 'u32[72,128]{1,0:T(1,128)}', space=vmem, size = 0x9000, scoped, tag = 'internal scratch']
  %s0 = inlined_call_operand.vmem [shape: bf16[2,8,32], index: 0, kind: input, shape index: {}]
  %s1 = inlined_call_operand.vmem [shape: bf16[2,2,8,32], index: 1, kind: input, shape index: {}, may-alias: {1,2}]
  %s2 = inlined_call_operand.vmem [shape: bf16[2,2,8,32], index: 2, kind: input, shape index: {}, may-alias: {1,2}]
  %s3 = inlined_call_operand.vmem [shape: bf16[2,8,32], index: 3, kind: output, shape index: {}]
  %s4 = sld [smem:[#allocation0]]
  $region45: #{transformer_forward.43} parent=0
    _
  %s6 = ssub.s32 1, %s4
  %s7 = scalar_select 0, %s6, %s4
  loop: start=0, step=1, limit=4
  $region2: #{transformer_forward.43} parent=0 // loop_pre_header
    _
  $region3: #{transformer_forward.43} parent=0 // loop_header
    %s9 = sphi 0, %s13
    %p10 = scmp.ge.s32.totalorder %s9, 4
    %s16 = sphi 0, %s28
    %s17 = sphi 0, %s24
    %s18 = sphi 0, %s16
    %s19 = sphi 0, %s17
    %s20 = sphi 0, %s18
    %s21 = sphi 0, %s19
    %s33 = sphi 0, %s35
    %s36 = sphi 0, %s33
    %s37 = sphi 0, %s36
    %s53 = sphi 0, %s37
    %s59 = sphi 0, %s61
    %s62 = sphi 0, %s59
    %s63 = sphi 0, %s62
    %s79 = sphi 0, %s63
    %s85 = sphi 0, %s87
    %s88 = sphi 0, %s85
    %s89 = sphi 0, %s88
    %s105 = sphi 0, %s89
    %s113 = sphi 0, %s115
    %s116 = sphi 0, %s113
    %s117 = sphi 0, %s116
    %s133 = sphi 0, %s117
  $region4: #{transformer_forward.43} parent=0 // loop_header_branch
    %12 = sbr.rel (%p10) target = $region8
  $region5: #{transformer_forward.43} parent=0 // loop_body
    %s14 = ssub.s32 %s9, 1
    %s15 = ssub.s32 %s9, 2
    %s22 = sadd.s32 1, %s17
    %p23 = scmp.ge.s32.totalorder %s22, 1
    %s24 = scalar_select %p23, 0, %s22
    %s25 = sadd.s32 1, %s16
    %s26 = scalar_select %p23, %s25, %s16
    %p27 = scmp.ge.s32.totalorder %s26, 2
    %s28 = scalar_select %p27, 0, %s26
    %s29 = ssub.s32 %s16, %s28
    %s30 = ssub.s32 %s17, %s24
    %s31 = sor.u32 %s29, %s30
    %p32 = scmp.eq.s32.totalorder %s31, 0
    %s34 = sadd.s32 %s33, 1
    %s35 = scalar_select %p32, %s33, %s34
    %p38 = pneg %p32
    %p39 = scmp.eq.s32.totalorder %s9, 1
    %p40 = por %p38, %p39
    %p41 = scmp.ne.s32.totalorder %s33, %s36
    %p42 = scmp.eq.s32.totalorder %s9, 0
    %p43 = por %p41, %p42
    %p44 = scmp.ne.s32.totalorder %s33, %s36
    %p45 = scmp.eq.s32.totalorder %s14, 1
    %p46 = por %p44, %p45
    %p47 = scmp.ne.s32.totalorder %s36, %s37
    %p48 = scmp.eq.s32.totalorder %s14, 0
    %p49 = por %p47, %p48
    %p50 = scmp.ne.s32.totalorder %s36, %s37
    %p51 = scmp.eq.s32.totalorder %s15, 1
    %p52 = por %p50, %p51
    %p54 = scmp.ne.s32.totalorder %s37, %s53
    %p55 = scmp.eq.s32.totalorder %s15, 0
    %p56 = por %p54, %p55
    %s57 = ssub.s32 %s16, %s28
    %p58 = scmp.eq.s32.totalorder %s57, 0
    %s60 = sadd.s32 %s59, 1
    %s61 = scalar_select %p58, %s59, %s60
    %p64 = pneg %p58
    %p65 = scmp.eq.s32.totalorder %s9, 1
    %p66 = por %p64, %p65
    %p67 = scmp.ne.s32.totalorder %s59, %s62
    %p68 = scmp.eq.s32.totalorder %s9, 0
    %p69 = por %p67, %p68
    %p70 = scmp.ne.s32.totalorder %s59, %s62
    %p71 = scmp.eq.s32.totalorder %s14, 1
    %p72 = por %p70, %p71
    %p73 = scmp.ne.s32.totalorder %s62, %s63
    %p74 = scmp.eq.s32.totalorder %s14, 0
    %p75 = por %p73, %p74
    %p76 = scmp.ne.s32.totalorder %s62, %s63
    %p77 = scmp.eq.s32.totalorder %s15, 1
    %p78 = por %p76, %p77
    %p80 = scmp.ne.s32.totalorder %s63, %s79
    %p81 = scmp.eq.s32.totalorder %s15, 0
    %p82 = por %p80, %p81
    %s83 = ssub.s32 %s16, %s28
    %p84 = scmp.eq.s32.totalorder %s83, 0
    %s86 = sadd.s32 %s85, 1
    %s87 = scalar_select %p84, %s85, %s86
    %p90 = pneg %p84
    %p91 = scmp.eq.s32.totalorder %s9, 1
    %p92 = por %p90, %p91
    %p93 = scmp.ne.s32.totalorder %s85, %s88
    %p94 = scmp.eq.s32.totalorder %s9, 0
    %p95 = por %p93, %p94
    %p96 = scmp.ne.s32.totalorder %s85, %s88
    %p97 = scmp.eq.s32.totalorder %s14, 1
    %p98 = por %p96, %p97
    %p99 = scmp.ne.s32.totalorder %s88, %s89
    %p100 = scmp.eq.s32.totalorder %s14, 0
    %p101 = por %p99, %p100
    %p102 = scmp.ne.s32.totalorder %s88, %s89
    %p103 = scmp.eq.s32.totalorder %s15, 1
    %p104 = por %p102, %p103
    %p106 = scmp.ne.s32.totalorder %s89, %s105
    %p107 = scmp.eq.s32.totalorder %s15, 0
    %p108 = por %p106, %p107
    %s109 = ssub.s32 %s16, %s28
    %s110 = ssub.s32 %s17, %s24
    %s111 = sor.u32 %s109, %s110
    %p112 = scmp.eq.s32.totalorder %s111, 0
    %s114 = sadd.s32 %s113, 1
    %s115 = scalar_select %p112, %s113, %s114
    %p118 = pneg %p112
    %p119 = scmp.eq.s32.totalorder %s9, 1
    %p120 = por %p118, %p119
    %p121 = scmp.ne.s32.totalorder %s113, %s116
    %p122 = scmp.eq.s32.totalorder %s9, 0
    %p123 = por %p121, %p122
    %p124 = scmp.ne.s32.totalorder %s113, %s116
    %p125 = scmp.eq.s32.totalorder %s14, 1
    %p126 = por %p124, %p125
    %p127 = scmp.ne.s32.totalorder %s116, %s117
    %p128 = scmp.eq.s32.totalorder %s14, 0
    %p129 = por %p127, %p128
    %p130 = scmp.ne.s32.totalorder %s116, %s117
    %p131 = scmp.eq.s32.totalorder %s15, 1
    %p132 = por %p130, %p131
    %p134 = scmp.ne.s32.totalorder %s117, %s133
    %p135 = scmp.eq.s32.totalorder %s15, 0
    %p136 = por %p134, %p135
    %p137 = scmp.le.s32.totalorder 1, %s9
    %p138 = scmp.lt.s32.totalorder %s9, 3
    %p139 = pnand %p137, %p138
    %p140 = pneg %p139
    // Predicated region
    $region9: #{transformer_forward.43} parent=5 // pred_check
      _
    $region10: #{transformer_forward.43} parent=5 // pred_check_branch
      %142 = sbr.rel (%p139) target = $region12
    $region11: #{transformer_forward.43} parent=5 // pred_region
      %s143 = ssub.s32 %s9, 1
    $region12: #{transformer_forward.43} parent=5 // pred_fallthru
      _
    %p144 = scmp.lt.s32.totalorder %s9, 2
    // Predicated region
    $region13: #{transformer_forward.43} parent=5 // pred_check
      %p145 = pneg %p144
    $region14: #{transformer_forward.43} parent=5 // pred_check_branch
      %147 = sbr.rel (%p145) target = $region16
    $region15: #{transformer_forward.43} parent=5 // pred_region
      // Predicated region
      $region17: #{transformer_forward.43} parent=15 // pred_check
        %p148 = pneg %p43
      $region18: #{transformer_forward.43} parent=15 // pred_check_branch
        %150 = sbr.rel (%p148) target = $region20
      $region19: #{transformer_forward.43} parent=15 // pred_region
        %p151 = scmp.lt.s32.totalorder %s16, 1
        %s152 = scalar_select %p151, %s16, 1
        %p153 = scmp.lt.s32.totalorder %s17, 0
        %s154 = scalar_select %p153, %s17, 0
        %s155 = sadd.s32 %s154, %s152
        %s156 = smul.addr %s155, 4
        %s157 = scalar_lea.vmem %s0, %s156
      $region20: #{transformer_forward.43} parent=15 // pred_fallthru
        _
      // Predicated region
      $region21: #{transformer_forward.43} parent=15 // pred_check
        %p158 = pneg %p69
      $region22: #{transformer_forward.43} parent=15 // pred_check_branch
        %160 = sbr.rel (%p158) target = $region24
      $region23: #{transformer_forward.43} parent=15 // pred_region
        %p161 = scmp.lt.s32.totalorder %s16, 1
        %s162 = scalar_select %p161, %s16, 1
        %s163 = smul.addr %s162, 4
        %s164 = scalar_lea.vmem %s1, %s163
      $region24: #{transformer_forward.43} parent=15 // pred_fallthru
        _
      // Predicated region
      $region25: #{transformer_forward.43} parent=15 // pred_check
        %p165 = pneg %p95
      $region26: #{transformer_forward.43} parent=15 // pred_check_branch
        %167 = sbr.rel (%p165) target = $region28
      $region27: #{transformer_forward.43} parent=15 // pred_region
        %p168 = scmp.lt.s32.totalorder %s16, 1
        %s169 = scalar_select %p168, %s16, 1
        %s170 = sadd.s32 %s169, 2
        %s171 = smul.addr %s170, 4
        %s172 = scalar_lea.vmem %s2, %s171
      $region28: #{transformer_forward.43} parent=15 // pred_fallthru
        _
    $region16: #{transformer_forward.43} parent=5 // pred_fallthru
      _
    %p173 = scmp.le.s32.totalorder 1, %s9
    %p174 = scmp.lt.s32.totalorder %s9, 3
    %p175 = pnand %p173, %p174
    %p176 = pneg %p175
    // Predicated region
    $region29: #{transformer_forward.43} parent=5 // pred_check
      _
    $region30: #{transformer_forward.43} parent=5 // pred_check_branch
      %178 = sbr.rel (%p175) target = $region32
    $region31: #{transformer_forward.43} parent=5 // pred_region
      %s179 = ssub.s32 %s9, 1
      %p180 = scmp.lt.s32.totalorder %s18, 1
      %s181 = scalar_select %p180, %s18, 1
      %p182 = scmp.lt.s32.totalorder %s19, 0
      %s183 = scalar_select %p182, %s19, 0
      %s184 = sadd.s32 %s183, %s181
      %s185 = smul.addr %s184, 4
      %s186 = scalar_lea.vmem %s0, %s185
      %p187 = pneg %p49
      %p188 = pneg %p46
      %p189 = scmp.lt.s32.totalorder %s18, 1
      %s190 = scalar_select %p189, %s18, 1
      %s191 = smul.addr %s190, 4
      %s192 = scalar_lea.vmem %s1, %s191
      %p193 = pneg %p75
      %p194 = pneg %p72
      %p195 = scmp.lt.s32.totalorder %s18, 1
      %s196 = scalar_select %p195, %s18, 1
      %s197 = sadd.s32 %s196, 2
      %s198 = smul.addr %s197, 4
      %s199 = scalar_lea.vmem %s2, %s198
      %p200 = pneg %p101
      %p201 = pneg %p98
      %p202 = pneg %p129
      %p203 = pneg %p126
      %p204 = scmp.lt.s32.totalorder %s18, 1
      %s205 = scalar_select %p204, %s18, 1
      %p206 = scmp.lt.s32.totalorder %s19, 0
      %s207 = scalar_select %p206, %s19, 0
      %s208 = sadd.s32 %s207, %s205
      %s209 = smul.addr %s208, 4
      %s210 = scalar_lea.vmem %s3, %s209
      %p211 = scmp.lt.s32.totalorder %s18, 1
      %s212 = scalar_select %p211, %s18, 1
      %p213 = scmp.lt.s32.totalorder %s19, 0
      %s214 = scalar_select %p213, %s19, 0
      %s215 = sadd.s32 %s214, %s212
      %s216 = smul.addr %s215, 4
      %s217 = scalar_lea.vmem %s0, %s216
      %p218 = scmp.lt.s32.totalorder %s18, 1
      %s219 = scalar_select %p218, %s18, 1
      %s220 = smul.addr %s219, 4
      %s221 = scalar_lea.vmem %s1, %s220
      %p222 = scmp.lt.s32.totalorder %s18, 1
      %s223 = scalar_select %p222, %s18, 1
      %s224 = sadd.s32 %s223, 2
      %s225 = smul.addr %s224, 4
      %s226 = scalar_lea.vmem %s2, %s225
      %p227 = scmp.lt.s32.totalorder %s18, 1
      %s228 = scalar_select %p227, %s18, 1
      %p229 = scmp.lt.s32.totalorder %s19, 0
      %s230 = scalar_select %p229, %s19, 0
      %s231 = sadd.s32 %s230, %s228
      %s232 = smul.addr %s231, 4
      %s233 = scalar_lea.vmem %s3, %s232
      %v235 = vld [vmem:[%s217] sm:$0xf]
      %v236 = vunpack.c.l.bf16 %v235
      %v237 = vmul.f32 %v236, 0.35351563
      %v238 = vpack.c.bf16 %v237, %v237
      %240 = vrot.lane.b32.xlu0 %v238, 120
      %v241 = vpop.permute.xlu0 %240
      %242 = vrot.lane.b32.xlu0 %v238, 112
      %v243 = vpop.permute.xlu0 %242
      %244 = vrot.lane.b32.xlu0 %v238, 104
      %v245 = vpop.permute.xlu0 %244
      %v248 = vpack.i.b16 %v241, %v238
      %v249 = vshrl.u32 %v238, 16
      %v250 = vshrl.u32 %v241, 16
      %v251 = vpack.i.b16 %v250, %v249
      %v254 = vpack.i.b16 %v245, %v243
      %v255 = vshrl.u32 %v243, 16
      %v256 = vshrl.u32 %v245, 16
      %v257 = vpack.i.b16 %v256, %v255
      %v260 = vunpack.c.l.s4 1983009808
      %v261 = vunpack.c.0.s8 %v260
      %v262 = vperm.slane %v248, %v261
      %v265 = vunpack.c.l.s4 1983009808
      %v266 = vunpack.c.0.s8 %v265
      %v267 = vperm.slane %v254, %v266
      %v268 = vrot.slane %v267, 4
      %vm269 = vcmask 1047556
      %v270 = vsel %vm269, %v268, %v262
      %v271 = vrot.slane %v262, 4
      %v272 = vsel %vm269, %v267, %v271
      %v274 = vunpack.c.l.s4 1934713408
      %v275 = vunpack.c.0.s8 %v274
      %v276 = vperm.slane %v270, %v275
      %v278 = vunpack.c.l.s4 1934713408
      %v279 = vunpack.c.0.s8 %v278
      %v280 = vperm.slane %v272, %v279
      %v281 = vrot.slane %v276, 4
      %v282 = vsel %vm269, 0, %v281
      %v283 = vrot.slane %v280, 4
      %v284 = vsel %vm269, 0, %v283
      %v287 = vunpack.c.l.s4 1983009808
      %v288 = vunpack.c.0.s8 %v287
      %v289 = vperm.slane %v251, %v288
      %v292 = vunpack.c.l.s4 1983009808
      %v293 = vunpack.c.0.s8 %v292
      %v294 = vperm.slane %v257, %v293
      %v295 = vrot.slane %v294, 4
      %v296 = vsel %vm269, %v295, %v289
      %v297 = vrot.slane %v289, 4
      %v298 = vsel %vm269, %v294, %v297
      %v300 = vunpack.c.l.s4 1934713408
      %v301 = vunpack.c.0.s8 %v300
      %v302 = vperm.slane %v296, %v301
      %v304 = vunpack.c.l.s4 1934713408
      %v305 = vunpack.c.0.s8 %v304
      %v306 = vperm.slane %v298, %v305
      %v307 = vrot.slane %v302, 4
      %v308 = vsel %vm269, 0, %v307
      %v309 = vrot.slane %v306, 4
      %v310 = vsel %vm269, 0, %v309
      %v311 = vsel %vm269, %v283, %v276
      %v313 = vunpack.c.l.s4 1983009808
      %v314 = vunpack.c.0.s8 %v313
      %v315 = vperm.slane %v311, %v314
      %v316 = vrot.slane %v284, 4
      %v317 = vsel %vm269, %v316, %v282
      %v319 = vunpack.c.l.s4 1983009808
      %v320 = vunpack.c.0.s8 %v319
      %v321 = vperm.slane %v317, %v320
      %v322 = vrot.slane %v321, 4
      %v323 = vsel %vm269, %v322, %v315
      %v325 = vunpack.c.l.s4 1934713408
      %v326 = vunpack.c.0.s8 %v325
      %v327 = vperm.slane %v323, %v326
      %v328 = vrot.slane %v327, 4
      %v329 = vsel %vm269, 0, %v328
      %v330 = vsel %vm269, %v309, %v302
      %v332 = vunpack.c.l.s4 1983009808
      %v333 = vunpack.c.0.s8 %v332
      %v334 = vperm.slane %v330, %v333
      %v335 = vrot.slane %v310, 4
      %v336 = vsel %vm269, %v335, %v308
      %v338 = vunpack.c.l.s4 1983009808
      %v339 = vunpack.c.0.s8 %v338
      %v340 = vperm.slane %v336, %v339
      %v341 = vrot.slane %v340, 4
      %v342 = vsel %vm269, %v341, %v334
      %v344 = vunpack.c.l.s4 1934713408
      %v345 = vunpack.c.0.s8 %v344
      %v346 = vperm.slane %v342, %v345
      %v347 = vrot.slane %v346, 4
      %v348 = vsel %vm269, 0, %v347
      %v351 = vpack.i.b16 %v346, %v327
      %v352 = vshrl.u32 %v327, 16
      %v353 = vshrl.u32 %v346, 16
      %v354 = vpack.i.b16 %v353, %v352
      %v357 = vpack.i.b16 %v348, %v329
      %v358 = vshrl.u32 %v329, 16
      %v359 = vshrl.u32 %v348, 16
      %v360 = vpack.i.b16 %v359, %v358
      %v361 = vld [vmem:[%s221] sm:$0xf]
      %363 = vrot.lane.b32.xlu0 %v361, 120
      %v364 = vpop.permute.xlu0 %363
      %365 = vrot.lane.b32.xlu0 %v361, 112
      %v366 = vpop.permute.xlu0 %365
      %367 = vrot.lane.b32.xlu0 %v361, 104
      %v368 = vpop.permute.xlu0 %367
      %v371 = vpack.i.b16 %v364, %v361
      %v372 = vshrl.u32 %v361, 16
      %v373 = vshrl.u32 %v364, 16
      %v374 = vpack.i.b16 %v373, %v372
      %v377 = vpack.i.b16 %v368, %v366
      %v378 = vshrl.u32 %v366, 16
      %v379 = vshrl.u32 %v368, 16
      %v380 = vpack.i.b16 %v379, %v378
      %v383 = vunpack.c.l.s4 1983009808
      %v384 = vunpack.c.0.s8 %v383
      %v385 = vperm.slane %v371, %v384
      %v388 = vunpack.c.l.s4 1983009808
      %v389 = vunpack.c.0.s8 %v388
      %v390 = vperm.slane %v377, %v389
      %v391 = vrot.slane %v390, 4
      %v392 = vsel %vm269, %v391, %v385
      %v393 = vrot.slane %v385, 4
      %v394 = vsel %vm269, %v390, %v393
      %v396 = vunpack.c.l.s4 1934713408
      %v397 = vunpack.c.0.s8 %v396
      %v398 = vperm.slane %v392, %v397
      %v400 = vunpack.c.l.s4 1934713408
      %v401 = vunpack.c.0.s8 %v400
      %v402 = vperm.slane %v394, %v401
      %v403 = vrot.slane %v398, 4
      %v404 = vsel %vm269, 0, %v403
      %v405 = vrot.slane %v402, 4
      %v406 = vsel %vm269, 0, %v405
      %v409 = vunpack.c.l.s4 1983009808
      %v410 = vunpack.c.0.s8 %v409
      %v411 = vperm.slane %v374, %v410
      %v414 = vunpack.c.l.s4 1983009808
      %v415 = vunpack.c.0.s8 %v414
      %v416 = vperm.slane %v380, %v415
      %v417 = vrot.slane %v416, 4
      %v418 = vsel %vm269, %v417, %v411
      %v419 = vrot.slane %v411, 4
      %v420 = vsel %vm269, %v416, %v419
      %v422 = vunpack.c.l.s4 1934713408
      %v423 = vunpack.c.0.s8 %v422
      %v424 = vperm.slane %v418, %v423
      %v426 = vunpack.c.l.s4 1934713408
      %v427 = vunpack.c.0.s8 %v426
      %v428 = vperm.slane %v420, %v427
      %v429 = vrot.slane %v424, 4
      %v430 = vsel %vm269, 0, %v429
      %v431 = vrot.slane %v428, 4
      %v432 = vsel %vm269, 0, %v431
      %v433 = vsel %vm269, %v405, %v398
      %v435 = vunpack.c.l.s4 1983009808
      %v436 = vunpack.c.0.s8 %v435
      %v437 = vperm.slane %v433, %v436
      %v438 = vrot.slane %v406, 4
      %v439 = vsel %vm269, %v438, %v404
      %v441 = vunpack.c.l.s4 1983009808
      %v442 = vunpack.c.0.s8 %v441
      %v443 = vperm.slane %v439, %v442
      %v444 = vrot.slane %v443, 4
      %v445 = vsel %vm269, %v444, %v437
      %v447 = vunpack.c.l.s4 1934713408
      %v448 = vunpack.c.0.s8 %v447
      %v449 = vperm.slane %v445, %v448
      %v450 = vrot.slane %v449, 4
      %v451 = vsel %vm269, 0, %v450
      %v452 = vsel %vm269, %v431, %v424
      %v454 = vunpack.c.l.s4 1983009808
      %v455 = vunpack.c.0.s8 %v454
      %v456 = vperm.slane %v452, %v455
      %v457 = vrot.slane %v432, 4
      %v458 = vsel %vm269, %v457, %v430
      %v460 = vunpack.c.l.s4 1983009808
      %v461 = vunpack.c.0.s8 %v460
      %v462 = vperm.slane %v458, %v461
      %v463 = vrot.slane %v462, 4
      %v464 = vsel %vm269, %v463, %v456
      %v466 = vunpack.c.l.s4 1934713408
      %v467 = vunpack.c.0.s8 %v466
      %v468 = vperm.slane %v464, %v467
      %v469 = vrot.slane %v468, 4
      %v470 = vsel %vm269, 0, %v469
      %v473 = vpack.i.b16 %v468, %v449
      %v474 = vshrl.u32 %v449, 16
      %v475 = vshrl.u32 %v468, 16
      %v476 = vpack.i.b16 %v475, %v474
      %v479 = vpack.i.b16 %v470, %v451
      %v480 = vshrl.u32 %v451, 16
      %v481 = vshrl.u32 %v470, 16
      %v482 = vpack.i.b16 %v481, %v480
      %v483 = vld [vmem:[%s226] sm:$0xf]
      %485 = vrot.lane.b32.xlu0 %v483, 120
      %v486 = vpop.permute.xlu0 %485
      %487 = vrot.lane.b32.xlu0 %v483, 112
      %v488 = vpop.permute.xlu0 %487
      %489 = vrot.lane.b32.xlu0 %v483, 104
      %v490 = vpop.permute.xlu0 %489
      %v493 = vpack.i.b16 %v486, %v483
      %v494 = vshrl.u32 %v483, 16
      %v495 = vshrl.u32 %v486, 16
      %v496 = vpack.i.b16 %v495, %v494
      %v499 = vpack.i.b16 %v490, %v488
      %v500 = vshrl.u32 %v488, 16
      %v501 = vshrl.u32 %v490, 16
      %v502 = vpack.i.b16 %v501, %v500
      %v505 = vunpack.c.l.s4 1983009808
      %v506 = vunpack.c.0.s8 %v505
      %v507 = vperm.slane %v493, %v506
      %v510 = vunpack.c.l.s4 1983009808
      %v511 = vunpack.c.0.s8 %v510
      %v512 = vperm.slane %v499, %v511
      %v513 = vrot.slane %v512, 4
      %v514 = vsel %vm269, %v513, %v507
      %v515 = vrot.slane %v507, 4
      %v516 = vsel %vm269, %v512, %v515
      %v518 = vunpack.c.l.s4 1934713408
      %v519 = vunpack.c.0.s8 %v518
      %v520 = vperm.slane %v514, %v519
      %v522 = vunpack.c.l.s4 1934713408
      %v523 = vunpack.c.0.s8 %v522
      %v524 = vperm.slane %v516, %v523
      %v525 = vrot.slane %v520, 4
      %v526 = vsel %vm269, 0, %v525
      %v527 = vrot.slane %v524, 4
      %v528 = vsel %vm269, 0, %v527
      %v531 = vunpack.c.l.s4 1983009808
      %v532 = vunpack.c.0.s8 %v531
      %v533 = vperm.slane %v496, %v532
      %v536 = vunpack.c.l.s4 1983009808
      %v537 = vunpack.c.0.s8 %v536
      %v538 = vperm.slane %v502, %v537
      %v539 = vrot.slane %v538, 4
      %v540 = vsel %vm269, %v539, %v533
      %v541 = vrot.slane %v533, 4
      %v542 = vsel %vm269, %v538, %v541
      %v544 = vunpack.c.l.s4 1934713408
      %v545 = vunpack.c.0.s8 %v544
      %v546 = vperm.slane %v540, %v545
      %v548 = vunpack.c.l.s4 1934713408
      %v549 = vunpack.c.0.s8 %v548
      %v550 = vperm.slane %v542, %v549
      %v551 = vrot.slane %v546, 4
      %v552 = vsel %vm269, 0, %v551
      %v553 = vrot.slane %v550, 4
      %v554 = vsel %vm269, 0, %v553
      %v555 = vsel %vm269, %v527, %v520
      %v557 = vunpack.c.l.s4 1983009808
      %v558 = vunpack.c.0.s8 %v557
      %v559 = vperm.slane %v555, %v558
      %v560 = vrot.slane %v528, 4
      %v561 = vsel %vm269, %v560, %v526
      %v563 = vunpack.c.l.s4 1983009808
      %v564 = vunpack.c.0.s8 %v563
      %v565 = vperm.slane %v561, %v564
      %v566 = vrot.slane %v565, 4
      %v567 = vsel %vm269, %v566, %v559
      %v569 = vunpack.c.l.s4 1934713408
      %v570 = vunpack.c.0.s8 %v569
      %v571 = vperm.slane %v567, %v570
      %v572 = vrot.slane %v571, 4
      %v573 = vsel %vm269, 0, %v572
      %v574 = vsel %vm269, %v553, %v546
      %v576 = vunpack.c.l.s4 1983009808
      %v577 = vunpack.c.0.s8 %v576
      %v578 = vperm.slane %v574, %v577
      %v579 = vrot.slane %v554, 4
      %v580 = vsel %vm269, %v579, %v552
      %v582 = vunpack.c.l.s4 1983009808
      %v583 = vunpack.c.0.s8 %v582
      %v584 = vperm.slane %v580, %v583
      %v585 = vrot.slane %v584, 4
      %v586 = vsel %vm269, %v585, %v578
      %v588 = vunpack.c.l.s4 1934713408
      %v589 = vunpack.c.0.s8 %v588
      %v590 = vperm.slane %v586, %v589
      %v591 = vrot.slane %v590, 4
      %v592 = vsel %vm269, 0, %v591
      %v595 = vpack.i.b16 %v590, %v571
      %v596 = vshrl.u32 %v571, 16
      %v597 = vshrl.u32 %v590, 16
      %v598 = vpack.i.b16 %v597, %v596
      %v601 = vpack.i.b16 %v592, %v573
      %v602 = vshrl.u32 %v573, 16
      %v603 = vshrl.u32 %v592, 16
      %v604 = vpack.i.b16 %v603, %v602
      %vm605 = vcmask 64512
      %v607 = vsel %vm605, %v351, 0
      %v610 = vsel %vm605, %v473, 0
      %612 = vmatpush.bf16.xpose.msra.mxu0 0
      %613 = vmatpush.bf16.xpose.msra.mxu0 0
      %614 = vmatpush.bf16.xpose.msra.mxu0 0
      %615 = vmatpush.bf16.xpose.msra.mxu0 0
      %616 = vmatpush.bf16.xpose.msra.mxu0 0
      %617 = vmatpush.bf16.xpose.msra.mxu0 0
      %618 = vmatpush.bf16.xpose.msra.mxu0 0
      %619 = vmatpush.bf16.xpose.msra.mxu0 %v610
      %620 = vmatmul.bf16.gmra.mxu0 %v607
      %v621 = vpop.f32.mrf.mxu0
      %v622 = vadd.f32 0.0, %v621
      %v623 = vpop.f32.mrf.mxu0
      %624 = vdwg.mxu0
      %v626 = vsel %vm605, %v354, 0
      %v629 = vsel %vm605, %v476, 0
      %631 = vmatpush.bf16.xpose.msra.mxu0 0
      %632 = vmatpush.bf16.xpose.msra.mxu0 0
      %633 = vmatpush.bf16.xpose.msra.mxu0 0
      %634 = vmatpush.bf16.xpose.msra.mxu0 0
      %635 = vmatpush.bf16.xpose.msra.mxu0 0
      %636 = vmatpush.bf16.xpose.msra.mxu0 0
      %637 = vmatpush.bf16.xpose.msra.mxu0 0
      %638 = vmatpush.bf16.xpose.msra.mxu0 %v629
      %639 = vmatmul.bf16.gmra.mxu0 %v626
      %v640 = vpop.f32.mrf.mxu0
      %v641 = vadd.f32 0.0, %v640
      %v642 = vpop.f32.mrf.mxu0
      %643 = vdwg.mxu0
      %v645 = vsel %vm605, %v357, 0
      %v648 = vsel %vm605, %v479, 0
      %650 = vmatpush.bf16.xpose.msra.mxu0 0
      %651 = vmatpush.bf16.xpose.msra.mxu0 0
      %652 = vmatpush.bf16.xpose.msra.mxu0 0
      %653 = vmatpush.bf16.xpose.msra.mxu0 0
      %654 = vmatpush.bf16.xpose.msra.mxu0 0
      %655 = vmatpush.bf16.xpose.msra.mxu0 0
      %656 = vmatpush.bf16.xpose.msra.mxu0 0
      %657 = vmatpush.bf16.xpose.msra.mxu0 %v648
      %658 = vmatmul.bf16.gmra.mxu0 %v645
      %v659 = vpop.f32.mrf.mxu0
      %v660 = vadd.f32 0.0, %v659
      %v661 = vpop.f32.mrf.mxu0
      %662 = vdwg.mxu0
      %v664 = vsel %vm605, %v360, 0
      %v667 = vsel %vm605, %v482, 0
      %669 = vmatpush.bf16.xpose.msra.mxu0 0
      %670 = vmatpush.bf16.xpose.msra.mxu0 0
      %671 = vmatpush.bf16.xpose.msra.mxu0 0
      %672 = vmatpush.bf16.xpose.msra.mxu0 0
      %673 = vmatpush.bf16.xpose.msra.mxu0 0
      %674 = vmatpush.bf16.xpose.msra.mxu0 0
      %675 = vmatpush.bf16.xpose.msra.mxu0 0
      %676 = vmatpush.bf16.xpose.msra.mxu0 %v667
      %677 = vmatmul.bf16.gmra.mxu0 %v664
      %v678 = vpop.f32.mrf.mxu0
      %v679 = vadd.f32 0.0, %v678
      %v680 = vpop.f32.mrf.mxu0
      %681 = vdwg.mxu0
      %v682 = vsel %vm605, %v622, -inf
      %683 = vmax.xlane.f32.xlu0 %v682
      %v684 = vpop.xlane.xlu0 %683
      %v685 = vsel %vm605, %v641, -inf
      %686 = vmax.xlane.f32.xlu0 %v685
      %v687 = vpop.xlane.xlu0 %686
      %v688 = vsel %vm605, %v660, -inf
      %689 = vmax.xlane.f32.xlu0 %v688
      %v690 = vpop.xlane.xlu0 %689
      %v691 = vsel %vm605, %v679, -inf
      %692 = vmax.xlane.f32.xlu0 %v691
      %v693 = vpop.xlane.xlu0 %692
      %v694 = vsub.f32 %v622, %v684
      %v695 = vsub.f32 %v641, %v687
      %v696 = vsub.f32 %v660, %v690
      %v697 = vsub.f32 %v679, %v693
      %v698 = vmul.f32 %v694, 1.442695
      %v699 = vpow.pop %v698
      %v700 = vmul.f32 %v695, 1.442695
      %v701 = vpow.pop %v700
      %v702 = vmul.f32 %v696, 1.442695
      %v703 = vpow.pop %v702
      %v704 = vmul.f32 %v697, 1.442695
      %v705 = vpow.pop %v704
      %v706 = vsel %vm605, %v699, 0.0
      %707 = vadd.xlane.f32.xlu0 %v706
      %v708 = vpop.xlane.xlu0 %707
      %v709 = vsel %vm605, %v701, 0.0
      %710 = vadd.xlane.f32.xlu0 %v709
      %v711 = vpop.xlane.xlu0 %710
      %v712 = vsel %vm605, %v703, 0.0
      %713 = vadd.xlane.f32.xlu0 %v712
      %v714 = vpop.xlane.xlu0 %713
      %v715 = vsel %vm605, %v705, 0.0
      %716 = vadd.xlane.f32.xlu0 %v715
      %v717 = vpop.xlane.xlu0 %716
      %v718 = vrcp.pop %v708
      %v719 = vrcp.pop %v711
      %v720 = vrcp.pop %v714
      %v721 = vrcp.pop %v717
      %v722 = vmul.f32 %v699, %v718
      %v723 = vmul.f32 %v701, %v719
      %v724 = vmul.f32 %v703, %v720
      %v725 = vmul.f32 %v705, %v721
      %v726 = vpack.c.bf16 %v722, %v722
      %v727 = vpack.c.bf16 %v723, %v723
      %v728 = vpack.c.bf16 %v724, %v724
      %v729 = vpack.c.bf16 %v725, %v725
      %v731 = vsel %vm605, %v726, 0
      %vm733 = vcmask 1043456
      %v735 = vsel %vm733, %v595, 0
      %737 = vmatpush.bf16.msra.mxu0 0
      %738 = vmatpush.bf16.msra.mxu0 0
      %739 = vmatpush.bf16.msra.mxu0 0
      %740 = vmatpush.bf16.msra.mxu0 0
      %741 = vmatpush.bf16.msra.mxu0 0
      %742 = vmatpush.bf16.msra.mxu0 0
      %743 = vmatpush.bf16.msra.mxu0 0
      %744 = vmatpush.bf16.msra.mxu0 %v735
      %745 = vmatmul.bf16.gmra.mxu0 %v731
      %v746 = vpop.f32.mrf.mxu0
      %v747 = vadd.f32 0.0, %v746
      %v748 = vpop.f32.mrf.mxu0
      %749 = vdwg.mxu0
      %v751 = vsel %vm605, %v727, 0
      %v754 = vsel %vm733, %v598, 0
      %756 = vmatpush.bf16.msra.mxu0 0
      %757 = vmatpush.bf16.msra.mxu0 0
      %758 = vmatpush.bf16.msra.mxu0 0
      %759 = vmatpush.bf16.msra.mxu0 0
      %760 = vmatpush.bf16.msra.mxu0 0
      %761 = vmatpush.bf16.msra.mxu0 0
      %762 = vmatpush.bf16.msra.mxu0 0
      %763 = vmatpush.bf16.msra.mxu0 %v754
      %764 = vmatmul.bf16.gmra.mxu0 %v751
      %v765 = vpop.f32.mrf.mxu0
      %v766 = vadd.f32 0.0, %v765
      %v767 = vpop.f32.mrf.mxu0
      %768 = vdwg.mxu0
      %v770 = vsel %vm605, %v728, 0
      %v773 = vsel %vm733, %v601, 0
      %775 = vmatpush.bf16.msra.mxu0 0
      %776 = vmatpush.bf16.msra.mxu0 0
      %777 = vmatpush.bf16.msra.mxu0 0
      %778 = vmatpush.bf16.msra.mxu0 0
      %779 = vmatpush.bf16.msra.mxu0 0
      %780 = vmatpush.bf16.msra.mxu0 0
      %781 = vmatpush.bf16.msra.mxu0 0
      %782 = vmatpush.bf16.msra.mxu0 %v773
      %783 = vmatmul.bf16.gmra.mxu0 %v770
      %v784 = vpop.f32.mrf.mxu0
      %v785 = vadd.f32 0.0, %v784
      %v786 = vpop.f32.mrf.mxu0
      %787 = vdwg.mxu0
      %v789 = vsel %vm605, %v729, 0
      %v792 = vsel %vm733, %v604, 0
      %794 = vmatpush.bf16.msra.mxu0 0
      %795 = vmatpush.bf16.msra.mxu0 0
      %796 = vmatpush.bf16.msra.mxu0 0
      %797 = vmatpush.bf16.msra.mxu0 0
      %798 = vmatpush.bf16.msra.mxu0 0
      %799 = vmatpush.bf16.msra.mxu0 0
      %800 = vmatpush.bf16.msra.mxu0 0
      %801 = vmatpush.bf16.msra.mxu0 %v792
      %802 = vmatmul.bf16.gmra.mxu0 %v789
      %v803 = vpop.f32.mrf.mxu0
      %v804 = vadd.f32 0.0, %v803
      %v805 = vpop.f32.mrf.mxu0
      %806 = vdwg.mxu0
      %v807 = vrot.slane %v785, 4
      %vm808 = vcmask 1047556
      %v809 = vsel %vm808, %v807, %v747
      %v810 = vrot.slane %v747, 4
      %v811 = vsel %vm808, %v785, %v810
      %v813 = vunpack.c.l.s4 1983009808
      %v814 = vunpack.c.0.s8 %v813
      %v815 = vperm.slane %v809, %v814
      %v817 = vunpack.c.l.s4 1983009808
      %v818 = vunpack.c.0.s8 %v817
      %v819 = vperm.slane %v811, %v818
      %v820 = vrot.slane %v804, 4
      %v821 = vsel %vm808, %v820, %v766
      %v822 = vrot.slane %v766, 4
      %v823 = vsel %vm808, %v804, %v822
      %v825 = vunpack.c.l.s4 1983009808
      %v826 = vunpack.c.0.s8 %v825
      %v827 = vperm.slane %v821, %v826
      %v829 = vunpack.c.l.s4 1983009808
      %v830 = vunpack.c.0.s8 %v829
      %v831 = vperm.slane %v823, %v830
      %v832 = vrot.slane %v827, 4
      %v833 = vsel %vm808, %v832, %v815
      %v834 = vrot.slane %v815, 4
      %v835 = vsel %vm808, %v827, %v834
      %v837 = vunpack.c.l.s4 1934713408
      %v838 = vunpack.c.0.s8 %v837
      %v839 = vperm.slane %v833, %v838
      %v841 = vunpack.c.l.s4 1934713408
      %v842 = vunpack.c.0.s8 %v841
      %v843 = vperm.slane %v835, %v842
      %v844 = vrot.slane %v831, 4
      %v845 = vsel %vm808, %v844, %v819
      %v846 = vrot.slane %v819, 4
      %v847 = vsel %vm808, %v831, %v846
      %v849 = vunpack.c.l.s4 1934713408
      %v850 = vunpack.c.0.s8 %v849
      %v851 = vperm.slane %v845, %v850
      %v853 = vunpack.c.l.s4 1934713408
      %v854 = vunpack.c.0.s8 %v853
      %v855 = vperm.slane %v847, %v854
      %v856 = vrot.slane %v839, 4
      %v857 = vsel %vm808, 0.0, %v856
      %v858 = vrot.slane %v843, 4
      %v859 = vsel %vm808, 0.0, %v858
      %v860 = vrot.slane %v851, 4
      %v861 = vsel %vm808, 0.0, %v860
      %v862 = vrot.slane %v855, 4
      %v863 = vsel %vm808, 0.0, %v862
      %v864 = vsel %vm808, %v858, %v839
      %v866 = vunpack.c.l.s4 1983009808
      %v867 = vunpack.c.0.s8 %v866
      %v868 = vperm.slane %v864, %v867
      %v869 = vrot.slane %v859, 4
      %v870 = vsel %vm808, %v869, %v857
      %v872 = vunpack.c.l.s4 1983009808
      %v873 = vunpack.c.0.s8 %v872
      %v874 = vperm.slane %v870, %v873
      %v875 = vsel %vm808, %v862, %v851
      %v877 = vunpack.c.l.s4 1983009808
      %v878 = vunpack.c.0.s8 %v877
      %v879 = vperm.slane %v875, %v878
      %v880 = vrot.slane %v863, 4
      %v881 = vsel %vm808, %v880, %v861
      %v883 = vunpack.c.l.s4 1983009808
      %v884 = vunpack.c.0.s8 %v883
      %v885 = vperm.slane %v881, %v884
      %v886 = vrot.slane %v874, 4
      %v887 = vsel %vm808, %v886, %v868
      %v888 = vrot.slane %v868, 4
      %v889 = vsel %vm808, %v874, %v888
      %v891 = vunpack.c.l.s4 1934713408
      %v892 = vunpack.c.0.s8 %v891
      %v893 = vperm.slane %v887, %v892
      %v895 = vunpack.c.l.s4 1934713408
      %v896 = vunpack.c.0.s8 %v895
      %v897 = vperm.slane %v889, %v896
      %v898 = vrot.slane %v885, 4
      %v899 = vsel %vm808, %v898, %v879
      %v900 = vrot.slane %v879, 4
      %v901 = vsel %vm808, %v885, %v900
      %v903 = vunpack.c.l.s4 1934713408
      %v904 = vunpack.c.0.s8 %v903
      %v905 = vperm.slane %v899, %v904
      %v907 = vunpack.c.l.s4 1934713408
      %v908 = vunpack.c.0.s8 %v907
      %v909 = vperm.slane %v901, %v908
      %v910 = vrot.slane %v905, 4
      %v911 = vsel %vm808, %v910, %v893
      %v912 = vrot.slane %v893, 4
      %v913 = vsel %vm808, %v905, %v912
      %v914 = vrot.slane %v909, 4
      %v915 = vsel %vm808, %v914, %v897
      %v916 = vrot.slane %v897, 4
      %v917 = vsel %vm808, %v909, %v916
      %919 = vrot.lane.b32.xlu0 %v913, 8
      %v920 = vpop.permute.xlu0 %919
      %923 = vrot.lane.b32.xlu0 %v915, 16
      %v924 = vpop.permute.xlu0 %923
      %927 = vrot.lane.b32.xlu0 %v917, 24
      %v928 = vpop.permute.xlu0 %927
      %v930 = vsel %vm605, %v911, %v920
      %vm931 = vcmask 130048
      %v932 = vsel %vm931, %v930, %v924
      %vm933 = vcmask 195584
      %v934 = vsel %vm933, %v932, %v928
      %v935 = vpack.c.bf16 %v934, %v934
      %vm936 = vcmask 257024
      %937 = vst.msk [vmem:[%s233] sm:$0xf] %vm936, %v935
      %p938 = scmp.lt.s32.totalorder %s18, 1
      %s939 = scalar_select %p938, %s18, 1
      %p940 = scmp.lt.s32.totalorder %s19, 0
      %s941 = scalar_select %p940, %s19, 0
      %s942 = sadd.s32 %s941, %s939
      %s943 = smul.addr %s942, 4
      %s944 = scalar_lea.vmem %s3, %s943
      // Predicated region
      $region33: #{transformer_forward.43} parent=31 // pred_check
        %p945 = pneg %p126
      $region34: #{transformer_forward.43} parent=31 // pred_check_branch
        %947 = sbr.rel (%p945) target = $region36
      $region35: #{transformer_forward.43} parent=31 // pred_region
        _
      $region36: #{transformer_forward.43} parent=31 // pred_fallthru
        _
    $region32: #{transformer_forward.43} parent=5 // pred_fallthru
      _
    %p948 = scmp.le.s32.totalorder 2, %s9
    // Predicated region
    $region37: #{transformer_forward.43} parent=5 // pred_check
      %p949 = pneg %p948
    $region38: #{transformer_forward.43} parent=5 // pred_check_branch
      %951 = sbr.rel (%p949) target = $region40
    $region39: #{transformer_forward.43} parent=5 // pred_region
      %s952 = ssub.s32 %s9, 2
      // Predicated region
      $region41: #{transformer_forward.43} parent=39 // pred_check
        %p953 = pneg %p132
      $region42: #{transformer_forward.43} parent=39 // pred_check_branch
        %955 = sbr.rel (%p953) target = $region44
      $region43: #{transformer_forward.43} parent=39 // pred_region
        %p956 = scmp.lt.s32.totalorder %s20, 1
        %s957 = scalar_select %p956, %s20, 1
        %p958 = scmp.lt.s32.totalorder %s21, 0
        %s959 = scalar_select %p958, %s21, 0
        %s960 = sadd.s32 %s959, %s957
        %s961 = smul.addr %s960, 4
        %s962 = scalar_lea.vmem %s3, %s961
      $region44: #{transformer_forward.43} parent=39 // pred_fallthru
        _
    $region40: #{transformer_forward.43} parent=5 // pred_fallthru
      _
  $region6: #{transformer_forward.43} parent=0 // loop_footer
    %s13 = sadd.s32 1, %s9
  $region7: #{transformer_forward.43} parent=0 // loop_footer_branch
    %8 = sbr.rel target = $region3
  $region8: #{transformer_forward.43} parent=0 // loop_exit
    _

// kernel: transformer_forward.45
$region0: #{transformer_forward.45}
  #allocation0 [shape = 'u32[]', space=smem, size = 0x4, offset = 0x4, fixed_abs, tag = 'smem constant byte address 0x4 - core index']
  #allocation1 [shape = 'u32[72,128]{1,0:T(1,128)}', space=vmem, size = 0x9000, scoped, tag = 'internal scratch']
  #allocation2 [shape = 'f32[16,128]{1,0:T(8,128)}', space=vmem, size = 0x2000, scoped, tag = 'scratch operand']
  %s0 = inlined_call_operand.vmem [shape: bf16[16,32], index: 0, kind: input, shape index: {}]
  %s1 = inlined_call_operand.vmem [shape: bf16[32,128], index: 1, kind: input, shape index: {}]
  %s2 = inlined_call_operand.hbm [shape: f32[1,128], index: 2, kind: input, shape index: {}]
  %s3 = inlined_call_operand.vmem [shape: bf16[16,128], index: 3, kind: output, shape index: {}]
  %s4 = sld [smem:[#allocation0]]
  $region34: #{transformer_forward.45} parent=0
    _
  %s6 = ssub.s32 1, %s4
  %s7 = scalar_select 0, %s6, %s4
  $region1: #{transformer_forward.45} parent=0
    #allocation3 [shape = 'u8[512]{0}', space=vmem, size = 0x400, scoped, tag = 'input window, operand 2, single buffered']
    #allocation4 [shape = 's32[1]{0}', space=sflag, size = 0x4, scoped, tag = 'scoped memory for transformer_forward.45']
    %8 = vsyncpa [#allocation4], 0
    // Predicated region
    $region2: #{transformer_forward.45} parent=1 // pred_check
      _
    $region3: #{transformer_forward.45} parent=1 // pred_check_branch
      %10 = sbr.rel (0) target = $region5
    $region4: #{transformer_forward.45} parent=1 // pred_region
      _
    $region5: #{transformer_forward.45} parent=1 // pred_fallthru
      _
    // Predicated region
    $region6: #{transformer_forward.45} parent=1 // pred_check
      _
    $region7: #{transformer_forward.45} parent=1 // pred_check_branch
      %12 = sbr.rel (0) target = $region9
    $region8: #{transformer_forward.45} parent=1 // pred_region
      _
    $region9: #{transformer_forward.45} parent=1 // pred_fallthru
      _
    // Predicated region
    $region10: #{transformer_forward.45} parent=1 // pred_check
      _
    $region11: #{transformer_forward.45} parent=1 // pred_check_branch
      %14 = sbr.rel (0) target = $region13
    $region12: #{transformer_forward.45} parent=1 // pred_region
      %16 = vsyncadd [#allocation4], 0
      %s18 = sshll.u32 %s2, 4
      %s19 = int_to_ptr.hbm [resolvable:$true] %s18
      %s20 = sshll.u32 [#allocation3], 4
      %s21 = int_to_ptr.vmem [resolvable:$true] %s20
      %23 = dma.hbm_to_vmem [thread:$0]  %s19, 16, %s21, [#allocation4]
    $region13: #{transformer_forward.45} parent=1 // pred_fallthru
      _
    // Predicated region
    $region14: #{transformer_forward.45} parent=1 // pred_check
      _
    $region15: #{transformer_forward.45} parent=1 // pred_check_branch
      %25 = sbr.rel (0) target = $region17
    $region16: #{transformer_forward.45} parent=1 // pred_region
      %27 = dma.done [#allocation4], 16
    $region17: #{transformer_forward.45} parent=1 // pred_fallthru
      _
    %p29 = scmp.eq.s32.totalorder 0, 0
    // Predicated region
    $region18: #{transformer_forward.45} parent=1 // pred_check
      %p30 = pneg %p29
    $region19: #{transformer_forward.45} parent=1 // pred_check_branch
      %32 = sbr.rel (%p30) target = $region21
    $region20: #{transformer_forward.45} parent=1 // pred_region
      %33 = vst [vmem:[#allocation2] sm:$0xff] 0.0
      %34 = vst [vmem:[#allocation2 + $0x8] sm:$0xff] 0.0
    $region21: #{transformer_forward.45} parent=1 // pred_fallthru
      _
    %v35 = vld [vmem:[%s1] sm:$0xf]
    %v36 = vld [vmem:[%s1 + $0x4] sm:$0xf]
    %v37 = vld [vmem:[%s1 + $0x8] sm:$0xf]
    %v38 = vld [vmem:[%s1 + $0xc] sm:$0xf]
    %v39 = vld [vmem:[#allocation2] sm:$0xff]
    %v40 = vld [vmem:[#allocation2 + $0x8] sm:$0xff]
    %v41 = vld [vmem:[%s0] sm:$0xf]
    %v42 = vld [vmem:[%s0 + $0x4] sm:$0xf]
    %v45 = vunpack.c.l.b16 %v41
    %v46 = vunpack.c.l.b16 %v42
    %v47 = vpack.c.b16 %v46, %v45
    %v52 = vunpack.c.l.b16 %v35
    %v53 = vunpack.c.l.b16 %v36
    %v54 = vunpack.c.l.b16 %v37
    %v55 = vunpack.c.l.b16 %v38
    %v56 = vpack.c.b16 %v53, %v52
    %v57 = vpack.c.b16 %v55, %v54
    %vm60 = vcmask 261120
    %v62 = vsel %vm60, %v47, 0
    %64 = vmatpush.bf16.msra.mxu0 0
    %65 = vmatpush.bf16.msra.mxu0 0
    %66 = vmatpush.bf16.msra.mxu0 0
    %67 = vmatpush.bf16.msra.mxu0 0
    %68 = vmatpush.bf16.msra.mxu0 0
    %69 = vmatpush.bf16.msra.mxu0 0
    %70 = vmatpush.bf16.msra.mxu0 %v57
    %71 = vmatpush.bf16.msra.mxu0 %v56
    %72 = vmatmul.bf16.gmra.mxu0 %v62
    %v73 = vpop.f32.mrf.mxu0
    %v74 = vadd.f32 0.0, %v73
    %v75 = vpop.f32.mrf.mxu0
    %v76 = vadd.f32 0.0, %v75
    %77 = vdwg.mxu0
    %v78 = vadd.f32 %v39, %v74
    %v79 = vadd.f32 %v40, %v76
    %80 = vst [vmem:[#allocation2] sm:$0xff] %v78
    %81 = vst [vmem:[#allocation2 + $0x8] sm:$0xff] %v79
    // Predicated region
    $region22: #{transformer_forward.45} parent=1 // pred_check
      %p82 = pneg %p29
    $region23: #{transformer_forward.45} parent=1 // pred_check_branch
      %84 = sbr.rel (%p82) target = $region25
    $region24: #{transformer_forward.45} parent=1 // pred_region
      %v85 = vld [vmem:[#allocation2] sm:$0xff]
      %v86 = vld [vmem:[#allocation2 + $0x8] sm:$0xff]
      %v87 = vld [vmem:[#allocation3] sm:$0x1]
      %v89 = vperm.slane %v87, 0
      %v91 = vadd.f32 %v85, %v89
      %v92 = vadd.f32 %v86, %v89
      %v93 = vmax.f32 %v91, 0.0
      %v94 = vmax.f32 %v92, 0.0
      %v95 = vpack.c.bf16 %v93, %v93
      %v96 = vpack.c.bf16 %v94, %v94
      %97 = vst [vmem:[%s3] sm:$0xf] %v95
      %98 = vst [vmem:[%s3 + $0x4] sm:$0xf] %v96
    $region25: #{transformer_forward.45} parent=1 // pred_fallthru
      _
    // Predicated region
    $region26: #{transformer_forward.45} parent=1 // pred_check
      _
    $region27: #{transformer_forward.45} parent=1 // pred_check_branch
      %100 = sbr.rel (0) target = $region29
    $region28: #{transformer_forward.45} parent=1 // pred_region
      _
    $region29: #{transformer_forward.45} parent=1 // pred_fallthru
      _
    // Predicated region
    $region30: #{transformer_forward.45} parent=1 // pred_check
      _
    $region31: #{transformer_forward.45} parent=1 // pred_check_branch
      %102 = sbr.rel (0) target = $region33
    $region32: #{transformer_forward.45} parent=1 // pred_region
      _
    $region33: #{transformer_forward.45} parent=1 // pred_fallthru
      _
    %103 = vsyncpa [#allocation4], 1

// kernel: transformer_forward.44
$region0: #{transformer_forward.44}
  #allocation0 [shape = 'u32[]', space=smem, size = 0x4, offset = 0x4, fixed_abs, tag = 'smem constant byte address 0x4 - core index']
  #allocation1 [shape = 'u32[72,128]{1,0:T(1,128)}', space=vmem, size = 0x9000, scoped, tag = 'internal scratch']
  #allocation2 [shape = 'f32[16,32]{1,0:T(8,128)}', space=vmem, size = 0x2000, scoped, tag = 'scratch operand']
  %s0 = inlined_call_operand.vmem [shape: bf16[16,32], index: 0, kind: input, shape index: {}]
  %s1 = inlined_call_operand.vmem [shape: bf16[32,32], index: 1, kind: input, shape index: {}]
  %s2 = inlined_call_operand.hbm [shape: f32[1,32], index: 2, kind: input, shape index: {}]
  %s3 = inlined_call_operand.vmem [shape: bf16[16,32], index: 3, kind: input, shape index: {}]
  %s4 = inlined_call_operand.hbm [shape: f32[1,32], index: 4, kind: input, shape index: {}]
  %s5 = inlined_call_operand.hbm [shape: f32[1,32], index: 5, kind: input, shape index: {}]
  %s6 = inlined_call_operand.vmem [shape: bf16[16,32], index: 6, kind: output, shape index: {}]
  %s7 = sld [smem:[#allocation0]]
  $region54: #{transformer_forward.44} parent=0
    _
  %s9 = ssub.s32 1, %s7
  %s10 = scalar_select 0, %s9, %s7
  $region1: #{transformer_forward.44} parent=0
    #allocation3 [shape = 'u8[512]{0}', space=vmem, size = 0x400, scoped, tag = 'input window, operand 2, single buffered']
    #allocation4 [shape = 's32[1]{0}', space=sflag, size = 0x4, scoped, tag = 'scoped memory for transformer_forward.44']
    #allocation5 [shape = 'u8[512]{0}', space=vmem, size = 0x400, scoped, tag = 'input window, operand 4, single buffered']
    #allocation6 [shape = 's32[1]{0}', space=sflag, size = 0x4, scoped, tag = 'scoped memory for transformer_forward.44']
    #allocation7 [shape = 'u8[512]{0}', space=vmem, size = 0x400, scoped, tag = 'input window, operand 5, single buffered']
    %11 = vsyncpa [#allocation4], 0
    %12 = vsyncpa [#allocation6], 0
    // Predicated region
    $region2: #{transformer_forward.44} parent=1 // pred_check
      _
    $region3: #{transformer_forward.44} parent=1 // pred_check_branch
      %14 = sbr.rel (0) target = $region5
    $region4: #{transformer_forward.44} parent=1 // pred_region
      _
    $region5: #{transformer_forward.44} parent=1 // pred_fallthru
      _
    // Predicated region
    $region6: #{transformer_forward.44} parent=1 // pred_check
      _
    $region7: #{transformer_forward.44} parent=1 // pred_check_branch
      %16 = sbr.rel (0) target = $region9
    $region8: #{transformer_forward.44} parent=1 // pred_region
      _
    $region9: #{transformer_forward.44} parent=1 // pred_fallthru
      _
    // Predicated region
    $region10: #{transformer_forward.44} parent=1 // pred_check
      _
    $region11: #{transformer_forward.44} parent=1 // pred_check_branch
      %18 = sbr.rel (0) target = $region13
    $region12: #{transformer_forward.44} parent=1 // pred_region
      %20 = vsyncadd [#allocation4], 0
      %s22 = sshll.u32 %s2, 4
      %s23 = int_to_ptr.hbm [resolvable:$true] %s22
      %s24 = sshll.u32 [#allocation3], 4
      %s25 = int_to_ptr.vmem [resolvable:$true] %s24
      %27 = dma.hbm_to_vmem [thread:$0]  %s23, 16, %s25, [#allocation4]
    $region13: #{transformer_forward.44} parent=1 // pred_fallthru
      _
    // Predicated region
    $region14: #{transformer_forward.44} parent=1 // pred_check
      _
    $region15: #{transformer_forward.44} parent=1 // pred_check_branch
      %29 = sbr.rel (0) target = $region17
    $region16: #{transformer_forward.44} parent=1 // pred_region
      _
    $region17: #{transformer_forward.44} parent=1 // pred_fallthru
      _
    // Predicated region
    $region18: #{transformer_forward.44} parent=1 // pred_check
      _
    $region19: #{transformer_forward.44} parent=1 // pred_check_branch
      %31 = sbr.rel (0) target = $region21
    $region20: #{transformer_forward.44} parent=1 // pred_region
      %33 = vsyncadd [#allocation6], 0
      %s35 = sshll.u32 %s4, 4
      %s36 = int_to_ptr.hbm [resolvable:$true] %s35
      %s37 = sshll.u32 [#allocation5], 4
      %s38 = int_to_ptr.vmem [resolvable:$true] %s37
      %40 = dma.hbm_to_vmem [thread:$0]  %s36, 16, %s38, [#allocation6]
    $region21: #{transformer_forward.44} parent=1 // pred_fallthru
      _
    // Predicated region
    $region22: #{transformer_forward.44} parent=1 // pred_check
      _
    $region23: #{transformer_forward.44} parent=1 // pred_check_branch
      %42 = sbr.rel (0) target = $region25
    $region24: #{transformer_forward.44} parent=1 // pred_region
      %44 = vsyncadd [#allocation6], 0
      %s46 = sshll.u32 %s5, 4
      %s47 = int_to_ptr.hbm [resolvable:$true] %s46
      %s48 = sshll.u32 [#allocation7], 4
      %s49 = int_to_ptr.vmem [resolvable:$true] %s48
      %51 = dma.hbm_to_vmem [thread:$0]  %s47, 16, %s49, [#allocation6]
    $region25: #{transformer_forward.44} parent=1 // pred_fallthru
      _
    // Predicated region
    $region26: #{transformer_forward.44} parent=1 // pred_check
      _
    $region27: #{transformer_forward.44} parent=1 // pred_check_branch
      %53 = sbr.rel (0) target = $region29
    $region28: #{transformer_forward.44} parent=1 // pred_region
      %55 = dma.done [#allocation4], 16
    $region29: #{transformer_forward.44} parent=1 // pred_fallthru
      _
    // Predicated region
    $region30: #{transformer_forward.44} parent=1 // pred_check
      _
    $region31: #{transformer_forward.44} parent=1 // pred_check_branch
      %57 = sbr.rel (0) target = $region33
    $region32: #{transformer_forward.44} parent=1 // pred_region
      %59 = dma.done [#allocation6], 16
    $region33: #{transformer_forward.44} parent=1 // pred_fallthru
      _
    // Predicated region
    $region34: #{transformer_forward.44} parent=1 // pred_check
      _
    $region35: #{transformer_forward.44} parent=1 // pred_check_branch
      %61 = sbr.rel (0) target = $region37
    $region36: #{transformer_forward.44} parent=1 // pred_region
      %63 = dma.done [#allocation6], 16
    $region37: #{transformer_forward.44} parent=1 // pred_fallthru
      _
    %p65 = scmp.eq.s32.totalorder 0, 0
    // Predicated region
    $region38: #{transformer_forward.44} parent=1 // pred_check
      %p66 = pneg %p65
    $region39: #{transformer_forward.44} parent=1 // pred_check_branch
      %68 = sbr.rel (%p66) target = $region41
    $region40: #{transformer_forward.44} parent=1 // pred_region
      %vm69 = vcmask 261120
      %70 = vst.msk [vmem:[#allocation2] sm:$0xff] %vm69, 0.0
      %71 = vst.msk [vmem:[#allocation2 + $0x8] sm:$0xff] %vm69, 0.0
    $region41: #{transformer_forward.44} parent=1 // pred_fallthru
      _
    %v72 = vld [vmem:[%s1] sm:$0xf]
    %v73 = vld [vmem:[%s1 + $0x4] sm:$0xf]
    %v74 = vld [vmem:[%s1 + $0x8] sm:$0xf]
    %v75 = vld [vmem:[%s1 + $0xc] sm:$0xf]
    %v76 = vld [vmem:[#allocation2] sm:$0xff]
    %v77 = vld [vmem:[#allocation2 + $0x8] sm:$0xff]
    %v78 = vld [vmem:[%s0] sm:$0xf]
    %v79 = vld [vmem:[%s0 + $0x4] sm:$0xf]
    %v82 = vunpack.c.l.b16 %v78
    %v83 = vunpack.c.l.b16 %v79
    %v84 = vpack.c.b16 %v83, %v82
    %v89 = vunpack.c.l.b16 %v72
    %v90 = vunpack.c.l.b16 %v73
    %v91 = vunpack.c.l.b16 %v74
    %v92 = vunpack.c.l.b16 %v75
    %v93 = vpack.c.b16 %v90, %v89
    %v94 = vpack.c.b16 %v92, %v91
    %vm97 = vcmask 261120
    %v99 = vsel %vm97, %v84, 0
    %101 = vmatpush.bf16.msra.mxu0 0
    %102 = vmatpush.bf16.msra.mxu0 0
    %103 = vmatpush.bf16.msra.mxu0 0
    %104 = vmatpush.bf16.msra.mxu0 0
    %105 = vmatpush.bf16.msra.mxu0 0
    %106 = vmatpush.bf16.msra.mxu0 0
    %107 = vmatpush.bf16.msra.mxu0 %v94
    %108 = vmatpush.bf16.msra.mxu0 %v93
    %109 = vmatmul.bf16.gmra.mxu0 %v99
    %v110 = vpop.f32.mrf.mxu0
    %v111 = vadd.f32 0.0, %v110
    %v112 = vpop.f32.mrf.mxu0
    %v113 = vadd.f32 0.0, %v112
    %114 = vdwg.mxu0
    %v115 = vadd.f32 %v76, %v111
    %v116 = vadd.f32 %v77, %v113
    %117 = vst.msk [vmem:[#allocation2] sm:$0xff] %vm97, %v115
    %118 = vst.msk [vmem:[#allocation2 + $0x8] sm:$0xff] %vm97, %v116
    // Predicated region
    $region42: #{transformer_forward.44} parent=1 // pred_check
      %p119 = pneg %p65
    $region43: #{transformer_forward.44} parent=1 // pred_check_branch
      %121 = sbr.rel (%p119) target = $region45
    $region44: #{transformer_forward.44} parent=1 // pred_region
      %v122 = vld [vmem:[#allocation2] sm:$0xff]
      %v123 = vld [vmem:[#allocation2 + $0x8] sm:$0xff]
      %v124 = vld [vmem:[#allocation3] sm:$0x1]
      %v126 = vperm.slane %v124, 0
      %v128 = vadd.f32 %v122, %v126
      %v129 = vadd.f32 %v123, %v126
      %v130 = vld [vmem:[%s3] sm:$0xf]
      %v131 = vld [vmem:[%s3 + $0x4] sm:$0xf]
      %v132 = vunpack.c.l.bf16 %v130
      %v133 = vunpack.c.l.bf16 %v131
      %v134 = vadd.f32 %v128, %v132
      %v135 = vadd.f32 %v129, %v133
      %v136 = vsel %vm97, %v134, 0.0
      %137 = vadd.xlane.f32.xlu0 %v136
      %v138 = vpop.xlane.xlu0 %137
      %v139 = vsel %vm97, %v135, 0.0
      %140 = vadd.xlane.f32.xlu0 %v139
      %v141 = vpop.xlane.xlu0 %140
      %v142 = vrcp.pop 32.0
      %v143 = vmul.f32 32.0, %v142
      %v144 = vsub.f32 1.0, %v143
      %v145 = vmul.f32 %v142, %v144
      %v146 = vadd.f32 %v142, %v145
      %vm147 = vweird.f32 %v142
      %v148 = vsel %vm147, %v142, %v146
      %v149 = vmul.f32 %v138, %v148
      %v150 = vmul.f32 %v141, %v148
      %v151 = vsub.f32 %v134, %v149
      %v152 = vsub.f32 %v135, %v150
      %v153 = vmul.f32 %v151, %v151
      %v154 = vmul.f32 %v152, %v152
      %v155 = vsel %vm97, %v153, 0.0
      %156 = vadd.xlane.f32.xlu0 %v155
      %v157 = vpop.xlane.xlu0 %156
      %v158 = vsel %vm97, %v154, 0.0
      %159 = vadd.xlane.f32.xlu0 %v158
      %v160 = vpop.xlane.xlu0 %159
      %v161 = vmul.f32 %v157, %v148
      %v162 = vmul.f32 %v160, %v148
      %v163 = vadd.f32 %v161, 1e-05
      %v164 = vadd.f32 %v162, 1e-05
      %v165 = vrsqrt.pop %v163
      %v166 = vmul.f32 %v165, %v163
      %v167 = vmul.f32 %v166, %v165
      %v168 = vmul.f32 0.5, %v167
      %v169 = vsub.f32 1.5, %v168
      %v170 = vmul.f32 %v165, %v169
      %vm171 = vweird.f32 %v163
      %vm172 = vweird.f32 %v165
      %vm173 = vmor %vm171, %vm172
      %v174 = vsel %vm173, %v165, %v170
      %v175 = vrsqrt.pop %v164
      %v176 = vmul.f32 %v175, %v164
      %v177 = vmul.f32 %v176, %v175
      %v178 = vmul.f32 0.5, %v177
      %v179 = vsub.f32 1.5, %v178
      %v180 = vmul.f32 %v175, %v179
      %vm181 = vweird.f32 %v164
      %vm182 = vweird.f32 %v175
      %vm183 = vmor %vm181, %vm182
      %v184 = vsel %vm183, %v175, %v180
      %v185 = vmul.f32 %v151, %v174
      %v186 = vmul.f32 %v152, %v184
      %v187 = vld [vmem:[#allocation5] sm:$0x1]
      %v189 = vperm.slane %v187, 0
      %v191 = vmul.f32 %v185, %v189
      %v192 = vmul.f32 %v186, %v189
      %v193 = vld [vmem:[#allocation7] sm:$0x1]
      %v195 = vperm.slane %v193, 0
      %v197 = vadd.f32 %v191, %v195
      %v198 = vadd.f32 %v192, %v195
      %v199 = vpack.c.bf16 %v197, %v197
      %v200 = vpack.c.bf16 %v198, %v198
      %vm201 = vcmask 257024
      %202 = vst.msk [vmem:[%s6] sm:$0xf] %vm201, %v199
      %203 = vst.msk [vmem:[%s6 + $0x4] sm:$0xf] %vm201, %v200
    $region45: #{transformer_forward.44} parent=1 // pred_fallthru
      _
    // Predicated region
    $region46: #{transformer_forward.44} parent=1 // pred_check
      _
    $region47: #{transformer_forward.44} parent=1 // pred_check_branch
      %205 = sbr.rel (0) target = $region49
    $region48: #{transformer_forward.44} parent=1 // pred_region
      _
    $region49: #{transformer_forward.44} parent=1 // pred_fallthru
      _
    // Predicated region
    $region50: #{transformer_forward.44} parent=1 // pred_check
      _
    $region51: #{transformer_forward.44} parent=1 // pred_check_branch
      %207 = sbr.rel (0) target = $region53
    $region52: #{transformer_forward.44} parent=1 // pred_region
      _
    $region53: #{transformer_forward.44} parent=1 // pred_fallthru
      _
    %208 = vsyncpa [#allocation4], 1
    %209 = vsyncpa [#allocation6], 1

// kernel: transformer_forward.46
$region0: #{transformer_forward.46}
  #allocation0 [shape = 'u32[]', space=smem, size = 0x4, offset = 0x4, fixed_abs, tag = 'smem constant byte address 0x4 - core index']
  #allocation1 [shape = 'u32[72,128]{1,0:T(1,128)}', space=vmem, size = 0x9000, scoped, tag = 'internal scratch']
  #allocation2 [shape = 'f32[16,32]{1,0:T(8,128)}', space=vmem, size = 0x2000, scoped, tag = 'scratch operand']
  %s0 = inlined_call_operand.vmem [shape: bf16[16,128], index: 0, kind: input, shape index: {}]
  %s1 = inlined_call_operand.vmem [shape: bf16[128,32], index: 1, kind: input, shape index: {}]
  %s2 = inlined_call_operand.vmem [shape: f32[1,32], index: 2, kind: input, shape index: {}]
  %s3 = inlined_call_operand.vmem [shape: bf16[16,32], index: 3, kind: input, shape index: {}]
  %s4 = inlined_call_operand.hbm [shape: f32[1,32], index: 4, kind: input, shape index: {}]
  %s5 = inlined_call_operand.hbm [shape: f32[1,32], index: 5, kind: input, shape index: {}]
  %s6 = inlined_call_operand.vmem [shape: bf16[16,32], index: 6, kind: output, shape index: {}]
  %s7 = sld [smem:[#allocation0]]
  $region50: #{transformer_forward.46} parent=0
    _
  %s9 = ssub.s32 1, %s7
  %s10 = scalar_select 0, %s9, %s7
  $region1: #{transformer_forward.46} parent=0
    #allocation3 [shape = 'u8[512]{0}', space=vmem, size = 0x400, scoped, tag = 'input window, operand 4, single buffered']
    #allocation4 [shape = 's32[1]{0}', space=sflag, size = 0x4, scoped, tag = 'scoped memory for transformer_forward.46']
    #allocation5 [shape = 'u8[512]{0}', space=vmem, size = 0x400, scoped, tag = 'input window, operand 5, single buffered']
    #allocation6 [shape = 's32[1]{0}', space=sflag, size = 0x4, scoped, tag = 'scoped memory for transformer_forward.46']
    %11 = vsyncpa [#allocation4], 0
    %12 = vsyncpa [#allocation6], 0
    // Predicated region
    $region2: #{transformer_forward.46} parent=1 // pred_check
      _
    $region3: #{transformer_forward.46} parent=1 // pred_check_branch
      %14 = sbr.rel (0) target = $region5
    $region4: #{transformer_forward.46} parent=1 // pred_region
      _
    $region5: #{transformer_forward.46} parent=1 // pred_fallthru
      _
    // Predicated region
    $region6: #{transformer_forward.46} parent=1 // pred_check
      _
    $region7: #{transformer_forward.46} parent=1 // pred_check_branch
      %16 = sbr.rel (0) target = $region9
    $region8: #{transformer_forward.46} parent=1 // pred_region
      _
    $region9: #{transformer_forward.46} parent=1 // pred_fallthru
      _
    // Predicated region
    $region10: #{transformer_forward.46} parent=1 // pred_check
      _
    $region11: #{transformer_forward.46} parent=1 // pred_check_branch
      %18 = sbr.rel (0) target = $region13
    $region12: #{transformer_forward.46} parent=1 // pred_region
      _
    $region13: #{transformer_forward.46} parent=1 // pred_fallthru
      _
    // Predicated region
    $region14: #{transformer_forward.46} parent=1 // pred_check
      _
    $region15: #{transformer_forward.46} parent=1 // pred_check_branch
      %20 = sbr.rel (0) target = $region17
    $region16: #{transformer_forward.46} parent=1 // pred_region
      _
    $region17: #{transformer_forward.46} parent=1 // pred_fallthru
      _
    // Predicated region
    $region18: #{transformer_forward.46} parent=1 // pred_check
      _
    $region19: #{transformer_forward.46} parent=1 // pred_check_branch
      %22 = sbr.rel (0) target = $region21
    $region20: #{transformer_forward.46} parent=1 // pred_region
      %24 = vsyncadd [#allocation4], 0
      %s26 = sshll.u32 %s4, 4
      %s27 = int_to_ptr.hbm [resolvable:$true] %s26
      %s28 = sshll.u32 [#allocation3], 4
      %s29 = int_to_ptr.vmem [resolvable:$true] %s28
      %31 = dma.hbm_to_vmem [thread:$0]  %s27, 16, %s29, [#allocation4]
    $region21: #{transformer_forward.46} parent=1 // pred_fallthru
      _
    // Predicated region
    $region22: #{transformer_forward.46} parent=1 // pred_check
      _
    $region23: #{transformer_forward.46} parent=1 // pred_check_branch
      %33 = sbr.rel (0) target = $region25
    $region24: #{transformer_forward.46} parent=1 // pred_region
      %35 = vsyncadd [#allocation6], 0
      %s37 = sshll.u32 %s5, 4
      %s38 = int_to_ptr.hbm [resolvable:$true] %s37
      %s39 = sshll.u32 [#allocation5], 4
      %s40 = int_to_ptr.vmem [resolvable:$true] %s39
      %42 = dma.hbm_to_vmem [thread:$0]  %s38, 16, %s40, [#allocation6]
    $region25: #{transformer_forward.46} parent=1 // pred_fallthru
      _
    // Predicated region
    $region26: #{transformer_forward.46} parent=1 // pred_check
      _
    $region27: #{transformer_forward.46} parent=1 // pred_check_branch
      %44 = sbr.rel (0) target = $region29
    $region28: #{transformer_forward.46} parent=1 // pred_region
      %46 = dma.done [#allocation4], 16
    $region29: #{transformer_forward.46} parent=1 // pred_fallthru
      _
    // Predicated region
    $region30: #{transformer_forward.46} parent=1 // pred_check
      _
    $region31: #{transformer_forward.46} parent=1 // pred_check_branch
      %48 = sbr.rel (0) target = $region33
    $region32: #{transformer_forward.46} parent=1 // pred_region
      %50 = dma.done [#allocation6], 16
    $region33: #{transformer_forward.46} parent=1 // pred_fallthru
      _
    %p51 = scmp.eq.s32.totalorder 0, 0
    // Predicated region
    $region34: #{transformer_forward.46} parent=1 // pred_check
      %p52 = pneg %p51
    $region35: #{transformer_forward.46} parent=1 // pred_check_branch
      %54 = sbr.rel (%p52) target = $region37
    $region36: #{transformer_forward.46} parent=1 // pred_region
      %vm55 = vcmask 261120
      %56 = vst.msk [vmem:[#allocation2] sm:$0xff] %vm55, 0.0
      %57 = vst.msk [vmem:[#allocation2 + $0x8] sm:$0xff] %vm55, 0.0
    $region37: #{transformer_forward.46} parent=1 // pred_fallthru
      _
    %v58 = vld [vmem:[%s1] sm:$0xf]
    %v59 = vld [vmem:[%s1 + $0x4] sm:$0xf]
    %v60 = vld [vmem:[%s1 + $0x8] sm:$0xf]
    %v61 = vld [vmem:[%s1 + $0xc] sm:$0xf]
    %v62 = vld [vmem:[%s1 + $0x10] sm:$0xf]
    %v63 = vld [vmem:[%s1 + $0x14] sm:$0xf]
    %v64 = vld [vmem:[%s1 + $0x18] sm:$0xf]
    %v65 = vld [vmem:[%s1 + $0x1c] sm:$0xf]
    %v66 = vld [vmem:[%s1 + $0x20] sm:$0xf]
    %v67 = vld [vmem:[%s1 + $0x24] sm:$0xf]
    %v68 = vld [vmem:[%s1 + $0x28] sm:$0xf]
    %v69 = vld [vmem:[%s1 + $0x2c] sm:$0xf]
    %v70 = vld [vmem:[%s1 + $0x30] sm:$0xf]
    %v71 = vld [vmem:[%s1 + $0x34] sm:$0xf]
    %v72 = vld [vmem:[%s1 + $0x38] sm:$0xf]
    %v73 = vld [vmem:[%s1 + $0x3c] sm:$0xf]
    %v74 = vld [vmem:[#allocation2] sm:$0xff]
    %v75 = vld [vmem:[#allocation2 + $0x8] sm:$0xff]
    %v76 = vld [vmem:[%s0] sm:$0xf]
    %v77 = vld [vmem:[%s0 + $0x4] sm:$0xf]
    %v80 = vunpack.c.l.b16 %v76
    %v81 = vunpack.c.l.b16 %v77
    %v82 = vpack.c.b16 %v81, %v80
    %v100 = vunpack.c.l.b16 %v58
    %v101 = vunpack.c.l.b16 %v59
    %v102 = vunpack.c.l.b16 %v60
    %v103 = vunpack.c.l.b16 %v61
    %v104 = vunpack.c.l.b16 %v62
    %v105 = vunpack.c.l.b16 %v63
    %v106 = vunpack.c.l.b16 %v64
    %v107 = vunpack.c.l.b16 %v65
    %v108 = vunpack.c.l.b16 %v66
    %v109 = vunpack.c.l.b16 %v67
    %v110 = vunpack.c.l.b16 %v68
    %v111 = vunpack.c.l.b16 %v69
    %v112 = vunpack.c.l.b16 %v70
    %v113 = vunpack.c.l.b16 %v71
    %v114 = vunpack.c.l.b16 %v72
    %v115 = vunpack.c.l.b16 %v73
    %v116 = vpack.c.b16 %v101, %v100
    %v117 = vpack.c.b16 %v103, %v102
    %v118 = vpack.c.b16 %v105, %v104
    %v119 = vpack.c.b16 %v107, %v106
    %v120 = vpack.c.b16 %v109, %v108
    %v121 = vpack.c.b16 %v111, %v110
    %v122 = vpack.c.b16 %v113, %v112
    %v123 = vpack.c.b16 %v115, %v114
    %132 = vmatpush.bf16.msra.mxu0 %v123
    %133 = vmatpush.bf16.msra.mxu0 %v122
    %134 = vmatpush.bf16.msra.mxu0 %v121
    %135 = vmatpush.bf16.msra.mxu0 %v120
    %136 = vmatpush.bf16.msra.mxu0 %v119
    %137 = vmatpush.bf16.msra.mxu0 %v118
    %138 = vmatpush.bf16.msra.mxu0 %v117
    %139 = vmatpush.bf16.msra.mxu0 %v116
    %140 = vmatmul.bf16.gmra.mxu0 %v82
    %v141 = vpop.f32.mrf.mxu0
    %v142 = vadd.f32 0.0, %v141
    %v143 = vpop.f32.mrf.mxu0
    %v144 = vadd.f32 0.0, %v143
    %145 = vdwg.mxu0
    %v146 = vadd.f32 %v74, %v142
    %v147 = vadd.f32 %v75, %v144
    %vm148 = vcmask 261120
    %149 = vst.msk [vmem:[#allocation2] sm:$0xff] %vm148, %v146
    %150 = vst.msk [vmem:[#allocation2 + $0x8] sm:$0xff] %vm148, %v147
    // Predicated region
    $region38: #{transformer_forward.46} parent=1 // pred_check
      %p151 = pneg %p51
    $region39: #{transformer_forward.46} parent=1 // pred_check_branch
      %153 = sbr.rel (%p151) target = $region41
    $region40: #{transformer_forward.46} parent=1 // pred_region
      %v154 = vld [vmem:[#allocation2] sm:$0xff]
      %v155 = vld [vmem:[#allocation2 + $0x8] sm:$0xff]
      %v156 = vld [vmem:[%s2] sm:$0x1]
      %v158 = vperm.slane %v156, 0
      %v160 = vadd.f32 %v154, %v158
      %v161 = vadd.f32 %v155, %v158
      %v162 = vld [vmem:[%s3] sm:$0xf]
      %v163 = vld [vmem:[%s3 + $0x4] sm:$0xf]
      %v164 = vunpack.c.l.bf16 %v162
      %v165 = vunpack.c.l.bf16 %v163
      %v166 = vadd.f32 %v160, %v164
      %v167 = vadd.f32 %v161, %v165
      %v168 = vsel %vm148, %v166, 0.0
      %169 = vadd.xlane.f32.xlu0 %v168
      %v170 = vpop.xlane.xlu0 %169
      %v171 = vsel %vm148, %v167, 0.0
      %172 = vadd.xlane.f32.xlu0 %v171
      %v173 = vpop.xlane.xlu0 %172
      %v174 = vrcp.pop 32.0
      %v175 = vmul.f32 32.0, %v174
      %v176 = vsub.f32 1.0, %v175
      %v177 = vmul.f32 %v174, %v176
      %v178 = vadd.f32 %v174, %v177
      %vm179 = vweird.f32 %v174
      %v180 = vsel %vm179, %v174, %v178
      %v181 = vmul.f32 %v170, %v180
      %v182 = vmul.f32 %v173, %v180
      %v183 = vsub.f32 %v166, %v181
      %v184 = vsub.f32 %v167, %v182
      %v185 = vmul.f32 %v183, %v183
      %v186 = vmul.f32 %v184, %v184
      %v187 = vsel %vm148, %v185, 0.0
      %188 = vadd.xlane.f32.xlu0 %v187
      %v189 = vpop.xlane.xlu0 %188
      %v190 = vsel %vm148, %v186, 0.0
      %191 = vadd.xlane.f32.xlu0 %v190
      %v192 = vpop.xlane.xlu0 %191
      %v193 = vmul.f32 %v189, %v180
      %v194 = vmul.f32 %v192, %v180
      %v195 = vadd.f32 %v193, 1e-05
      %v196 = vadd.f32 %v194, 1e-05
      %v197 = vrsqrt.pop %v195
      %v198 = vmul.f32 %v197, %v195
      %v199 = vmul.f32 %v198, %v197
      %v200 = vmul.f32 0.5, %v199
      %v201 = vsub.f32 1.5, %v200
      %v202 = vmul.f32 %v197, %v201
      %vm203 = vweird.f32 %v195
      %vm204 = vweird.f32 %v197
      %vm205 = vmor %vm203, %vm204
      %v206 = vsel %vm205, %v197, %v202
      %v207 = vrsqrt.pop %v196
      %v208 = vmul.f32 %v207, %v196
      %v209 = vmul.f32 %v208, %v207
      %v210 = vmul.f32 0.5, %v209
      %v211 = vsub.f32 1.5, %v210
      %v212 = vmul.f32 %v207, %v211
      %vm213 = vweird.f32 %v196
      %vm214 = vweird.f32 %v207
      %vm215 = vmor %vm213, %vm214
      %v216 = vsel %vm215, %v207, %v212
      %v217 = vmul.f32 %v183, %v206
      %v218 = vmul.f32 %v184, %v216
      %v219 = vld [vmem:[#allocation3] sm:$0x1]
      %v221 = vperm.slane %v219, 0
      %v223 = vmul.f32 %v217, %v221
      %v224 = vmul.f32 %v218, %v221
      %v225 = vld [vmem:[#allocation5] sm:$0x1]
      %v227 = vperm.slane %v225, 0
      %v229 = vadd.f32 %v223, %v227
      %v230 = vadd.f32 %v224, %v227
      %v231 = vpack.c.bf16 %v229, %v229
      %v232 = vpack.c.bf16 %v230, %v230
      %vm233 = vcmask 257024
      %234 = vst.msk [vmem:[%s6] sm:$0xf] %vm233, %v231
      %235 = vst.msk [vmem:[%s6 + $0x4] sm:$0xf] %vm233, %v232
    $region41: #{transformer_forward.46} parent=1 // pred_fallthru
      _
    // Predicated region
    $region42: #{transformer_forward.46} parent=1 // pred_check
      _
    $region43: #{transformer_forward.46} parent=1 // pred_check_branch
      %237 = sbr.rel (0) target = $region45
    $region44: #{transformer_forward.46} parent=1 // pred_region
      _
    $region45: #{transformer_forward.46} parent=1 // pred_fallthru
      _
    // Predicated region
    $region46: #{transformer_forward.46} parent=1 // pred_check
      _
    $region47: #{transformer_forward.46} parent=1 // pred_check_branch
      %239 = sbr.rel (0) target = $region49
    $region48: #{transformer_forward.46} parent=1 // pred_region
      _
    $region49: #{transformer_forward.46} parent=1 // pred_fallthru
      _
    %240 = vsyncpa [#allocation4], 1
    %241 = vsyncpa [#allocation6], 1

// kernel: transformer_forward.53
$region0: #{transformer_forward.53}
  #allocation0 [shape = 'u32[]', space=smem, size = 0x4, offset = 0x4, fixed_abs, tag = 'smem constant byte address 0x4 - core index']
  #allocation1 [shape = 'u32[72,128]{1,0:T(1,128)}', space=vmem, size = 0x9000, scoped, tag = 'internal scratch']
  #allocation2 [shape = 'f32[16,32]{1,0:T(8,128)}', space=vmem, size = 0x2000, scoped, tag = 'scratch operand']
  %s0 = inlined_call_operand.vmem [shape: bf16[16,32], index: 0, kind: input, shape index: {}]
  %s1 = inlined_call_operand.vmem [shape: bf16[32,32], index: 1, kind: input, shape index: {}]
  %s2 = inlined_call_operand.vmem [shape: f32[1,32], index: 2, kind: input, shape index: {}]
  %s3 = inlined_call_operand.vmem [shape: bf16[16,32], index: 3, kind: input, shape index: {}]
  %s4 = inlined_call_operand.vmem [shape: f32[1,32], index: 4, kind: input, shape index: {}]
  %s5 = inlined_call_operand.hbm [shape: f32[1,32], index: 5, kind: input, shape index: {}]
  %s6 = inlined_call_operand.vmem [shape: bf16[16,32], index: 6, kind: output, shape index: {}]
  %s7 = sld [smem:[#allocation0]]
  $region46: #{transformer_forward.53} parent=0
    _
  %s9 = ssub.s32 1, %s7
  %s10 = scalar_select 0, %s9, %s7
  $region1: #{transformer_forward.53} parent=0
    #allocation3 [shape = 'u8[512]{0}', space=vmem, size = 0x400, scoped, tag = 'input window, operand 5, single buffered']
    #allocation4 [shape = 's32[1]{0}', space=sflag, size = 0x4, scoped, tag = 'scoped memory for transformer_forward.53']
    %11 = vsyncpa [#allocation4], 0
    // Predicated region
    $region2: #{transformer_forward.53} parent=1 // pred_check
      _
    $region3: #{transformer_forward.53} parent=1 // pred_check_branch
      %13 = sbr.rel (0) target = $region5
    $region4: #{transformer_forward.53} parent=1 // pred_region
      _
    $region5: #{transformer_forward.53} parent=1 // pred_fallthru
      _
    // Predicated region
    $region6: #{transformer_forward.53} parent=1 // pred_check
      _
    $region7: #{transformer_forward.53} parent=1 // pred_check_branch
      %15 = sbr.rel (0) target = $region9
    $region8: #{transformer_forward.53} parent=1 // pred_region
      _
    $region9: #{transformer_forward.53} parent=1 // pred_fallthru
      _
    // Predicated region
    $region10: #{transformer_forward.53} parent=1 // pred_check
      _
    $region11: #{transformer_forward.53} parent=1 // pred_check_branch
      %17 = sbr.rel (0) target = $region13
    $region12: #{transformer_forward.53} parent=1 // pred_region
      _
    $region13: #{transformer_forward.53} parent=1 // pred_fallthru
      _
    // Predicated region
    $region14: #{transformer_forward.53} parent=1 // pred_check
      _
    $region15: #{transformer_forward.53} parent=1 // pred_check_branch
      %19 = sbr.rel (0) target = $region17
    $region16: #{transformer_forward.53} parent=1 // pred_region
      _
    $region17: #{transformer_forward.53} parent=1 // pred_fallthru
      _
    // Predicated region
    $region18: #{transformer_forward.53} parent=1 // pred_check
      _
    $region19: #{transformer_forward.53} parent=1 // pred_check_branch
      %21 = sbr.rel (0) target = $region21
    $region20: #{transformer_forward.53} parent=1 // pred_region
      _
    $region21: #{transformer_forward.53} parent=1 // pred_fallthru
      _
    // Predicated region
    $region22: #{transformer_forward.53} parent=1 // pred_check
      _
    $region23: #{transformer_forward.53} parent=1 // pred_check_branch
      %23 = sbr.rel (0) target = $region25
    $region24: #{transformer_forward.53} parent=1 // pred_region
      %25 = vsyncadd [#allocation4], 0
      %s27 = sshll.u32 %s5, 4
      %s28 = int_to_ptr.hbm [resolvable:$true] %s27
      %s29 = sshll.u32 [#allocation3], 4
      %s30 = int_to_ptr.vmem [resolvable:$true] %s29
      %32 = dma.hbm_to_vmem [thread:$0]  %s28, 16, %s30, [#allocation4]
    $region25: #{transformer_forward.53} parent=1 // pred_fallthru
      _
    // Predicated region
    $region26: #{transformer_forward.53} parent=1 // pred_check
      _
    $region27: #{transformer_forward.53} parent=1 // pred_check_branch
      %34 = sbr.rel (0) target = $region29
    $region28: #{transformer_forward.53} parent=1 // pred_region
      %36 = dma.done [#allocation4], 16
    $region29: #{transformer_forward.53} parent=1 // pred_fallthru
      _
    %p38 = scmp.eq.s32.totalorder 0, 0
    // Predicated region
    $region30: #{transformer_forward.53} parent=1 // pred_check
      %p39 = pneg %p38
    $region31: #{transformer_forward.53} parent=1 // pred_check_branch
      %41 = sbr.rel (%p39) target = $region33
    $region32: #{transformer_forward.53} parent=1 // pred_region
      %vm42 = vcmask 261120
      %43 = vst.msk [vmem:[#allocation2] sm:$0xff] %vm42, 0.0
      %44 = vst.msk [vmem:[#allocation2 + $0x8] sm:$0xff] %vm42, 0.0
    $region33: #{transformer_forward.53} parent=1 // pred_fallthru
      _
    %v45 = vld [vmem:[%s1] sm:$0xf]
    %v46 = vld [vmem:[%s1 + $0x4] sm:$0xf]
    %v47 = vld [vmem:[%s1 + $0x8] sm:$0xf]
    %v48 = vld [vmem:[%s1 + $0xc] sm:$0xf]
    %v49 = vld [vmem:[#allocation2] sm:$0xff]
    %v50 = vld [vmem:[#allocation2 + $0x8] sm:$0xff]
    %v51 = vld [vmem:[%s0] sm:$0xf]
    %v52 = vld [vmem:[%s0 + $0x4] sm:$0xf]
    %v55 = vunpack.c.l.b16 %v51
    %v56 = vunpack.c.l.b16 %v52
    %v57 = vpack.c.b16 %v56, %v55
    %v62 = vunpack.c.l.b16 %v45
    %v63 = vunpack.c.l.b16 %v46
    %v64 = vunpack.c.l.b16 %v47
    %v65 = vunpack.c.l.b16 %v48
    %v66 = vpack.c.b16 %v63, %v62
    %v67 = vpack.c.b16 %v65, %v64
    %vm70 = vcmask 261120
    %v72 = vsel %vm70, %v57, 0
    %74 = vmatpush.bf16.msra.mxu0 0
    %75 = vmatpush.bf16.msra.mxu0 0
    %76 = vmatpush.bf16.msra.mxu0 0
    %77 = vmatpush.bf16.msra.mxu0 0
    %78 = vmatpush.bf16.msra.mxu0 0
    %79 = vmatpush.bf16.msra.mxu0 0
    %80 = vmatpush.bf16.msra.mxu0 %v67
    %81 = vmatpush.bf16.msra.mxu0 %v66
    %82 = vmatmul.bf16.gmra.mxu0 %v72
    %v83 = vpop.f32.mrf.mxu0
    %v84 = vadd.f32 0.0, %v83
    %v85 = vpop.f32.mrf.mxu0
    %v86 = vadd.f32 0.0, %v85
    %87 = vdwg.mxu0
    %v88 = vadd.f32 %v49, %v84
    %v89 = vadd.f32 %v50, %v86
    %90 = vst.msk [vmem:[#allocation2] sm:$0xff] %vm70, %v88
    %91 = vst.msk [vmem:[#allocation2 + $0x8] sm:$0xff] %vm70, %v89
    // Predicated region
    $region34: #{transformer_forward.53} parent=1 // pred_check
      %p92 = pneg %p38
    $region35: #{transformer_forward.53} parent=1 // pred_check_branch
      %94 = sbr.rel (%p92) target = $region37
    $region36: #{transformer_forward.53} parent=1 // pred_region
      %v95 = vld [vmem:[#allocation2] sm:$0xff]
      %v96 = vld [vmem:[#allocation2 + $0x8] sm:$0xff]
      %v97 = vld [vmem:[%s2] sm:$0x1]
      %v99 = vperm.slane %v97, 0
      %v101 = vadd.f32 %v95, %v99
      %v102 = vadd.f32 %v96, %v99
      %v103 = vld [vmem:[%s3] sm:$0xf]
      %v104 = vld [vmem:[%s3 + $0x4] sm:$0xf]
      %v105 = vunpack.c.l.bf16 %v103
      %v106 = vunpack.c.l.bf16 %v104
      %v107 = vadd.f32 %v101, %v105
      %v108 = vadd.f32 %v102, %v106
      %v109 = vsel %vm70, %v107, 0.0
      %110 = vadd.xlane.f32.xlu0 %v109
      %v111 = vpop.xlane.xlu0 %110
      %v112 = vsel %vm70, %v108, 0.0
      %113 = vadd.xlane.f32.xlu0 %v112
      %v114 = vpop.xlane.xlu0 %113
      %v115 = vrcp.pop 32.0
      %v116 = vmul.f32 32.0, %v115
      %v117 = vsub.f32 1.0, %v116
      %v118 = vmul.f32 %v115, %v117
      %v119 = vadd.f32 %v115, %v118
      %vm120 = vweird.f32 %v115
      %v121 = vsel %vm120, %v115, %v119
      %v122 = vmul.f32 %v111, %v121
      %v123 = vmul.f32 %v114, %v121
      %v124 = vsub.f32 %v107, %v122
      %v125 = vsub.f32 %v108, %v123
      %v126 = vmul.f32 %v124, %v124
      %v127 = vmul.f32 %v125, %v125
      %v128 = vsel %vm70, %v126, 0.0
      %129 = vadd.xlane.f32.xlu0 %v128
      %v130 = vpop.xlane.xlu0 %129
      %v131 = vsel %vm70, %v127, 0.0
      %132 = vadd.xlane.f32.xlu0 %v131
      %v133 = vpop.xlane.xlu0 %132
      %v134 = vmul.f32 %v130, %v121
      %v135 = vmul.f32 %v133, %v121
      %v136 = vadd.f32 %v134, 1e-05
      %v137 = vadd.f32 %v135, 1e-05
      %v138 = vrsqrt.pop %v136
      %v139 = vmul.f32 %v138, %v136
      %v140 = vmul.f32 %v139, %v138
      %v141 = vmul.f32 0.5, %v140
      %v142 = vsub.f32 1.5, %v141
      %v143 = vmul.f32 %v138, %v142
      %vm144 = vweird.f32 %v136
      %vm145 = vweird.f32 %v138
      %vm146 = vmor %vm144, %vm145
      %v147 = vsel %vm146, %v138, %v143
      %v148 = vrsqrt.pop %v137
      %v149 = vmul.f32 %v148, %v137
      %v150 = vmul.f32 %v149, %v148
      %v151 = vmul.f32 0.5, %v150
      %v152 = vsub.f32 1.5, %v151
      %v153 = vmul.f32 %v148, %v152
      %vm154 = vweird.f32 %v137
      %vm155 = vweird.f32 %v148
      %vm156 = vmor %vm154, %vm155
      %v157 = vsel %vm156, %v148, %v153
      %v158 = vmul.f32 %v124, %v147
      %v159 = vmul.f32 %v125, %v157
      %v160 = vld [vmem:[%s4] sm:$0x1]
      %v162 = vperm.slane %v160, 0
      %v164 = vmul.f32 %v158, %v162
      %v165 = vmul.f32 %v159, %v162
      %v166 = vld [vmem:[#allocation3] sm:$0x1]
      %v168 = vperm.slane %v166, 0
      %v170 = vadd.f32 %v164, %v168
      %v171 = vadd.f32 %v165, %v168
      %v172 = vpack.c.bf16 %v170, %v170
      %v173 = vpack.c.bf16 %v171, %v171
      %vm174 = vcmask 257024
      %175 = vst.msk [vmem:[%s6] sm:$0xf] %vm174, %v172
      %176 = vst.msk [vmem:[%s6 + $0x4] sm:$0xf] %vm174, %v173
    $region37: #{transformer_forward.53} parent=1 // pred_fallthru
      _
    // Predicated region
    $region38: #{transformer_forward.53} parent=1 // pred_check
      _
    $region39: #{transformer_forward.53} parent=1 // pred_check_branch
      %178 = sbr.rel (0) target = $region41
    $region40: #{transformer_forward.53} parent=1 // pred_region
      _
    $region41: #{transformer_forward.53} parent=1 // pred_fallthru
      _
    // Predicated region
    $region42: #{transformer_forward.53} parent=1 // pred_check
      _
    $region43: #{transformer_forward.53} parent=1 // pred_check_branch
      %180 = sbr.rel (0) target = $region45
    $region44: #{transformer_forward.53} parent=1 // pred_region
      _
    $region45: #{transformer_forward.53} parent=1 // pred_fallthru
      _
    %181 = vsyncpa [#allocation4], 1

</llo_original>
